<compile_context>
chip_gen: v7x
topology: tpu7x:2x2x1
jax: 0.10.0
libtpu: 0.0.40
codegen_flags: <defaults>
</compile_context>

<pallas_src>
import functools

import jax
import jax.numpy as jnp
from jax import lax
from jax.experimental import pallas as pl
from jax.experimental.pallas import tpu as pltpu

VMEM = pltpu.MemorySpace.VMEM
_BN_EPS = 1e-5  # Python float -> compile-time immediate (NOT a captured jax array)


# ----------------------------- fused kernel ----------------------------------

def _fused_forward_kernel(G, N, Hd, L,
                          x_ref, e_ref, snn_ref, sne_ref,
                          ehw, ehb, eew, eeb,
                          wn_ref, bn_ref, wc_ref, bc_ref,
                          gh_ref, bh_ref, ge_ref, be_ref,
                          w0, b0, w1, b1, w2, b2,
                          y_ref):
    def lin(a, w, b):
        return jnp.dot(a, w, preferred_element_type=jnp.float32) + b

    # ---- embeddings (everything below stays in VMEM) -------------------------
    H = lin(x_ref[...], ehw[...], ehb[...])          # [G*N, Hd]
    # nn.Linear(1, Hd): [M,1] @ [1,Hd] == broadcast multiply (avoid K=1 matmul)
    Ef = e_ref[...] * eew[...] + eeb[...]            # [G*N*N, Hd]
    snn = snn_ref[...]                               # [G*N, 1]
    sne = sne_ref[...]                               # [G*N*N, 1]

    # ---- GatedGCN layers (unrolled: per-layer weights differ) ----------------
    for l in range(L):
        # one lane-dense node matmul for A|B|D|E:  [G*N, Hd] @ [Hd, 4*Hd]
        P = lin(H, wn_ref[l], bn_ref[l])
        AX = P[:, 0 * Hd:1 * Hd]                      # stays 2D: [G*N, Hd]
        BX3 = P[:, 1 * Hd:2 * Hd].reshape(G, N, Hd)
        DX3 = P[:, 2 * Hd:3 * Hd].reshape(G, N, Hd)
        EX3 = P[:, 3 * Hd:4 * Hd].reshape(G, N, Hd)
        CE4 = lin(Ef, wc_ref[l], bc_ref[l]).reshape(G, N, N, Hd)  # [graph,dst,src,Hd]

        # message: e_ij = CE_ij + DX[src j] + EX[dst i]
        e_new = CE4 + DX3[:, None, :, :] + EX3[:, :, None, :]
        sig = jax.nn.sigmoid(e_new)                               # EUP
        num = jnp.sum(sig * BX3[:, None, :, :], axis=2)           # sum over src j
        den = jnp.sum(sig, axis=2)
        num2 = num.reshape(G * N, Hd)
        den2 = den.reshape(G * N, Hd)
        # den = sum of sigmoids > 0, so torch.nan_to_num guard is dead.
        # EUP approx reciprocal + one Newton step (keeps f32 accuracy everywhere).
        inv = pl.reciprocal(den2, approx=True)
        inv = inv * (2.0 - den2 * inv)

        Hn = (AX + num2 * inv) * snn                              # [G*N, Hd]
        Eo = e_new.reshape(G * N * N, Hd) * sne                   # [G*N*N, Hd]

        # BatchNorm1d over dim 0 (training-mode batch stats, biased variance),
        # folded into per-feature scale/shift.
        hm = jnp.mean(Hn, axis=0, keepdims=True)
        hv = jnp.mean((Hn - hm) ** 2, axis=0, keepdims=True)
        hs = gh_ref[l] * lax.rsqrt(hv + _BN_EPS)
        Hn = Hn * hs + (bh_ref[l] - hm * hs)

        em = jnp.mean(Eo, axis=0, keepdims=True)
        ev = jnp.mean((Eo - em) ** 2, axis=0, keepdims=True)
        es = ge_ref[l] * lax.rsqrt(ev + _BN_EPS)
        Eo = Eo * es + (be_ref[l] - em * es)

        # ReLU + residual (with this layer's inputs)
        H = H + jnp.maximum(Hn, 0.0)
        Ef = Ef + jnp.maximum(Eo, 0.0)

    # ---- readout: dgl.mean_nodes + MLP ---------------------------------------
    y = jnp.mean(H.reshape(G, N, Hd), axis=1)        # [G, Hd]
    y = jnp.maximum(lin(y, w0[...], b0[...]), 0.0)
    y = jnp.maximum(lin(y, w1[...], b1[...]), 0.0)
    y_ref[...] = lin(y, w2[...], b2[...])            # [G, out_dim]


# ----------------------------- wrapper ----------------------------------------

def _stack_layer_params(layers):
    """Stack per-layer params along a leading L axis (fewer, larger kernel operands)."""
    wn, bn, wc, bc, gh, bh, ge, be = ([] for _ in range(8))
    for (wa, ba, wb, bb, wc_, bc_, wd, bd, we, be_, g_h, b_h, g_e, b_e) in layers:
        # concatenate A|B|D|E so the kernel does one [Hd, 4*Hd] matmul
        wn.append(jnp.concatenate([wa, wb, wd, we], axis=1))     # [Hd, 4*Hd]
        bn.append(jnp.concatenate([ba, bb, bd, be_], axis=1))    # [1, 4*Hd]
        wc.append(wc_); bc.append(bc_)
        gh.append(g_h); bh.append(b_h); ge.append(g_e); be.append(b_e)
    return [jnp.stack(x, axis=0) for x in (wn, bn, wc, bc, gh, bh, ge, be)]


@functools.partial(jax.jit, static_argnums=(5, 6, 7, 8))
def gated_gcn_forward(params, X, E, snorm_n, snorm_e, G, N, Hd, out_dim):
    L = len(params["layers"])
    inputs = [X, E, snorm_n, snorm_e,
              params["emb_h_w"], params["emb_h_b"],
              params["emb_e_w"], params["emb_e_b"],
              *_stack_layer_params(params["layers"]),
              *params["mlp"]]
    kern = functools.partial(_fused_forward_kernel, G, N, Hd, L)
    return pl.pallas_call(
        kern,
        out_shape=jax.ShapeDtypeStruct((G, out_dim), jnp.float32),
        in_specs=[pl.BlockSpec(memory_space=VMEM)] * len(inputs),
        out_specs=pl.BlockSpec(memory_space=VMEM),
    )(*inputs)


# ----------------------------- pure-JAX reference ------------------------------

def _reference(params, X, E, snorm_n, snorm_e, G, N, Hd):
    eps = 1e-5
    H = X @ params["emb_h_w"] + params["emb_h_b"]
    Ef = E * params["emb_e_w"] + params["emb_e_b"]
    for (wa, ba, wb, bb, wc, bc, wd, bd, we, be_, gh, bh, ge, bbe) in params["layers"]:
        AX, BX = H @ wa + ba, H @ wb + bb
        DX, EXn = H @ wd + bd, H @ we + be_
        CE = Ef @ wc + bc
        AX3, BX3 = AX.reshape(G, N, Hd), BX.reshape(G, N, Hd)
        DX3, EX3 = DX.reshape(G, N, Hd), EXn.reshape(G, N, Hd)
        CE4 = CE.reshape(G, N, N, Hd)
        e_new = CE4 + DX3[:, None, :, :] + EX3[:, :, None, :]
        sig = jax.nn.sigmoid(e_new)
        num = jnp.sum(sig * BX3[:, None, :, :], axis=2)
        den = jnp.sum(sig, axis=2)
        Hn = (AX3 + num / den).reshape(G * N, Hd)
        Eo = e_new.reshape(G * N * N, Hd)
        Hn = Hn * snorm_n
        Eo = Eo * snorm_e
        hm = jnp.mean(Hn, 0, keepdims=True)
        hv = jnp.mean((Hn - hm) ** 2, 0, keepdims=True)
        Hn = gh * (Hn - hm) / jnp.sqrt(hv + eps) + bh
        em = jnp.mean(Eo, 0, keepdims=True)
        ev = jnp.mean((Eo - em) ** 2, 0, keepdims=True)
        Eo = ge * (Eo - em) / jnp.sqrt(ev + eps) + bbe
        H = H + jnp.maximum(Hn, 0.0)
        Ef = Ef + jnp.maximum(Eo, 0.0)
    y = jnp.mean(H.reshape(G, N, Hd), axis=1)
    w0, b0, w1, b1, w2, b2 = params["mlp"]
    y = jnp.maximum(y @ w0 + b0, 0.0)
    y = jnp.maximum(y @ w1 + b1, 0.0)
    return y @ w2 + b2


# ----------------------------- main --------------------------------------------

def _init_linear(key, fan_in, fan_out):
    k1, k2 = jax.random.split(key)
    lim = 1.0 / (fan_in ** 0.5)
    w = jax.random.uniform(k1, (fan_in, fan_out), jnp.float32, -lim, lim)
    b = jax.random.uniform(k2, (1, fan_out), jnp.float32, -lim, lim)
    return w, b


if __name__ == "__main__":
    # consistent matmul precision for kernel vs. reference comparison
    jax.config.update("jax_default_matmul_precision", "highest")

    G, N = 2, 8                     # 2 graphs, 8 nodes each (fully connected)
    input_dim, Hd, out_dim, L = 4, 32, 3, 2
    Ntot, M = G * N, G * N * N

    key = jax.random.PRNGKey(0)
    keys = jax.random.split(key, 32)
    kit = iter(keys)

    # parameters (deterministic)
    emb_h_w, emb_h_b = _init_linear(next(kit), input_dim, Hd)
    emb_e_w, emb_e_b = _init_linear(next(kit), 1, Hd)
    layers = []
    for _ in range(L):
        lp = []
        for _ in range(5):                       # A, B, C, D, E linears
            w, b = _init_linear(next(kit), Hd, Hd)
            lp += [w, b]
        lp += [jnp.ones((1, Hd), jnp.float32), jnp.zeros((1, Hd), jnp.float32),   # bn_node_h
               jnp.ones((1, Hd), jnp.float32), jnp.zeros((1, Hd), jnp.float32)]   # bn_node_e
        layers.append(tuple(lp))
    mlp = []
    for fi, fo in [(Hd, Hd), (Hd, Hd), (Hd, out_dim)]:
        w, b = _init_linear(next(kit), fi, fo)
        mlp += [w, b]
    params = {"emb_h_w": emb_h_w, "emb_h_b": emb_h_b,
              "emb_e_w": emb_e_w, "emb_e_b": emb_e_b,
              "layers": layers, "mlp": tuple(mlp)}

    # inputs (deterministic); fully-connected graphs -> dense N x N edge blocks
    # TODO(synk): arbitrary (sparse) DGL graph connectivity is not expressed here;
    # the dense fully-connected formulation matches the original visualisation setup.
    X = jax.random.normal(next(kit), (Ntot, input_dim), jnp.float32)
    E = jax.random.normal(next(kit), (M, 1), jnp.float32)
    snorm_n = jnp.full((Ntot, 1), 1.0 / (N ** 0.5), jnp.float32)
    snorm_e = jnp.full((M, 1), 1.0 / N, jnp.float32)

    y = gated_gcn_forward(params, X, E, snorm_n, snorm_e, G, N, Hd, out_dim)
    y = jax.block_until_ready(y)

    y_ref = _reference(params, X, E, snorm_n, snorm_e, G, N, Hd)
    assert y.shape == (G, out_dim)
    assert bool(jnp.all(jnp.isfinite(y)))
    assert bool(jnp.allclose(y, y_ref, rtol=1e-2, atol=1e-2)), (y, y_ref)

    print("KERNEL_OK")
</pallas_src>

<mosaic_0001>
module attributes {stable_mosaic.version = 11 : i64} {
  func.func @_fused_forward_kernel(%arg0: memref<16x4xf32, #tpu.memory_space<vmem>>, %arg1: memref<128x1xf32, #tpu.memory_space<vmem>>, %arg2: memref<16x1xf32, #tpu.memory_space<vmem>>, %arg3: memref<128x1xf32, #tpu.memory_space<vmem>>, %arg4: memref<4x32xf32, #tpu.memory_space<vmem>>, %arg5: memref<1x32xf32, #tpu.memory_space<vmem>>, %arg6: memref<1x32xf32, #tpu.memory_space<vmem>>, %arg7: memref<1x32xf32, #tpu.memory_space<vmem>>, %arg8: memref<2x32x128xf32, #tpu.memory_space<vmem>>, %arg9: memref<2x1x128xf32, #tpu.memory_space<vmem>>, %arg10: memref<2x32x32xf32, #tpu.memory_space<vmem>>, %arg11: memref<2x1x32xf32, #tpu.memory_space<vmem>>, %arg12: memref<2x1x32xf32, #tpu.memory_space<vmem>>, %arg13: memref<2x1x32xf32, #tpu.memory_space<vmem>>, %arg14: memref<2x1x32xf32, #tpu.memory_space<vmem>>, %arg15: memref<2x1x32xf32, #tpu.memory_space<vmem>>, %arg16: memref<32x32xf32, #tpu.memory_space<vmem>>, %arg17: memref<1x32xf32, #tpu.memory_space<vmem>>, %arg18: memref<32x32xf32, #tpu.memory_space<vmem>>, %arg19: memref<1x32xf32, #tpu.memory_space<vmem>>, %arg20: memref<32x3xf32, #tpu.memory_space<vmem>>, %arg21: memref<1x3xf32, #tpu.memory_space<vmem>>, %arg22: memref<2x3xf32, #tpu.memory_space<vmem>>) attributes {dimension_semantics = [], scalar_prefetch = 0 : i64, scratch_operands = 0 : i64, tpu.core_type = #tpu.core_type<tc>} {
    %c0 = arith.constant 0 : index
    %c0_0 = arith.constant 0 : index
    %0 = vector.load %arg0[%c0, %c0_0] : memref<16x4xf32, #tpu.memory_space<vmem>>, vector<16x4xf32>
    %c0_1 = arith.constant 0 : index
    %c0_2 = arith.constant 0 : index
    %1 = vector.load %arg4[%c0_1, %c0_2] : memref<4x32xf32, #tpu.memory_space<vmem>>, vector<4x32xf32>
    %c0_3 = arith.constant 0 : index
    %c0_4 = arith.constant 0 : index
    %2 = vector.load %arg5[%c0_3, %c0_4] : memref<1x32xf32, #tpu.memory_space<vmem>>, vector<1x32xf32>
    %cst = arith.constant dense<0.000000e+00> : vector<16x32xf32>
    %3 = tpu.matmul %0, %1, %cst {dimension_numbers = #tpu.dot_dimension_numbers<[1], [0], [0], [1], [0, 0, 1, 1], [], []>, precision = #tpu.contract_precision<fp32>} : vector<16x4xf32>, vector<4x32xf32>, vector<16x32xf32> -> vector<16x32xf32>
    %4 = vector.broadcast %2 : vector<1x32xf32> to vector<16x32xf32>
    %5 = arith.addf %3, %4 : vector<16x32xf32>
    %c0_5 = arith.constant 0 : index
    %c0_6 = arith.constant 0 : index
    %6 = vector.load %arg1[%c0_5, %c0_6] : memref<128x1xf32, #tpu.memory_space<vmem>>, vector<128x1xf32>
    %c0_7 = arith.constant 0 : index
    %c0_8 = arith.constant 0 : index
    %7 = vector.load %arg6[%c0_7, %c0_8] : memref<1x32xf32, #tpu.memory_space<vmem>>, vector<1x32xf32>
    %8 = vector.broadcast %6 : vector<128x1xf32> to vector<128x32xf32>
    %9 = vector.broadcast %7 : vector<1x32xf32> to vector<128x32xf32>
    %10 = arith.mulf %8, %9 : vector<128x32xf32>
    %c0_9 = arith.constant 0 : index
    %c0_10 = arith.constant 0 : index
    %11 = vector.load %arg7[%c0_9, %c0_10] : memref<1x32xf32, #tpu.memory_space<vmem>>, vector<1x32xf32>
    %12 = vector.broadcast %11 : vector<1x32xf32> to vector<128x32xf32>
    %13 = arith.addf %10, %12 : vector<128x32xf32>
    %c0_11 = arith.constant 0 : index
    %c0_12 = arith.constant 0 : index
    %14 = vector.load %arg2[%c0_11, %c0_12] : memref<16x1xf32, #tpu.memory_space<vmem>>, vector<16x1xf32>
    %c0_13 = arith.constant 0 : index
    %c0_14 = arith.constant 0 : index
    %15 = vector.load %arg3[%c0_13, %c0_14] : memref<128x1xf32, #tpu.memory_space<vmem>>, vector<128x1xf32>
    %c0_15 = arith.constant 0 : index
    %c0_16 = arith.constant 0 : index
    %c0_17 = arith.constant 0 : index
    %16 = vector.load %arg8[%c0_15, %c0_16, %c0_17] : memref<2x32x128xf32, #tpu.memory_space<vmem>>, vector<1x32x128xf32>
    %17 = vector.shape_cast %16 : vector<1x32x128xf32> to vector<32x128xf32>
    %c0_18 = arith.constant 0 : index
    %c0_19 = arith.constant 0 : index
    %c0_20 = arith.constant 0 : index
    %18 = vector.load %arg9[%c0_18, %c0_19, %c0_20] : memref<2x1x128xf32, #tpu.memory_space<vmem>>, vector<1x1x128xf32>
    %19 = vector.shape_cast %18 : vector<1x1x128xf32> to vector<1x128xf32>
    %cst_21 = arith.constant dense<0.000000e+00> : vector<16x128xf32>
    %20 = tpu.matmul %5, %17, %cst_21 {dimension_numbers = #tpu.dot_dimension_numbers<[1], [0], [0], [1], [0, 0, 1, 1], [], []>, precision = #tpu.contract_precision<fp32>} : vector<16x32xf32>, vector<32x128xf32>, vector<16x128xf32> -> vector<16x128xf32>
    %21 = vector.broadcast %19 : vector<1x128xf32> to vector<16x128xf32>
    %22 = arith.addf %20, %21 : vector<16x128xf32>
    %23 = vector.extract_strided_slice %22 {offsets = [0, 0], sizes = [16, 32], strides = [1, 1]} : vector<16x128xf32> to vector<16x32xf32>
    %24 = vector.extract_strided_slice %22 {offsets = [0, 32], sizes = [16, 32], strides = [1, 1]} : vector<16x128xf32> to vector<16x32xf32>
    %25 = vector.shape_cast %24 : vector<16x32xf32> to vector<2x8x32xf32>
    %26 = vector.extract_strided_slice %22 {offsets = [0, 64], sizes = [16, 32], strides = [1, 1]} : vector<16x128xf32> to vector<16x32xf32>
    %27 = vector.shape_cast %26 : vector<16x32xf32> to vector<2x8x32xf32>
    %28 = vector.extract_strided_slice %22 {offsets = [0, 96], sizes = [16, 32], strides = [1, 1]} : vector<16x128xf32> to vector<16x32xf32>
    %29 = vector.shape_cast %28 : vector<16x32xf32> to vector<2x8x32xf32>
    %c0_22 = arith.constant 0 : index
    %c0_23 = arith.constant 0 : index
    %c0_24 = arith.constant 0 : index
    %30 = vector.load %arg10[%c0_22, %c0_23, %c0_24] : memref<2x32x32xf32, #tpu.memory_space<vmem>>, vector<1x32x32xf32>
    %31 = vector.shape_cast %30 : vector<1x32x32xf32> to vector<32x32xf32>
    %c0_25 = arith.constant 0 : index
    %c0_26 = arith.constant 0 : index
    %c0_27 = arith.constant 0 : index
    %32 = vector.load %arg11[%c0_25, %c0_26, %c0_27] : memref<2x1x32xf32, #tpu.memory_space<vmem>>, vector<1x1x32xf32>
    %33 = vector.shape_cast %32 : vector<1x1x32xf32> to vector<1x32xf32>
    %cst_28 = arith.constant dense<0.000000e+00> : vector<128x32xf32>
    %34 = tpu.matmul %13, %31, %cst_28 {dimension_numbers = #tpu.dot_dimension_numbers<[1], [0], [0], [1], [0, 0, 1, 1], [], []>, precision = #tpu.contract_precision<fp32>} : vector<128x32xf32>, vector<32x32xf32>, vector<128x32xf32> -> vector<128x32xf32>
    %35 = vector.broadcast %33 : vector<1x32xf32> to vector<128x32xf32>
    %36 = arith.addf %34, %35 : vector<128x32xf32>
    %37 = vector.shape_cast %36 : vector<128x32xf32> to vector<2x8x8x32xf32>
    %38 = vector.shape_cast %27 : vector<2x8x32xf32> to vector<2x1x8x32xf32>
    %39 = vector.broadcast %38 : vector<2x1x8x32xf32> to vector<2x8x8x32xf32>
    %40 = arith.addf %37, %39 : vector<2x8x8x32xf32>
    %41 = vector.shape_cast %29 : vector<2x8x32xf32> to vector<2x8x1x32xf32>
    %42 = vector.broadcast %41 : vector<2x8x1x32xf32> to vector<2x8x8x32xf32>
    %43 = arith.addf %40, %42 : vector<2x8x8x32xf32>
    %44 = arith.negf %43 : vector<2x8x8x32xf32>
    %45 = math.exp %44 : vector<2x8x8x32xf32>
    %cst_29 = arith.constant 1.000000e+00 : f32
    %46 = vector.broadcast %cst_29 : f32 to vector<2x8x8x32xf32>
    %47 = arith.addf %46, %45 : vector<2x8x8x32xf32>
    %48 = arith.divf %46, %47 : vector<2x8x8x32xf32>
    %49 = vector.shape_cast %25 : vector<2x8x32xf32> to vector<2x1x8x32xf32>
    %50 = vector.broadcast %49 : vector<2x1x8x32xf32> to vector<2x8x8x32xf32>
    %51 = arith.mulf %48, %50 : vector<2x8x8x32xf32>
    %cst_30 = arith.constant dense<0.000000e+00> : vector<2x8x32xf32>
    %52 = vector.multi_reduction <add>, %51, %cst_30 [2] : vector<2x8x8x32xf32> to vector<2x8x32xf32>
    %cst_31 = arith.constant dense<0.000000e+00> : vector<2x8x32xf32>
    %53 = vector.multi_reduction <add>, %48, %cst_31 [2] : vector<2x8x8x32xf32> to vector<2x8x32xf32>
    %54 = vector.shape_cast %52 : vector<2x8x32xf32> to vector<16x32xf32>
    %55 = vector.shape_cast %53 : vector<2x8x32xf32> to vector<16x32xf32>
    %56 = tpu.reciprocal %55 {approx = true} : vector<16x32xf32> -> vector<16x32xf32>
    %57 = arith.mulf %55, %56 : vector<16x32xf32>
    %cst_32 = arith.constant 2.000000e+00 : f32
    %58 = vector.broadcast %cst_32 : f32 to vector<16x32xf32>
    %59 = arith.subf %58, %57 : vector<16x32xf32>
    %60 = arith.mulf %56, %59 : vector<16x32xf32>
    %61 = arith.mulf %54, %60 : vector<16x32xf32>
    %62 = arith.addf %23, %61 : vector<16x32xf32>
    %63 = vector.broadcast %14 : vector<16x1xf32> to vector<16x32xf32>
    %64 = arith.mulf %62, %63 : vector<16x32xf32>
    %65 = vector.shape_cast %43 : vector<2x8x8x32xf32> to vector<128x32xf32>
    %66 = vector.broadcast %15 : vector<128x1xf32> to vector<128x32xf32>
    %67 = arith.mulf %65, %66 : vector<128x32xf32>
    %cst_33 = arith.constant dense<0.000000e+00> : vector<32xf32>
    %68 = vector.multi_reduction <add>, %64, %cst_33 [0] : vector<16x32xf32> to vector<32xf32>
    %69 = vector.shape_cast %68 : vector<32xf32> to vector<1x32xf32>
    %cst_34 = arith.constant 1.600000e+01 : f32
    %70 = vector.broadcast %cst_34 : f32 to vector<1x32xf32>
    %71 = arith.divf %69, %70 : vector<1x32xf32>
    %72 = vector.broadcast %71 : vector<1x32xf32> to vector<16x32xf32>
    %73 = arith.subf %64, %72 : vector<16x32xf32>
    %74 = arith.mulf %73, %73 : vector<16x32xf32>
    %cst_35 = arith.constant dense<0.000000e+00> : vector<32xf32>
    %75 = vector.multi_reduction <add>, %74, %cst_35 [0] : vector<16x32xf32> to vector<32xf32>
    %76 = vector.shape_cast %75 : vector<32xf32> to vector<1x32xf32>
    %cst_36 = arith.constant 1.600000e+01 : f32
    %77 = vector.broadcast %cst_36 : f32 to vector<1x32xf32>
    %78 = arith.divf %76, %77 : vector<1x32xf32>
    %c0_37 = arith.constant 0 : index
    %c0_38 = arith.constant 0 : index
    %c0_39 = arith.constant 0 : index
    %79 = vector.load %arg12[%c0_37, %c0_38, %c0_39] : memref<2x1x32xf32, #tpu.memory_space<vmem>>, vector<1x1x32xf32>
    %80 = vector.shape_cast %79 : vector<1x1x32xf32> to vector<1x32xf32>
    %cst_40 = arith.constant 9.99999974E-6 : f32
    %81 = vector.broadcast %cst_40 : f32 to vector<1x32xf32>
    %82 = arith.addf %78, %81 : vector<1x32xf32>
    %83 = math.rsqrt %82 : vector<1x32xf32>
    %84 = arith.mulf %80, %83 : vector<1x32xf32>
    %85 = vector.broadcast %84 : vector<1x32xf32> to vector<16x32xf32>
    %86 = arith.mulf %64, %85 : vector<16x32xf32>
    %c0_41 = arith.constant 0 : index
    %c0_42 = arith.constant 0 : index
    %c0_43 = arith.constant 0 : index
    %87 = vector.load %arg13[%c0_41, %c0_42, %c0_43] : memref<2x1x32xf32, #tpu.memory_space<vmem>>, vector<1x1x32xf32>
    %88 = vector.shape_cast %87 : vector<1x1x32xf32> to vector<1x32xf32>
    %89 = arith.mulf %71, %84 : vector<1x32xf32>
    %90 = arith.subf %88, %89 : vector<1x32xf32>
    %91 = vector.broadcast %90 : vector<1x32xf32> to vector<16x32xf32>
    %92 = arith.addf %86, %91 : vector<16x32xf32>
    %cst_44 = arith.constant dense<0.000000e+00> : vector<32xf32>
    %93 = vector.multi_reduction <add>, %67, %cst_44 [0] : vector<128x32xf32> to vector<32xf32>
    %94 = vector.shape_cast %93 : vector<32xf32> to vector<1x32xf32>
    %cst_45 = arith.constant 1.280000e+02 : f32
    %95 = vector.broadcast %cst_45 : f32 to vector<1x32xf32>
    %96 = arith.divf %94, %95 : vector<1x32xf32>
    %97 = vector.broadcast %96 : vector<1x32xf32> to vector<128x32xf32>
    %98 = arith.subf %67, %97 : vector<128x32xf32>
    %99 = arith.mulf %98, %98 : vector<128x32xf32>
    %cst_46 = arith.constant dense<0.000000e+00> : vector<32xf32>
    %100 = vector.multi_reduction <add>, %99, %cst_46 [0] : vector<128x32xf32> to vector<32xf32>
    %101 = vector.shape_cast %100 : vector<32xf32> to vector<1x32xf32>
    %cst_47 = arith.constant 1.280000e+02 : f32
    %102 = vector.broadcast %cst_47 : f32 to vector<1x32xf32>
    %103 = arith.divf %101, %102 : vector<1x32xf32>
    %c0_48 = arith.constant 0 : index
    %c0_49 = arith.constant 0 : index
    %c0_50 = arith.constant 0 : index
    %104 = vector.load %arg14[%c0_48, %c0_49, %c0_50] : memref<2x1x32xf32, #tpu.memory_space<vmem>>, vector<1x1x32xf32>
    %105 = vector.shape_cast %104 : vector<1x1x32xf32> to vector<1x32xf32>
    %cst_51 = arith.constant 9.99999974E-6 : f32
    %106 = vector.broadcast %cst_51 : f32 to vector<1x32xf32>
    %107 = arith.addf %103, %106 : vector<1x32xf32>
    %108 = math.rsqrt %107 : vector<1x32xf32>
    %109 = arith.mulf %105, %108 : vector<1x32xf32>
    %110 = vector.broadcast %109 : vector<1x32xf32> to vector<128x32xf32>
    %111 = arith.mulf %67, %110 : vector<128x32xf32>
    %c0_52 = arith.constant 0 : index
    %c0_53 = arith.constant 0 : index
    %c0_54 = arith.constant 0 : index
    %112 = vector.load %arg15[%c0_52, %c0_53, %c0_54] : memref<2x1x32xf32, #tpu.memory_space<vmem>>, vector<1x1x32xf32>
    %113 = vector.shape_cast %112 : vector<1x1x32xf32> to vector<1x32xf32>
    %114 = arith.mulf %96, %109 : vector<1x32xf32>
    %115 = arith.subf %113, %114 : vector<1x32xf32>
    %116 = vector.broadcast %115 : vector<1x32xf32> to vector<128x32xf32>
    %117 = arith.addf %111, %116 : vector<128x32xf32>
    %cst_55 = arith.constant 0.000000e+00 : f32
    %118 = vector.broadcast %cst_55 : f32 to vector<16x32xf32>
    %119 = arith.maximumf %92, %118 : vector<16x32xf32>
    %120 = arith.addf %5, %119 : vector<16x32xf32>
    %cst_56 = arith.constant 0.000000e+00 : f32
    %121 = vector.broadcast %cst_56 : f32 to vector<128x32xf32>
    %122 = arith.maximumf %117, %121 : vector<128x32xf32>
    %123 = arith.addf %13, %122 : vector<128x32xf32>
    %c1 = arith.constant 1 : index
    %c0_57 = arith.constant 0 : index
    %c0_58 = arith.constant 0 : index
    %124 = vector.load %arg8[%c1, %c0_57, %c0_58] : memref<2x32x128xf32, #tpu.memory_space<vmem>>, vector<1x32x128xf32>
    %125 = vector.shape_cast %124 : vector<1x32x128xf32> to vector<32x128xf32>
    %c1_59 = arith.constant 1 : index
    %c0_60 = arith.constant 0 : index
    %c0_61 = arith.constant 0 : index
    %126 = vector.load %arg9[%c1_59, %c0_60, %c0_61] : memref<2x1x128xf32, #tpu.memory_space<vmem>>, vector<1x1x128xf32>
    %127 = vector.shape_cast %126 : vector<1x1x128xf32> to vector<1x128xf32>
    %cst_62 = arith.constant dense<0.000000e+00> : vector<16x128xf32>
    %128 = tpu.matmul %120, %125, %cst_62 {dimension_numbers = #tpu.dot_dimension_numbers<[1], [0], [0], [1], [0, 0, 1, 1], [], []>, precision = #tpu.contract_precision<fp32>} : vector<16x32xf32>, vector<32x128xf32>, vector<16x128xf32> -> vector<16x128xf32>
    %129 = vector.broadcast %127 : vector<1x128xf32> to vector<16x128xf32>
    %130 = arith.addf %128, %129 : vector<16x128xf32>
    %131 = vector.extract_strided_slice %130 {offsets = [0, 0], sizes = [16, 32], strides = [1, 1]} : vector<16x128xf32> to vector<16x32xf32>
    %132 = vector.extract_strided_slice %130 {offsets = [0, 32], sizes = [16, 32], strides = [1, 1]} : vector<16x128xf32> to vector<16x32xf32>
    %133 = vector.shape_cast %132 : vector<16x32xf32> to vector<2x8x32xf32>
    %134 = vector.extract_strided_slice %130 {offsets = [0, 64], sizes = [16, 32], strides = [1, 1]} : vector<16x128xf32> to vector<16x32xf32>
    %135 = vector.shape_cast %134 : vector<16x32xf32> to vector<2x8x32xf32>
    %136 = vector.extract_strided_slice %130 {offsets = [0, 96], sizes = [16, 32], strides = [1, 1]} : vector<16x128xf32> to vector<16x32xf32>
    %137 = vector.shape_cast %136 : vector<16x32xf32> to vector<2x8x32xf32>
    %c1_63 = arith.constant 1 : index
    %c0_64 = arith.constant 0 : index
    %c0_65 = arith.constant 0 : index
    %138 = vector.load %arg10[%c1_63, %c0_64, %c0_65] : memref<2x32x32xf32, #tpu.memory_space<vmem>>, vector<1x32x32xf32>
    %139 = vector.shape_cast %138 : vector<1x32x32xf32> to vector<32x32xf32>
    %c1_66 = arith.constant 1 : index
    %c0_67 = arith.constant 0 : index
    %c0_68 = arith.constant 0 : index
    %140 = vector.load %arg11[%c1_66, %c0_67, %c0_68] : memref<2x1x32xf32, #tpu.memory_space<vmem>>, vector<1x1x32xf32>
    %141 = vector.shape_cast %140 : vector<1x1x32xf32> to vector<1x32xf32>
    %cst_69 = arith.constant dense<0.000000e+00> : vector<128x32xf32>
    %142 = tpu.matmul %123, %139, %cst_69 {dimension_numbers = #tpu.dot_dimension_numbers<[1], [0], [0], [1], [0, 0, 1, 1], [], []>, precision = #tpu.contract_precision<fp32>} : vector<128x32xf32>, vector<32x32xf32>, vector<128x32xf32> -> vector<128x32xf32>
    %143 = vector.broadcast %141 : vector<1x32xf32> to vector<128x32xf32>
    %144 = arith.addf %142, %143 : vector<128x32xf32>
    %145 = vector.shape_cast %144 : vector<128x32xf32> to vector<2x8x8x32xf32>
    %146 = vector.shape_cast %135 : vector<2x8x32xf32> to vector<2x1x8x32xf32>
    %147 = vector.broadcast %146 : vector<2x1x8x32xf32> to vector<2x8x8x32xf32>
    %148 = arith.addf %145, %147 : vector<2x8x8x32xf32>
    %149 = vector.shape_cast %137 : vector<2x8x32xf32> to vector<2x8x1x32xf32>
    %150 = vector.broadcast %149 : vector<2x8x1x32xf32> to vector<2x8x8x32xf32>
    %151 = arith.addf %148, %150 : vector<2x8x8x32xf32>
    %152 = arith.negf %151 : vector<2x8x8x32xf32>
    %153 = math.exp %152 : vector<2x8x8x32xf32>
    %cst_70 = arith.constant 1.000000e+00 : f32
    %154 = vector.broadcast %cst_70 : f32 to vector<2x8x8x32xf32>
    %155 = arith.addf %154, %153 : vector<2x8x8x32xf32>
    %156 = arith.divf %154, %155 : vector<2x8x8x32xf32>
    %157 = vector.shape_cast %133 : vector<2x8x32xf32> to vector<2x1x8x32xf32>
    %158 = vector.broadcast %157 : vector<2x1x8x32xf32> to vector<2x8x8x32xf32>
    %159 = arith.mulf %156, %158 : vector<2x8x8x32xf32>
    %cst_71 = arith.constant dense<0.000000e+00> : vector<2x8x32xf32>
    %160 = vector.multi_reduction <add>, %159, %cst_71 [2] : vector<2x8x8x32xf32> to vector<2x8x32xf32>
    %cst_72 = arith.constant dense<0.000000e+00> : vector<2x8x32xf32>
    %161 = vector.multi_reduction <add>, %156, %cst_72 [2] : vector<2x8x8x32xf32> to vector<2x8x32xf32>
    %162 = vector.shape_cast %160 : vector<2x8x32xf32> to vector<16x32xf32>
    %163 = vector.shape_cast %161 : vector<2x8x32xf32> to vector<16x32xf32>
    %164 = tpu.reciprocal %163 {approx = true} : vector<16x32xf32> -> vector<16x32xf32>
    %165 = arith.mulf %163, %164 : vector<16x32xf32>
    %cst_73 = arith.constant 2.000000e+00 : f32
    %166 = vector.broadcast %cst_73 : f32 to vector<16x32xf32>
    %167 = arith.subf %166, %165 : vector<16x32xf32>
    %168 = arith.mulf %164, %167 : vector<16x32xf32>
    %169 = arith.mulf %162, %168 : vector<16x32xf32>
    %170 = arith.addf %131, %169 : vector<16x32xf32>
    %171 = vector.broadcast %14 : vector<16x1xf32> to vector<16x32xf32>
    %172 = arith.mulf %170, %171 : vector<16x32xf32>
    %cst_74 = arith.constant dense<0.000000e+00> : vector<32xf32>
    %173 = vector.multi_reduction <add>, %172, %cst_74 [0] : vector<16x32xf32> to vector<32xf32>
    %174 = vector.shape_cast %173 : vector<32xf32> to vector<1x32xf32>
    %cst_75 = arith.constant 1.600000e+01 : f32
    %175 = vector.broadcast %cst_75 : f32 to vector<1x32xf32>
    %176 = arith.divf %174, %175 : vector<1x32xf32>
    %177 = vector.broadcast %176 : vector<1x32xf32> to vector<16x32xf32>
    %178 = arith.subf %172, %177 : vector<16x32xf32>
    %179 = arith.mulf %178, %178 : vector<16x32xf32>
    %cst_76 = arith.constant dense<0.000000e+00> : vector<32xf32>
    %180 = vector.multi_reduction <add>, %179, %cst_76 [0] : vector<16x32xf32> to vector<32xf32>
    %181 = vector.shape_cast %180 : vector<32xf32> to vector<1x32xf32>
    %cst_77 = arith.constant 1.600000e+01 : f32
    %182 = vector.broadcast %cst_77 : f32 to vector<1x32xf32>
    %183 = arith.divf %181, %182 : vector<1x32xf32>
    %c1_78 = arith.constant 1 : index
    %c0_79 = arith.constant 0 : index
    %c0_80 = arith.constant 0 : index
    %184 = vector.load %arg12[%c1_78, %c0_79, %c0_80] : memref<2x1x32xf32, #tpu.memory_space<vmem>>, vector<1x1x32xf32>
    %185 = vector.shape_cast %184 : vector<1x1x32xf32> to vector<1x32xf32>
    %cst_81 = arith.constant 9.99999974E-6 : f32
    %186 = vector.broadcast %cst_81 : f32 to vector<1x32xf32>
    %187 = arith.addf %183, %186 : vector<1x32xf32>
    %188 = math.rsqrt %187 : vector<1x32xf32>
    %189 = arith.mulf %185, %188 : vector<1x32xf32>
    %190 = vector.broadcast %189 : vector<1x32xf32> to vector<16x32xf32>
    %191 = arith.mulf %172, %190 : vector<16x32xf32>
    %c1_82 = arith.constant 1 : index
    %c0_83 = arith.constant 0 : index
    %c0_84 = arith.constant 0 : index
    %192 = vector.load %arg13[%c1_82, %c0_83, %c0_84] : memref<2x1x32xf32, #tpu.memory_space<vmem>>, vector<1x1x32xf32>
    %193 = vector.shape_cast %192 : vector<1x1x32xf32> to vector<1x32xf32>
    %194 = arith.mulf %176, %189 : vector<1x32xf32>
    %195 = arith.subf %193, %194 : vector<1x32xf32>
    %196 = vector.broadcast %195 : vector<1x32xf32> to vector<16x32xf32>
    %197 = arith.addf %191, %196 : vector<16x32xf32>
    %cst_85 = arith.constant 0.000000e+00 : f32
    %198 = vector.broadcast %cst_85 : f32 to vector<16x32xf32>
    %199 = arith.maximumf %197, %198 : vector<16x32xf32>
    %200 = arith.addf %120, %199 : vector<16x32xf32>
    %201 = vector.shape_cast %200 : vector<16x32xf32> to vector<2x8x32xf32>
    %cst_86 = arith.constant dense<0.000000e+00> : vector<2x32xf32>
    %202 = vector.multi_reduction <add>, %201, %cst_86 [1] : vector<2x8x32xf32> to vector<2x32xf32>
    %cst_87 = arith.constant 8.000000e+00 : f32
    %203 = vector.broadcast %cst_87 : f32 to vector<2x32xf32>
    %204 = arith.divf %202, %203 : vector<2x32xf32>
    %c0_88 = arith.constant 0 : index
    %c0_89 = arith.constant 0 : index
    %205 = vector.load %arg16[%c0_88, %c0_89] : memref<32x32xf32, #tpu.memory_space<vmem>>, vector<32x32xf32>
    %c0_90 = arith.constant 0 : index
    %c0_91 = arith.constant 0 : index
    %206 = vector.load %arg17[%c0_90, %c0_91] : memref<1x32xf32, #tpu.memory_space<vmem>>, vector<1x32xf32>
    %cst_92 = arith.constant dense<0.000000e+00> : vector<2x32xf32>
    %207 = tpu.matmul %204, %205, %cst_92 {dimension_numbers = #tpu.dot_dimension_numbers<[1], [0], [0], [1], [0, 0, 1, 1], [], []>, precision = #tpu.contract_precision<fp32>} : vector<2x32xf32>, vector<32x32xf32>, vector<2x32xf32> -> vector<2x32xf32>
    %208 = vector.broadcast %206 : vector<1x32xf32> to vector<2x32xf32>
    %209 = arith.addf %207, %208 : vector<2x32xf32>
    %cst_93 = arith.constant 0.000000e+00 : f32
    %210 = vector.broadcast %cst_93 : f32 to vector<2x32xf32>
    %211 = arith.maximumf %209, %210 : vector<2x32xf32>
    %c0_94 = arith.constant 0 : index
    %c0_95 = arith.constant 0 : index
    %212 = vector.load %arg18[%c0_94, %c0_95] : memref<32x32xf32, #tpu.memory_space<vmem>>, vector<32x32xf32>
    %c0_96 = arith.constant 0 : index
    %c0_97 = arith.constant 0 : index
    %213 = vector.load %arg19[%c0_96, %c0_97] : memref<1x32xf32, #tpu.memory_space<vmem>>, vector<1x32xf32>
    %cst_98 = arith.constant dense<0.000000e+00> : vector<2x32xf32>
    %214 = tpu.matmul %211, %212, %cst_98 {dimension_numbers = #tpu.dot_dimension_numbers<[1], [0], [0], [1], [0, 0, 1, 1], [], []>, precision = #tpu.contract_precision<fp32>} : vector<2x32xf32>, vector<32x32xf32>, vector<2x32xf32> -> vector<2x32xf32>
    %215 = vector.broadcast %213 : vector<1x32xf32> to vector<2x32xf32>
    %216 = arith.addf %214, %215 : vector<2x32xf32>
    %cst_99 = arith.constant 0.000000e+00 : f32
    %217 = vector.broadcast %cst_99 : f32 to vector<2x32xf32>
    %218 = arith.maximumf %216, %217 : vector<2x32xf32>
    %c0_100 = arith.constant 0 : index
    %c0_101 = arith.constant 0 : index
    %219 = vector.load %arg20[%c0_100, %c0_101] : memref<32x3xf32, #tpu.memory_space<vmem>>, vector<32x3xf32>
    %c0_102 = arith.constant 0 : index
    %c0_103 = arith.constant 0 : index
    %220 = vector.load %arg21[%c0_102, %c0_103] : memref<1x3xf32, #tpu.memory_space<vmem>>, vector<1x3xf32>
    %cst_104 = arith.constant dense<0.000000e+00> : vector<2x3xf32>
    %221 = tpu.matmul %218, %219, %cst_104 {dimension_numbers = #tpu.dot_dimension_numbers<[1], [0], [0], [1], [0, 0, 1, 1], [], []>, precision = #tpu.contract_precision<fp32>} : vector<2x32xf32>, vector<32x3xf32>, vector<2x3xf32> -> vector<2x3xf32>
    %222 = vector.broadcast %220 : vector<1x3xf32> to vector<2x3xf32>
    %223 = arith.addf %221, %222 : vector<2x3xf32>
    %c0_105 = arith.constant 0 : index
    %c0_106 = arith.constant 0 : index
    %224 = vector.load %arg22[%c0_105, %c0_106] : memref<2x3xf32, #tpu.memory_space<vmem>>, vector<2x3xf32>
    tpu.vector_store %arg22[%c0_105, %c0_106], %223 {strides = array<i32>} : memref<2x3xf32, #tpu.memory_space<vmem>>, vector<2x3xf32>,
    return
  }
}

</mosaic_0001>

<llo_original>
// kernel: gated_gcn_forward.1
$region0: #{gated_gcn_forward.1}
  #allocation0 [shape = 'u32[]', space=smem, size = 0x4, offset = 0x4, fixed_abs, tag = 'smem constant byte address 0x4 - core index']
  #allocation1 [shape = 'u32[144,128]{1,0:T(1,128)}', space=vmem, size = 0x12000, scoped, tag = 'internal scratch']
  %s0 = inlined_call_operand.vmem [shape: f32[16,4], index: 0, kind: input, shape index: {}]
  %s1 = inlined_call_operand.vmem [shape: f32[128,1], index: 1, kind: input, shape index: {}]
  %s2 = inlined_call_operand.vmem [shape: f32[16,1], index: 2, kind: input, shape index: {}]
  %s3 = inlined_call_operand.vmem [shape: f32[128,1], index: 3, kind: input, shape index: {}]
  %s4 = inlined_call_operand.vmem [shape: f32[4,32], index: 4, kind: input, shape index: {}]
  %s5 = inlined_call_operand.vmem [shape: f32[1,32], index: 5, kind: input, shape index: {}]
  %s6 = inlined_call_operand.vmem [shape: f32[1,32], index: 6, kind: input, shape index: {}]
  %s7 = inlined_call_operand.vmem [shape: f32[1,32], index: 7, kind: input, shape index: {}]
  %s8 = inlined_call_operand.vmem [shape: f32[2,32,128], index: 8, kind: input, shape index: {}]
  %s9 = inlined_call_operand.vmem [shape: f32[2,1,128], index: 9, kind: input, shape index: {}]
  %s10 = inlined_call_operand.vmem [shape: f32[2,32,32], index: 10, kind: input, shape index: {}]
  %s11 = inlined_call_operand.vmem [shape: f32[2,1,32], index: 11, kind: input, shape index: {}]
  %s12 = inlined_call_operand.vmem [shape: f32[2,1,32], index: 12, kind: input, shape index: {}]
  %s13 = inlined_call_operand.vmem [shape: f32[2,1,32], index: 13, kind: input, shape index: {}]
  %s14 = inlined_call_operand.vmem [shape: f32[2,1,32], index: 14, kind: input, shape index: {}]
  %s15 = inlined_call_operand.vmem [shape: f32[2,1,32], index: 15, kind: input, shape index: {}]
  %s16 = inlined_call_operand.vmem [shape: f32[32,32], index: 16, kind: input, shape index: {}]
  %s17 = inlined_call_operand.vmem [shape: f32[1,32], index: 17, kind: input, shape index: {}]
  %s18 = inlined_call_operand.vmem [shape: f32[32,32], index: 18, kind: input, shape index: {}]
  %s19 = inlined_call_operand.vmem [shape: f32[1,32], index: 19, kind: input, shape index: {}]
  %s20 = inlined_call_operand.vmem [shape: f32[32,3], index: 20, kind: input, shape index: {}]
  %s21 = inlined_call_operand.vmem [shape: f32[1,3], index: 21, kind: input, shape index: {}]
  %s22 = inlined_call_operand.hbm [shape: f32[2,3], index: 22, kind: output, shape index: {}]
  %s23 = sld [smem:[#allocation0]]
  $region98: #{gated_gcn_forward.1} parent=0
    _
  %s25 = ssub.s32 1, %s23
  %s26 = scalar_select 0, %s25, %s23
  $region1: #{gated_gcn_forward.1} parent=0
    #allocation2 [shape = 'u8[1024]{0}', space=vmem, size = 0x400, scoped, tag = 'output window, operand 0, single buffered']
    #allocation3 [shape = 's32[1]{0}', space=sflag, size = 0x4, scoped, tag = 'scoped memory for gated_gcn_forward.1']
    %27 = vsyncpa [#allocation3], 0
    // Predicated region
    $region2: #{gated_gcn_forward.1} parent=1 // pred_check
      _
    $region3: #{gated_gcn_forward.1} parent=1 // pred_check_branch
      %29 = sbr.rel (0) target = $region5
    $region4: #{gated_gcn_forward.1} parent=1 // pred_region
      _
    $region5: #{gated_gcn_forward.1} parent=1 // pred_fallthru
      _
    // Predicated region
    $region6: #{gated_gcn_forward.1} parent=1 // pred_check
      _
    $region7: #{gated_gcn_forward.1} parent=1 // pred_check_branch
      %31 = sbr.rel (0) target = $region9
    $region8: #{gated_gcn_forward.1} parent=1 // pred_region
      _
    $region9: #{gated_gcn_forward.1} parent=1 // pred_fallthru
      _
    // Predicated region
    $region10: #{gated_gcn_forward.1} parent=1 // pred_check
      _
    $region11: #{gated_gcn_forward.1} parent=1 // pred_check_branch
      %33 = sbr.rel (0) target = $region13
    $region12: #{gated_gcn_forward.1} parent=1 // pred_region
      _
    $region13: #{gated_gcn_forward.1} parent=1 // pred_fallthru
      _
    // Predicated region
    $region14: #{gated_gcn_forward.1} parent=1 // pred_check
      _
    $region15: #{gated_gcn_forward.1} parent=1 // pred_check_branch
      %35 = sbr.rel (0) target = $region17
    $region16: #{gated_gcn_forward.1} parent=1 // pred_region
      _
    $region17: #{gated_gcn_forward.1} parent=1 // pred_fallthru
      _
    // Predicated region
    $region18: #{gated_gcn_forward.1} parent=1 // pred_check
      _
    $region19: #{gated_gcn_forward.1} parent=1 // pred_check_branch
      %37 = sbr.rel (0) target = $region21
    $region20: #{gated_gcn_forward.1} parent=1 // pred_region
      _
    $region21: #{gated_gcn_forward.1} parent=1 // pred_fallthru
      _
    // Predicated region
    $region22: #{gated_gcn_forward.1} parent=1 // pred_check
      _
    $region23: #{gated_gcn_forward.1} parent=1 // pred_check_branch
      %39 = sbr.rel (0) target = $region25
    $region24: #{gated_gcn_forward.1} parent=1 // pred_region
      _
    $region25: #{gated_gcn_forward.1} parent=1 // pred_fallthru
      _
    // Predicated region
    $region26: #{gated_gcn_forward.1} parent=1 // pred_check
      _
    $region27: #{gated_gcn_forward.1} parent=1 // pred_check_branch
      %41 = sbr.rel (0) target = $region29
    $region28: #{gated_gcn_forward.1} parent=1 // pred_region
      _
    $region29: #{gated_gcn_forward.1} parent=1 // pred_fallthru
      _
    // Predicated region
    $region30: #{gated_gcn_forward.1} parent=1 // pred_check
      _
    $region31: #{gated_gcn_forward.1} parent=1 // pred_check_branch
      %43 = sbr.rel (0) target = $region33
    $region32: #{gated_gcn_forward.1} parent=1 // pred_region
      _
    $region33: #{gated_gcn_forward.1} parent=1 // pred_fallthru
      _
    // Predicated region
    $region34: #{gated_gcn_forward.1} parent=1 // pred_check
      _
    $region35: #{gated_gcn_forward.1} parent=1 // pred_check_branch
      %45 = sbr.rel (0) target = $region37
    $region36: #{gated_gcn_forward.1} parent=1 // pred_region
      _
    $region37: #{gated_gcn_forward.1} parent=1 // pred_fallthru
      _
    // Predicated region
    $region38: #{gated_gcn_forward.1} parent=1 // pred_check
      _
    $region39: #{gated_gcn_forward.1} parent=1 // pred_check_branch
      %47 = sbr.rel (0) target = $region41
    $region40: #{gated_gcn_forward.1} parent=1 // pred_region
      _
    $region41: #{gated_gcn_forward.1} parent=1 // pred_fallthru
      _
    // Predicated region
    $region42: #{gated_gcn_forward.1} parent=1 // pred_check
      _
    $region43: #{gated_gcn_forward.1} parent=1 // pred_check_branch
      %49 = sbr.rel (0) target = $region45
    $region44: #{gated_gcn_forward.1} parent=1 // pred_region
      _
    $region45: #{gated_gcn_forward.1} parent=1 // pred_fallthru
      _
    // Predicated region
    $region46: #{gated_gcn_forward.1} parent=1 // pred_check
      _
    $region47: #{gated_gcn_forward.1} parent=1 // pred_check_branch
      %51 = sbr.rel (0) target = $region49
    $region48: #{gated_gcn_forward.1} parent=1 // pred_region
      _
    $region49: #{gated_gcn_forward.1} parent=1 // pred_fallthru
      _
    // Predicated region
    $region50: #{gated_gcn_forward.1} parent=1 // pred_check
      _
    $region51: #{gated_gcn_forward.1} parent=1 // pred_check_branch
      %53 = sbr.rel (0) target = $region53
    $region52: #{gated_gcn_forward.1} parent=1 // pred_region
      _
    $region53: #{gated_gcn_forward.1} parent=1 // pred_fallthru
      _
    // Predicated region
    $region54: #{gated_gcn_forward.1} parent=1 // pred_check
      _
    $region55: #{gated_gcn_forward.1} parent=1 // pred_check_branch
      %55 = sbr.rel (0) target = $region57
    $region56: #{gated_gcn_forward.1} parent=1 // pred_region
      _
    $region57: #{gated_gcn_forward.1} parent=1 // pred_fallthru
      _
    // Predicated region
    $region58: #{gated_gcn_forward.1} parent=1 // pred_check
      _
    $region59: #{gated_gcn_forward.1} parent=1 // pred_check_branch
      %57 = sbr.rel (0) target = $region61
    $region60: #{gated_gcn_forward.1} parent=1 // pred_region
      _
    $region61: #{gated_gcn_forward.1} parent=1 // pred_fallthru
      _
    // Predicated region
    $region62: #{gated_gcn_forward.1} parent=1 // pred_check
      _
    $region63: #{gated_gcn_forward.1} parent=1 // pred_check_branch
      %59 = sbr.rel (0) target = $region65
    $region64: #{gated_gcn_forward.1} parent=1 // pred_region
      _
    $region65: #{gated_gcn_forward.1} parent=1 // pred_fallthru
      _
    // Predicated region
    $region66: #{gated_gcn_forward.1} parent=1 // pred_check
      _
    $region67: #{gated_gcn_forward.1} parent=1 // pred_check_branch
      %61 = sbr.rel (0) target = $region69
    $region68: #{gated_gcn_forward.1} parent=1 // pred_region
      _
    $region69: #{gated_gcn_forward.1} parent=1 // pred_fallthru
      _
    // Predicated region
    $region70: #{gated_gcn_forward.1} parent=1 // pred_check
      _
    $region71: #{gated_gcn_forward.1} parent=1 // pred_check_branch
      %63 = sbr.rel (0) target = $region73
    $region72: #{gated_gcn_forward.1} parent=1 // pred_region
      _
    $region73: #{gated_gcn_forward.1} parent=1 // pred_fallthru
      _
    // Predicated region
    $region74: #{gated_gcn_forward.1} parent=1 // pred_check
      _
    $region75: #{gated_gcn_forward.1} parent=1 // pred_check_branch
      %65 = sbr.rel (0) target = $region77
    $region76: #{gated_gcn_forward.1} parent=1 // pred_region
      _
    $region77: #{gated_gcn_forward.1} parent=1 // pred_fallthru
      _
    // Predicated region
    $region78: #{gated_gcn_forward.1} parent=1 // pred_check
      _
    $region79: #{gated_gcn_forward.1} parent=1 // pred_check_branch
      %67 = sbr.rel (0) target = $region81
    $region80: #{gated_gcn_forward.1} parent=1 // pred_region
      _
    $region81: #{gated_gcn_forward.1} parent=1 // pred_fallthru
      _
    // Predicated region
    $region82: #{gated_gcn_forward.1} parent=1 // pred_check
      _
    $region83: #{gated_gcn_forward.1} parent=1 // pred_check_branch
      %69 = sbr.rel (0) target = $region85
    $region84: #{gated_gcn_forward.1} parent=1 // pred_region
      _
    $region85: #{gated_gcn_forward.1} parent=1 // pred_fallthru
      _
    // Predicated region
    $region86: #{gated_gcn_forward.1} parent=1 // pred_check
      _
    $region87: #{gated_gcn_forward.1} parent=1 // pred_check_branch
      %71 = sbr.rel (0) target = $region89
    $region88: #{gated_gcn_forward.1} parent=1 // pred_region
      _
    $region89: #{gated_gcn_forward.1} parent=1 // pred_fallthru
      _
    %v72 = vld [vmem:[%s0] sm:$0xff]
    %v73 = vld [vmem:[%s0 + $0x8] sm:$0xff]
    %v74 = vld [vmem:[%s4] sm:$0xf]
    %v75 = vld [vmem:[%s5] sm:$0x1]
    %v77 = vlaneseq
    %v78 = vshrl.u32 %v77, 7
    %v79 = vsub.s32 0, %v78
    %v80 = vrot.slane %v75, %v79
    %vm82 = vcmask 31744
    %v84 = vsel %vm82, %v72, 0
    %v87 = vsel %vm82, %v73, 0
    %vm89 = vcmask 1043456
    %v91 = vsel %vm89, %v74, 0
    %93 = vmatprep.subr.mxu0 0.0
    %v94 = vand.u32 %v91, 4294901760
    %95 = vmatpush1.msra.mxu0 %v94
    %96 = vmatprep.subr.mxu0 0.0
    %97 = vmatpush1.msra.mxu0 0.0
    %98 = vmatprep.subr.mxu0 0.0
    %99 = vmatpush1.msra.mxu0 0.0
    %100 = vmatprep.subr.mxu0 0.0
    %101 = vmatpush1.msra.mxu0 0.0
    %102 = vmatprep.subr.mxu0 0.0
    %103 = vmatpush1.msra.mxu0 0.0
    %104 = vmatprep.subr.mxu0 0.0
    %105 = vmatpush1.msra.mxu0 0.0
    %106 = vmatprep.subr.mxu0 0.0
    %107 = vmatpush1.msra.mxu0 0.0
    %108 = vmatprep.subr.mxu0 0.0
    %109 = vmatpush1.msra.mxu0 0.0
    %110 = vmatprep.subr.mxu0 0.0
    %111 = vmatpush1.msra.mxu0 0.0
    %112 = vmatprep.subr.mxu0 0.0
    %113 = vmatpush1.msra.mxu0 0.0
    %114 = vmatprep.subr.mxu0 0.0
    %115 = vmatpush1.msra.mxu0 0.0
    %116 = vmatprep.subr.mxu0 0.0
    %117 = vmatpush1.msra.mxu0 0.0
    %118 = vmatprep.subr.mxu0 0.0
    %119 = vmatpush1.msra.mxu0 0.0
    %120 = vmatprep.subr.mxu0 0.0
    %121 = vmatpush1.msra.mxu0 0.0
    %122 = vmatprep.subr.mxu0 0.0
    %123 = vmatpush1.msra.mxu0 0.0
    %124 = vmatprep.subr.mxu0 0.0
    %125 = vmatpush1.msra.mxu0 0.0
    %126 = vmatprep.subr.mxu0 0.0
    %127 = vmatpush1.msra.mxu0 0.0
    %128 = vmatprep.subr.mxu0 0.0
    %129 = vmatpush1.msra.mxu0 0.0
    %130 = vmatprep.subr.mxu0 0.0
    %131 = vmatpush1.msra.mxu0 0.0
    %132 = vmatprep.subr.mxu0 0.0
    %133 = vmatpush1.msra.mxu0 0.0
    %134 = vmatprep.subr.mxu0 0.0
    %135 = vmatpush1.msra.mxu0 0.0
    %136 = vmatprep.subr.mxu0 0.0
    %137 = vmatpush1.msra.mxu0 0.0
    %138 = vmatprep.subr.mxu0 0.0
    %139 = vmatpush1.msra.mxu0 0.0
    %140 = vmatprep.subr.mxu0 0.0
    %141 = vmatpush1.msra.mxu0 0.0
    %142 = vmatprep.subr.mxu0 0.0
    %143 = vmatpush1.msra.mxu0 0.0
    %144 = vmatprep.subr.mxu0 0.0
    %145 = vmatpush1.msra.mxu0 0.0
    %146 = vmatprep.subr.mxu0 0.0
    %147 = vmatpush1.msra.mxu0 0.0
    %148 = vmatprep.subr.mxu0 0.0
    %149 = vmatpush1.msra.mxu0 0.0
    %150 = vmatprep.subr.mxu0 0.0
    %151 = vmatpush1.msra.mxu0 0.0
    %152 = vmatprep.subr.mxu0 0.0
    %153 = vmatpush1.msra.mxu0 0.0
    %154 = vmatprep.subr.mxu0 0.0
    %155 = vmatpush1.msra.mxu0 0.0
    %156 = vmatprep.subr.mxu0 0.0
    %157 = vmatpush1.msra.mxu0 0.0
    %158 = vmatprep.mubr.f32.mxu0 0.0
    %v159 = vand.u32 %v84, 4294901760
    %v160 = vsub.f32 %v84, %v159
    %v161 = vand.u32 %v160, 4294901760
    %v162 = vsub.f32 %v160, %v161
    %v163 = vand.u32 %v162, 4294901760
    %164 = vmatmul.mubr.f32.gmra.mrb[0].mxu0 %v163
    %v165 = vpop.f32.mrb[0].mxu0
    %v166 = vadd.f32 %v80, %v165
    %v167 = vpop.f32.mrb[0].mxu0
    %168 = vmatprep.mubr.f32.mxu0 0.0
    %v169 = vand.u32 %v87, 4294901760
    %v170 = vsub.f32 %v87, %v169
    %v171 = vand.u32 %v170, 4294901760
    %v172 = vsub.f32 %v170, %v171
    %v173 = vand.u32 %v172, 4294901760
    %174 = vmatmul.mubr.f32.gmra.mrb[0].mxu0 %v173
    %v175 = vpop.f32.mrb[0].mxu0
    %v176 = vadd.f32 %v80, %v175
    %v177 = vpop.f32.mrb[0].mxu0
    %178 = vdwg.mxu0
    %179 = vmatprep.subr.mxu0 0.0
    %v180 = vand.u32 %v91, 4294901760
    %v181 = vsub.f32 %v91, %v180
    %v182 = vand.u32 %v181, 4294901760
    %v183 = vsub.f32 %v181, %v182
    %v184 = vand.u32 %v183, 4294901760
    %185 = vmatpush1.msra.mxu0 %v184
    %186 = vmatprep.subr.mxu0 0.0
    %187 = vmatpush1.msra.mxu0 0.0
    %188 = vmatprep.subr.mxu0 0.0
    %189 = vmatpush1.msra.mxu0 0.0
    %190 = vmatprep.subr.mxu0 0.0
    %191 = vmatpush1.msra.mxu0 0.0
    %192 = vmatprep.subr.mxu0 0.0
    %193 = vmatpush1.msra.mxu0 0.0
    %194 = vmatprep.subr.mxu0 0.0
    %195 = vmatpush1.msra.mxu0 0.0
    %196 = vmatprep.subr.mxu0 0.0
    %197 = vmatpush1.msra.mxu0 0.0
    %198 = vmatprep.subr.mxu0 0.0
    %199 = vmatpush1.msra.mxu0 0.0
    %200 = vmatprep.subr.mxu0 0.0
    %201 = vmatpush1.msra.mxu0 0.0
    %202 = vmatprep.subr.mxu0 0.0
    %203 = vmatpush1.msra.mxu0 0.0
    %204 = vmatprep.subr.mxu0 0.0
    %205 = vmatpush1.msra.mxu0 0.0
    %206 = vmatprep.subr.mxu0 0.0
    %207 = vmatpush1.msra.mxu0 0.0
    %208 = vmatprep.subr.mxu0 0.0
    %209 = vmatpush1.msra.mxu0 0.0
    %210 = vmatprep.subr.mxu0 0.0
    %211 = vmatpush1.msra.mxu0 0.0
    %212 = vmatprep.subr.mxu0 0.0
    %213 = vmatpush1.msra.mxu0 0.0
    %214 = vmatprep.subr.mxu0 0.0
    %215 = vmatpush1.msra.mxu0 0.0
    %216 = vmatprep.subr.mxu0 0.0
    %217 = vmatpush1.msra.mxu0 0.0
    %218 = vmatprep.subr.mxu0 0.0
    %219 = vmatpush1.msra.mxu0 0.0
    %220 = vmatprep.subr.mxu0 0.0
    %221 = vmatpush1.msra.mxu0 0.0
    %222 = vmatprep.subr.mxu0 0.0
    %223 = vmatpush1.msra.mxu0 0.0
    %224 = vmatprep.subr.mxu0 0.0
    %225 = vmatpush1.msra.mxu0 0.0
    %226 = vmatprep.subr.mxu0 0.0
    %227 = vmatpush1.msra.mxu0 0.0
    %228 = vmatprep.subr.mxu0 0.0
    %229 = vmatpush1.msra.mxu0 0.0
    %230 = vmatprep.subr.mxu0 0.0
    %231 = vmatpush1.msra.mxu0 0.0
    %232 = vmatprep.subr.mxu0 0.0
    %233 = vmatpush1.msra.mxu0 0.0
    %234 = vmatprep.subr.mxu0 0.0
    %235 = vmatpush1.msra.mxu0 0.0
    %236 = vmatprep.subr.mxu0 0.0
    %237 = vmatpush1.msra.mxu0 0.0
    %238 = vmatprep.subr.mxu0 0.0
    %239 = vmatpush1.msra.mxu0 0.0
    %240 = vmatprep.subr.mxu0 0.0
    %241 = vmatpush1.msra.mxu0 0.0
    %242 = vmatprep.subr.mxu0 0.0
    %243 = vmatpush1.msra.mxu0 0.0
    %244 = vmatprep.subr.mxu0 0.0
    %245 = vmatpush1.msra.mxu0 0.0
    %246 = vmatprep.subr.mxu0 0.0
    %247 = vmatpush1.msra.mxu0 0.0
    %248 = vmatprep.mubr.f32.mxu0 0.0
    %v249 = vand.u32 %v84, 4294901760
    %250 = vmatmul.mubr.f32.gmra.mrb[0].mxu0 %v249
    %v251 = vpop.f32.mrb[0].mxu0
    %v252 = vadd.f32 %v166, %v251
    %v253 = vpop.f32.mrb[0].mxu0
    %254 = vmatprep.mubr.f32.mxu0 0.0
    %v255 = vand.u32 %v87, 4294901760
    %256 = vmatmul.mubr.f32.gmra.mrb[0].mxu0 %v255
    %v257 = vpop.f32.mrb[0].mxu0
    %v258 = vadd.f32 %v176, %v257
    %v259 = vpop.f32.mrb[0].mxu0
    %260 = vdwg.mxu0
    %261 = vmatprep.subr.mxu0 0.0
    %v262 = vand.u32 %v91, 4294901760
    %v263 = vsub.f32 %v91, %v262
    %264 = vmatpush1.msra.mxu0 %v263
    %265 = vmatprep.subr.mxu0 0.0
    %266 = vmatpush1.msra.mxu0 0.0
    %267 = vmatprep.subr.mxu0 0.0
    %268 = vmatpush1.msra.mxu0 0.0
    %269 = vmatprep.subr.mxu0 0.0
    %270 = vmatpush1.msra.mxu0 0.0
    %271 = vmatprep.subr.mxu0 0.0
    %272 = vmatpush1.msra.mxu0 0.0
    %273 = vmatprep.subr.mxu0 0.0
    %274 = vmatpush1.msra.mxu0 0.0
    %275 = vmatprep.subr.mxu0 0.0
    %276 = vmatpush1.msra.mxu0 0.0
    %277 = vmatprep.subr.mxu0 0.0
    %278 = vmatpush1.msra.mxu0 0.0
    %279 = vmatprep.subr.mxu0 0.0
    %280 = vmatpush1.msra.mxu0 0.0
    %281 = vmatprep.subr.mxu0 0.0
    %282 = vmatpush1.msra.mxu0 0.0
    %283 = vmatprep.subr.mxu0 0.0
    %284 = vmatpush1.msra.mxu0 0.0
    %285 = vmatprep.subr.mxu0 0.0
    %286 = vmatpush1.msra.mxu0 0.0
    %287 = vmatprep.subr.mxu0 0.0
    %288 = vmatpush1.msra.mxu0 0.0
    %289 = vmatprep.subr.mxu0 0.0
    %290 = vmatpush1.msra.mxu0 0.0
    %291 = vmatprep.subr.mxu0 0.0
    %292 = vmatpush1.msra.mxu0 0.0
    %293 = vmatprep.subr.mxu0 0.0
    %294 = vmatpush1.msra.mxu0 0.0
    %295 = vmatprep.subr.mxu0 0.0
    %296 = vmatpush1.msra.mxu0 0.0
    %297 = vmatprep.subr.mxu0 0.0
    %298 = vmatpush1.msra.mxu0 0.0
    %299 = vmatprep.subr.mxu0 0.0
    %300 = vmatpush1.msra.mxu0 0.0
    %301 = vmatprep.subr.mxu0 0.0
    %302 = vmatpush1.msra.mxu0 0.0
    %303 = vmatprep.subr.mxu0 0.0
    %304 = vmatpush1.msra.mxu0 0.0
    %305 = vmatprep.subr.mxu0 0.0
    %306 = vmatpush1.msra.mxu0 0.0
    %307 = vmatprep.subr.mxu0 0.0
    %308 = vmatpush1.msra.mxu0 0.0
    %309 = vmatprep.subr.mxu0 0.0
    %310 = vmatpush1.msra.mxu0 0.0
    %311 = vmatprep.subr.mxu0 0.0
    %312 = vmatpush1.msra.mxu0 0.0
    %313 = vmatprep.subr.mxu0 0.0
    %314 = vmatpush1.msra.mxu0 0.0
    %315 = vmatprep.subr.mxu0 0.0
    %316 = vmatpush1.msra.mxu0 0.0
    %317 = vmatprep.subr.mxu0 0.0
    %318 = vmatpush1.msra.mxu0 0.0
    %319 = vmatprep.subr.mxu0 0.0
    %320 = vmatpush1.msra.mxu0 0.0
    %321 = vmatprep.subr.mxu0 0.0
    %322 = vmatpush1.msra.mxu0 0.0
    %323 = vmatprep.subr.mxu0 0.0
    %324 = vmatpush1.msra.mxu0 0.0
    %325 = vmatprep.subr.mxu0 0.0
    %326 = vmatpush1.msra.mxu0 0.0
    %327 = vmatprep.mubr.f32.mxu0 0.0
    %v328 = vand.u32 %v84, 4294901760
    %v329 = vsub.f32 %v84, %v328
    %330 = vmatmul.mubr.f32.gmra.mrb[0].mxu0 %v329
    %v331 = vpop.f32.mrb[0].mxu0
    %v332 = vadd.f32 %v252, %v331
    %v333 = vpop.f32.mrb[0].mxu0
    %334 = vmatprep.mubr.f32.mxu0 0.0
    %v335 = vand.u32 %v87, 4294901760
    %v336 = vsub.f32 %v87, %v335
    %337 = vmatmul.mubr.f32.gmra.mrb[0].mxu0 %v336
    %v338 = vpop.f32.mrb[0].mxu0
    %v339 = vadd.f32 %v258, %v338
    %v340 = vpop.f32.mrb[0].mxu0
    %341 = vdwg.mxu0
    %342 = vmatprep.subr.mxu0 0.0
    %v343 = vand.u32 %v91, 4294901760
    %344 = vmatpush1.msra.mxu0 %v343
    %345 = vmatprep.subr.mxu0 0.0
    %346 = vmatpush1.msra.mxu0 0.0
    %347 = vmatprep.subr.mxu0 0.0
    %348 = vmatpush1.msra.mxu0 0.0
    %349 = vmatprep.subr.mxu0 0.0
    %350 = vmatpush1.msra.mxu0 0.0
    %351 = vmatprep.subr.mxu0 0.0
    %352 = vmatpush1.msra.mxu0 0.0
    %353 = vmatprep.subr.mxu0 0.0
    %354 = vmatpush1.msra.mxu0 0.0
    %355 = vmatprep.subr.mxu0 0.0
    %356 = vmatpush1.msra.mxu0 0.0
    %357 = vmatprep.subr.mxu0 0.0
    %358 = vmatpush1.msra.mxu0 0.0
    %359 = vmatprep.subr.mxu0 0.0
    %360 = vmatpush1.msra.mxu0 0.0
    %361 = vmatprep.subr.mxu0 0.0
    %362 = vmatpush1.msra.mxu0 0.0
    %363 = vmatprep.subr.mxu0 0.0
    %364 = vmatpush1.msra.mxu0 0.0
    %365 = vmatprep.subr.mxu0 0.0
    %366 = vmatpush1.msra.mxu0 0.0
    %367 = vmatprep.subr.mxu0 0.0
    %368 = vmatpush1.msra.mxu0 0.0
    %369 = vmatprep.subr.mxu0 0.0
    %370 = vmatpush1.msra.mxu0 0.0
    %371 = vmatprep.subr.mxu0 0.0
    %372 = vmatpush1.msra.mxu0 0.0
    %373 = vmatprep.subr.mxu0 0.0
    %374 = vmatpush1.msra.mxu0 0.0
    %375 = vmatprep.subr.mxu0 0.0
    %376 = vmatpush1.msra.mxu0 0.0
    %377 = vmatprep.subr.mxu0 0.0
    %378 = vmatpush1.msra.mxu0 0.0
    %379 = vmatprep.subr.mxu0 0.0
    %380 = vmatpush1.msra.mxu0 0.0
    %381 = vmatprep.subr.mxu0 0.0
    %382 = vmatpush1.msra.mxu0 0.0
    %383 = vmatprep.subr.mxu0 0.0
    %384 = vmatpush1.msra.mxu0 0.0
    %385 = vmatprep.subr.mxu0 0.0
    %386 = vmatpush1.msra.mxu0 0.0
    %387 = vmatprep.subr.mxu0 0.0
    %388 = vmatpush1.msra.mxu0 0.0
    %389 = vmatprep.subr.mxu0 0.0
    %390 = vmatpush1.msra.mxu0 0.0
    %391 = vmatprep.subr.mxu0 0.0
    %392 = vmatpush1.msra.mxu0 0.0
    %393 = vmatprep.subr.mxu0 0.0
    %394 = vmatpush1.msra.mxu0 0.0
    %395 = vmatprep.subr.mxu0 0.0
    %396 = vmatpush1.msra.mxu0 0.0
    %397 = vmatprep.subr.mxu0 0.0
    %398 = vmatpush1.msra.mxu0 0.0
    %399 = vmatprep.subr.mxu0 0.0
    %400 = vmatpush1.msra.mxu0 0.0
    %401 = vmatprep.subr.mxu0 0.0
    %402 = vmatpush1.msra.mxu0 0.0
    %403 = vmatprep.subr.mxu0 0.0
    %404 = vmatpush1.msra.mxu0 0.0
    %405 = vmatprep.subr.mxu0 0.0
    %406 = vmatpush1.msra.mxu0 0.0
    %407 = vmatprep.mubr.f32.mxu0 0.0
    %v408 = vand.u32 %v84, 4294901760
    %v409 = vsub.f32 %v84, %v408
    %v410 = vand.u32 %v409, 4294901760
    %411 = vmatmul.mubr.f32.gmra.mrb[0].mxu0 %v410
    %v412 = vpop.f32.mrb[0].mxu0
    %v413 = vadd.f32 %v332, %v412
    %v414 = vpop.f32.mrb[0].mxu0
    %415 = vmatprep.mubr.f32.mxu0 0.0
    %v416 = vand.u32 %v87, 4294901760
    %v417 = vsub.f32 %v87, %v416
    %v418 = vand.u32 %v417, 4294901760
    %419 = vmatmul.mubr.f32.gmra.mrb[0].mxu0 %v418
    %v420 = vpop.f32.mrb[0].mxu0
    %v421 = vadd.f32 %v339, %v420
    %v422 = vpop.f32.mrb[0].mxu0
    %423 = vdwg.mxu0
    %424 = vmatprep.subr.mxu0 0.0
    %v425 = vand.u32 %v91, 4294901760
    %v426 = vsub.f32 %v91, %v425
    %v427 = vand.u32 %v426, 4294901760
    %428 = vmatpush1.msra.mxu0 %v427
    %429 = vmatprep.subr.mxu0 0.0
    %430 = vmatpush1.msra.mxu0 0.0
    %431 = vmatprep.subr.mxu0 0.0
    %432 = vmatpush1.msra.mxu0 0.0
    %433 = vmatprep.subr.mxu0 0.0
    %434 = vmatpush1.msra.mxu0 0.0
    %435 = vmatprep.subr.mxu0 0.0
    %436 = vmatpush1.msra.mxu0 0.0
    %437 = vmatprep.subr.mxu0 0.0
    %438 = vmatpush1.msra.mxu0 0.0
    %439 = vmatprep.subr.mxu0 0.0
    %440 = vmatpush1.msra.mxu0 0.0
    %441 = vmatprep.subr.mxu0 0.0
    %442 = vmatpush1.msra.mxu0 0.0
    %443 = vmatprep.subr.mxu0 0.0
    %444 = vmatpush1.msra.mxu0 0.0
    %445 = vmatprep.subr.mxu0 0.0
    %446 = vmatpush1.msra.mxu0 0.0
    %447 = vmatprep.subr.mxu0 0.0
    %448 = vmatpush1.msra.mxu0 0.0
    %449 = vmatprep.subr.mxu0 0.0
    %450 = vmatpush1.msra.mxu0 0.0
    %451 = vmatprep.subr.mxu0 0.0
    %452 = vmatpush1.msra.mxu0 0.0
    %453 = vmatprep.subr.mxu0 0.0
    %454 = vmatpush1.msra.mxu0 0.0
    %455 = vmatprep.subr.mxu0 0.0
    %456 = vmatpush1.msra.mxu0 0.0
    %457 = vmatprep.subr.mxu0 0.0
    %458 = vmatpush1.msra.mxu0 0.0
    %459 = vmatprep.subr.mxu0 0.0
    %460 = vmatpush1.msra.mxu0 0.0
    %461 = vmatprep.subr.mxu0 0.0
    %462 = vmatpush1.msra.mxu0 0.0
    %463 = vmatprep.subr.mxu0 0.0
    %464 = vmatpush1.msra.mxu0 0.0
    %465 = vmatprep.subr.mxu0 0.0
    %466 = vmatpush1.msra.mxu0 0.0
    %467 = vmatprep.subr.mxu0 0.0
    %468 = vmatpush1.msra.mxu0 0.0
    %469 = vmatprep.subr.mxu0 0.0
    %470 = vmatpush1.msra.mxu0 0.0
    %471 = vmatprep.subr.mxu0 0.0
    %472 = vmatpush1.msra.mxu0 0.0
    %473 = vmatprep.subr.mxu0 0.0
    %474 = vmatpush1.msra.mxu0 0.0
    %475 = vmatprep.subr.mxu0 0.0
    %476 = vmatpush1.msra.mxu0 0.0
    %477 = vmatprep.subr.mxu0 0.0
    %478 = vmatpush1.msra.mxu0 0.0
    %479 = vmatprep.subr.mxu0 0.0
    %480 = vmatpush1.msra.mxu0 0.0
    %481 = vmatprep.subr.mxu0 0.0
    %482 = vmatpush1.msra.mxu0 0.0
    %483 = vmatprep.subr.mxu0 0.0
    %484 = vmatpush1.msra.mxu0 0.0
    %485 = vmatprep.subr.mxu0 0.0
    %486 = vmatpush1.msra.mxu0 0.0
    %487 = vmatprep.subr.mxu0 0.0
    %488 = vmatpush1.msra.mxu0 0.0
    %489 = vmatprep.subr.mxu0 0.0
    %490 = vmatpush1.msra.mxu0 0.0
    %491 = vmatprep.mubr.f32.mxu0 0.0
    %v492 = vand.u32 %v84, 4294901760
    %493 = vmatmul.mubr.f32.gmra.mrb[0].mxu0 %v492
    %v494 = vpop.f32.mrb[0].mxu0
    %v495 = vadd.f32 %v413, %v494
    %v496 = vpop.f32.mrb[0].mxu0
    %497 = vmatprep.mubr.f32.mxu0 0.0
    %v498 = vand.u32 %v87, 4294901760
    %499 = vmatmul.mubr.f32.gmra.mrb[0].mxu0 %v498
    %v500 = vpop.f32.mrb[0].mxu0
    %v501 = vadd.f32 %v421, %v500
    %v502 = vpop.f32.mrb[0].mxu0
    %503 = vdwg.mxu0
    %504 = vmatprep.subr.mxu0 0.0
    %v505 = vand.u32 %v91, 4294901760
    %506 = vmatpush1.msra.mxu0 %v505
    %507 = vmatprep.subr.mxu0 0.0
    %508 = vmatpush1.msra.mxu0 0.0
    %509 = vmatprep.subr.mxu0 0.0
    %510 = vmatpush1.msra.mxu0 0.0
    %511 = vmatprep.subr.mxu0 0.0
    %512 = vmatpush1.msra.mxu0 0.0
    %513 = vmatprep.subr.mxu0 0.0
    %514 = vmatpush1.msra.mxu0 0.0
    %515 = vmatprep.subr.mxu0 0.0
    %516 = vmatpush1.msra.mxu0 0.0
    %517 = vmatprep.subr.mxu0 0.0
    %518 = vmatpush1.msra.mxu0 0.0
    %519 = vmatprep.subr.mxu0 0.0
    %520 = vmatpush1.msra.mxu0 0.0
    %521 = vmatprep.subr.mxu0 0.0
    %522 = vmatpush1.msra.mxu0 0.0
    %523 = vmatprep.subr.mxu0 0.0
    %524 = vmatpush1.msra.mxu0 0.0
    %525 = vmatprep.subr.mxu0 0.0
    %526 = vmatpush1.msra.mxu0 0.0
    %527 = vmatprep.subr.mxu0 0.0
    %528 = vmatpush1.msra.mxu0 0.0
    %529 = vmatprep.subr.mxu0 0.0
    %530 = vmatpush1.msra.mxu0 0.0
    %531 = vmatprep.subr.mxu0 0.0
    %532 = vmatpush1.msra.mxu0 0.0
    %533 = vmatprep.subr.mxu0 0.0
    %534 = vmatpush1.msra.mxu0 0.0
    %535 = vmatprep.subr.mxu0 0.0
    %536 = vmatpush1.msra.mxu0 0.0
    %537 = vmatprep.subr.mxu0 0.0
    %538 = vmatpush1.msra.mxu0 0.0
    %539 = vmatprep.subr.mxu0 0.0
    %540 = vmatpush1.msra.mxu0 0.0
    %541 = vmatprep.subr.mxu0 0.0
    %542 = vmatpush1.msra.mxu0 0.0
    %543 = vmatprep.subr.mxu0 0.0
    %544 = vmatpush1.msra.mxu0 0.0
    %545 = vmatprep.subr.mxu0 0.0
    %546 = vmatpush1.msra.mxu0 0.0
    %547 = vmatprep.subr.mxu0 0.0
    %548 = vmatpush1.msra.mxu0 0.0
    %549 = vmatprep.subr.mxu0 0.0
    %550 = vmatpush1.msra.mxu0 0.0
    %551 = vmatprep.subr.mxu0 0.0
    %552 = vmatpush1.msra.mxu0 0.0
    %553 = vmatprep.subr.mxu0 0.0
    %554 = vmatpush1.msra.mxu0 0.0
    %555 = vmatprep.subr.mxu0 0.0
    %556 = vmatpush1.msra.mxu0 0.0
    %557 = vmatprep.subr.mxu0 0.0
    %558 = vmatpush1.msra.mxu0 0.0
    %559 = vmatprep.subr.mxu0 0.0
    %560 = vmatpush1.msra.mxu0 0.0
    %561 = vmatprep.subr.mxu0 0.0
    %562 = vmatpush1.msra.mxu0 0.0
    %563 = vmatprep.subr.mxu0 0.0
    %564 = vmatpush1.msra.mxu0 0.0
    %565 = vmatprep.subr.mxu0 0.0
    %566 = vmatpush1.msra.mxu0 0.0
    %567 = vmatprep.subr.mxu0 0.0
    %568 = vmatpush1.msra.mxu0 0.0
    %569 = vmatprep.mubr.f32.mxu0 0.0
    %v570 = vand.u32 %v84, 4294901760
    %571 = vmatmul.mubr.f32.gmra.mrb[0].mxu0 %v570
    %v572 = vpop.f32.mrb[0].mxu0
    %v573 = vadd.f32 %v495, %v572
    %v574 = vpop.f32.mrb[0].mxu0
    %575 = vmatprep.mubr.f32.mxu0 0.0
    %v576 = vand.u32 %v87, 4294901760
    %577 = vmatmul.mubr.f32.gmra.mrb[0].mxu0 %v576
    %v578 = vpop.f32.mrb[0].mxu0
    %v579 = vadd.f32 %v501, %v578
    %v580 = vpop.f32.mrb[0].mxu0
    %581 = vdwg.mxu0
    %v582 = vld [vmem:[%s1] sm:$0xff]
    %v583 = vld [vmem:[%s1 + $0x8] sm:$0xff]
    %v584 = vld [vmem:[%s1 + $0x10] sm:$0xff]
    %v585 = vld [vmem:[%s1 + $0x18] sm:$0xff]
    %v586 = vld [vmem:[%s1 + $0x20] sm:$0xff]
    %v587 = vld [vmem:[%s1 + $0x28] sm:$0xff]
    %v588 = vld [vmem:[%s1 + $0x30] sm:$0xff]
    %v589 = vld [vmem:[%s1 + $0x38] sm:$0xff]
    %v590 = vld [vmem:[%s1 + $0x40] sm:$0xff]
    %v591 = vld [vmem:[%s1 + $0x48] sm:$0xff]
    %v592 = vld [vmem:[%s1 + $0x50] sm:$0xff]
    %v593 = vld [vmem:[%s1 + $0x58] sm:$0xff]
    %v594 = vld [vmem:[%s1 + $0x60] sm:$0xff]
    %v595 = vld [vmem:[%s1 + $0x68] sm:$0xff]
    %v596 = vld [vmem:[%s1 + $0x70] sm:$0xff]
    %v597 = vld [vmem:[%s1 + $0x78] sm:$0xff]
    %v598 = vld [vmem:[%s6] sm:$0x1]
    %600 = vset.pattern.permute.xlu0 0
    %601 = vperm.xlu0 %600, %v582
    %v602 = vpop.permute.xlu0 %601
    %605 = vset.pattern.permute.xlu0 0
    %606 = vperm.xlu0 %605, %v583
    %v607 = vpop.permute.xlu0 %606
    %610 = vset.pattern.permute.xlu0 0
    %611 = vperm.xlu0 %610, %v584
    %v612 = vpop.permute.xlu0 %611
    %615 = vset.pattern.permute.xlu0 0
    %616 = vperm.xlu0 %615, %v585
    %v617 = vpop.permute.xlu0 %616
    %620 = vset.pattern.permute.xlu0 0
    %621 = vperm.xlu0 %620, %v586
    %v622 = vpop.permute.xlu0 %621
    %625 = vset.pattern.permute.xlu0 0
    %626 = vperm.xlu0 %625, %v587
    %v627 = vpop.permute.xlu0 %626
    %630 = vset.pattern.permute.xlu0 0
    %631 = vperm.xlu0 %630, %v588
    %v632 = vpop.permute.xlu0 %631
    %635 = vset.pattern.permute.xlu0 0
    %636 = vperm.xlu0 %635, %v589
    %v637 = vpop.permute.xlu0 %636
    %640 = vset.pattern.permute.xlu0 0
    %641 = vperm.xlu0 %640, %v590
    %v642 = vpop.permute.xlu0 %641
    %645 = vset.pattern.permute.xlu0 0
    %646 = vperm.xlu0 %645, %v591
    %v647 = vpop.permute.xlu0 %646
    %650 = vset.pattern.permute.xlu0 0
    %651 = vperm.xlu0 %650, %v592
    %v652 = vpop.permute.xlu0 %651
    %655 = vset.pattern.permute.xlu0 0
    %656 = vperm.xlu0 %655, %v593
    %v657 = vpop.permute.xlu0 %656
    %660 = vset.pattern.permute.xlu0 0
    %661 = vperm.xlu0 %660, %v594
    %v662 = vpop.permute.xlu0 %661
    %665 = vset.pattern.permute.xlu0 0
    %666 = vperm.xlu0 %665, %v595
    %v667 = vpop.permute.xlu0 %666
    %670 = vset.pattern.permute.xlu0 0
    %671 = vperm.xlu0 %670, %v596
    %v672 = vpop.permute.xlu0 %671
    %675 = vset.pattern.permute.xlu0 0
    %676 = vperm.xlu0 %675, %v597
    %v677 = vpop.permute.xlu0 %676
    %v680 = vlaneseq
    %v681 = vshrl.u32 %v680, 7
    %v682 = vsub.s32 0, %v681
    %v683 = vrot.slane %v598, %v682
    %v685 = vmul.f32 %v602, %v683
    %v686 = vmul.f32 %v607, %v683
    %v687 = vmul.f32 %v612, %v683
    %v688 = vmul.f32 %v617, %v683
    %v689 = vmul.f32 %v622, %v683
    %v690 = vmul.f32 %v627, %v683
    %v691 = vmul.f32 %v632, %v683
    %v692 = vmul.f32 %v637, %v683
    %v693 = vmul.f32 %v642, %v683
    %v694 = vmul.f32 %v647, %v683
    %v695 = vmul.f32 %v652, %v683
    %v696 = vmul.f32 %v657, %v683
    %v697 = vmul.f32 %v662, %v683
    %v698 = vmul.f32 %v667, %v683
    %v699 = vmul.f32 %v672, %v683
    %v700 = vmul.f32 %v677, %v683
    %v701 = vld [vmem:[%s7] sm:$0x1]
    %v703 = vlaneseq
    %v704 = vshrl.u32 %v703, 7
    %v705 = vsub.s32 0, %v704
    %v706 = vrot.slane %v701, %v705
    %v708 = vadd.f32 %v685, %v706
    %v709 = vadd.f32 %v686, %v706
    %v710 = vadd.f32 %v687, %v706
    %v711 = vadd.f32 %v688, %v706
    %v712 = vadd.f32 %v689, %v706
    %v713 = vadd.f32 %v690, %v706
    %v714 = vadd.f32 %v691, %v706
    %v715 = vadd.f32 %v692, %v706
    %v716 = vadd.f32 %v693, %v706
    %v717 = vadd.f32 %v694, %v706
    %v718 = vadd.f32 %v695, %v706
    %v719 = vadd.f32 %v696, %v706
    %v720 = vadd.f32 %v697, %v706
    %v721 = vadd.f32 %v698, %v706
    %v722 = vadd.f32 %v699, %v706
    %v723 = vadd.f32 %v700, %v706
    %v724 = vld [vmem:[%s2] sm:$0xff]
    %v725 = vld [vmem:[%s2 + $0x8] sm:$0xff]
    %v726 = vld [vmem:[%s3] sm:$0xff]
    %v727 = vld [vmem:[%s3 + $0x8] sm:$0xff]
    %v728 = vld [vmem:[%s3 + $0x10] sm:$0xff]
    %v729 = vld [vmem:[%s3 + $0x18] sm:$0xff]
    %v730 = vld [vmem:[%s3 + $0x20] sm:$0xff]
    %v731 = vld [vmem:[%s3 + $0x28] sm:$0xff]
    %v732 = vld [vmem:[%s3 + $0x30] sm:$0xff]
    %v733 = vld [vmem:[%s3 + $0x38] sm:$0xff]
    %v734 = vld [vmem:[%s3 + $0x40] sm:$0xff]
    %v735 = vld [vmem:[%s3 + $0x48] sm:$0xff]
    %v736 = vld [vmem:[%s3 + $0x50] sm:$0xff]
    %v737 = vld [vmem:[%s3 + $0x58] sm:$0xff]
    %v738 = vld [vmem:[%s3 + $0x60] sm:$0xff]
    %v739 = vld [vmem:[%s3 + $0x68] sm:$0xff]
    %v740 = vld [vmem:[%s3 + $0x70] sm:$0xff]
    %v741 = vld [vmem:[%s3 + $0x78] sm:$0xff]
    %v742 = vld [vmem:[%s8] sm:$0xff]
    %v743 = vld [vmem:[%s8 + $0x8] sm:$0xff]
    %v744 = vld [vmem:[%s8 + $0x10] sm:$0xff]
    %v745 = vld [vmem:[%s8 + $0x18] sm:$0xff]
    %v746 = vld [vmem:[%s9] sm:$0x1]
    %v748 = vlaneseq
    %v749 = vshrl.u32 %v748, 7
    %v750 = vsub.s32 0, %v749
    %v751 = vrot.slane %v746, %v750
    %vm753 = vcmask 261120
    %v755 = vsel %vm753, %v573, 0
    %v758 = vsel %vm753, %v579, 0
    %760 = vmatprep.subr.mxu0 0.0
    %v761 = vand.u32 %v742, 4294901760
    %762 = vmatpush1.msra.mxu0 %v761
    %763 = vmatprep.subr.mxu0 0.0
    %v764 = vand.u32 %v743, 4294901760
    %765 = vmatpush1.msra.mxu0 %v764
    %766 = vmatprep.subr.mxu0 0.0
    %v767 = vand.u32 %v744, 4294901760
    %768 = vmatpush1.msra.mxu0 %v767
    %769 = vmatprep.subr.mxu0 0.0
    %v770 = vand.u32 %v745, 4294901760
    %771 = vmatpush1.msra.mxu0 %v770
    %772 = vmatprep.subr.mxu0 0.0
    %773 = vmatpush1.msra.mxu0 0.0
    %774 = vmatprep.subr.mxu0 0.0
    %775 = vmatpush1.msra.mxu0 0.0
    %776 = vmatprep.subr.mxu0 0.0
    %777 = vmatpush1.msra.mxu0 0.0
    %778 = vmatprep.subr.mxu0 0.0
    %779 = vmatpush1.msra.mxu0 0.0
    %780 = vmatprep.subr.mxu0 0.0
    %781 = vmatpush1.msra.mxu0 0.0
    %782 = vmatprep.subr.mxu0 0.0
    %783 = vmatpush1.msra.mxu0 0.0
    %784 = vmatprep.subr.mxu0 0.0
    %785 = vmatpush1.msra.mxu0 0.0
    %786 = vmatprep.subr.mxu0 0.0
    %787 = vmatpush1.msra.mxu0 0.0
    %788 = vmatprep.subr.mxu0 0.0
    %789 = vmatpush1.msra.mxu0 0.0
    %790 = vmatprep.subr.mxu0 0.0
    %791 = vmatpush1.msra.mxu0 0.0
    %792 = vmatprep.subr.mxu0 0.0
    %793 = vmatpush1.msra.mxu0 0.0
    %794 = vmatprep.subr.mxu0 0.0
    %795 = vmatpush1.msra.mxu0 0.0
    %796 = vmatprep.subr.mxu0 0.0
    %797 = vmatpush1.msra.mxu0 0.0
    %798 = vmatprep.subr.mxu0 0.0
    %799 = vmatpush1.msra.mxu0 0.0
    %800 = vmatprep.subr.mxu0 0.0
    %801 = vmatpush1.msra.mxu0 0.0
    %802 = vmatprep.subr.mxu0 0.0
    %803 = vmatpush1.msra.mxu0 0.0
    %804 = vmatprep.subr.mxu0 0.0
    %805 = vmatpush1.msra.mxu0 0.0
    %806 = vmatprep.subr.mxu0 0.0
    %807 = vmatpush1.msra.mxu0 0.0
    %808 = vmatprep.subr.mxu0 0.0
    %809 = vmatpush1.msra.mxu0 0.0
    %810 = vmatprep.subr.mxu0 0.0
    %811 = vmatpush1.msra.mxu0 0.0
    %812 = vmatprep.subr.mxu0 0.0
    %813 = vmatpush1.msra.mxu0 0.0
    %814 = vmatprep.subr.mxu0 0.0
    %815 = vmatpush1.msra.mxu0 0.0
    %816 = vmatprep.subr.mxu0 0.0
    %817 = vmatpush1.msra.mxu0 0.0
    %818 = vmatprep.subr.mxu0 0.0
    %819 = vmatpush1.msra.mxu0 0.0
    %820 = vmatprep.subr.mxu0 0.0
    %821 = vmatpush1.msra.mxu0 0.0
    %822 = vmatprep.subr.mxu0 0.0
    %823 = vmatpush1.msra.mxu0 0.0
    %824 = vmatprep.subr.mxu0 0.0
    %825 = vmatpush1.msra.mxu0 0.0
    %826 = vmatprep.subr.mxu0 0.0
    %827 = vmatpush1.msra.mxu0 0.0
    %828 = vmatprep.mubr.f32.mxu0 0.0
    %v829 = vand.u32 %v755, 4294901760
    %v830 = vsub.f32 %v755, %v829
    %v831 = vand.u32 %v830, 4294901760
    %v832 = vsub.f32 %v830, %v831
    %v833 = vand.u32 %v832, 4294901760
    %834 = vmatmul.mubr.f32.gmra.mrb[0].mxu0 %v833
    %v835 = vpop.f32.mrb[0].mxu0
    %v836 = vadd.f32 %v751, %v835
    %v837 = vpop.f32.mrb[0].mxu0
    %838 = vmatprep.mubr.f32.mxu0 0.0
    %v839 = vand.u32 %v758, 4294901760
    %v840 = vsub.f32 %v758, %v839
    %v841 = vand.u32 %v840, 4294901760
    %v842 = vsub.f32 %v840, %v841
    %v843 = vand.u32 %v842, 4294901760
    %844 = vmatmul.mubr.f32.gmra.mrb[0].mxu0 %v843
    %v845 = vpop.f32.mrb[0].mxu0
    %v846 = vadd.f32 %v751, %v845
    %v847 = vpop.f32.mrb[0].mxu0
    %848 = vdwg.mxu0
    %849 = vmatprep.subr.mxu0 0.0
    %v850 = vand.u32 %v742, 4294901760
    %v851 = vsub.f32 %v742, %v850
    %v852 = vand.u32 %v851, 4294901760
    %v853 = vsub.f32 %v851, %v852
    %v854 = vand.u32 %v853, 4294901760
    %855 = vmatpush1.msra.mxu0 %v854
    %856 = vmatprep.subr.mxu0 0.0
    %v857 = vand.u32 %v743, 4294901760
    %v858 = vsub.f32 %v743, %v857
    %v859 = vand.u32 %v858, 4294901760
    %v860 = vsub.f32 %v858, %v859
    %v861 = vand.u32 %v860, 4294901760
    %862 = vmatpush1.msra.mxu0 %v861
    %863 = vmatprep.subr.mxu0 0.0
    %v864 = vand.u32 %v744, 4294901760
    %v865 = vsub.f32 %v744, %v864
    %v866 = vand.u32 %v865, 4294901760
    %v867 = vsub.f32 %v865, %v866
    %v868 = vand.u32 %v867, 4294901760
    %869 = vmatpush1.msra.mxu0 %v868
    %870 = vmatprep.subr.mxu0 0.0
    %v871 = vand.u32 %v745, 4294901760
    %v872 = vsub.f32 %v745, %v871
    %v873 = vand.u32 %v872, 4294901760
    %v874 = vsub.f32 %v872, %v873
    %v875 = vand.u32 %v874, 4294901760
    %876 = vmatpush1.msra.mxu0 %v875
    %877 = vmatprep.subr.mxu0 0.0
    %878 = vmatpush1.msra.mxu0 0.0
    %879 = vmatprep.subr.mxu0 0.0
    %880 = vmatpush1.msra.mxu0 0.0
    %881 = vmatprep.subr.mxu0 0.0
    %882 = vmatpush1.msra.mxu0 0.0
    %883 = vmatprep.subr.mxu0 0.0
    %884 = vmatpush1.msra.mxu0 0.0
    %885 = vmatprep.subr.mxu0 0.0
    %886 = vmatpush1.msra.mxu0 0.0
    %887 = vmatprep.subr.mxu0 0.0
    %888 = vmatpush1.msra.mxu0 0.0
    %889 = vmatprep.subr.mxu0 0.0
    %890 = vmatpush1.msra.mxu0 0.0
    %891 = vmatprep.subr.mxu0 0.0
    %892 = vmatpush1.msra.mxu0 0.0
    %893 = vmatprep.subr.mxu0 0.0
    %894 = vmatpush1.msra.mxu0 0.0
    %895 = vmatprep.subr.mxu0 0.0
    %896 = vmatpush1.msra.mxu0 0.0
    %897 = vmatprep.subr.mxu0 0.0
    %898 = vmatpush1.msra.mxu0 0.0
    %899 = vmatprep.subr.mxu0 0.0
    %900 = vmatpush1.msra.mxu0 0.0
    %901 = vmatprep.subr.mxu0 0.0
    %902 = vmatpush1.msra.mxu0 0.0
    %903 = vmatprep.subr.mxu0 0.0
    %904 = vmatpush1.msra.mxu0 0.0
    %905 = vmatprep.subr.mxu0 0.0
    %906 = vmatpush1.msra.mxu0 0.0
    %907 = vmatprep.subr.mxu0 0.0
    %908 = vmatpush1.msra.mxu0 0.0
    %909 = vmatprep.subr.mxu0 0.0
    %910 = vmatpush1.msra.mxu0 0.0
    %911 = vmatprep.subr.mxu0 0.0
    %912 = vmatpush1.msra.mxu0 0.0
    %913 = vmatprep.subr.mxu0 0.0
    %914 = vmatpush1.msra.mxu0 0.0
    %915 = vmatprep.subr.mxu0 0.0
    %916 = vmatpush1.msra.mxu0 0.0
    %917 = vmatprep.subr.mxu0 0.0
    %918 = vmatpush1.msra.mxu0 0.0
    %919 = vmatprep.subr.mxu0 0.0
    %920 = vmatpush1.msra.mxu0 0.0
    %921 = vmatprep.subr.mxu0 0.0
    %922 = vmatpush1.msra.mxu0 0.0
    %923 = vmatprep.subr.mxu0 0.0
    %924 = vmatpush1.msra.mxu0 0.0
    %925 = vmatprep.subr.mxu0 0.0
    %926 = vmatpush1.msra.mxu0 0.0
    %927 = vmatprep.subr.mxu0 0.0
    %928 = vmatpush1.msra.mxu0 0.0
    %929 = vmatprep.subr.mxu0 0.0
    %930 = vmatpush1.msra.mxu0 0.0
    %931 = vmatprep.subr.mxu0 0.0
    %932 = vmatpush1.msra.mxu0 0.0
    %933 = vmatprep.mubr.f32.mxu0 0.0
    %v934 = vand.u32 %v755, 4294901760
    %935 = vmatmul.mubr.f32.gmra.mrb[0].mxu0 %v934
    %v936 = vpop.f32.mrb[0].mxu0
    %v937 = vadd.f32 %v836, %v936
    %v938 = vpop.f32.mrb[0].mxu0
    %939 = vmatprep.mubr.f32.mxu0 0.0
    %v940 = vand.u32 %v758, 4294901760
    %941 = vmatmul.mubr.f32.gmra.mrb[0].mxu0 %v940
    %v942 = vpop.f32.mrb[0].mxu0
    %v943 = vadd.f32 %v846, %v942
    %v944 = vpop.f32.mrb[0].mxu0
    %945 = vdwg.mxu0
    %946 = vmatprep.subr.mxu0 0.0
    %v947 = vand.u32 %v742, 4294901760
    %v948 = vsub.f32 %v742, %v947
    %949 = vmatpush1.msra.mxu0 %v948
    %950 = vmatprep.subr.mxu0 0.0
    %v951 = vand.u32 %v743, 4294901760
    %v952 = vsub.f32 %v743, %v951
    %953 = vmatpush1.msra.mxu0 %v952
    %954 = vmatprep.subr.mxu0 0.0
    %v955 = vand.u32 %v744, 4294901760
    %v956 = vsub.f32 %v744, %v955
    %957 = vmatpush1.msra.mxu0 %v956
    %958 = vmatprep.subr.mxu0 0.0
    %v959 = vand.u32 %v745, 4294901760
    %v960 = vsub.f32 %v745, %v959
    %961 = vmatpush1.msra.mxu0 %v960
    %962 = vmatprep.subr.mxu0 0.0
    %963 = vmatpush1.msra.mxu0 0.0
    %964 = vmatprep.subr.mxu0 0.0
    %965 = vmatpush1.msra.mxu0 0.0
    %966 = vmatprep.subr.mxu0 0.0
    %967 = vmatpush1.msra.mxu0 0.0
    %968 = vmatprep.subr.mxu0 0.0
    %969 = vmatpush1.msra.mxu0 0.0
    %970 = vmatprep.subr.mxu0 0.0
    %971 = vmatpush1.msra.mxu0 0.0
    %972 = vmatprep.subr.mxu0 0.0
    %973 = vmatpush1.msra.mxu0 0.0
    %974 = vmatprep.subr.mxu0 0.0
    %975 = vmatpush1.msra.mxu0 0.0
    %976 = vmatprep.subr.mxu0 0.0
    %977 = vmatpush1.msra.mxu0 0.0
    %978 = vmatprep.subr.mxu0 0.0
    %979 = vmatpush1.msra.mxu0 0.0
    %980 = vmatprep.subr.mxu0 0.0
    %981 = vmatpush1.msra.mxu0 0.0
    %982 = vmatprep.subr.mxu0 0.0
    %983 = vmatpush1.msra.mxu0 0.0
    %984 = vmatprep.subr.mxu0 0.0
    %985 = vmatpush1.msra.mxu0 0.0
    %986 = vmatprep.subr.mxu0 0.0
    %987 = vmatpush1.msra.mxu0 0.0
    %988 = vmatprep.subr.mxu0 0.0
    %989 = vmatpush1.msra.mxu0 0.0
    %990 = vmatprep.subr.mxu0 0.0
    %991 = vmatpush1.msra.mxu0 0.0
    %992 = vmatprep.subr.mxu0 0.0
    %993 = vmatpush1.msra.mxu0 0.0
    %994 = vmatprep.subr.mxu0 0.0
    %995 = vmatpush1.msra.mxu0 0.0
    %996 = vmatprep.subr.mxu0 0.0
    %997 = vmatpush1.msra.mxu0 0.0
    %998 = vmatprep.subr.mxu0 0.0
    %999 = vmatpush1.msra.mxu0 0.0
    %1000 = vmatprep.subr.mxu0 0.0
    %1001 = vmatpush1.msra.mxu0 0.0
    %1002 = vmatprep.subr.mxu0 0.0
    %1003 = vmatpush1.msra.mxu0 0.0
    %1004 = vmatprep.subr.mxu0 0.0
    %1005 = vmatpush1.msra.mxu0 0.0
    %1006 = vmatprep.subr.mxu0 0.0
    %1007 = vmatpush1.msra.mxu0 0.0
    %1008 = vmatprep.subr.mxu0 0.0
    %1009 = vmatpush1.msra.mxu0 0.0
    %1010 = vmatprep.subr.mxu0 0.0
    %1011 = vmatpush1.msra.mxu0 0.0
    %1012 = vmatprep.subr.mxu0 0.0
    %1013 = vmatpush1.msra.mxu0 0.0
    %1014 = vmatprep.subr.mxu0 0.0
    %1015 = vmatpush1.msra.mxu0 0.0
    %1016 = vmatprep.subr.mxu0 0.0
    %1017 = vmatpush1.msra.mxu0 0.0
    %1018 = vmatprep.mubr.f32.mxu0 0.0
    %v1019 = vand.u32 %v755, 4294901760
    %v1020 = vsub.f32 %v755, %v1019
    %1021 = vmatmul.mubr.f32.gmra.mrb[0].mxu0 %v1020
    %v1022 = vpop.f32.mrb[0].mxu0
    %v1023 = vadd.f32 %v937, %v1022
    %v1024 = vpop.f32.mrb[0].mxu0
    %1025 = vmatprep.mubr.f32.mxu0 0.0
    %v1026 = vand.u32 %v758, 4294901760
    %v1027 = vsub.f32 %v758, %v1026
    %1028 = vmatmul.mubr.f32.gmra.mrb[0].mxu0 %v1027
    %v1029 = vpop.f32.mrb[0].mxu0
    %v1030 = vadd.f32 %v943, %v1029
    %v1031 = vpop.f32.mrb[0].mxu0
    %1032 = vdwg.mxu0
    %1033 = vmatprep.subr.mxu0 0.0
    %v1034 = vand.u32 %v742, 4294901760
    %1035 = vmatpush1.msra.mxu0 %v1034
    %1036 = vmatprep.subr.mxu0 0.0
    %v1037 = vand.u32 %v743, 4294901760
    %1038 = vmatpush1.msra.mxu0 %v1037
    %1039 = vmatprep.subr.mxu0 0.0
    %v1040 = vand.u32 %v744, 4294901760
    %1041 = vmatpush1.msra.mxu0 %v1040
    %1042 = vmatprep.subr.mxu0 0.0
    %v1043 = vand.u32 %v745, 4294901760
    %1044 = vmatpush1.msra.mxu0 %v1043
    %1045 = vmatprep.subr.mxu0 0.0
    %1046 = vmatpush1.msra.mxu0 0.0
    %1047 = vmatprep.subr.mxu0 0.0
    %1048 = vmatpush1.msra.mxu0 0.0
    %1049 = vmatprep.subr.mxu0 0.0
    %1050 = vmatpush1.msra.mxu0 0.0
    %1051 = vmatprep.subr.mxu0 0.0
    %1052 = vmatpush1.msra.mxu0 0.0
    %1053 = vmatprep.subr.mxu0 0.0
    %1054 = vmatpush1.msra.mxu0 0.0
    %1055 = vmatprep.subr.mxu0 0.0
    %1056 = vmatpush1.msra.mxu0 0.0
    %1057 = vmatprep.subr.mxu0 0.0
    %1058 = vmatpush1.msra.mxu0 0.0
    %1059 = vmatprep.subr.mxu0 0.0
    %1060 = vmatpush1.msra.mxu0 0.0
    %1061 = vmatprep.subr.mxu0 0.0
    %1062 = vmatpush1.msra.mxu0 0.0
    %1063 = vmatprep.subr.mxu0 0.0
    %1064 = vmatpush1.msra.mxu0 0.0
    %1065 = vmatprep.subr.mxu0 0.0
    %1066 = vmatpush1.msra.mxu0 0.0
    %1067 = vmatprep.subr.mxu0 0.0
    %1068 = vmatpush1.msra.mxu0 0.0
    %1069 = vmatprep.subr.mxu0 0.0
    %1070 = vmatpush1.msra.mxu0 0.0
    %1071 = vmatprep.subr.mxu0 0.0
    %1072 = vmatpush1.msra.mxu0 0.0
    %1073 = vmatprep.subr.mxu0 0.0
    %1074 = vmatpush1.msra.mxu0 0.0
    %1075 = vmatprep.subr.mxu0 0.0
    %1076 = vmatpush1.msra.mxu0 0.0
    %1077 = vmatprep.subr.mxu0 0.0
    %1078 = vmatpush1.msra.mxu0 0.0
    %1079 = vmatprep.subr.mxu0 0.0
    %1080 = vmatpush1.msra.mxu0 0.0
    %1081 = vmatprep.subr.mxu0 0.0
    %1082 = vmatpush1.msra.mxu0 0.0
    %1083 = vmatprep.subr.mxu0 0.0
    %1084 = vmatpush1.msra.mxu0 0.0
    %1085 = vmatprep.subr.mxu0 0.0
    %1086 = vmatpush1.msra.mxu0 0.0
    %1087 = vmatprep.subr.mxu0 0.0
    %1088 = vmatpush1.msra.mxu0 0.0
    %1089 = vmatprep.subr.mxu0 0.0
    %1090 = vmatpush1.msra.mxu0 0.0
    %1091 = vmatprep.subr.mxu0 0.0
    %1092 = vmatpush1.msra.mxu0 0.0
    %1093 = vmatprep.subr.mxu0 0.0
    %1094 = vmatpush1.msra.mxu0 0.0
    %1095 = vmatprep.subr.mxu0 0.0
    %1096 = vmatpush1.msra.mxu0 0.0
    %1097 = vmatprep.subr.mxu0 0.0
    %1098 = vmatpush1.msra.mxu0 0.0
    %1099 = vmatprep.subr.mxu0 0.0
    %1100 = vmatpush1.msra.mxu0 0.0
    %1101 = vmatprep.mubr.f32.mxu0 0.0
    %v1102 = vand.u32 %v755, 4294901760
    %v1103 = vsub.f32 %v755, %v1102
    %v1104 = vand.u32 %v1103, 4294901760
    %1105 = vmatmul.mubr.f32.gmra.mrb[0].mxu0 %v1104
    %v1106 = vpop.f32.mrb[0].mxu0
    %v1107 = vadd.f32 %v1023, %v1106
    %v1108 = vpop.f32.mrb[0].mxu0
    %1109 = vmatprep.mubr.f32.mxu0 0.0
    %v1110 = vand.u32 %v758, 4294901760
    %v1111 = vsub.f32 %v758, %v1110
    %v1112 = vand.u32 %v1111, 4294901760
    %1113 = vmatmul.mubr.f32.gmra.mrb[0].mxu0 %v1112
    %v1114 = vpop.f32.mrb[0].mxu0
    %v1115 = vadd.f32 %v1030, %v1114
    %v1116 = vpop.f32.mrb[0].mxu0
    %1117 = vdwg.mxu0
    %1118 = vmatprep.subr.mxu0 0.0
    %v1119 = vand.u32 %v742, 4294901760
    %v1120 = vsub.f32 %v742, %v1119
    %v1121 = vand.u32 %v1120, 4294901760
    %1122 = vmatpush1.msra.mxu0 %v1121
    %1123 = vmatprep.subr.mxu0 0.0
    %v1124 = vand.u32 %v743, 4294901760
    %v1125 = vsub.f32 %v743, %v1124
    %v1126 = vand.u32 %v1125, 4294901760
    %1127 = vmatpush1.msra.mxu0 %v1126
    %1128 = vmatprep.subr.mxu0 0.0
    %v1129 = vand.u32 %v744, 4294901760
    %v1130 = vsub.f32 %v744, %v1129
    %v1131 = vand.u32 %v1130, 4294901760
    %1132 = vmatpush1.msra.mxu0 %v1131
    %1133 = vmatprep.subr.mxu0 0.0
    %v1134 = vand.u32 %v745, 4294901760
    %v1135 = vsub.f32 %v745, %v1134
    %v1136 = vand.u32 %v1135, 4294901760
    %1137 = vmatpush1.msra.mxu0 %v1136
    %1138 = vmatprep.subr.mxu0 0.0
    %1139 = vmatpush1.msra.mxu0 0.0
    %1140 = vmatprep.subr.mxu0 0.0
    %1141 = vmatpush1.msra.mxu0 0.0
    %1142 = vmatprep.subr.mxu0 0.0
    %1143 = vmatpush1.msra.mxu0 0.0
    %1144 = vmatprep.subr.mxu0 0.0
    %1145 = vmatpush1.msra.mxu0 0.0
    %1146 = vmatprep.subr.mxu0 0.0
    %1147 = vmatpush1.msra.mxu0 0.0
    %1148 = vmatprep.subr.mxu0 0.0
    %1149 = vmatpush1.msra.mxu0 0.0
    %1150 = vmatprep.subr.mxu0 0.0
    %1151 = vmatpush1.msra.mxu0 0.0
    %1152 = vmatprep.subr.mxu0 0.0
    %1153 = vmatpush1.msra.mxu0 0.0
    %1154 = vmatprep.subr.mxu0 0.0
    %1155 = vmatpush1.msra.mxu0 0.0
    %1156 = vmatprep.subr.mxu0 0.0
    %1157 = vmatpush1.msra.mxu0 0.0
    %1158 = vmatprep.subr.mxu0 0.0
    %1159 = vmatpush1.msra.mxu0 0.0
    %1160 = vmatprep.subr.mxu0 0.0
    %1161 = vmatpush1.msra.mxu0 0.0
    %1162 = vmatprep.subr.mxu0 0.0
    %1163 = vmatpush1.msra.mxu0 0.0
    %1164 = vmatprep.subr.mxu0 0.0
    %1165 = vmatpush1.msra.mxu0 0.0
    %1166 = vmatprep.subr.mxu0 0.0
    %1167 = vmatpush1.msra.mxu0 0.0
    %1168 = vmatprep.subr.mxu0 0.0
    %1169 = vmatpush1.msra.mxu0 0.0
    %1170 = vmatprep.subr.mxu0 0.0
    %1171 = vmatpush1.msra.mxu0 0.0
    %1172 = vmatprep.subr.mxu0 0.0
    %1173 = vmatpush1.msra.mxu0 0.0
    %1174 = vmatprep.subr.mxu0 0.0
    %1175 = vmatpush1.msra.mxu0 0.0
    %1176 = vmatprep.subr.mxu0 0.0
    %1177 = vmatpush1.msra.mxu0 0.0
    %1178 = vmatprep.subr.mxu0 0.0
    %1179 = vmatpush1.msra.mxu0 0.0
    %1180 = vmatprep.subr.mxu0 0.0
    %1181 = vmatpush1.msra.mxu0 0.0
    %1182 = vmatprep.subr.mxu0 0.0
    %1183 = vmatpush1.msra.mxu0 0.0
    %1184 = vmatprep.subr.mxu0 0.0
    %1185 = vmatpush1.msra.mxu0 0.0
    %1186 = vmatprep.subr.mxu0 0.0
    %1187 = vmatpush1.msra.mxu0 0.0
    %1188 = vmatprep.subr.mxu0 0.0
    %1189 = vmatpush1.msra.mxu0 0.0
    %1190 = vmatprep.subr.mxu0 0.0
    %1191 = vmatpush1.msra.mxu0 0.0
    %1192 = vmatprep.subr.mxu0 0.0
    %1193 = vmatpush1.msra.mxu0 0.0
    %1194 = vmatprep.mubr.f32.mxu0 0.0
    %v1195 = vand.u32 %v755, 4294901760
    %1196 = vmatmul.mubr.f32.gmra.mrb[0].mxu0 %v1195
    %v1197 = vpop.f32.mrb[0].mxu0
    %v1198 = vadd.f32 %v1107, %v1197
    %v1199 = vpop.f32.mrb[0].mxu0
    %1200 = vmatprep.mubr.f32.mxu0 0.0
    %v1201 = vand.u32 %v758, 4294901760
    %1202 = vmatmul.mubr.f32.gmra.mrb[0].mxu0 %v1201
    %v1203 = vpop.f32.mrb[0].mxu0
    %v1204 = vadd.f32 %v1115, %v1203
    %v1205 = vpop.f32.mrb[0].mxu0
    %1206 = vdwg.mxu0
    %1207 = vmatprep.subr.mxu0 0.0
    %v1208 = vand.u32 %v742, 4294901760
    %1209 = vmatpush1.msra.mxu0 %v1208
    %1210 = vmatprep.subr.mxu0 0.0
    %v1211 = vand.u32 %v743, 4294901760
    %1212 = vmatpush1.msra.mxu0 %v1211
    %1213 = vmatprep.subr.mxu0 0.0
    %v1214 = vand.u32 %v744, 4294901760
    %1215 = vmatpush1.msra.mxu0 %v1214
    %1216 = vmatprep.subr.mxu0 0.0
    %v1217 = vand.u32 %v745, 4294901760
    %1218 = vmatpush1.msra.mxu0 %v1217
    %1219 = vmatprep.subr.mxu0 0.0
    %1220 = vmatpush1.msra.mxu0 0.0
    %1221 = vmatprep.subr.mxu0 0.0
    %1222 = vmatpush1.msra.mxu0 0.0
    %1223 = vmatprep.subr.mxu0 0.0
    %1224 = vmatpush1.msra.mxu0 0.0
    %1225 = vmatprep.subr.mxu0 0.0
    %1226 = vmatpush1.msra.mxu0 0.0
    %1227 = vmatprep.subr.mxu0 0.0
    %1228 = vmatpush1.msra.mxu0 0.0
    %1229 = vmatprep.subr.mxu0 0.0
    %1230 = vmatpush1.msra.mxu0 0.0
    %1231 = vmatprep.subr.mxu0 0.0
    %1232 = vmatpush1.msra.mxu0 0.0
    %1233 = vmatprep.subr.mxu0 0.0
    %1234 = vmatpush1.msra.mxu0 0.0
    %1235 = vmatprep.subr.mxu0 0.0
    %1236 = vmatpush1.msra.mxu0 0.0
    %1237 = vmatprep.subr.mxu0 0.0
    %1238 = vmatpush1.msra.mxu0 0.0
    %1239 = vmatprep.subr.mxu0 0.0
    %1240 = vmatpush1.msra.mxu0 0.0
    %1241 = vmatprep.subr.mxu0 0.0
    %1242 = vmatpush1.msra.mxu0 0.0
    %1243 = vmatprep.subr.mxu0 0.0
    %1244 = vmatpush1.msra.mxu0 0.0
    %1245 = vmatprep.subr.mxu0 0.0
    %1246 = vmatpush1.msra.mxu0 0.0
    %1247 = vmatprep.subr.mxu0 0.0
    %1248 = vmatpush1.msra.mxu0 0.0
    %1249 = vmatprep.subr.mxu0 0.0
    %1250 = vmatpush1.msra.mxu0 0.0
    %1251 = vmatprep.subr.mxu0 0.0
    %1252 = vmatpush1.msra.mxu0 0.0
    %1253 = vmatprep.subr.mxu0 0.0
    %1254 = vmatpush1.msra.mxu0 0.0
    %1255 = vmatprep.subr.mxu0 0.0
    %1256 = vmatpush1.msra.mxu0 0.0
    %1257 = vmatprep.subr.mxu0 0.0
    %1258 = vmatpush1.msra.mxu0 0.0
    %1259 = vmatprep.subr.mxu0 0.0
    %1260 = vmatpush1.msra.mxu0 0.0
    %1261 = vmatprep.subr.mxu0 0.0
    %1262 = vmatpush1.msra.mxu0 0.0
    %1263 = vmatprep.subr.mxu0 0.0
    %1264 = vmatpush1.msra.mxu0 0.0
    %1265 = vmatprep.subr.mxu0 0.0
    %1266 = vmatpush1.msra.mxu0 0.0
    %1267 = vmatprep.subr.mxu0 0.0
    %1268 = vmatpush1.msra.mxu0 0.0
    %1269 = vmatprep.subr.mxu0 0.0
    %1270 = vmatpush1.msra.mxu0 0.0
    %1271 = vmatprep.subr.mxu0 0.0
    %1272 = vmatpush1.msra.mxu0 0.0
    %1273 = vmatprep.subr.mxu0 0.0
    %1274 = vmatpush1.msra.mxu0 0.0
    %1275 = vmatprep.mubr.f32.mxu0 0.0
    %v1276 = vand.u32 %v755, 4294901760
    %1277 = vmatmul.mubr.f32.gmra.mrb[0].mxu0 %v1276
    %v1278 = vpop.f32.mrb[0].mxu0
    %v1279 = vadd.f32 %v1198, %v1278
    %v1280 = vpop.f32.mrb[0].mxu0
    %1281 = vmatprep.mubr.f32.mxu0 0.0
    %v1282 = vand.u32 %v758, 4294901760
    %1283 = vmatmul.mubr.f32.gmra.mrb[0].mxu0 %v1282
    %v1284 = vpop.f32.mrb[0].mxu0
    %v1285 = vadd.f32 %v1204, %v1284
    %v1286 = vpop.f32.mrb[0].mxu0
    %1287 = vdwg.mxu0
    %v1288 = vld [vmem:[%s10] sm:$0xff]
    %v1289 = vld [vmem:[%s10 + $0x8] sm:$0xff]
    %v1290 = vld [vmem:[%s10 + $0x10] sm:$0xff]
    %v1291 = vld [vmem:[%s10 + $0x18] sm:$0xff]
    %v1292 = vld [vmem:[%s11] sm:$0x1]
    %v1294 = vlaneseq
    %v1295 = vshrl.u32 %v1294, 7
    %v1296 = vsub.s32 0, %v1295
    %v1297 = vrot.slane %v1292, %v1296
    %v1300 = vsel %vm753, %v708, 0
    %v1303 = vsel %vm753, %v709, 0
    %v1306 = vsel %vm753, %v710, 0
    %v1309 = vsel %vm753, %v711, 0
    %v1312 = vsel %vm753, %v712, 0
    %v1315 = vsel %vm753, %v713, 0
    %v1318 = vsel %vm753, %v714, 0
    %v1321 = vsel %vm753, %v715, 0
    %v1324 = vsel %vm753, %v716, 0
    %v1327 = vsel %vm753, %v717, 0
    %v1330 = vsel %vm753, %v718, 0
    %v1333 = vsel %vm753, %v719, 0
    %v1336 = vsel %vm753, %v720, 0
    %v1339 = vsel %vm753, %v721, 0
    %v1342 = vsel %vm753, %v722, 0
    %v1345 = vsel %vm753, %v723, 0
    %1347 = vmatprep.subr.mxu0 0.0
    %v1348 = vand.u32 %v1288, 4294901760
    %1349 = vmatpush1.msra.mxu0 %v1348
    %1350 = vmatprep.subr.mxu0 0.0
    %v1351 = vand.u32 %v1289, 4294901760
    %1352 = vmatpush1.msra.mxu0 %v1351
    %1353 = vmatprep.subr.mxu0 0.0
    %v1354 = vand.u32 %v1290, 4294901760
    %1355 = vmatpush1.msra.mxu0 %v1354
    %1356 = vmatprep.subr.mxu0 0.0
    %v1357 = vand.u32 %v1291, 4294901760
    %1358 = vmatpush1.msra.mxu0 %v1357
    %1359 = vmatprep.subr.mxu0 0.0
    %1360 = vmatpush1.msra.mxu0 0.0
    %1361 = vmatprep.subr.mxu0 0.0
    %1362 = vmatpush1.msra.mxu0 0.0
    %1363 = vmatprep.subr.mxu0 0.0
    %1364 = vmatpush1.msra.mxu0 0.0
    %1365 = vmatprep.subr.mxu0 0.0
    %1366 = vmatpush1.msra.mxu0 0.0
    %1367 = vmatprep.subr.mxu0 0.0
    %1368 = vmatpush1.msra.mxu0 0.0
    %1369 = vmatprep.subr.mxu0 0.0
    %1370 = vmatpush1.msra.mxu0 0.0
    %1371 = vmatprep.subr.mxu0 0.0
    %1372 = vmatpush1.msra.mxu0 0.0
    %1373 = vmatprep.subr.mxu0 0.0
    %1374 = vmatpush1.msra.mxu0 0.0
    %1375 = vmatprep.subr.mxu0 0.0
    %1376 = vmatpush1.msra.mxu0 0.0
    %1377 = vmatprep.subr.mxu0 0.0
    %1378 = vmatpush1.msra.mxu0 0.0
    %1379 = vmatprep.subr.mxu0 0.0
    %1380 = vmatpush1.msra.mxu0 0.0
    %1381 = vmatprep.subr.mxu0 0.0
    %1382 = vmatpush1.msra.mxu0 0.0
    %1383 = vmatprep.subr.mxu0 0.0
    %1384 = vmatpush1.msra.mxu0 0.0
    %1385 = vmatprep.subr.mxu0 0.0
    %1386 = vmatpush1.msra.mxu0 0.0
    %1387 = vmatprep.subr.mxu0 0.0
    %1388 = vmatpush1.msra.mxu0 0.0
    %1389 = vmatprep.subr.mxu0 0.0
    %1390 = vmatpush1.msra.mxu0 0.0
    %1391 = vmatprep.subr.mxu0 0.0
    %1392 = vmatpush1.msra.mxu0 0.0
    %1393 = vmatprep.subr.mxu0 0.0
    %1394 = vmatpush1.msra.mxu0 0.0
    %1395 = vmatprep.subr.mxu0 0.0
    %1396 = vmatpush1.msra.mxu0 0.0
    %1397 = vmatprep.subr.mxu0 0.0
    %1398 = vmatpush1.msra.mxu0 0.0
    %1399 = vmatprep.subr.mxu0 0.0
    %1400 = vmatpush1.msra.mxu0 0.0
    %1401 = vmatprep.subr.mxu0 0.0
    %1402 = vmatpush1.msra.mxu0 0.0
    %1403 = vmatprep.subr.mxu0 0.0
    %1404 = vmatpush1.msra.mxu0 0.0
    %1405 = vmatprep.subr.mxu0 0.0
    %1406 = vmatpush1.msra.mxu0 0.0
    %1407 = vmatprep.subr.mxu0 0.0
    %1408 = vmatpush1.msra.mxu0 0.0
    %1409 = vmatprep.subr.mxu0 0.0
    %1410 = vmatpush1.msra.mxu0 0.0
    %1411 = vmatprep.subr.mxu0 0.0
    %1412 = vmatpush1.msra.mxu0 0.0
    %1413 = vmatprep.subr.mxu0 0.0
    %1414 = vmatpush1.msra.mxu0 0.0
    %1415 = vmatprep.mubr.f32.mxu0 0.0
    %v1416 = vand.u32 %v1300, 4294901760
    %v1417 = vsub.f32 %v1300, %v1416
    %v1418 = vand.u32 %v1417, 4294901760
    %v1419 = vsub.f32 %v1417, %v1418
    %v1420 = vand.u32 %v1419, 4294901760
    %1421 = vmatmul.mubr.f32.gmra.mrb[0].mxu0 %v1420
    %v1422 = vpop.f32.mrb[0].mxu0
    %v1423 = vadd.f32 %v1297, %v1422
    %v1424 = vpop.f32.mrb[0].mxu0
    %1425 = vmatprep.mubr.f32.mxu0 0.0
    %v1426 = vand.u32 %v1303, 4294901760
    %v1427 = vsub.f32 %v1303, %v1426
    %v1428 = vand.u32 %v1427, 4294901760
    %v1429 = vsub.f32 %v1427, %v1428
    %v1430 = vand.u32 %v1429, 4294901760
    %1431 = vmatmul.mubr.f32.gmra.mrb[0].mxu0 %v1430
    %v1432 = vpop.f32.mrb[0].mxu0
    %v1433 = vadd.f32 %v1297, %v1432
    %v1434 = vpop.f32.mrb[0].mxu0
    %1435 = vmatprep.mubr.f32.mxu0 0.0
    %v1436 = vand.u32 %v1306, 4294901760
    %v1437 = vsub.f32 %v1306, %v1436
    %v1438 = vand.u32 %v1437, 4294901760
    %v1439 = vsub.f32 %v1437, %v1438
    %v1440 = vand.u32 %v1439, 4294901760
    %1441 = vmatmul.mubr.f32.gmra.mrb[0].mxu0 %v1440
    %v1442 = vpop.f32.mrb[0].mxu0
    %v1443 = vadd.f32 %v1297, %v1442
    %v1444 = vpop.f32.mrb[0].mxu0
    %1445 = vmatprep.mubr.f32.mxu0 0.0
    %v1446 = vand.u32 %v1309, 4294901760
    %v1447 = vsub.f32 %v1309, %v1446
    %v1448 = vand.u32 %v1447, 4294901760
    %v1449 = vsub.f32 %v1447, %v1448
    %v1450 = vand.u32 %v1449, 4294901760
    %1451 = vmatmul.mubr.f32.gmra.mrb[0].mxu0 %v1450
    %v1452 = vpop.f32.mrb[0].mxu0
    %v1453 = vadd.f32 %v1297, %v1452
    %v1454 = vpop.f32.mrb[0].mxu0
    %1455 = vmatprep.mubr.f32.mxu0 0.0
    %v1456 = vand.u32 %v1312, 4294901760
    %v1457 = vsub.f32 %v1312, %v1456
    %v1458 = vand.u32 %v1457, 4294901760
    %v1459 = vsub.f32 %v1457, %v1458
    %v1460 = vand.u32 %v1459, 4294901760
    %1461 = vmatmul.mubr.f32.gmra.mrb[0].mxu0 %v1460
    %v1462 = vpop.f32.mrb[0].mxu0
    %v1463 = vadd.f32 %v1297, %v1462
    %v1464 = vpop.f32.mrb[0].mxu0
    %1465 = vmatprep.mubr.f32.mxu0 0.0
    %v1466 = vand.u32 %v1315, 4294901760
    %v1467 = vsub.f32 %v1315, %v1466
    %v1468 = vand.u32 %v1467, 4294901760
    %v1469 = vsub.f32 %v1467, %v1468
    %v1470 = vand.u32 %v1469, 4294901760
    %1471 = vmatmul.mubr.f32.gmra.mrb[0].mxu0 %v1470
    %v1472 = vpop.f32.mrb[0].mxu0
    %v1473 = vadd.f32 %v1297, %v1472
    %v1474 = vpop.f32.mrb[0].mxu0
    %1475 = vmatprep.mubr.f32.mxu0 0.0
    %v1476 = vand.u32 %v1318, 4294901760
    %v1477 = vsub.f32 %v1318, %v1476
    %v1478 = vand.u32 %v1477, 4294901760
    %v1479 = vsub.f32 %v1477, %v1478
    %v1480 = vand.u32 %v1479, 4294901760
    %1481 = vmatmul.mubr.f32.gmra.mrb[0].mxu0 %v1480
    %v1482 = vpop.f32.mrb[0].mxu0
    %v1483 = vadd.f32 %v1297, %v1482
    %v1484 = vpop.f32.mrb[0].mxu0
    %1485 = vmatprep.mubr.f32.mxu0 0.0
    %v1486 = vand.u32 %v1321, 4294901760
    %v1487 = vsub.f32 %v1321, %v1486
    %v1488 = vand.u32 %v1487, 4294901760
    %v1489 = vsub.f32 %v1487, %v1488
    %v1490 = vand.u32 %v1489, 4294901760
    %1491 = vmatmul.mubr.f32.gmra.mrb[0].mxu0 %v1490
    %v1492 = vpop.f32.mrb[0].mxu0
    %v1493 = vadd.f32 %v1297, %v1492
    %v1494 = vpop.f32.mrb[0].mxu0
    %1495 = vmatprep.mubr.f32.mxu0 0.0
    %v1496 = vand.u32 %v1324, 4294901760
    %v1497 = vsub.f32 %v1324, %v1496
    %v1498 = vand.u32 %v1497, 4294901760
    %v1499 = vsub.f32 %v1497, %v1498
    %v1500 = vand.u32 %v1499, 4294901760
    %1501 = vmatmul.mubr.f32.gmra.mrb[0].mxu0 %v1500
    %v1502 = vpop.f32.mrb[0].mxu0
    %v1503 = vadd.f32 %v1297, %v1502
    %v1504 = vpop.f32.mrb[0].mxu0
    %1505 = vmatprep.mubr.f32.mxu0 0.0
    %v1506 = vand.u32 %v1327, 4294901760
    %v1507 = vsub.f32 %v1327, %v1506
    %v1508 = vand.u32 %v1507, 4294901760
    %v1509 = vsub.f32 %v1507, %v1508
    %v1510 = vand.u32 %v1509, 4294901760
    %1511 = vmatmul.mubr.f32.gmra.mrb[0].mxu0 %v1510
    %v1512 = vpop.f32.mrb[0].mxu0
    %v1513 = vadd.f32 %v1297, %v1512
    %v1514 = vpop.f32.mrb[0].mxu0
    %1515 = vmatprep.mubr.f32.mxu0 0.0
    %v1516 = vand.u32 %v1330, 4294901760
    %v1517 = vsub.f32 %v1330, %v1516
    %v1518 = vand.u32 %v1517, 4294901760
    %v1519 = vsub.f32 %v1517, %v1518
    %v1520 = vand.u32 %v1519, 4294901760
    %1521 = vmatmul.mubr.f32.gmra.mrb[0].mxu0 %v1520
    %v1522 = vpop.f32.mrb[0].mxu0
    %v1523 = vadd.f32 %v1297, %v1522
    %v1524 = vpop.f32.mrb[0].mxu0
    %1525 = vmatprep.mubr.f32.mxu0 0.0
    %v1526 = vand.u32 %v1333, 4294901760
    %v1527 = vsub.f32 %v1333, %v1526
    %v1528 = vand.u32 %v1527, 4294901760
    %v1529 = vsub.f32 %v1527, %v1528
    %v1530 = vand.u32 %v1529, 4294901760
    %1531 = vmatmul.mubr.f32.gmra.mrb[0].mxu0 %v1530
    %v1532 = vpop.f32.mrb[0].mxu0
    %v1533 = vadd.f32 %v1297, %v1532
    %v1534 = vpop.f32.mrb[0].mxu0
    %1535 = vmatprep.mubr.f32.mxu0 0.0
    %v1536 = vand.u32 %v1336, 4294901760
    %v1537 = vsub.f32 %v1336, %v1536
    %v1538 = vand.u32 %v1537, 4294901760
    %v1539 = vsub.f32 %v1537, %v1538
    %v1540 = vand.u32 %v1539, 4294901760
    %1541 = vmatmul.mubr.f32.gmra.mrb[0].mxu0 %v1540
    %v1542 = vpop.f32.mrb[0].mxu0
    %v1543 = vadd.f32 %v1297, %v1542
    %v1544 = vpop.f32.mrb[0].mxu0
    %1545 = vmatprep.mubr.f32.mxu0 0.0
    %v1546 = vand.u32 %v1339, 4294901760
    %v1547 = vsub.f32 %v1339, %v1546
    %v1548 = vand.u32 %v1547, 4294901760
    %v1549 = vsub.f32 %v1547, %v1548
    %v1550 = vand.u32 %v1549, 4294901760
    %1551 = vmatmul.mubr.f32.gmra.mrb[0].mxu0 %v1550
    %v1552 = vpop.f32.mrb[0].mxu0
    %v1553 = vadd.f32 %v1297, %v1552
    %v1554 = vpop.f32.mrb[0].mxu0
    %1555 = vmatprep.mubr.f32.mxu0 0.0
    %v1556 = vand.u32 %v1342, 4294901760
    %v1557 = vsub.f32 %v1342, %v1556
    %v1558 = vand.u32 %v1557, 4294901760
    %v1559 = vsub.f32 %v1557, %v1558
    %v1560 = vand.u32 %v1559, 4294901760
    %1561 = vmatmul.mubr.f32.gmra.mrb[0].mxu0 %v1560
    %v1562 = vpop.f32.mrb[0].mxu0
    %v1563 = vadd.f32 %v1297, %v1562
    %v1564 = vpop.f32.mrb[0].mxu0
    %1565 = vmatprep.mubr.f32.mxu0 0.0
    %v1566 = vand.u32 %v1345, 4294901760
    %v1567 = vsub.f32 %v1345, %v1566
    %v1568 = vand.u32 %v1567, 4294901760
    %v1569 = vsub.f32 %v1567, %v1568
    %v1570 = vand.u32 %v1569, 4294901760
    %1571 = vmatmul.mubr.f32.gmra.mrb[0].mxu0 %v1570
    %v1572 = vpop.f32.mrb[0].mxu0
    %v1573 = vadd.f32 %v1297, %v1572
    %v1574 = vpop.f32.mrb[0].mxu0
    %1575 = vdwg.mxu0
    %1576 = vmatprep.subr.mxu0 0.0
    %v1577 = vand.u32 %v1288, 4294901760
    %v1578 = vsub.f32 %v1288, %v1577
    %v1579 = vand.u32 %v1578, 4294901760
    %v1580 = vsub.f32 %v1578, %v1579
    %v1581 = vand.u32 %v1580, 4294901760
    %1582 = vmatpush1.msra.mxu0 %v1581
    %1583 = vmatprep.subr.mxu0 0.0
    %v1584 = vand.u32 %v1289, 4294901760
    %v1585 = vsub.f32 %v1289, %v1584
    %v1586 = vand.u32 %v1585, 4294901760
    %v1587 = vsub.f32 %v1585, %v1586
    %v1588 = vand.u32 %v1587, 4294901760
    %1589 = vmatpush1.msra.mxu0 %v1588
    %1590 = vmatprep.subr.mxu0 0.0
    %v1591 = vand.u32 %v1290, 4294901760
    %v1592 = vsub.f32 %v1290, %v1591
    %v1593 = vand.u32 %v1592, 4294901760
    %v1594 = vsub.f32 %v1592, %v1593
    %v1595 = vand.u32 %v1594, 4294901760
    %1596 = vmatpush1.msra.mxu0 %v1595
    %1597 = vmatprep.subr.mxu0 0.0
    %v1598 = vand.u32 %v1291, 4294901760
    %v1599 = vsub.f32 %v1291, %v1598
    %v1600 = vand.u32 %v1599, 4294901760
    %v1601 = vsub.f32 %v1599, %v1600
    %v1602 = vand.u32 %v1601, 4294901760
    %1603 = vmatpush1.msra.mxu0 %v1602
    %1604 = vmatprep.subr.mxu0 0.0
    %1605 = vmatpush1.msra.mxu0 0.0
    %1606 = vmatprep.subr.mxu0 0.0
    %1607 = vmatpush1.msra.mxu0 0.0
    %1608 = vmatprep.subr.mxu0 0.0
    %1609 = vmatpush1.msra.mxu0 0.0
    %1610 = vmatprep.subr.mxu0 0.0
    %1611 = vmatpush1.msra.mxu0 0.0
    %1612 = vmatprep.subr.mxu0 0.0
    %1613 = vmatpush1.msra.mxu0 0.0
    %1614 = vmatprep.subr.mxu0 0.0
    %1615 = vmatpush1.msra.mxu0 0.0
    %1616 = vmatprep.subr.mxu0 0.0
    %1617 = vmatpush1.msra.mxu0 0.0
    %1618 = vmatprep.subr.mxu0 0.0
    %1619 = vmatpush1.msra.mxu0 0.0
    %1620 = vmatprep.subr.mxu0 0.0
    %1621 = vmatpush1.msra.mxu0 0.0
    %1622 = vmatprep.subr.mxu0 0.0
    %1623 = vmatpush1.msra.mxu0 0.0
    %1624 = vmatprep.subr.mxu0 0.0
    %1625 = vmatpush1.msra.mxu0 0.0
    %1626 = vmatprep.subr.mxu0 0.0
    %1627 = vmatpush1.msra.mxu0 0.0
    %1628 = vmatprep.subr.mxu0 0.0
    %1629 = vmatpush1.msra.mxu0 0.0
    %1630 = vmatprep.subr.mxu0 0.0
    %1631 = vmatpush1.msra.mxu0 0.0
    %1632 = vmatprep.subr.mxu0 0.0
    %1633 = vmatpush1.msra.mxu0 0.0
    %1634 = vmatprep.subr.mxu0 0.0
    %1635 = vmatpush1.msra.mxu0 0.0
    %1636 = vmatprep.subr.mxu0 0.0
    %1637 = vmatpush1.msra.mxu0 0.0
    %1638 = vmatprep.subr.mxu0 0.0
    %1639 = vmatpush1.msra.mxu0 0.0
    %1640 = vmatprep.subr.mxu0 0.0
    %1641 = vmatpush1.msra.mxu0 0.0
    %1642 = vmatprep.subr.mxu0 0.0
    %1643 = vmatpush1.msra.mxu0 0.0
    %1644 = vmatprep.subr.mxu0 0.0
    %1645 = vmatpush1.msra.mxu0 0.0
    %1646 = vmatprep.subr.mxu0 0.0
    %1647 = vmatpush1.msra.mxu0 0.0
    %1648 = vmatprep.subr.mxu0 0.0
    %1649 = vmatpush1.msra.mxu0 0.0
    %1650 = vmatprep.subr.mxu0 0.0
    %1651 = vmatpush1.msra.mxu0 0.0
    %1652 = vmatprep.subr.mxu0 0.0
    %1653 = vmatpush1.msra.mxu0 0.0
    %1654 = vmatprep.subr.mxu0 0.0
    %1655 = vmatpush1.msra.mxu0 0.0
    %1656 = vmatprep.subr.mxu0 0.0
    %1657 = vmatpush1.msra.mxu0 0.0
    %1658 = vmatprep.subr.mxu0 0.0
    %1659 = vmatpush1.msra.mxu0 0.0
    %1660 = vmatprep.mubr.f32.mxu0 0.0
    %v1661 = vand.u32 %v1300, 4294901760
    %1662 = vmatmul.mubr.f32.gmra.mrb[0].mxu0 %v1661
    %v1663 = vpop.f32.mrb[0].mxu0
    %v1664 = vadd.f32 %v1423, %v1663
    %v1665 = vpop.f32.mrb[0].mxu0
    %1666 = vmatprep.mubr.f32.mxu0 0.0
    %v1667 = vand.u32 %v1303, 4294901760
    %1668 = vmatmul.mubr.f32.gmra.mrb[0].mxu0 %v1667
    %v1669 = vpop.f32.mrb[0].mxu0
    %v1670 = vadd.f32 %v1433, %v1669
    %v1671 = vpop.f32.mrb[0].mxu0
    %1672 = vmatprep.mubr.f32.mxu0 0.0
    %v1673 = vand.u32 %v1306, 4294901760
    %1674 = vmatmul.mubr.f32.gmra.mrb[0].mxu0 %v1673
    %v1675 = vpop.f32.mrb[0].mxu0
    %v1676 = vadd.f32 %v1443, %v1675
    %v1677 = vpop.f32.mrb[0].mxu0
    %1678 = vmatprep.mubr.f32.mxu0 0.0
    %v1679 = vand.u32 %v1309, 4294901760
    %1680 = vmatmul.mubr.f32.gmra.mrb[0].mxu0 %v1679
    %v1681 = vpop.f32.mrb[0].mxu0
    %v1682 = vadd.f32 %v1453, %v1681
    %v1683 = vpop.f32.mrb[0].mxu0
    %1684 = vmatprep.mubr.f32.mxu0 0.0
    %v1685 = vand.u32 %v1312, 4294901760
    %1686 = vmatmul.mubr.f32.gmra.mrb[0].mxu0 %v1685
    %v1687 = vpop.f32.mrb[0].mxu0
    %v1688 = vadd.f32 %v1463, %v1687
    %v1689 = vpop.f32.mrb[0].mxu0
    %1690 = vmatprep.mubr.f32.mxu0 0.0
    %v1691 = vand.u32 %v1315, 4294901760
    %1692 = vmatmul.mubr.f32.gmra.mrb[0].mxu0 %v1691
    %v1693 = vpop.f32.mrb[0].mxu0
    %v1694 = vadd.f32 %v1473, %v1693
    %v1695 = vpop.f32.mrb[0].mxu0
    %1696 = vmatprep.mubr.f32.mxu0 0.0
    %v1697 = vand.u32 %v1318, 4294901760
    %1698 = vmatmul.mubr.f32.gmra.mrb[0].mxu0 %v1697
    %v1699 = vpop.f32.mrb[0].mxu0
    %v1700 = vadd.f32 %v1483, %v1699
    %v1701 = vpop.f32.mrb[0].mxu0
    %1702 = vmatprep.mubr.f32.mxu0 0.0
    %v1703 = vand.u32 %v1321, 4294901760
    %1704 = vmatmul.mubr.f32.gmra.mrb[0].mxu0 %v1703
    %v1705 = vpop.f32.mrb[0].mxu0
    %v1706 = vadd.f32 %v1493, %v1705
    %v1707 = vpop.f32.mrb[0].mxu0
    %1708 = vmatprep.mubr.f32.mxu0 0.0
    %v1709 = vand.u32 %v1324, 4294901760
    %1710 = vmatmul.mubr.f32.gmra.mrb[0].mxu0 %v1709
    %v1711 = vpop.f32.mrb[0].mxu0
    %v1712 = vadd.f32 %v1503, %v1711
    %v1713 = vpop.f32.mrb[0].mxu0
    %1714 = vmatprep.mubr.f32.mxu0 0.0
    %v1715 = vand.u32 %v1327, 4294901760
    %1716 = vmatmul.mubr.f32.gmra.mrb[0].mxu0 %v1715
    %v1717 = vpop.f32.mrb[0].mxu0
    %v1718 = vadd.f32 %v1513, %v1717
    %v1719 = vpop.f32.mrb[0].mxu0
    %1720 = vmatprep.mubr.f32.mxu0 0.0
    %v1721 = vand.u32 %v1330, 4294901760
    %1722 = vmatmul.mubr.f32.gmra.mrb[0].mxu0 %v1721
    %v1723 = vpop.f32.mrb[0].mxu0
    %v1724 = vadd.f32 %v1523, %v1723
    %v1725 = vpop.f32.mrb[0].mxu0
    %1726 = vmatprep.mubr.f32.mxu0 0.0
    %v1727 = vand.u32 %v1333, 4294901760
    %1728 = vmatmul.mubr.f32.gmra.mrb[0].mxu0 %v1727
    %v1729 = vpop.f32.mrb[0].mxu0
    %v1730 = vadd.f32 %v1533, %v1729
    %v1731 = vpop.f32.mrb[0].mxu0
    %1732 = vmatprep.mubr.f32.mxu0 0.0
    %v1733 = vand.u32 %v1336, 4294901760
    %1734 = vmatmul.mubr.f32.gmra.mrb[0].mxu0 %v1733
    %v1735 = vpop.f32.mrb[0].mxu0
    %v1736 = vadd.f32 %v1543, %v1735
    %v1737 = vpop.f32.mrb[0].mxu0
    %1738 = vmatprep.mubr.f32.mxu0 0.0
    %v1739 = vand.u32 %v1339, 4294901760
    %1740 = vmatmul.mubr.f32.gmra.mrb[0].mxu0 %v1739
    %v1741 = vpop.f32.mrb[0].mxu0
    %v1742 = vadd.f32 %v1553, %v1741
    %v1743 = vpop.f32.mrb[0].mxu0
    %1744 = vmatprep.mubr.f32.mxu0 0.0
    %v1745 = vand.u32 %v1342, 4294901760
    %1746 = vmatmul.mubr.f32.gmra.mrb[0].mxu0 %v1745
    %v1747 = vpop.f32.mrb[0].mxu0
    %v1748 = vadd.f32 %v1563, %v1747
    %v1749 = vpop.f32.mrb[0].mxu0
    %1750 = vmatprep.mubr.f32.mxu0 0.0
    %v1751 = vand.u32 %v1345, 4294901760
    %1752 = vmatmul.mubr.f32.gmra.mrb[0].mxu0 %v1751
    %v1753 = vpop.f32.mrb[0].mxu0
    %v1754 = vadd.f32 %v1573, %v1753
    %v1755 = vpop.f32.mrb[0].mxu0
    %1756 = vdwg.mxu0
    %1757 = vmatprep.subr.mxu0 0.0
    %v1758 = vand.u32 %v1288, 4294901760
    %v1759 = vsub.f32 %v1288, %v1758
    %1760 = vmatpush1.msra.mxu0 %v1759
    %1761 = vmatprep.subr.mxu0 0.0
    %v1762 = vand.u32 %v1289, 4294901760
    %v1763 = vsub.f32 %v1289, %v1762
    %1764 = vmatpush1.msra.mxu0 %v1763
    %1765 = vmatprep.subr.mxu0 0.0
    %v1766 = vand.u32 %v1290, 4294901760
    %v1767 = vsub.f32 %v1290, %v1766
    %1768 = vmatpush1.msra.mxu0 %v1767
    %1769 = vmatprep.subr.mxu0 0.0
    %v1770 = vand.u32 %v1291, 4294901760
    %v1771 = vsub.f32 %v1291, %v1770
    %1772 = vmatpush1.msra.mxu0 %v1771
    %1773 = vmatprep.subr.mxu0 0.0
    %1774 = vmatpush1.msra.mxu0 0.0
    %1775 = vmatprep.subr.mxu0 0.0
    %1776 = vmatpush1.msra.mxu0 0.0
    %1777 = vmatprep.subr.mxu0 0.0
    %1778 = vmatpush1.msra.mxu0 0.0
    %1779 = vmatprep.subr.mxu0 0.0
    %1780 = vmatpush1.msra.mxu0 0.0
    %1781 = vmatprep.subr.mxu0 0.0
    %1782 = vmatpush1.msra.mxu0 0.0
    %1783 = vmatprep.subr.mxu0 0.0
    %1784 = vmatpush1.msra.mxu0 0.0
    %1785 = vmatprep.subr.mxu0 0.0
    %1786 = vmatpush1.msra.mxu0 0.0
    %1787 = vmatprep.subr.mxu0 0.0
    %1788 = vmatpush1.msra.mxu0 0.0
    %1789 = vmatprep.subr.mxu0 0.0
    %1790 = vmatpush1.msra.mxu0 0.0
    %1791 = vmatprep.subr.mxu0 0.0
    %1792 = vmatpush1.msra.mxu0 0.0
    %1793 = vmatprep.subr.mxu0 0.0
    %1794 = vmatpush1.msra.mxu0 0.0
    %1795 = vmatprep.subr.mxu0 0.0
    %1796 = vmatpush1.msra.mxu0 0.0
    %1797 = vmatprep.subr.mxu0 0.0
    %1798 = vmatpush1.msra.mxu0 0.0
    %1799 = vmatprep.subr.mxu0 0.0
    %1800 = vmatpush1.msra.mxu0 0.0
    %1801 = vmatprep.subr.mxu0 0.0
    %1802 = vmatpush1.msra.mxu0 0.0
    %1803 = vmatprep.subr.mxu0 0.0
    %1804 = vmatpush1.msra.mxu0 0.0
    %1805 = vmatprep.subr.mxu0 0.0
    %1806 = vmatpush1.msra.mxu0 0.0
    %1807 = vmatprep.subr.mxu0 0.0
    %1808 = vmatpush1.msra.mxu0 0.0
    %1809 = vmatprep.subr.mxu0 0.0
    %1810 = vmatpush1.msra.mxu0 0.0
    %1811 = vmatprep.subr.mxu0 0.0
    %1812 = vmatpush1.msra.mxu0 0.0
    %1813 = vmatprep.subr.mxu0 0.0
    %1814 = vmatpush1.msra.mxu0 0.0
    %1815 = vmatprep.subr.mxu0 0.0
    %1816 = vmatpush1.msra.mxu0 0.0
    %1817 = vmatprep.subr.mxu0 0.0
    %1818 = vmatpush1.msra.mxu0 0.0
    %1819 = vmatprep.subr.mxu0 0.0
    %1820 = vmatpush1.msra.mxu0 0.0
    %1821 = vmatprep.subr.mxu0 0.0
    %1822 = vmatpush1.msra.mxu0 0.0
    %1823 = vmatprep.subr.mxu0 0.0
    %1824 = vmatpush1.msra.mxu0 0.0
    %1825 = vmatprep.subr.mxu0 0.0
    %1826 = vmatpush1.msra.mxu0 0.0
    %1827 = vmatprep.subr.mxu0 0.0
    %1828 = vmatpush1.msra.mxu0 0.0
    %1829 = vmatprep.mubr.f32.mxu0 0.0
    %v1830 = vand.u32 %v1300, 4294901760
    %v1831 = vsub.f32 %v1300, %v1830
    %1832 = vmatmul.mubr.f32.gmra.mrb[0].mxu0 %v1831
    %v1833 = vpop.f32.mrb[0].mxu0
    %v1834 = vadd.f32 %v1664, %v1833
    %v1835 = vpop.f32.mrb[0].mxu0
    %1836 = vmatprep.mubr.f32.mxu0 0.0
    %v1837 = vand.u32 %v1303, 4294901760
    %v1838 = vsub.f32 %v1303, %v1837
    %1839 = vmatmul.mubr.f32.gmra.mrb[0].mxu0 %v1838
    %v1840 = vpop.f32.mrb[0].mxu0
    %v1841 = vadd.f32 %v1670, %v1840
    %v1842 = vpop.f32.mrb[0].mxu0
    %1843 = vmatprep.mubr.f32.mxu0 0.0
    %v1844 = vand.u32 %v1306, 4294901760
    %v1845 = vsub.f32 %v1306, %v1844
    %1846 = vmatmul.mubr.f32.gmra.mrb[0].mxu0 %v1845
    %v1847 = vpop.f32.mrb[0].mxu0
    %v1848 = vadd.f32 %v1676, %v1847
    %v1849 = vpop.f32.mrb[0].mxu0
    %1850 = vmatprep.mubr.f32.mxu0 0.0
    %v1851 = vand.u32 %v1309, 4294901760
    %v1852 = vsub.f32 %v1309, %v1851
    %1853 = vmatmul.mubr.f32.gmra.mrb[0].mxu0 %v1852
    %v1854 = vpop.f32.mrb[0].mxu0
    %v1855 = vadd.f32 %v1682, %v1854
    %v1856 = vpop.f32.mrb[0].mxu0
    %1857 = vmatprep.mubr.f32.mxu0 0.0
    %v1858 = vand.u32 %v1312, 4294901760
    %v1859 = vsub.f32 %v1312, %v1858
    %1860 = vmatmul.mubr.f32.gmra.mrb[0].mxu0 %v1859
    %v1861 = vpop.f32.mrb[0].mxu0
    %v1862 = vadd.f32 %v1688, %v1861
    %v1863 = vpop.f32.mrb[0].mxu0
    %1864 = vmatprep.mubr.f32.mxu0 0.0
    %v1865 = vand.u32 %v1315, 4294901760
    %v1866 = vsub.f32 %v1315, %v1865
    %1867 = vmatmul.mubr.f32.gmra.mrb[0].mxu0 %v1866
    %v1868 = vpop.f32.mrb[0].mxu0
    %v1869 = vadd.f32 %v1694, %v1868
    %v1870 = vpop.f32.mrb[0].mxu0
    %1871 = vmatprep.mubr.f32.mxu0 0.0
    %v1872 = vand.u32 %v1318, 4294901760
    %v1873 = vsub.f32 %v1318, %v1872
    %1874 = vmatmul.mubr.f32.gmra.mrb[0].mxu0 %v1873
    %v1875 = vpop.f32.mrb[0].mxu0
    %v1876 = vadd.f32 %v1700, %v1875
    %v1877 = vpop.f32.mrb[0].mxu0
    %1878 = vmatprep.mubr.f32.mxu0 0.0
    %v1879 = vand.u32 %v1321, 4294901760
    %v1880 = vsub.f32 %v1321, %v1879
    %1881 = vmatmul.mubr.f32.gmra.mrb[0].mxu0 %v1880
    %v1882 = vpop.f32.mrb[0].mxu0
    %v1883 = vadd.f32 %v1706, %v1882
    %v1884 = vpop.f32.mrb[0].mxu0
    %1885 = vmatprep.mubr.f32.mxu0 0.0
    %v1886 = vand.u32 %v1324, 4294901760
    %v1887 = vsub.f32 %v1324, %v1886
    %1888 = vmatmul.mubr.f32.gmra.mrb[0].mxu0 %v1887
    %v1889 = vpop.f32.mrb[0].mxu0
    %v1890 = vadd.f32 %v1712, %v1889
    %v1891 = vpop.f32.mrb[0].mxu0
    %1892 = vmatprep.mubr.f32.mxu0 0.0
    %v1893 = vand.u32 %v1327, 4294901760
    %v1894 = vsub.f32 %v1327, %v1893
    %1895 = vmatmul.mubr.f32.gmra.mrb[0].mxu0 %v1894
    %v1896 = vpop.f32.mrb[0].mxu0
    %v1897 = vadd.f32 %v1718, %v1896
    %v1898 = vpop.f32.mrb[0].mxu0
    %1899 = vmatprep.mubr.f32.mxu0 0.0
    %v1900 = vand.u32 %v1330, 4294901760
    %v1901 = vsub.f32 %v1330, %v1900
    %1902 = vmatmul.mubr.f32.gmra.mrb[0].mxu0 %v1901
    %v1903 = vpop.f32.mrb[0].mxu0
    %v1904 = vadd.f32 %v1724, %v1903
    %v1905 = vpop.f32.mrb[0].mxu0
    %1906 = vmatprep.mubr.f32.mxu0 0.0
    %v1907 = vand.u32 %v1333, 4294901760
    %v1908 = vsub.f32 %v1333, %v1907
    %1909 = vmatmul.mubr.f32.gmra.mrb[0].mxu0 %v1908
    %v1910 = vpop.f32.mrb[0].mxu0
    %v1911 = vadd.f32 %v1730, %v1910
    %v1912 = vpop.f32.mrb[0].mxu0
    %1913 = vmatprep.mubr.f32.mxu0 0.0
    %v1914 = vand.u32 %v1336, 4294901760
    %v1915 = vsub.f32 %v1336, %v1914
    %1916 = vmatmul.mubr.f32.gmra.mrb[0].mxu0 %v1915
    %v1917 = vpop.f32.mrb[0].mxu0
    %v1918 = vadd.f32 %v1736, %v1917
    %v1919 = vpop.f32.mrb[0].mxu0
    %1920 = vmatprep.mubr.f32.mxu0 0.0
    %v1921 = vand.u32 %v1339, 4294901760
    %v1922 = vsub.f32 %v1339, %v1921
    %1923 = vmatmul.mubr.f32.gmra.mrb[0].mxu0 %v1922
    %v1924 = vpop.f32.mrb[0].mxu0
    %v1925 = vadd.f32 %v1742, %v1924
    %v1926 = vpop.f32.mrb[0].mxu0
    %1927 = vmatprep.mubr.f32.mxu0 0.0
    %v1928 = vand.u32 %v1342, 4294901760
    %v1929 = vsub.f32 %v1342, %v1928
    %1930 = vmatmul.mubr.f32.gmra.mrb[0].mxu0 %v1929
    %v1931 = vpop.f32.mrb[0].mxu0
    %v1932 = vadd.f32 %v1748, %v1931
    %v1933 = vpop.f32.mrb[0].mxu0
    %1934 = vmatprep.mubr.f32.mxu0 0.0
    %v1935 = vand.u32 %v1345, 4294901760
    %v1936 = vsub.f32 %v1345, %v1935
    %1937 = vmatmul.mubr.f32.gmra.mrb[0].mxu0 %v1936
    %v1938 = vpop.f32.mrb[0].mxu0
    %v1939 = vadd.f32 %v1754, %v1938
    %v1940 = vpop.f32.mrb[0].mxu0
    %1941 = vdwg.mxu0
    %1942 = vmatprep.subr.mxu0 0.0
    %v1943 = vand.u32 %v1288, 4294901760
    %1944 = vmatpush1.msra.mxu0 %v1943
    %1945 = vmatprep.subr.mxu0 0.0
    %v1946 = vand.u32 %v1289, 4294901760
    %1947 = vmatpush1.msra.mxu0 %v1946
    %1948 = vmatprep.subr.mxu0 0.0
    %v1949 = vand.u32 %v1290, 4294901760
    %1950 = vmatpush1.msra.mxu0 %v1949
    %1951 = vmatprep.subr.mxu0 0.0
    %v1952 = vand.u32 %v1291, 4294901760
    %1953 = vmatpush1.msra.mxu0 %v1952
    %1954 = vmatprep.subr.mxu0 0.0
    %1955 = vmatpush1.msra.mxu0 0.0
    %1956 = vmatprep.subr.mxu0 0.0
    %1957 = vmatpush1.msra.mxu0 0.0
    %1958 = vmatprep.subr.mxu0 0.0
    %1959 = vmatpush1.msra.mxu0 0.0
    %1960 = vmatprep.subr.mxu0 0.0
    %1961 = vmatpush1.msra.mxu0 0.0
    %1962 = vmatprep.subr.mxu0 0.0
    %1963 = vmatpush1.msra.mxu0 0.0
    %1964 = vmatprep.subr.mxu0 0.0
    %1965 = vmatpush1.msra.mxu0 0.0
    %1966 = vmatprep.subr.mxu0 0.0
    %1967 = vmatpush1.msra.mxu0 0.0
    %1968 = vmatprep.subr.mxu0 0.0
    %1969 = vmatpush1.msra.mxu0 0.0
    %1970 = vmatprep.subr.mxu0 0.0
    %1971 = vmatpush1.msra.mxu0 0.0
    %1972 = vmatprep.subr.mxu0 0.0
    %1973 = vmatpush1.msra.mxu0 0.0
    %1974 = vmatprep.subr.mxu0 0.0
    %1975 = vmatpush1.msra.mxu0 0.0
    %1976 = vmatprep.subr.mxu0 0.0
    %1977 = vmatpush1.msra.mxu0 0.0
    %1978 = vmatprep.subr.mxu0 0.0
    %1979 = vmatpush1.msra.mxu0 0.0
    %1980 = vmatprep.subr.mxu0 0.0
    %1981 = vmatpush1.msra.mxu0 0.0
    %1982 = vmatprep.subr.mxu0 0.0
    %1983 = vmatpush1.msra.mxu0 0.0
    %1984 = vmatprep.subr.mxu0 0.0
    %1985 = vmatpush1.msra.mxu0 0.0
    %1986 = vmatprep.subr.mxu0 0.0
    %1987 = vmatpush1.msra.mxu0 0.0
    %1988 = vmatprep.subr.mxu0 0.0
    %1989 = vmatpush1.msra.mxu0 0.0
    %1990 = vmatprep.subr.mxu0 0.0
    %1991 = vmatpush1.msra.mxu0 0.0
    %1992 = vmatprep.subr.mxu0 0.0
    %1993 = vmatpush1.msra.mxu0 0.0
    %1994 = vmatprep.subr.mxu0 0.0
    %1995 = vmatpush1.msra.mxu0 0.0
    %1996 = vmatprep.subr.mxu0 0.0
    %1997 = vmatpush1.msra.mxu0 0.0
    %1998 = vmatprep.subr.mxu0 0.0
    %1999 = vmatpush1.msra.mxu0 0.0
    %2000 = vmatprep.subr.mxu0 0.0
    %2001 = vmatpush1.msra.mxu0 0.0
    %2002 = vmatprep.subr.mxu0 0.0
    %2003 = vmatpush1.msra.mxu0 0.0
    %2004 = vmatprep.subr.mxu0 0.0
    %2005 = vmatpush1.msra.mxu0 0.0
    %2006 = vmatprep.subr.mxu0 0.0
    %2007 = vmatpush1.msra.mxu0 0.0
    %2008 = vmatprep.subr.mxu0 0.0
    %2009 = vmatpush1.msra.mxu0 0.0
    %2010 = vmatprep.mubr.f32.mxu0 0.0
    %v2011 = vand.u32 %v1300, 4294901760
    %v2012 = vsub.f32 %v1300, %v2011
    %v2013 = vand.u32 %v2012, 4294901760
    %2014 = vmatmul.mubr.f32.gmra.mrb[0].mxu0 %v2013
    %v2015 = vpop.f32.mrb[0].mxu0
    %v2016 = vadd.f32 %v1834, %v2015
    %v2017 = vpop.f32.mrb[0].mxu0
    %2018 = vmatprep.mubr.f32.mxu0 0.0
    %v2019 = vand.u32 %v1303, 4294901760
    %v2020 = vsub.f32 %v1303, %v2019
    %v2021 = vand.u32 %v2020, 4294901760
    %2022 = vmatmul.mubr.f32.gmra.mrb[0].mxu0 %v2021
    %v2023 = vpop.f32.mrb[0].mxu0
    %v2024 = vadd.f32 %v1841, %v2023
    %v2025 = vpop.f32.mrb[0].mxu0
    %2026 = vmatprep.mubr.f32.mxu0 0.0
    %v2027 = vand.u32 %v1306, 4294901760
    %v2028 = vsub.f32 %v1306, %v2027
    %v2029 = vand.u32 %v2028, 4294901760
    %2030 = vmatmul.mubr.f32.gmra.mrb[0].mxu0 %v2029
    %v2031 = vpop.f32.mrb[0].mxu0
    %v2032 = vadd.f32 %v1848, %v2031
    %v2033 = vpop.f32.mrb[0].mxu0
    %2034 = vmatprep.mubr.f32.mxu0 0.0
    %v2035 = vand.u32 %v1309, 4294901760
    %v2036 = vsub.f32 %v1309, %v2035
    %v2037 = vand.u32 %v2036, 4294901760
    %2038 = vmatmul.mubr.f32.gmra.mrb[0].mxu0 %v2037
    %v2039 = vpop.f32.mrb[0].mxu0
    %v2040 = vadd.f32 %v1855, %v2039
    %v2041 = vpop.f32.mrb[0].mxu0
    %2042 = vmatprep.mubr.f32.mxu0 0.0
    %v2043 = vand.u32 %v1312, 4294901760
    %v2044 = vsub.f32 %v1312, %v2043
    %v2045 = vand.u32 %v2044, 4294901760
    %2046 = vmatmul.mubr.f32.gmra.mrb[0].mxu0 %v2045
    %v2047 = vpop.f32.mrb[0].mxu0
    %v2048 = vadd.f32 %v1862, %v2047
    %v2049 = vpop.f32.mrb[0].mxu0
    %2050 = vmatprep.mubr.f32.mxu0 0.0
    %v2051 = vand.u32 %v1315, 4294901760
    %v2052 = vsub.f32 %v1315, %v2051
    %v2053 = vand.u32 %v2052, 4294901760
    %2054 = vmatmul.mubr.f32.gmra.mrb[0].mxu0 %v2053
    %v2055 = vpop.f32.mrb[0].mxu0
    %v2056 = vadd.f32 %v1869, %v2055
    %v2057 = vpop.f32.mrb[0].mxu0
    %2058 = vmatprep.mubr.f32.mxu0 0.0
    %v2059 = vand.u32 %v1318, 4294901760
    %v2060 = vsub.f32 %v1318, %v2059
    %v2061 = vand.u32 %v2060, 4294901760
    %2062 = vmatmul.mubr.f32.gmra.mrb[0].mxu0 %v2061
    %v2063 = vpop.f32.mrb[0].mxu0
    %v2064 = vadd.f32 %v1876, %v2063
    %v2065 = vpop.f32.mrb[0].mxu0
    %2066 = vmatprep.mubr.f32.mxu0 0.0
    %v2067 = vand.u32 %v1321, 4294901760
    %v2068 = vsub.f32 %v1321, %v2067
    %v2069 = vand.u32 %v2068, 4294901760
    %2070 = vmatmul.mubr.f32.gmra.mrb[0].mxu0 %v2069
    %v2071 = vpop.f32.mrb[0].mxu0
    %v2072 = vadd.f32 %v1883, %v2071
    %v2073 = vpop.f32.mrb[0].mxu0
    %2074 = vmatprep.mubr.f32.mxu0 0.0
    %v2075 = vand.u32 %v1324, 4294901760
    %v2076 = vsub.f32 %v1324, %v2075
    %v2077 = vand.u32 %v2076, 4294901760
    %2078 = vmatmul.mubr.f32.gmra.mrb[0].mxu0 %v2077
    %v2079 = vpop.f32.mrb[0].mxu0
    %v2080 = vadd.f32 %v1890, %v2079
    %v2081 = vpop.f32.mrb[0].mxu0
    %2082 = vmatprep.mubr.f32.mxu0 0.0
    %v2083 = vand.u32 %v1327, 4294901760
    %v2084 = vsub.f32 %v1327, %v2083
    %v2085 = vand.u32 %v2084, 4294901760
    %2086 = vmatmul.mubr.f32.gmra.mrb[0].mxu0 %v2085
    %v2087 = vpop.f32.mrb[0].mxu0
    %v2088 = vadd.f32 %v1897, %v2087
    %v2089 = vpop.f32.mrb[0].mxu0
    %2090 = vmatprep.mubr.f32.mxu0 0.0
    %v2091 = vand.u32 %v1330, 4294901760
    %v2092 = vsub.f32 %v1330, %v2091
    %v2093 = vand.u32 %v2092, 4294901760
    %2094 = vmatmul.mubr.f32.gmra.mrb[0].mxu0 %v2093
    %v2095 = vpop.f32.mrb[0].mxu0
    %v2096 = vadd.f32 %v1904, %v2095
    %v2097 = vpop.f32.mrb[0].mxu0
    %2098 = vmatprep.mubr.f32.mxu0 0.0
    %v2099 = vand.u32 %v1333, 4294901760
    %v2100 = vsub.f32 %v1333, %v2099
    %v2101 = vand.u32 %v2100, 4294901760
    %2102 = vmatmul.mubr.f32.gmra.mrb[0].mxu0 %v2101
    %v2103 = vpop.f32.mrb[0].mxu0
    %v2104 = vadd.f32 %v1911, %v2103
    %v2105 = vpop.f32.mrb[0].mxu0
    %2106 = vmatprep.mubr.f32.mxu0 0.0
    %v2107 = vand.u32 %v1336, 4294901760
    %v2108 = vsub.f32 %v1336, %v2107
    %v2109 = vand.u32 %v2108, 4294901760
    %2110 = vmatmul.mubr.f32.gmra.mrb[0].mxu0 %v2109
    %v2111 = vpop.f32.mrb[0].mxu0
    %v2112 = vadd.f32 %v1918, %v2111
    %v2113 = vpop.f32.mrb[0].mxu0
    %2114 = vmatprep.mubr.f32.mxu0 0.0
    %v2115 = vand.u32 %v1339, 4294901760
    %v2116 = vsub.f32 %v1339, %v2115
    %v2117 = vand.u32 %v2116, 4294901760
    %2118 = vmatmul.mubr.f32.gmra.mrb[0].mxu0 %v2117
    %v2119 = vpop.f32.mrb[0].mxu0
    %v2120 = vadd.f32 %v1925, %v2119
    %v2121 = vpop.f32.mrb[0].mxu0
    %2122 = vmatprep.mubr.f32.mxu0 0.0
    %v2123 = vand.u32 %v1342, 4294901760
    %v2124 = vsub.f32 %v1342, %v2123
    %v2125 = vand.u32 %v2124, 4294901760
    %2126 = vmatmul.mubr.f32.gmra.mrb[0].mxu0 %v2125
    %v2127 = vpop.f32.mrb[0].mxu0
    %v2128 = vadd.f32 %v1932, %v2127
    %v2129 = vpop.f32.mrb[0].mxu0
    %2130 = vmatprep.mubr.f32.mxu0 0.0
    %v2131 = vand.u32 %v1345, 4294901760
    %v2132 = vsub.f32 %v1345, %v2131
    %v2133 = vand.u32 %v2132, 4294901760
    %2134 = vmatmul.mubr.f32.gmra.mrb[0].mxu0 %v2133
    %v2135 = vpop.f32.mrb[0].mxu0
    %v2136 = vadd.f32 %v1939, %v2135
    %v2137 = vpop.f32.mrb[0].mxu0
    %2138 = vdwg.mxu0
    %2139 = vmatprep.subr.mxu0 0.0
    %v2140 = vand.u32 %v1288, 4294901760
    %v2141 = vsub.f32 %v1288, %v2140
    %v2142 = vand.u32 %v2141, 4294901760
    %2143 = vmatpush1.msra.mxu0 %v2142
    %2144 = vmatprep.subr.mxu0 0.0
    %v2145 = vand.u32 %v1289, 4294901760
    %v2146 = vsub.f32 %v1289, %v2145
    %v2147 = vand.u32 %v2146, 4294901760
    %2148 = vmatpush1.msra.mxu0 %v2147
    %2149 = vmatprep.subr.mxu0 0.0
    %v2150 = vand.u32 %v1290, 4294901760
    %v2151 = vsub.f32 %v1290, %v2150
    %v2152 = vand.u32 %v2151, 4294901760
    %2153 = vmatpush1.msra.mxu0 %v2152
    %2154 = vmatprep.subr.mxu0 0.0
    %v2155 = vand.u32 %v1291, 4294901760
    %v2156 = vsub.f32 %v1291, %v2155
    %v2157 = vand.u32 %v2156, 4294901760
    %2158 = vmatpush1.msra.mxu0 %v2157
    %2159 = vmatprep.subr.mxu0 0.0
    %2160 = vmatpush1.msra.mxu0 0.0
    %2161 = vmatprep.subr.mxu0 0.0
    %2162 = vmatpush1.msra.mxu0 0.0
    %2163 = vmatprep.subr.mxu0 0.0
    %2164 = vmatpush1.msra.mxu0 0.0
    %2165 = vmatprep.subr.mxu0 0.0
    %2166 = vmatpush1.msra.mxu0 0.0
    %2167 = vmatprep.subr.mxu0 0.0
    %2168 = vmatpush1.msra.mxu0 0.0
    %2169 = vmatprep.subr.mxu0 0.0
    %2170 = vmatpush1.msra.mxu0 0.0
    %2171 = vmatprep.subr.mxu0 0.0
    %2172 = vmatpush1.msra.mxu0 0.0
    %2173 = vmatprep.subr.mxu0 0.0
    %2174 = vmatpush1.msra.mxu0 0.0
    %2175 = vmatprep.subr.mxu0 0.0
    %2176 = vmatpush1.msra.mxu0 0.0
    %2177 = vmatprep.subr.mxu0 0.0
    %2178 = vmatpush1.msra.mxu0 0.0
    %2179 = vmatprep.subr.mxu0 0.0
    %2180 = vmatpush1.msra.mxu0 0.0
    %2181 = vmatprep.subr.mxu0 0.0
    %2182 = vmatpush1.msra.mxu0 0.0
    %2183 = vmatprep.subr.mxu0 0.0
    %2184 = vmatpush1.msra.mxu0 0.0
    %2185 = vmatprep.subr.mxu0 0.0
    %2186 = vmatpush1.msra.mxu0 0.0
    %2187 = vmatprep.subr.mxu0 0.0
    %2188 = vmatpush1.msra.mxu0 0.0
    %2189 = vmatprep.subr.mxu0 0.0
    %2190 = vmatpush1.msra.mxu0 0.0
    %2191 = vmatprep.subr.mxu0 0.0
    %2192 = vmatpush1.msra.mxu0 0.0
    %2193 = vmatprep.subr.mxu0 0.0
    %2194 = vmatpush1.msra.mxu0 0.0
    %2195 = vmatprep.subr.mxu0 0.0
    %2196 = vmatpush1.msra.mxu0 0.0
    %2197 = vmatprep.subr.mxu0 0.0
    %2198 = vmatpush1.msra.mxu0 0.0
    %2199 = vmatprep.subr.mxu0 0.0
    %2200 = vmatpush1.msra.mxu0 0.0
    %2201 = vmatprep.subr.mxu0 0.0
    %2202 = vmatpush1.msra.mxu0 0.0
    %2203 = vmatprep.subr.mxu0 0.0
    %2204 = vmatpush1.msra.mxu0 0.0
    %2205 = vmatprep.subr.mxu0 0.0
    %2206 = vmatpush1.msra.mxu0 0.0
    %2207 = vmatprep.subr.mxu0 0.0
    %2208 = vmatpush1.msra.mxu0 0.0
    %2209 = vmatprep.subr.mxu0 0.0
    %2210 = vmatpush1.msra.mxu0 0.0
    %2211 = vmatprep.subr.mxu0 0.0
    %2212 = vmatpush1.msra.mxu0 0.0
    %2213 = vmatprep.subr.mxu0 0.0
    %2214 = vmatpush1.msra.mxu0 0.0
    %2215 = vmatprep.mubr.f32.mxu0 0.0
    %v2216 = vand.u32 %v1300, 4294901760
    %2217 = vmatmul.mubr.f32.gmra.mrb[0].mxu0 %v2216
    %v2218 = vpop.f32.mrb[0].mxu0
    %v2219 = vadd.f32 %v2016, %v2218
    %v2220 = vpop.f32.mrb[0].mxu0
    %2221 = vmatprep.mubr.f32.mxu0 0.0
    %v2222 = vand.u32 %v1303, 4294901760
    %2223 = vmatmul.mubr.f32.gmra.mrb[0].mxu0 %v2222
    %v2224 = vpop.f32.mrb[0].mxu0
    %v2225 = vadd.f32 %v2024, %v2224
    %v2226 = vpop.f32.mrb[0].mxu0
    %2227 = vmatprep.mubr.f32.mxu0 0.0
    %v2228 = vand.u32 %v1306, 4294901760
    %2229 = vmatmul.mubr.f32.gmra.mrb[0].mxu0 %v2228
    %v2230 = vpop.f32.mrb[0].mxu0
    %v2231 = vadd.f32 %v2032, %v2230
    %v2232 = vpop.f32.mrb[0].mxu0
    %2233 = vmatprep.mubr.f32.mxu0 0.0
    %v2234 = vand.u32 %v1309, 4294901760
    %2235 = vmatmul.mubr.f32.gmra.mrb[0].mxu0 %v2234
    %v2236 = vpop.f32.mrb[0].mxu0
    %v2237 = vadd.f32 %v2040, %v2236
    %v2238 = vpop.f32.mrb[0].mxu0
    %2239 = vmatprep.mubr.f32.mxu0 0.0
    %v2240 = vand.u32 %v1312, 4294901760
    %2241 = vmatmul.mubr.f32.gmra.mrb[0].mxu0 %v2240
    %v2242 = vpop.f32.mrb[0].mxu0
    %v2243 = vadd.f32 %v2048, %v2242
    %v2244 = vpop.f32.mrb[0].mxu0
    %2245 = vmatprep.mubr.f32.mxu0 0.0
    %v2246 = vand.u32 %v1315, 4294901760
    %2247 = vmatmul.mubr.f32.gmra.mrb[0].mxu0 %v2246
    %v2248 = vpop.f32.mrb[0].mxu0
    %v2249 = vadd.f32 %v2056, %v2248
    %v2250 = vpop.f32.mrb[0].mxu0
    %2251 = vmatprep.mubr.f32.mxu0 0.0
    %v2252 = vand.u32 %v1318, 4294901760
    %2253 = vmatmul.mubr.f32.gmra.mrb[0].mxu0 %v2252
    %v2254 = vpop.f32.mrb[0].mxu0
    %v2255 = vadd.f32 %v2064, %v2254
    %v2256 = vpop.f32.mrb[0].mxu0
    %2257 = vmatprep.mubr.f32.mxu0 0.0
    %v2258 = vand.u32 %v1321, 4294901760
    %2259 = vmatmul.mubr.f32.gmra.mrb[0].mxu0 %v2258
    %v2260 = vpop.f32.mrb[0].mxu0
    %v2261 = vadd.f32 %v2072, %v2260
    %v2262 = vpop.f32.mrb[0].mxu0
    %2263 = vmatprep.mubr.f32.mxu0 0.0
    %v2264 = vand.u32 %v1324, 4294901760
    %2265 = vmatmul.mubr.f32.gmra.mrb[0].mxu0 %v2264
    %v2266 = vpop.f32.mrb[0].mxu0
    %v2267 = vadd.f32 %v2080, %v2266
    %v2268 = vpop.f32.mrb[0].mxu0
    %2269 = vmatprep.mubr.f32.mxu0 0.0
    %v2270 = vand.u32 %v1327, 4294901760
    %2271 = vmatmul.mubr.f32.gmra.mrb[0].mxu0 %v2270
    %v2272 = vpop.f32.mrb[0].mxu0
    %v2273 = vadd.f32 %v2088, %v2272
    %v2274 = vpop.f32.mrb[0].mxu0
    %2275 = vmatprep.mubr.f32.mxu0 0.0
    %v2276 = vand.u32 %v1330, 4294901760
    %2277 = vmatmul.mubr.f32.gmra.mrb[0].mxu0 %v2276
    %v2278 = vpop.f32.mrb[0].mxu0
    %v2279 = vadd.f32 %v2096, %v2278
    %v2280 = vpop.f32.mrb[0].mxu0
    %2281 = vmatprep.mubr.f32.mxu0 0.0
    %v2282 = vand.u32 %v1333, 4294901760
    %2283 = vmatmul.mubr.f32.gmra.mrb[0].mxu0 %v2282
    %v2284 = vpop.f32.mrb[0].mxu0
    %v2285 = vadd.f32 %v2104, %v2284
    %v2286 = vpop.f32.mrb[0].mxu0
    %2287 = vmatprep.mubr.f32.mxu0 0.0
    %v2288 = vand.u32 %v1336, 4294901760
    %2289 = vmatmul.mubr.f32.gmra.mrb[0].mxu0 %v2288
    %v2290 = vpop.f32.mrb[0].mxu0
    %v2291 = vadd.f32 %v2112, %v2290
    %v2292 = vpop.f32.mrb[0].mxu0
    %2293 = vmatprep.mubr.f32.mxu0 0.0
    %v2294 = vand.u32 %v1339, 4294901760
    %2295 = vmatmul.mubr.f32.gmra.mrb[0].mxu0 %v2294
    %v2296 = vpop.f32.mrb[0].mxu0
    %v2297 = vadd.f32 %v2120, %v2296
    %v2298 = vpop.f32.mrb[0].mxu0
    %2299 = vmatprep.mubr.f32.mxu0 0.0
    %v2300 = vand.u32 %v1342, 4294901760
    %2301 = vmatmul.mubr.f32.gmra.mrb[0].mxu0 %v2300
    %v2302 = vpop.f32.mrb[0].mxu0
    %v2303 = vadd.f32 %v2128, %v2302
    %v2304 = vpop.f32.mrb[0].mxu0
    %2305 = vmatprep.mubr.f32.mxu0 0.0
    %v2306 = vand.u32 %v1345, 4294901760
    %2307 = vmatmul.mubr.f32.gmra.mrb[0].mxu0 %v2306
    %v2308 = vpop.f32.mrb[0].mxu0
    %v2309 = vadd.f32 %v2136, %v2308
    %v2310 = vpop.f32.mrb[0].mxu0
    %2311 = vdwg.mxu0
    %2312 = vmatprep.subr.mxu0 0.0
    %v2313 = vand.u32 %v1288, 4294901760
    %2314 = vmatpush1.msra.mxu0 %v2313
    %2315 = vmatprep.subr.mxu0 0.0
    %v2316 = vand.u32 %v1289, 4294901760
    %2317 = vmatpush1.msra.mxu0 %v2316
    %2318 = vmatprep.subr.mxu0 0.0
    %v2319 = vand.u32 %v1290, 4294901760
    %2320 = vmatpush1.msra.mxu0 %v2319
    %2321 = vmatprep.subr.mxu0 0.0
    %v2322 = vand.u32 %v1291, 4294901760
    %2323 = vmatpush1.msra.mxu0 %v2322
    %2324 = vmatprep.subr.mxu0 0.0
    %2325 = vmatpush1.msra.mxu0 0.0
    %2326 = vmatprep.subr.mxu0 0.0
    %2327 = vmatpush1.msra.mxu0 0.0
    %2328 = vmatprep.subr.mxu0 0.0
    %2329 = vmatpush1.msra.mxu0 0.0
    %2330 = vmatprep.subr.mxu0 0.0
    %2331 = vmatpush1.msra.mxu0 0.0
    %2332 = vmatprep.subr.mxu0 0.0
    %2333 = vmatpush1.msra.mxu0 0.0
    %2334 = vmatprep.subr.mxu0 0.0
    %2335 = vmatpush1.msra.mxu0 0.0
    %2336 = vmatprep.subr.mxu0 0.0
    %2337 = vmatpush1.msra.mxu0 0.0
    %2338 = vmatprep.subr.mxu0 0.0
    %2339 = vmatpush1.msra.mxu0 0.0
    %2340 = vmatprep.subr.mxu0 0.0
    %2341 = vmatpush1.msra.mxu0 0.0
    %2342 = vmatprep.subr.mxu0 0.0
    %2343 = vmatpush1.msra.mxu0 0.0
    %2344 = vmatprep.subr.mxu0 0.0
    %2345 = vmatpush1.msra.mxu0 0.0
    %2346 = vmatprep.subr.mxu0 0.0
    %2347 = vmatpush1.msra.mxu0 0.0
    %2348 = vmatprep.subr.mxu0 0.0
    %2349 = vmatpush1.msra.mxu0 0.0
    %2350 = vmatprep.subr.mxu0 0.0
    %2351 = vmatpush1.msra.mxu0 0.0
    %2352 = vmatprep.subr.mxu0 0.0
    %2353 = vmatpush1.msra.mxu0 0.0
    %2354 = vmatprep.subr.mxu0 0.0
    %2355 = vmatpush1.msra.mxu0 0.0
    %2356 = vmatprep.subr.mxu0 0.0
    %2357 = vmatpush1.msra.mxu0 0.0
    %2358 = vmatprep.subr.mxu0 0.0
    %2359 = vmatpush1.msra.mxu0 0.0
    %2360 = vmatprep.subr.mxu0 0.0
    %2361 = vmatpush1.msra.mxu0 0.0
    %2362 = vmatprep.subr.mxu0 0.0
    %2363 = vmatpush1.msra.mxu0 0.0
    %2364 = vmatprep.subr.mxu0 0.0
    %2365 = vmatpush1.msra.mxu0 0.0
    %2366 = vmatprep.subr.mxu0 0.0
    %2367 = vmatpush1.msra.mxu0 0.0
    %2368 = vmatprep.subr.mxu0 0.0
    %2369 = vmatpush1.msra.mxu0 0.0
    %2370 = vmatprep.subr.mxu0 0.0
    %2371 = vmatpush1.msra.mxu0 0.0
    %2372 = vmatprep.subr.mxu0 0.0
    %2373 = vmatpush1.msra.mxu0 0.0
    %2374 = vmatprep.subr.mxu0 0.0
    %2375 = vmatpush1.msra.mxu0 0.0
    %2376 = vmatprep.subr.mxu0 0.0
    %2377 = vmatpush1.msra.mxu0 0.0
    %2378 = vmatprep.subr.mxu0 0.0
    %2379 = vmatpush1.msra.mxu0 0.0
    %2380 = vmatprep.mubr.f32.mxu0 0.0
    %v2381 = vand.u32 %v1300, 4294901760
    %2382 = vmatmul.mubr.f32.gmra.mrb[0].mxu0 %v2381
    %v2383 = vpop.f32.mrb[0].mxu0
    %v2384 = vadd.f32 %v2219, %v2383
    %v2385 = vpop.f32.mrb[0].mxu0
    %2386 = vmatprep.mubr.f32.mxu0 0.0
    %v2387 = vand.u32 %v1303, 4294901760
    %2388 = vmatmul.mubr.f32.gmra.mrb[0].mxu0 %v2387
    %v2389 = vpop.f32.mrb[0].mxu0
    %v2390 = vadd.f32 %v2225, %v2389
    %v2391 = vpop.f32.mrb[0].mxu0
    %2392 = vmatprep.mubr.f32.mxu0 0.0
    %v2393 = vand.u32 %v1306, 4294901760
    %2394 = vmatmul.mubr.f32.gmra.mrb[0].mxu0 %v2393
    %v2395 = vpop.f32.mrb[0].mxu0
    %v2396 = vadd.f32 %v2231, %v2395
    %v2397 = vpop.f32.mrb[0].mxu0
    %2398 = vmatprep.mubr.f32.mxu0 0.0
    %v2399 = vand.u32 %v1309, 4294901760
    %2400 = vmatmul.mubr.f32.gmra.mrb[0].mxu0 %v2399
    %v2401 = vpop.f32.mrb[0].mxu0
    %v2402 = vadd.f32 %v2237, %v2401
    %v2403 = vpop.f32.mrb[0].mxu0
    %2404 = vmatprep.mubr.f32.mxu0 0.0
    %v2405 = vand.u32 %v1312, 4294901760
    %2406 = vmatmul.mubr.f32.gmra.mrb[0].mxu0 %v2405
    %v2407 = vpop.f32.mrb[0].mxu0
    %v2408 = vadd.f32 %v2243, %v2407
    %v2409 = vpop.f32.mrb[0].mxu0
    %2410 = vmatprep.mubr.f32.mxu0 0.0
    %v2411 = vand.u32 %v1315, 4294901760
    %2412 = vmatmul.mubr.f32.gmra.mrb[0].mxu0 %v2411
    %v2413 = vpop.f32.mrb[0].mxu0
    %v2414 = vadd.f32 %v2249, %v2413
    %v2415 = vpop.f32.mrb[0].mxu0
    %2416 = vmatprep.mubr.f32.mxu0 0.0
    %v2417 = vand.u32 %v1318, 4294901760
    %2418 = vmatmul.mubr.f32.gmra.mrb[0].mxu0 %v2417
    %v2419 = vpop.f32.mrb[0].mxu0
    %v2420 = vadd.f32 %v2255, %v2419
    %v2421 = vpop.f32.mrb[0].mxu0
    %2422 = vmatprep.mubr.f32.mxu0 0.0
    %v2423 = vand.u32 %v1321, 4294901760
    %2424 = vmatmul.mubr.f32.gmra.mrb[0].mxu0 %v2423
    %v2425 = vpop.f32.mrb[0].mxu0
    %v2426 = vadd.f32 %v2261, %v2425
    %v2427 = vpop.f32.mrb[0].mxu0
    %2428 = vmatprep.mubr.f32.mxu0 0.0
    %v2429 = vand.u32 %v1324, 4294901760
    %2430 = vmatmul.mubr.f32.gmra.mrb[0].mxu0 %v2429
    %v2431 = vpop.f32.mrb[0].mxu0
    %v2432 = vadd.f32 %v2267, %v2431
    %v2433 = vpop.f32.mrb[0].mxu0
    %2434 = vmatprep.mubr.f32.mxu0 0.0
    %v2435 = vand.u32 %v1327, 4294901760
    %2436 = vmatmul.mubr.f32.gmra.mrb[0].mxu0 %v2435
    %v2437 = vpop.f32.mrb[0].mxu0
    %v2438 = vadd.f32 %v2273, %v2437
    %v2439 = vpop.f32.mrb[0].mxu0
    %2440 = vmatprep.mubr.f32.mxu0 0.0
    %v2441 = vand.u32 %v1330, 4294901760
    %2442 = vmatmul.mubr.f32.gmra.mrb[0].mxu0 %v2441
    %v2443 = vpop.f32.mrb[0].mxu0
    %v2444 = vadd.f32 %v2279, %v2443
    %v2445 = vpop.f32.mrb[0].mxu0
    %2446 = vmatprep.mubr.f32.mxu0 0.0
    %v2447 = vand.u32 %v1333, 4294901760
    %2448 = vmatmul.mubr.f32.gmra.mrb[0].mxu0 %v2447
    %v2449 = vpop.f32.mrb[0].mxu0
    %v2450 = vadd.f32 %v2285, %v2449
    %v2451 = vpop.f32.mrb[0].mxu0
    %2452 = vmatprep.mubr.f32.mxu0 0.0
    %v2453 = vand.u32 %v1336, 4294901760
    %2454 = vmatmul.mubr.f32.gmra.mrb[0].mxu0 %v2453
    %v2455 = vpop.f32.mrb[0].mxu0
    %v2456 = vadd.f32 %v2291, %v2455
    %v2457 = vpop.f32.mrb[0].mxu0
    %2458 = vmatprep.mubr.f32.mxu0 0.0
    %v2459 = vand.u32 %v1339, 4294901760
    %2460 = vmatmul.mubr.f32.gmra.mrb[0].mxu0 %v2459
    %v2461 = vpop.f32.mrb[0].mxu0
    %v2462 = vadd.f32 %v2297, %v2461
    %v2463 = vpop.f32.mrb[0].mxu0
    %2464 = vmatprep.mubr.f32.mxu0 0.0
    %v2465 = vand.u32 %v1342, 4294901760
    %2466 = vmatmul.mubr.f32.gmra.mrb[0].mxu0 %v2465
    %v2467 = vpop.f32.mrb[0].mxu0
    %v2468 = vadd.f32 %v2303, %v2467
    %v2469 = vpop.f32.mrb[0].mxu0
    %2470 = vmatprep.mubr.f32.mxu0 0.0
    %v2471 = vand.u32 %v1345, 4294901760
    %2472 = vmatmul.mubr.f32.gmra.mrb[0].mxu0 %v2471
    %v2473 = vpop.f32.mrb[0].mxu0
    %v2474 = vadd.f32 %v2309, %v2473
    %v2475 = vpop.f32.mrb[0].mxu0
    %2476 = vdwg.mxu0
    %2479 = vrot.lane.b32.xlu0 %v1279, 64
    %v2480 = vpop.permute.xlu0 %2479
    %2481 = vrot.lane.b32.xlu0 %v1285, 64
    %v2482 = vpop.permute.xlu0 %2481
    %v2485 = vadd.f32 %v2384, %v2480
    %v2486 = vadd.f32 %v2390, %v2480
    %v2487 = vadd.f32 %v2396, %v2480
    %v2488 = vadd.f32 %v2402, %v2480
    %v2489 = vadd.f32 %v2408, %v2480
    %v2490 = vadd.f32 %v2414, %v2480
    %v2491 = vadd.f32 %v2420, %v2480
    %v2492 = vadd.f32 %v2426, %v2480
    %v2493 = vadd.f32 %v2432, %v2482
    %v2494 = vadd.f32 %v2438, %v2482
    %v2495 = vadd.f32 %v2444, %v2482
    %v2496 = vadd.f32 %v2450, %v2482
    %v2497 = vadd.f32 %v2456, %v2482
    %v2498 = vadd.f32 %v2462, %v2482
    %v2499 = vadd.f32 %v2468, %v2482
    %v2500 = vadd.f32 %v2474, %v2482
    %v2501 = vcombine.high %v1279, %v1279
    %v2503 = vunpack.c.l.s4 1966171168
    %v2504 = vunpack.c.0.s8 %v2503
    %v2505 = vlaneseq
    %v2506 = vshrl.u32 %v2505, 7
    %v2507 = vsub.s32 %v2504, %v2506
    %v2508 = vrot.slane %v1279, %v2507
    %v2510 = vunpack.c.l.s4 1966171168
    %v2511 = vunpack.c.0.s8 %v2510
    %v2512 = vlaneseq
    %v2513 = vshrl.u32 %v2512, 7
    %v2514 = vsub.s32 %v2511, %v2513
    %v2515 = vrot.slane %v2501, %v2514
    %v2516 = vcombine.high %v2508, %v2508
    %v2517 = vcombine.high %v2515, %v2515
    %v2519 = vunpack.c.l.s4 1966171168
    %v2520 = vunpack.c.0.s8 %v2519
    %v2521 = vlaneseq
    %v2522 = vshrl.u32 %v2521, 7
    %v2523 = vsub.s32 %v2520, %v2522
    %v2524 = vrot.slane %v2508, %v2523
    %v2526 = vunpack.c.l.s4 1966171168
    %v2527 = vunpack.c.0.s8 %v2526
    %v2528 = vlaneseq
    %v2529 = vshrl.u32 %v2528, 7
    %v2530 = vsub.s32 %v2527, %v2529
    %v2531 = vrot.slane %v2515, %v2530
    %v2533 = vunpack.c.l.s4 1966171168
    %v2534 = vunpack.c.0.s8 %v2533
    %v2535 = vlaneseq
    %v2536 = vshrl.u32 %v2535, 7
    %v2537 = vsub.s32 %v2534, %v2536
    %v2538 = vrot.slane %v2516, %v2537
    %v2540 = vunpack.c.l.s4 1966171168
    %v2541 = vunpack.c.0.s8 %v2540
    %v2542 = vlaneseq
    %v2543 = vshrl.u32 %v2542, 7
    %v2544 = vsub.s32 %v2541, %v2543
    %v2545 = vrot.slane %v2517, %v2544
    %v2546 = vcombine.high %v2524, %v2524
    %v2547 = vcombine.high %v2531, %v2531
    %v2548 = vcombine.high %v2538, %v2538
    %v2549 = vcombine.high %v2545, %v2545
    %v2550 = vcombine.high %v1285, %v1285
    %v2552 = vunpack.c.l.s4 1966171168
    %v2553 = vunpack.c.0.s8 %v2552
    %v2554 = vlaneseq
    %v2555 = vshrl.u32 %v2554, 7
    %v2556 = vsub.s32 %v2553, %v2555
    %v2557 = vrot.slane %v1285, %v2556
    %v2559 = vunpack.c.l.s4 1966171168
    %v2560 = vunpack.c.0.s8 %v2559
    %v2561 = vlaneseq
    %v2562 = vshrl.u32 %v2561, 7
    %v2563 = vsub.s32 %v2560, %v2562
    %v2564 = vrot.slane %v2550, %v2563
    %v2565 = vcombine.high %v2557, %v2557
    %v2566 = vcombine.high %v2564, %v2564
    %v2568 = vunpack.c.l.s4 1966171168
    %v2569 = vunpack.c.0.s8 %v2568
    %v2570 = vlaneseq
    %v2571 = vshrl.u32 %v2570, 7
    %v2572 = vsub.s32 %v2569, %v2571
    %v2573 = vrot.slane %v2557, %v2572
    %v2575 = vunpack.c.l.s4 1966171168
    %v2576 = vunpack.c.0.s8 %v2575
    %v2577 = vlaneseq
    %v2578 = vshrl.u32 %v2577, 7
    %v2579 = vsub.s32 %v2576, %v2578
    %v2580 = vrot.slane %v2564, %v2579
    %v2582 = vunpack.c.l.s4 1966171168
    %v2583 = vunpack.c.0.s8 %v2582
    %v2584 = vlaneseq
    %v2585 = vshrl.u32 %v2584, 7
    %v2586 = vsub.s32 %v2583, %v2585
    %v2587 = vrot.slane %v2565, %v2586
    %v2589 = vunpack.c.l.s4 1966171168
    %v2590 = vunpack.c.0.s8 %v2589
    %v2591 = vlaneseq
    %v2592 = vshrl.u32 %v2591, 7
    %v2593 = vsub.s32 %v2590, %v2592
    %v2594 = vrot.slane %v2566, %v2593
    %v2595 = vcombine.high %v2573, %v2573
    %v2596 = vcombine.high %v2580, %v2580
    %v2597 = vcombine.high %v2587, %v2587
    %v2598 = vcombine.high %v2594, %v2594
    %v2599 = vlaneseq
    %v2600 = vshrl.u32 %v2599, 7
    %v2601 = vsub.s32 0, %v2600
    %v2602 = vrot.slane %v2524, %v2601
    %v2603 = vlaneseq
    %v2604 = vshrl.u32 %v2603, 7
    %v2605 = vsub.s32 0, %v2604
    %v2606 = vrot.slane %v2538, %v2605
    %v2607 = vlaneseq
    %v2608 = vshrl.u32 %v2607, 7
    %v2609 = vsub.s32 0, %v2608
    %v2610 = vrot.slane %v2546, %v2609
    %v2611 = vlaneseq
    %v2612 = vshrl.u32 %v2611, 7
    %v2613 = vsub.s32 0, %v2612
    %v2614 = vrot.slane %v2548, %v2613
    %v2615 = vlaneseq
    %v2616 = vshrl.u32 %v2615, 7
    %v2617 = vsub.s32 0, %v2616
    %v2618 = vrot.slane %v2531, %v2617
    %v2619 = vlaneseq
    %v2620 = vshrl.u32 %v2619, 7
    %v2621 = vsub.s32 0, %v2620
    %v2622 = vrot.slane %v2545, %v2621
    %v2623 = vlaneseq
    %v2624 = vshrl.u32 %v2623, 7
    %v2625 = vsub.s32 0, %v2624
    %v2626 = vrot.slane %v2547, %v2625
    %v2627 = vlaneseq
    %v2628 = vshrl.u32 %v2627, 7
    %v2629 = vsub.s32 0, %v2628
    %v2630 = vrot.slane %v2549, %v2629
    %v2631 = vlaneseq
    %v2632 = vshrl.u32 %v2631, 7
    %v2633 = vsub.s32 0, %v2632
    %v2634 = vrot.slane %v2573, %v2633
    %v2635 = vlaneseq
    %v2636 = vshrl.u32 %v2635, 7
    %v2637 = vsub.s32 0, %v2636
    %v2638 = vrot.slane %v2587, %v2637
    %v2639 = vlaneseq
    %v2640 = vshrl.u32 %v2639, 7
    %v2641 = vsub.s32 0, %v2640
    %v2642 = vrot.slane %v2595, %v2641
    %v2643 = vlaneseq
    %v2644 = vshrl.u32 %v2643, 7
    %v2645 = vsub.s32 0, %v2644
    %v2646 = vrot.slane %v2597, %v2645
    %v2647 = vlaneseq
    %v2648 = vshrl.u32 %v2647, 7
    %v2649 = vsub.s32 0, %v2648
    %v2650 = vrot.slane %v2580, %v2649
    %v2651 = vlaneseq
    %v2652 = vshrl.u32 %v2651, 7
    %v2653 = vsub.s32 0, %v2652
    %v2654 = vrot.slane %v2594, %v2653
    %v2655 = vlaneseq
    %v2656 = vshrl.u32 %v2655, 7
    %v2657 = vsub.s32 0, %v2656
    %v2658 = vrot.slane %v2596, %v2657
    %v2659 = vlaneseq
    %v2660 = vshrl.u32 %v2659, 7
    %v2661 = vsub.s32 0, %v2660
    %v2662 = vrot.slane %v2598, %v2661
    %2663 = vrot.lane.b32.xlu0 %v2602, 32
    %v2664 = vpop.permute.xlu0 %2663
    %2665 = vrot.lane.b32.xlu0 %v2606, 32
    %v2666 = vpop.permute.xlu0 %2665
    %2667 = vrot.lane.b32.xlu0 %v2610, 32
    %v2668 = vpop.permute.xlu0 %2667
    %2669 = vrot.lane.b32.xlu0 %v2614, 32
    %v2670 = vpop.permute.xlu0 %2669
    %2671 = vrot.lane.b32.xlu0 %v2618, 32
    %v2672 = vpop.permute.xlu0 %2671
    %2673 = vrot.lane.b32.xlu0 %v2622, 32
    %v2674 = vpop.permute.xlu0 %2673
    %2675 = vrot.lane.b32.xlu0 %v2626, 32
    %v2676 = vpop.permute.xlu0 %2675
    %2677 = vrot.lane.b32.xlu0 %v2630, 32
    %v2678 = vpop.permute.xlu0 %2677
    %2679 = vrot.lane.b32.xlu0 %v2634, 32
    %v2680 = vpop.permute.xlu0 %2679
    %2681 = vrot.lane.b32.xlu0 %v2638, 32
    %v2682 = vpop.permute.xlu0 %2681
    %2683 = vrot.lane.b32.xlu0 %v2642, 32
    %v2684 = vpop.permute.xlu0 %2683
    %2685 = vrot.lane.b32.xlu0 %v2646, 32
    %v2686 = vpop.permute.xlu0 %2685
    %2687 = vrot.lane.b32.xlu0 %v2650, 32
    %v2688 = vpop.permute.xlu0 %2687
    %2689 = vrot.lane.b32.xlu0 %v2654, 32
    %v2690 = vpop.permute.xlu0 %2689
    %2691 = vrot.lane.b32.xlu0 %v2658, 32
    %v2692 = vpop.permute.xlu0 %2691
    %2693 = vrot.lane.b32.xlu0 %v2662, 32
    %v2694 = vpop.permute.xlu0 %2693
    %v2711 = vadd.f32 %v2485, %v2664
    %v2712 = vadd.f32 %v2486, %v2666
    %v2713 = vadd.f32 %v2487, %v2668
    %v2714 = vadd.f32 %v2488, %v2670
    %v2715 = vadd.f32 %v2489, %v2672
    %v2716 = vadd.f32 %v2490, %v2674
    %v2717 = vadd.f32 %v2491, %v2676
    %v2718 = vadd.f32 %v2492, %v2678
    %v2719 = vadd.f32 %v2493, %v2680
    %v2720 = vadd.f32 %v2494, %v2682
    %v2721 = vadd.f32 %v2495, %v2684
    %v2722 = vadd.f32 %v2496, %v2686
    %v2723 = vadd.f32 %v2497, %v2688
    %v2724 = vadd.f32 %v2498, %v2690
    %v2725 = vadd.f32 %v2499, %v2692
    %v2726 = vadd.f32 %v2500, %v2694
    %v2727 = vxor.u32 %v2711, 2147483648
    %v2728 = vxor.u32 %v2712, 2147483648
    %v2729 = vxor.u32 %v2713, 2147483648
    %v2730 = vxor.u32 %v2714, 2147483648
    %v2731 = vxor.u32 %v2715, 2147483648
    %v2732 = vxor.u32 %v2716, 2147483648
    %v2733 = vxor.u32 %v2717, 2147483648
    %v2734 = vxor.u32 %v2718, 2147483648
    %v2735 = vxor.u32 %v2719, 2147483648
    %v2736 = vxor.u32 %v2720, 2147483648
    %v2737 = vxor.u32 %v2721, 2147483648
    %v2738 = vxor.u32 %v2722, 2147483648
    %v2739 = vxor.u32 %v2723, 2147483648
    %v2740 = vxor.u32 %v2724, 2147483648
    %v2741 = vxor.u32 %v2725, 2147483648
    %v2742 = vxor.u32 %v2726, 2147483648
    %v2743 = vmul.f32 %v2727, 1.442695
    %v2744 = vpow.pop %v2743
    %v2745 = vmul.f32 %v2728, 1.442695
    %v2746 = vpow.pop %v2745
    %v2747 = vmul.f32 %v2729, 1.442695
    %v2748 = vpow.pop %v2747
    %v2749 = vmul.f32 %v2730, 1.442695
    %v2750 = vpow.pop %v2749
    %v2751 = vmul.f32 %v2731, 1.442695
    %v2752 = vpow.pop %v2751
    %v2753 = vmul.f32 %v2732, 1.442695
    %v2754 = vpow.pop %v2753
    %v2755 = vmul.f32 %v2733, 1.442695
    %v2756 = vpow.pop %v2755
    %v2757 = vmul.f32 %v2734, 1.442695
    %v2758 = vpow.pop %v2757
    %v2759 = vmul.f32 %v2735, 1.442695
    %v2760 = vpow.pop %v2759
    %v2761 = vmul.f32 %v2736, 1.442695
    %v2762 = vpow.pop %v2761
    %v2763 = vmul.f32 %v2737, 1.442695
    %v2764 = vpow.pop %v2763
    %v2765 = vmul.f32 %v2738, 1.442695
    %v2766 = vpow.pop %v2765
    %v2767 = vmul.f32 %v2739, 1.442695
    %v2768 = vpow.pop %v2767
    %v2769 = vmul.f32 %v2740, 1.442695
    %v2770 = vpow.pop %v2769
    %v2771 = vmul.f32 %v2741, 1.442695
    %v2772 = vpow.pop %v2771
    %v2773 = vmul.f32 %v2742, 1.442695
    %v2774 = vpow.pop %v2773
    %v2775 = vadd.f32 %v2744, 1.0
    %v2776 = vadd.f32 %v2746, 1.0
    %v2777 = vadd.f32 %v2748, 1.0
    %v2778 = vadd.f32 %v2750, 1.0
    %v2779 = vadd.f32 %v2752, 1.0
    %v2780 = vadd.f32 %v2754, 1.0
    %v2781 = vadd.f32 %v2756, 1.0
    %v2782 = vadd.f32 %v2758, 1.0
    %v2783 = vadd.f32 %v2760, 1.0
    %v2784 = vadd.f32 %v2762, 1.0
    %v2785 = vadd.f32 %v2764, 1.0
    %v2786 = vadd.f32 %v2766, 1.0
    %v2787 = vadd.f32 %v2768, 1.0
    %v2788 = vadd.f32 %v2770, 1.0
    %v2789 = vadd.f32 %v2772, 1.0
    %v2790 = vadd.f32 %v2774, 1.0
    %v2791 = vrcp.pop %v2775
    %v2792 = vmul.f32 1.0, %v2791
    %v2793 = vrcp.pop %v2776
    %v2794 = vmul.f32 1.0, %v2793
    %v2795 = vrcp.pop %v2777
    %v2796 = vmul.f32 1.0, %v2795
    %v2797 = vrcp.pop %v2778
    %v2798 = vmul.f32 1.0, %v2797
    %v2799 = vrcp.pop %v2779
    %v2800 = vmul.f32 1.0, %v2799
    %v2801 = vrcp.pop %v2780
    %v2802 = vmul.f32 1.0, %v2801
    %v2803 = vrcp.pop %v2781
    %v2804 = vmul.f32 1.0, %v2803
    %v2805 = vrcp.pop %v2782
    %v2806 = vmul.f32 1.0, %v2805
    %v2807 = vrcp.pop %v2783
    %v2808 = vmul.f32 1.0, %v2807
    %v2809 = vrcp.pop %v2784
    %v2810 = vmul.f32 1.0, %v2809
    %v2811 = vrcp.pop %v2785
    %v2812 = vmul.f32 1.0, %v2811
    %v2813 = vrcp.pop %v2786
    %v2814 = vmul.f32 1.0, %v2813
    %v2815 = vrcp.pop %v2787
    %v2816 = vmul.f32 1.0, %v2815
    %v2817 = vrcp.pop %v2788
    %v2818 = vmul.f32 1.0, %v2817
    %v2819 = vrcp.pop %v2789
    %v2820 = vmul.f32 1.0, %v2819
    %v2821 = vrcp.pop %v2790
    %v2822 = vmul.f32 1.0, %v2821
    %2823 = vrot.lane.b32.xlu0 %v1279, 96
    %v2824 = vpop.permute.xlu0 %2823
    %2825 = vrot.lane.b32.xlu0 %v1285, 96
    %v2826 = vpop.permute.xlu0 %2825
    %v2829 = vmul.f32 %v2792, %v2824
    %v2830 = vmul.f32 %v2794, %v2824
    %v2831 = vmul.f32 %v2796, %v2824
    %v2832 = vmul.f32 %v2798, %v2824
    %v2833 = vmul.f32 %v2800, %v2824
    %v2834 = vmul.f32 %v2802, %v2824
    %v2835 = vmul.f32 %v2804, %v2824
    %v2836 = vmul.f32 %v2806, %v2824
    %v2837 = vmul.f32 %v2808, %v2826
    %v2838 = vmul.f32 %v2810, %v2826
    %v2839 = vmul.f32 %v2812, %v2826
    %v2840 = vmul.f32 %v2814, %v2826
    %v2841 = vmul.f32 %v2816, %v2826
    %v2842 = vmul.f32 %v2818, %v2826
    %v2843 = vmul.f32 %v2820, %v2826
    %v2844 = vmul.f32 %v2822, %v2826
    %v2845 = vsel %vm753, %v2829, 0.0
    %v2846 = vrot.slane %v2845, 4
    %v2847 = vadd.f32 %v2845, %v2846
    %v2848 = vrot.slane %v2847, 2
    %v2849 = vadd.f32 %v2847, %v2848
    %v2850 = vrot.slane %v2849, 1
    %v2851 = vadd.f32 %v2849, %v2850
    %v2852 = vsel %vm753, %v2830, 0.0
    %v2853 = vrot.slane %v2852, 4
    %v2854 = vadd.f32 %v2852, %v2853
    %v2855 = vrot.slane %v2854, 2
    %v2856 = vadd.f32 %v2854, %v2855
    %v2857 = vrot.slane %v2856, 1
    %v2858 = vadd.f32 %v2856, %v2857
    %v2859 = vsel %vm753, %v2831, 0.0
    %v2860 = vrot.slane %v2859, 4
    %v2861 = vadd.f32 %v2859, %v2860
    %v2862 = vrot.slane %v2861, 2
    %v2863 = vadd.f32 %v2861, %v2862
    %v2864 = vrot.slane %v2863, 1
    %v2865 = vadd.f32 %v2863, %v2864
    %v2866 = vsel %vm753, %v2832, 0.0
    %v2867 = vrot.slane %v2866, 4
    %v2868 = vadd.f32 %v2866, %v2867
    %v2869 = vrot.slane %v2868, 2
    %v2870 = vadd.f32 %v2868, %v2869
    %v2871 = vrot.slane %v2870, 1
    %v2872 = vadd.f32 %v2870, %v2871
    %v2873 = vsel %vm753, %v2833, 0.0
    %v2874 = vrot.slane %v2873, 4
    %v2875 = vadd.f32 %v2873, %v2874
    %v2876 = vrot.slane %v2875, 2
    %v2877 = vadd.f32 %v2875, %v2876
    %v2878 = vrot.slane %v2877, 1
    %v2879 = vadd.f32 %v2877, %v2878
    %v2880 = vsel %vm753, %v2834, 0.0
    %v2881 = vrot.slane %v2880, 4
    %v2882 = vadd.f32 %v2880, %v2881
    %v2883 = vrot.slane %v2882, 2
    %v2884 = vadd.f32 %v2882, %v2883
    %v2885 = vrot.slane %v2884, 1
    %v2886 = vadd.f32 %v2884, %v2885
    %v2887 = vsel %vm753, %v2835, 0.0
    %v2888 = vrot.slane %v2887, 4
    %v2889 = vadd.f32 %v2887, %v2888
    %v2890 = vrot.slane %v2889, 2
    %v2891 = vadd.f32 %v2889, %v2890
    %v2892 = vrot.slane %v2891, 1
    %v2893 = vadd.f32 %v2891, %v2892
    %v2894 = vsel %vm753, %v2836, 0.0
    %v2895 = vrot.slane %v2894, 4
    %v2896 = vadd.f32 %v2894, %v2895
    %v2897 = vrot.slane %v2896, 2
    %v2898 = vadd.f32 %v2896, %v2897
    %v2899 = vrot.slane %v2898, 1
    %v2900 = vadd.f32 %v2898, %v2899
    %v2901 = vsel %vm753, %v2837, 0.0
    %v2902 = vrot.slane %v2901, 4
    %v2903 = vadd.f32 %v2901, %v2902
    %v2904 = vrot.slane %v2903, 2
    %v2905 = vadd.f32 %v2903, %v2904
    %v2906 = vrot.slane %v2905, 1
    %v2907 = vadd.f32 %v2905, %v2906
    %v2908 = vsel %vm753, %v2838, 0.0
    %v2909 = vrot.slane %v2908, 4
    %v2910 = vadd.f32 %v2908, %v2909
    %v2911 = vrot.slane %v2910, 2
    %v2912 = vadd.f32 %v2910, %v2911
    %v2913 = vrot.slane %v2912, 1
    %v2914 = vadd.f32 %v2912, %v2913
    %v2915 = vsel %vm753, %v2839, 0.0
    %v2916 = vrot.slane %v2915, 4
    %v2917 = vadd.f32 %v2915, %v2916
    %v2918 = vrot.slane %v2917, 2
    %v2919 = vadd.f32 %v2917, %v2918
    %v2920 = vrot.slane %v2919, 1
    %v2921 = vadd.f32 %v2919, %v2920
    %v2922 = vsel %vm753, %v2840, 0.0
    %v2923 = vrot.slane %v2922, 4
    %v2924 = vadd.f32 %v2922, %v2923
    %v2925 = vrot.slane %v2924, 2
    %v2926 = vadd.f32 %v2924, %v2925
    %v2927 = vrot.slane %v2926, 1
    %v2928 = vadd.f32 %v2926, %v2927
    %v2929 = vsel %vm753, %v2841, 0.0
    %v2930 = vrot.slane %v2929, 4
    %v2931 = vadd.f32 %v2929, %v2930
    %v2932 = vrot.slane %v2931, 2
    %v2933 = vadd.f32 %v2931, %v2932
    %v2934 = vrot.slane %v2933, 1
    %v2935 = vadd.f32 %v2933, %v2934
    %v2936 = vsel %vm753, %v2842, 0.0
    %v2937 = vrot.slane %v2936, 4
    %v2938 = vadd.f32 %v2936, %v2937
    %v2939 = vrot.slane %v2938, 2
    %v2940 = vadd.f32 %v2938, %v2939
    %v2941 = vrot.slane %v2940, 1
    %v2942 = vadd.f32 %v2940, %v2941
    %v2943 = vsel %vm753, %v2843, 0.0
    %v2944 = vrot.slane %v2943, 4
    %v2945 = vadd.f32 %v2943, %v2944
    %v2946 = vrot.slane %v2945, 2
    %v2947 = vadd.f32 %v2945, %v2946
    %v2948 = vrot.slane %v2947, 1
    %v2949 = vadd.f32 %v2947, %v2948
    %v2950 = vsel %vm753, %v2844, 0.0
    %v2951 = vrot.slane %v2950, 4
    %v2952 = vadd.f32 %v2950, %v2951
    %v2953 = vrot.slane %v2952, 2
    %v2954 = vadd.f32 %v2952, %v2953
    %v2955 = vrot.slane %v2954, 1
    %v2956 = vadd.f32 %v2954, %v2955
    %v2957 = vsel %vm753, %v2792, 0.0
    %v2958 = vrot.slane %v2957, 4
    %v2959 = vadd.f32 %v2957, %v2958
    %v2960 = vrot.slane %v2959, 2
    %v2961 = vadd.f32 %v2959, %v2960
    %v2962 = vrot.slane %v2961, 1
    %v2963 = vadd.f32 %v2961, %v2962
    %v2964 = vsel %vm753, %v2794, 0.0
    %v2965 = vrot.slane %v2964, 4
    %v2966 = vadd.f32 %v2964, %v2965
    %v2967 = vrot.slane %v2966, 2
    %v2968 = vadd.f32 %v2966, %v2967
    %v2969 = vrot.slane %v2968, 1
    %v2970 = vadd.f32 %v2968, %v2969
    %v2971 = vsel %vm753, %v2796, 0.0
    %v2972 = vrot.slane %v2971, 4
    %v2973 = vadd.f32 %v2971, %v2972
    %v2974 = vrot.slane %v2973, 2
    %v2975 = vadd.f32 %v2973, %v2974
    %v2976 = vrot.slane %v2975, 1
    %v2977 = vadd.f32 %v2975, %v2976
    %v2978 = vsel %vm753, %v2798, 0.0
    %v2979 = vrot.slane %v2978, 4
    %v2980 = vadd.f32 %v2978, %v2979
    %v2981 = vrot.slane %v2980, 2
    %v2982 = vadd.f32 %v2980, %v2981
    %v2983 = vrot.slane %v2982, 1
    %v2984 = vadd.f32 %v2982, %v2983
    %v2985 = vsel %vm753, %v2800, 0.0
    %v2986 = vrot.slane %v2985, 4
    %v2987 = vadd.f32 %v2985, %v2986
    %v2988 = vrot.slane %v2987, 2
    %v2989 = vadd.f32 %v2987, %v2988
    %v2990 = vrot.slane %v2989, 1
    %v2991 = vadd.f32 %v2989, %v2990
    %v2992 = vsel %vm753, %v2802, 0.0
    %v2993 = vrot.slane %v2992, 4
    %v2994 = vadd.f32 %v2992, %v2993
    %v2995 = vrot.slane %v2994, 2
    %v2996 = vadd.f32 %v2994, %v2995
    %v2997 = vrot.slane %v2996, 1
    %v2998 = vadd.f32 %v2996, %v2997
    %v2999 = vsel %vm753, %v2804, 0.0
    %v3000 = vrot.slane %v2999, 4
    %v3001 = vadd.f32 %v2999, %v3000
    %v3002 = vrot.slane %v3001, 2
    %v3003 = vadd.f32 %v3001, %v3002
    %v3004 = vrot.slane %v3003, 1
    %v3005 = vadd.f32 %v3003, %v3004
    %v3006 = vsel %vm753, %v2806, 0.0
    %v3007 = vrot.slane %v3006, 4
    %v3008 = vadd.f32 %v3006, %v3007
    %v3009 = vrot.slane %v3008, 2
    %v3010 = vadd.f32 %v3008, %v3009
    %v3011 = vrot.slane %v3010, 1
    %v3012 = vadd.f32 %v3010, %v3011
    %v3013 = vsel %vm753, %v2808, 0.0
    %v3014 = vrot.slane %v3013, 4
    %v3015 = vadd.f32 %v3013, %v3014
    %v3016 = vrot.slane %v3015, 2
    %v3017 = vadd.f32 %v3015, %v3016
    %v3018 = vrot.slane %v3017, 1
    %v3019 = vadd.f32 %v3017, %v3018
    %v3020 = vsel %vm753, %v2810, 0.0
    %v3021 = vrot.slane %v3020, 4
    %v3022 = vadd.f32 %v3020, %v3021
    %v3023 = vrot.slane %v3022, 2
    %v3024 = vadd.f32 %v3022, %v3023
    %v3025 = vrot.slane %v3024, 1
    %v3026 = vadd.f32 %v3024, %v3025
    %v3027 = vsel %vm753, %v2812, 0.0
    %v3028 = vrot.slane %v3027, 4
    %v3029 = vadd.f32 %v3027, %v3028
    %v3030 = vrot.slane %v3029, 2
    %v3031 = vadd.f32 %v3029, %v3030
    %v3032 = vrot.slane %v3031, 1
    %v3033 = vadd.f32 %v3031, %v3032
    %v3034 = vsel %vm753, %v2814, 0.0
    %v3035 = vrot.slane %v3034, 4
    %v3036 = vadd.f32 %v3034, %v3035
    %v3037 = vrot.slane %v3036, 2
    %v3038 = vadd.f32 %v3036, %v3037
    %v3039 = vrot.slane %v3038, 1
    %v3040 = vadd.f32 %v3038, %v3039
    %v3041 = vsel %vm753, %v2816, 0.0
    %v3042 = vrot.slane %v3041, 4
    %v3043 = vadd.f32 %v3041, %v3042
    %v3044 = vrot.slane %v3043, 2
    %v3045 = vadd.f32 %v3043, %v3044
    %v3046 = vrot.slane %v3045, 1
    %v3047 = vadd.f32 %v3045, %v3046
    %v3048 = vsel %vm753, %v2818, 0.0
    %v3049 = vrot.slane %v3048, 4
    %v3050 = vadd.f32 %v3048, %v3049
    %v3051 = vrot.slane %v3050, 2
    %v3052 = vadd.f32 %v3050, %v3051
    %v3053 = vrot.slane %v3052, 1
    %v3054 = vadd.f32 %v3052, %v3053
    %v3055 = vsel %vm753, %v2820, 0.0
    %v3056 = vrot.slane %v3055, 4
    %v3057 = vadd.f32 %v3055, %v3056
    %v3058 = vrot.slane %v3057, 2
    %v3059 = vadd.f32 %v3057, %v3058
    %v3060 = vrot.slane %v3059, 1
    %v3061 = vadd.f32 %v3059, %v3060
    %v3062 = vsel %vm753, %v2822, 0.0
    %v3063 = vrot.slane %v3062, 4
    %v3064 = vadd.f32 %v3062, %v3063
    %v3065 = vrot.slane %v3064, 2
    %v3066 = vadd.f32 %v3064, %v3065
    %v3067 = vrot.slane %v3066, 1
    %v3068 = vadd.f32 %v3066, %v3067
    %v3069 = vrcp.pop %v2963
    %v3070 = vrcp.pop %v2970
    %v3071 = vrcp.pop %v2977
    %v3072 = vrcp.pop %v2984
    %v3073 = vrcp.pop %v2991
    %v3074 = vrcp.pop %v2998
    %v3075 = vrcp.pop %v3005
    %v3076 = vrcp.pop %v3012
    %v3077 = vrcp.pop %v3019
    %v3078 = vrcp.pop %v3026
    %v3079 = vrcp.pop %v3033
    %v3080 = vrcp.pop %v3040
    %v3081 = vrcp.pop %v3047
    %v3082 = vrcp.pop %v3054
    %v3083 = vrcp.pop %v3061
    %v3084 = vrcp.pop %v3068
    %v3085 = vmul.f32 %v2963, %v3069
    %v3086 = vmul.f32 %v2970, %v3070
    %v3087 = vmul.f32 %v2977, %v3071
    %v3088 = vmul.f32 %v2984, %v3072
    %v3089 = vmul.f32 %v2991, %v3073
    %v3090 = vmul.f32 %v2998, %v3074
    %v3091 = vmul.f32 %v3005, %v3075
    %v3092 = vmul.f32 %v3012, %v3076
    %v3093 = vmul.f32 %v3019, %v3077
    %v3094 = vmul.f32 %v3026, %v3078
    %v3095 = vmul.f32 %v3033, %v3079
    %v3096 = vmul.f32 %v3040, %v3080
    %v3097 = vmul.f32 %v3047, %v3081
    %v3098 = vmul.f32 %v3054, %v3082
    %v3099 = vmul.f32 %v3061, %v3083
    %v3100 = vmul.f32 %v3068, %v3084
    %v3101 = vsub.f32 2.0, %v3085
    %v3102 = vsub.f32 2.0, %v3086
    %v3103 = vsub.f32 2.0, %v3087
    %v3104 = vsub.f32 2.0, %v3088
    %v3105 = vsub.f32 2.0, %v3089
    %v3106 = vsub.f32 2.0, %v3090
    %v3107 = vsub.f32 2.0, %v3091
    %v3108 = vsub.f32 2.0, %v3092
    %v3109 = vsub.f32 2.0, %v3093
    %v3110 = vsub.f32 2.0, %v3094
    %v3111 = vsub.f32 2.0, %v3095
    %v3112 = vsub.f32 2.0, %v3096
    %v3113 = vsub.f32 2.0, %v3097
    %v3114 = vsub.f32 2.0, %v3098
    %v3115 = vsub.f32 2.0, %v3099
    %v3116 = vsub.f32 2.0, %v3100
    %v3117 = vmul.f32 %v3069, %v3101
    %v3118 = vmul.f32 %v3070, %v3102
    %v3119 = vmul.f32 %v3071, %v3103
    %v3120 = vmul.f32 %v3072, %v3104
    %v3121 = vmul.f32 %v3073, %v3105
    %v3122 = vmul.f32 %v3074, %v3106
    %v3123 = vmul.f32 %v3075, %v3107
    %v3124 = vmul.f32 %v3076, %v3108
    %v3125 = vmul.f32 %v3077, %v3109
    %v3126 = vmul.f32 %v3078, %v3110
    %v3127 = vmul.f32 %v3079, %v3111
    %v3128 = vmul.f32 %v3080, %v3112
    %v3129 = vmul.f32 %v3081, %v3113
    %v3130 = vmul.f32 %v3082, %v3114
    %v3131 = vmul.f32 %v3083, %v3115
    %v3132 = vmul.f32 %v3084, %v3116
    %v3133 = vmul.f32 %v2851, %v3117
    %v3134 = vmul.f32 %v2858, %v3118
    %v3135 = vmul.f32 %v2865, %v3119
    %v3136 = vmul.f32 %v2872, %v3120
    %v3137 = vmul.f32 %v2879, %v3121
    %v3138 = vmul.f32 %v2886, %v3122
    %v3139 = vmul.f32 %v2893, %v3123
    %v3140 = vmul.f32 %v2900, %v3124
    %v3141 = vmul.f32 %v2907, %v3125
    %v3142 = vmul.f32 %v2914, %v3126
    %v3143 = vmul.f32 %v2921, %v3127
    %v3144 = vmul.f32 %v2928, %v3128
    %v3145 = vmul.f32 %v2935, %v3129
    %v3146 = vmul.f32 %v2942, %v3130
    %v3147 = vmul.f32 %v2949, %v3131
    %v3148 = vmul.f32 %v2956, %v3132
    %vm3165 = vcmask 1041409
    %v3166 = vsel %vm3165, %v3134, %v3133
    %vm3167 = vcmask 1042434
    %v3168 = vsel %vm3167, %v3135, %v3166
    %vm3169 = vcmask 1043459
    %v3170 = vsel %vm3169, %v3136, %v3168
    %vm3171 = vcmask 1044484
    %v3172 = vsel %vm3171, %v3137, %v3170
    %vm3173 = vcmask 1045509
    %v3174 = vsel %vm3173, %v3138, %v3172
    %vm3175 = vcmask 1046534
    %v3176 = vsel %vm3175, %v3139, %v3174
    %vm3177 = vcmask 1047559
    %v3178 = vsel %vm3177, %v3140, %v3176
    %v3179 = vsel %vm3165, %v3142, %v3141
    %v3180 = vsel %vm3167, %v3143, %v3179
    %v3181 = vsel %vm3169, %v3144, %v3180
    %v3182 = vsel %vm3171, %v3145, %v3181
    %v3183 = vsel %vm3173, %v3146, %v3182
    %v3184 = vsel %vm3175, %v3147, %v3183
    %v3185 = vsel %vm3177, %v3148, %v3184
    %v3188 = vadd.f32 %v1279, %v3178
    %v3189 = vadd.f32 %v1285, %v3185
    %3191 = vset.pattern.permute.xlu0 0
    %3192 = vperm.xlu0 %3191, %v724
    %v3193 = vpop.permute.xlu0 %3192
    %3196 = vset.pattern.permute.xlu0 0
    %3197 = vperm.xlu0 %3196, %v725
    %v3198 = vpop.permute.xlu0 %3197
    %v3200 = vmul.f32 %v3188, %v3193
    %v3201 = vmul.f32 %v3189, %v3198
    %3203 = vset.pattern.permute.xlu0 0
    %3204 = vperm.xlu0 %3203, %v726
    %v3205 = vpop.permute.xlu0 %3204
    %3208 = vset.pattern.permute.xlu0 0
    %3209 = vperm.xlu0 %3208, %v727
    %v3210 = vpop.permute.xlu0 %3209
    %3213 = vset.pattern.permute.xlu0 0
    %3214 = vperm.xlu0 %3213, %v728
    %v3215 = vpop.permute.xlu0 %3214
    %3218 = vset.pattern.permute.xlu0 0
    %3219 = vperm.xlu0 %3218, %v729
    %v3220 = vpop.permute.xlu0 %3219
    %3223 = vset.pattern.permute.xlu0 0
    %3224 = vperm.xlu0 %3223, %v730
    %v3225 = vpop.permute.xlu0 %3224
    %3228 = vset.pattern.permute.xlu0 0
    %3229 = vperm.xlu0 %3228, %v731
    %v3230 = vpop.permute.xlu0 %3229
    %3233 = vset.pattern.permute.xlu0 0
    %3234 = vperm.xlu0 %3233, %v732
    %v3235 = vpop.permute.xlu0 %3234
    %3238 = vset.pattern.permute.xlu0 0
    %3239 = vperm.xlu0 %3238, %v733
    %v3240 = vpop.permute.xlu0 %3239
    %3243 = vset.pattern.permute.xlu0 0
    %3244 = vperm.xlu0 %3243, %v734
    %v3245 = vpop.permute.xlu0 %3244
    %3248 = vset.pattern.permute.xlu0 0
    %3249 = vperm.xlu0 %3248, %v735
    %v3250 = vpop.permute.xlu0 %3249
    %3253 = vset.pattern.permute.xlu0 0
    %3254 = vperm.xlu0 %3253, %v736
    %v3255 = vpop.permute.xlu0 %3254
    %3258 = vset.pattern.permute.xlu0 0
    %3259 = vperm.xlu0 %3258, %v737
    %v3260 = vpop.permute.xlu0 %3259
    %3263 = vset.pattern.permute.xlu0 0
    %3264 = vperm.xlu0 %3263, %v738
    %v3265 = vpop.permute.xlu0 %3264
    %3268 = vset.pattern.permute.xlu0 0
    %3269 = vperm.xlu0 %3268, %v739
    %v3270 = vpop.permute.xlu0 %3269
    %3273 = vset.pattern.permute.xlu0 0
    %3274 = vperm.xlu0 %3273, %v740
    %v3275 = vpop.permute.xlu0 %3274
    %3278 = vset.pattern.permute.xlu0 0
    %3279 = vperm.xlu0 %3278, %v741
    %v3280 = vpop.permute.xlu0 %3279
    %v3282 = vmul.f32 %v2711, %v3205
    %v3283 = vmul.f32 %v2712, %v3210
    %v3284 = vmul.f32 %v2713, %v3215
    %v3285 = vmul.f32 %v2714, %v3220
    %v3286 = vmul.f32 %v2715, %v3225
    %v3287 = vmul.f32 %v2716, %v3230
    %v3288 = vmul.f32 %v2717, %v3235
    %v3289 = vmul.f32 %v2718, %v3240
    %v3290 = vmul.f32 %v2719, %v3245
    %v3291 = vmul.f32 %v2720, %v3250
    %v3292 = vmul.f32 %v2721, %v3255
    %v3293 = vmul.f32 %v2722, %v3260
    %v3294 = vmul.f32 %v2723, %v3265
    %v3295 = vmul.f32 %v2724, %v3270
    %v3296 = vmul.f32 %v2725, %v3275
    %v3297 = vmul.f32 %v2726, %v3280
    %v3298 = vsel %vm753, %v3200, 0.0
    %v3299 = vsel %vm753, %v3201, 0.0
    %v3300 = vadd.f32 %v3298, %v3299
    %v3301 = vrot.slane %v3300, 4
    %v3302 = vadd.f32 %v3300, %v3301
    %v3303 = vrot.slane %v3302, 2
    %v3304 = vadd.f32 %v3302, %v3303
    %v3305 = vrot.slane %v3304, 1
    %v3306 = vadd.f32 %v3304, %v3305
    %v3307 = vrcp.pop 16.0
    %v3308 = vmul.f32 %v3306, %v3307
    %v3309 = vsub.f32 %v3200, %v3308
    %v3310 = vsub.f32 %v3201, %v3308
    %v3311 = vmul.f32 %v3309, %v3309
    %v3312 = vmul.f32 %v3310, %v3310
    %v3313 = vsel %vm753, %v3311, 0.0
    %v3314 = vsel %vm753, %v3312, 0.0
    %v3315 = vadd.f32 %v3313, %v3314
    %v3316 = vrot.slane %v3315, 4
    %v3317 = vadd.f32 %v3315, %v3316
    %v3318 = vrot.slane %v3317, 2
    %v3319 = vadd.f32 %v3317, %v3318
    %v3320 = vrot.slane %v3319, 1
    %v3321 = vadd.f32 %v3319, %v3320
    %v3322 = vmul.f32 %v3321, %v3307
    %v3323 = vld [vmem:[%s12] sm:$0x1]
    %v3324 = vadd.f32 %v3322, 1e-05
    %v3325 = vrsqrt.pop %v3324
    %v3326 = vmul.f32 %v3323, %v3325
    %v3328 = vlaneseq
    %v3329 = vshrl.u32 %v3328, 7
    %v3330 = vsub.s32 0, %v3329
    %v3331 = vrot.slane %v3326, %v3330
    %v3333 = vmul.f32 %v3200, %v3331
    %v3334 = vmul.f32 %v3201, %v3331
    %v3335 = vld [vmem:[%s13] sm:$0x1]
    %v3336 = vmul.f32 %v3308, %v3326
    %v3337 = vsub.f32 %v3335, %v3336
    %v3339 = vlaneseq
    %v3340 = vshrl.u32 %v3339, 7
    %v3341 = vsub.s32 0, %v3340
    %v3342 = vrot.slane %v3337, %v3341
    %v3344 = vadd.f32 %v3333, %v3342
    %v3345 = vadd.f32 %v3334, %v3342
    %v3346 = vsel %vm753, %v3282, 0.0
    %v3347 = vsel %vm753, %v3283, 0.0
    %v3348 = vadd.f32 %v3346, %v3347
    %v3349 = vsel %vm753, %v3284, 0.0
    %v3350 = vadd.f32 %v3348, %v3349
    %v3351 = vsel %vm753, %v3285, 0.0
    %v3352 = vadd.f32 %v3350, %v3351
    %v3353 = vsel %vm753, %v3286, 0.0
    %v3354 = vadd.f32 %v3352, %v3353
    %v3355 = vsel %vm753, %v3287, 0.0
    %v3356 = vadd.f32 %v3354, %v3355
    %v3357 = vsel %vm753, %v3288, 0.0
    %v3358 = vadd.f32 %v3356, %v3357
    %v3359 = vsel %vm753, %v3289, 0.0
    %v3360 = vadd.f32 %v3358, %v3359
    %v3361 = vsel %vm753, %v3290, 0.0
    %v3362 = vadd.f32 %v3360, %v3361
    %v3363 = vsel %vm753, %v3291, 0.0
    %v3364 = vadd.f32 %v3362, %v3363
    %v3365 = vsel %vm753, %v3292, 0.0
    %v3366 = vadd.f32 %v3364, %v3365
    %v3367 = vsel %vm753, %v3293, 0.0
    %v3368 = vadd.f32 %v3366, %v3367
    %v3369 = vsel %vm753, %v3294, 0.0
    %v3370 = vadd.f32 %v3368, %v3369
    %v3371 = vsel %vm753, %v3295, 0.0
    %v3372 = vadd.f32 %v3370, %v3371
    %v3373 = vsel %vm753, %v3296, 0.0
    %v3374 = vadd.f32 %v3372, %v3373
    %v3375 = vsel %vm753, %v3297, 0.0
    %v3376 = vadd.f32 %v3374, %v3375
    %v3377 = vrot.slane %v3376, 4
    %v3378 = vadd.f32 %v3376, %v3377
    %v3379 = vrot.slane %v3378, 2
    %v3380 = vadd.f32 %v3378, %v3379
    %v3381 = vrot.slane %v3380, 1
    %v3382 = vadd.f32 %v3380, %v3381
    %v3383 = vrcp.pop 128.0
    %v3384 = vmul.f32 %v3382, %v3383
    %v3385 = vsub.f32 %v3282, %v3384
    %v3386 = vsub.f32 %v3283, %v3384
    %v3387 = vsub.f32 %v3284, %v3384
    %v3388 = vsub.f32 %v3285, %v3384
    %v3389 = vsub.f32 %v3286, %v3384
    %v3390 = vsub.f32 %v3287, %v3384
    %v3391 = vsub.f32 %v3288, %v3384
    %v3392 = vsub.f32 %v3289, %v3384
    %v3393 = vsub.f32 %v3290, %v3384
    %v3394 = vsub.f32 %v3291, %v3384
    %v3395 = vsub.f32 %v3292, %v3384
    %v3396 = vsub.f32 %v3293, %v3384
    %v3397 = vsub.f32 %v3294, %v3384
    %v3398 = vsub.f32 %v3295, %v3384
    %v3399 = vsub.f32 %v3296, %v3384
    %v3400 = vsub.f32 %v3297, %v3384
    %v3401 = vmul.f32 %v3385, %v3385
    %v3402 = vmul.f32 %v3386, %v3386
    %v3403 = vmul.f32 %v3387, %v3387
    %v3404 = vmul.f32 %v3388, %v3388
    %v3405 = vmul.f32 %v3389, %v3389
    %v3406 = vmul.f32 %v3390, %v3390
    %v3407 = vmul.f32 %v3391, %v3391
    %v3408 = vmul.f32 %v3392, %v3392
    %v3409 = vmul.f32 %v3393, %v3393
    %v3410 = vmul.f32 %v3394, %v3394
    %v3411 = vmul.f32 %v3395, %v3395
    %v3412 = vmul.f32 %v3396, %v3396
    %v3413 = vmul.f32 %v3397, %v3397
    %v3414 = vmul.f32 %v3398, %v3398
    %v3415 = vmul.f32 %v3399, %v3399
    %v3416 = vmul.f32 %v3400, %v3400
    %v3417 = vsel %vm753, %v3401, 0.0
    %v3418 = vsel %vm753, %v3402, 0.0
    %v3419 = vadd.f32 %v3417, %v3418
    %v3420 = vsel %vm753, %v3403, 0.0
    %v3421 = vadd.f32 %v3419, %v3420
    %v3422 = vsel %vm753, %v3404, 0.0
    %v3423 = vadd.f32 %v3421, %v3422
    %v3424 = vsel %vm753, %v3405, 0.0
    %v3425 = vadd.f32 %v3423, %v3424
    %v3426 = vsel %vm753, %v3406, 0.0
    %v3427 = vadd.f32 %v3425, %v3426
    %v3428 = vsel %vm753, %v3407, 0.0
    %v3429 = vadd.f32 %v3427, %v3428
    %v3430 = vsel %vm753, %v3408, 0.0
    %v3431 = vadd.f32 %v3429, %v3430
    %v3432 = vsel %vm753, %v3409, 0.0
    %v3433 = vadd.f32 %v3431, %v3432
    %v3434 = vsel %vm753, %v3410, 0.0
    %v3435 = vadd.f32 %v3433, %v3434
    %v3436 = vsel %vm753, %v3411, 0.0
    %v3437 = vadd.f32 %v3435, %v3436
    %v3438 = vsel %vm753, %v3412, 0.0
    %v3439 = vadd.f32 %v3437, %v3438
    %v3440 = vsel %vm753, %v3413, 0.0
    %v3441 = vadd.f32 %v3439, %v3440
    %v3442 = vsel %vm753, %v3414, 0.0
    %v3443 = vadd.f32 %v3441, %v3442
    %v3444 = vsel %vm753, %v3415, 0.0
    %v3445 = vadd.f32 %v3443, %v3444
    %v3446 = vsel %vm753, %v3416, 0.0
    %v3447 = vadd.f32 %v3445, %v3446
    %v3448 = vrot.slane %v3447, 4
    %v3449 = vadd.f32 %v3447, %v3448
    %v3450 = vrot.slane %v3449, 2
    %v3451 = vadd.f32 %v3449, %v3450
    %v3452 = vrot.slane %v3451, 1
    %v3453 = vadd.f32 %v3451, %v3452
    %v3454 = vmul.f32 %v3453, %v3383
    %v3455 = vld [vmem:[%s14] sm:$0x1]
    %v3456 = vadd.f32 %v3454, 1e-05
    %v3457 = vrsqrt.pop %v3456
    %v3458 = vmul.f32 %v3455, %v3457
    %v3460 = vlaneseq
    %v3461 = vshrl.u32 %v3460, 7
    %v3462 = vsub.s32 0, %v3461
    %v3463 = vrot.slane %v3458, %v3462
    %v3465 = vmul.f32 %v3282, %v3463
    %v3466 = vmul.f32 %v3283, %v3463
    %v3467 = vmul.f32 %v3284, %v3463
    %v3468 = vmul.f32 %v3285, %v3463
    %v3469 = vmul.f32 %v3286, %v3463
    %v3470 = vmul.f32 %v3287, %v3463
    %v3471 = vmul.f32 %v3288, %v3463
    %v3472 = vmul.f32 %v3289, %v3463
    %v3473 = vmul.f32 %v3290, %v3463
    %v3474 = vmul.f32 %v3291, %v3463
    %v3475 = vmul.f32 %v3292, %v3463
    %v3476 = vmul.f32 %v3293, %v3463
    %v3477 = vmul.f32 %v3294, %v3463
    %v3478 = vmul.f32 %v3295, %v3463
    %v3479 = vmul.f32 %v3296, %v3463
    %v3480 = vmul.f32 %v3297, %v3463
    %v3481 = vld [vmem:[%s15] sm:$0x1]
    %v3482 = vmul.f32 %v3384, %v3458
    %v3483 = vsub.f32 %v3481, %v3482
    %v3485 = vlaneseq
    %v3486 = vshrl.u32 %v3485, 7
    %v3487 = vsub.s32 0, %v3486
    %v3488 = vrot.slane %v3483, %v3487
    %v3490 = vadd.f32 %v3465, %v3488
    %v3491 = vadd.f32 %v3466, %v3488
    %v3492 = vadd.f32 %v3467, %v3488
    %v3493 = vadd.f32 %v3468, %v3488
    %v3494 = vadd.f32 %v3469, %v3488
    %v3495 = vadd.f32 %v3470, %v3488
    %v3496 = vadd.f32 %v3471, %v3488
    %v3497 = vadd.f32 %v3472, %v3488
    %v3498 = vadd.f32 %v3473, %v3488
    %v3499 = vadd.f32 %v3474, %v3488
    %v3500 = vadd.f32 %v3475, %v3488
    %v3501 = vadd.f32 %v3476, %v3488
    %v3502 = vadd.f32 %v3477, %v3488
    %v3503 = vadd.f32 %v3478, %v3488
    %v3504 = vadd.f32 %v3479, %v3488
    %v3505 = vadd.f32 %v3480, %v3488
    %v3506 = vmax.f32 %v3344, 0.0
    %v3507 = vmax.f32 %v3345, 0.0
    %v3508 = vadd.f32 %v573, %v3506
    %v3509 = vadd.f32 %v579, %v3507
    %v3510 = vmax.f32 %v3490, 0.0
    %v3511 = vmax.f32 %v3491, 0.0
    %v3512 = vmax.f32 %v3492, 0.0
    %v3513 = vmax.f32 %v3493, 0.0
    %v3514 = vmax.f32 %v3494, 0.0
    %v3515 = vmax.f32 %v3495, 0.0
    %v3516 = vmax.f32 %v3496, 0.0
    %v3517 = vmax.f32 %v3497, 0.0
    %v3518 = vmax.f32 %v3498, 0.0
    %v3519 = vmax.f32 %v3499, 0.0
    %v3520 = vmax.f32 %v3500, 0.0
    %v3521 = vmax.f32 %v3501, 0.0
    %v3522 = vmax.f32 %v3502, 0.0
    %v3523 = vmax.f32 %v3503, 0.0
    %v3524 = vmax.f32 %v3504, 0.0
    %v3525 = vmax.f32 %v3505, 0.0
    %v3526 = vadd.f32 %v708, %v3510
    %v3527 = vadd.f32 %v709, %v3511
    %v3528 = vadd.f32 %v710, %v3512
    %v3529 = vadd.f32 %v711, %v3513
    %v3530 = vadd.f32 %v712, %v3514
    %v3531 = vadd.f32 %v713, %v3515
    %v3532 = vadd.f32 %v714, %v3516
    %v3533 = vadd.f32 %v715, %v3517
    %v3534 = vadd.f32 %v716, %v3518
    %v3535 = vadd.f32 %v717, %v3519
    %v3536 = vadd.f32 %v718, %v3520
    %v3537 = vadd.f32 %v719, %v3521
    %v3538 = vadd.f32 %v720, %v3522
    %v3539 = vadd.f32 %v721, %v3523
    %v3540 = vadd.f32 %v722, %v3524
    %v3541 = vadd.f32 %v723, %v3525
    %s3542 = scalar_lea.vmem %s8, 32
    %v3543 = vld [vmem:[%s3542] sm:$0xff]
    %v3544 = vld [vmem:[%s3542 + $0x8] sm:$0xff]
    %v3545 = vld [vmem:[%s3542 + $0x10] sm:$0xff]
    %v3546 = vld [vmem:[%s3542 + $0x18] sm:$0xff]
    %s3547 = scalar_lea.vmem %s9, 1
    %v3548 = vld [vmem:[%s3547] sm:$0x1]
    %v3550 = vlaneseq
    %v3551 = vshrl.u32 %v3550, 7
    %v3552 = vsub.s32 0, %v3551
    %v3553 = vrot.slane %v3548, %v3552
    %v3556 = vsel %vm753, %v3508, 0
    %v3559 = vsel %vm753, %v3509, 0
    %3561 = vmatprep.subr.mxu0 0.0
    %v3562 = vand.u32 %v3543, 4294901760
    %3563 = vmatpush1.msra.mxu0 %v3562
    %3564 = vmatprep.subr.mxu0 0.0
    %v3565 = vand.u32 %v3544, 4294901760
    %3566 = vmatpush1.msra.mxu0 %v3565
    %3567 = vmatprep.subr.mxu0 0.0
    %v3568 = vand.u32 %v3545, 4294901760
    %3569 = vmatpush1.msra.mxu0 %v3568
    %3570 = vmatprep.subr.mxu0 0.0
    %v3571 = vand.u32 %v3546, 4294901760
    %3572 = vmatpush1.msra.mxu0 %v3571
    %3573 = vmatprep.subr.mxu0 0.0
    %3574 = vmatpush1.msra.mxu0 0.0
    %3575 = vmatprep.subr.mxu0 0.0
    %3576 = vmatpush1.msra.mxu0 0.0
    %3577 = vmatprep.subr.mxu0 0.0
    %3578 = vmatpush1.msra.mxu0 0.0
    %3579 = vmatprep.subr.mxu0 0.0
    %3580 = vmatpush1.msra.mxu0 0.0
    %3581 = vmatprep.subr.mxu0 0.0
    %3582 = vmatpush1.msra.mxu0 0.0
    %3583 = vmatprep.subr.mxu0 0.0
    %3584 = vmatpush1.msra.mxu0 0.0
    %3585 = vmatprep.subr.mxu0 0.0
    %3586 = vmatpush1.msra.mxu0 0.0
    %3587 = vmatprep.subr.mxu0 0.0
    %3588 = vmatpush1.msra.mxu0 0.0
    %3589 = vmatprep.subr.mxu0 0.0
    %3590 = vmatpush1.msra.mxu0 0.0
    %3591 = vmatprep.subr.mxu0 0.0
    %3592 = vmatpush1.msra.mxu0 0.0
    %3593 = vmatprep.subr.mxu0 0.0
    %3594 = vmatpush1.msra.mxu0 0.0
    %3595 = vmatprep.subr.mxu0 0.0
    %3596 = vmatpush1.msra.mxu0 0.0
    %3597 = vmatprep.subr.mxu0 0.0
    %3598 = vmatpush1.msra.mxu0 0.0
    %3599 = vmatprep.subr.mxu0 0.0
    %3600 = vmatpush1.msra.mxu0 0.0
    %3601 = vmatprep.subr.mxu0 0.0
    %3602 = vmatpush1.msra.mxu0 0.0
    %3603 = vmatprep.subr.mxu0 0.0
    %3604 = vmatpush1.msra.mxu0 0.0
    %3605 = vmatprep.subr.mxu0 0.0
    %3606 = vmatpush1.msra.mxu0 0.0
    %3607 = vmatprep.subr.mxu0 0.0
    %3608 = vmatpush1.msra.mxu0 0.0
    %3609 = vmatprep.subr.mxu0 0.0
    %3610 = vmatpush1.msra.mxu0 0.0
    %3611 = vmatprep.subr.mxu0 0.0
    %3612 = vmatpush1.msra.mxu0 0.0
    %3613 = vmatprep.subr.mxu0 0.0
    %3614 = vmatpush1.msra.mxu0 0.0
    %3615 = vmatprep.subr.mxu0 0.0
    %3616 = vmatpush1.msra.mxu0 0.0
    %3617 = vmatprep.subr.mxu0 0.0
    %3618 = vmatpush1.msra.mxu0 0.0
    %3619 = vmatprep.subr.mxu0 0.0
    %3620 = vmatpush1.msra.mxu0 0.0
    %3621 = vmatprep.subr.mxu0 0.0
    %3622 = vmatpush1.msra.mxu0 0.0
    %3623 = vmatprep.subr.mxu0 0.0
    %3624 = vmatpush1.msra.mxu0 0.0
    %3625 = vmatprep.subr.mxu0 0.0
    %3626 = vmatpush1.msra.mxu0 0.0
    %3627 = vmatprep.subr.mxu0 0.0
    %3628 = vmatpush1.msra.mxu0 0.0
    %3629 = vmatprep.mubr.f32.mxu0 0.0
    %v3630 = vand.u32 %v3556, 4294901760
    %v3631 = vsub.f32 %v3556, %v3630
    %v3632 = vand.u32 %v3631, 4294901760
    %v3633 = vsub.f32 %v3631, %v3632
    %v3634 = vand.u32 %v3633, 4294901760
    %3635 = vmatmul.mubr.f32.gmra.mrb[0].mxu0 %v3634
    %v3636 = vpop.f32.mrb[0].mxu0
    %v3637 = vadd.f32 %v3553, %v3636
    %v3638 = vpop.f32.mrb[0].mxu0
    %3639 = vmatprep.mubr.f32.mxu0 0.0
    %v3640 = vand.u32 %v3559, 4294901760
    %v3641 = vsub.f32 %v3559, %v3640
    %v3642 = vand.u32 %v3641, 4294901760
    %v3643 = vsub.f32 %v3641, %v3642
    %v3644 = vand.u32 %v3643, 4294901760
    %3645 = vmatmul.mubr.f32.gmra.mrb[0].mxu0 %v3644
    %v3646 = vpop.f32.mrb[0].mxu0
    %v3647 = vadd.f32 %v3553, %v3646
    %v3648 = vpop.f32.mrb[0].mxu0
    %3649 = vdwg.mxu0
    %3650 = vmatprep.subr.mxu0 0.0
    %v3651 = vand.u32 %v3543, 4294901760
    %v3652 = vsub.f32 %v3543, %v3651
    %v3653 = vand.u32 %v3652, 4294901760
    %v3654 = vsub.f32 %v3652, %v3653
    %v3655 = vand.u32 %v3654, 4294901760
    %3656 = vmatpush1.msra.mxu0 %v3655
    %3657 = vmatprep.subr.mxu0 0.0
    %v3658 = vand.u32 %v3544, 4294901760
    %v3659 = vsub.f32 %v3544, %v3658
    %v3660 = vand.u32 %v3659, 4294901760
    %v3661 = vsub.f32 %v3659, %v3660
    %v3662 = vand.u32 %v3661, 4294901760
    %3663 = vmatpush1.msra.mxu0 %v3662
    %3664 = vmatprep.subr.mxu0 0.0
    %v3665 = vand.u32 %v3545, 4294901760
    %v3666 = vsub.f32 %v3545, %v3665
    %v3667 = vand.u32 %v3666, 4294901760
    %v3668 = vsub.f32 %v3666, %v3667
    %v3669 = vand.u32 %v3668, 4294901760
    %3670 = vmatpush1.msra.mxu0 %v3669
    %3671 = vmatprep.subr.mxu0 0.0
    %v3672 = vand.u32 %v3546, 4294901760
    %v3673 = vsub.f32 %v3546, %v3672
    %v3674 = vand.u32 %v3673, 4294901760
    %v3675 = vsub.f32 %v3673, %v3674
    %v3676 = vand.u32 %v3675, 4294901760
    %3677 = vmatpush1.msra.mxu0 %v3676
    %3678 = vmatprep.subr.mxu0 0.0
    %3679 = vmatpush1.msra.mxu0 0.0
    %3680 = vmatprep.subr.mxu0 0.0
    %3681 = vmatpush1.msra.mxu0 0.0
    %3682 = vmatprep.subr.mxu0 0.0
    %3683 = vmatpush1.msra.mxu0 0.0
    %3684 = vmatprep.subr.mxu0 0.0
    %3685 = vmatpush1.msra.mxu0 0.0
    %3686 = vmatprep.subr.mxu0 0.0
    %3687 = vmatpush1.msra.mxu0 0.0
    %3688 = vmatprep.subr.mxu0 0.0
    %3689 = vmatpush1.msra.mxu0 0.0
    %3690 = vmatprep.subr.mxu0 0.0
    %3691 = vmatpush1.msra.mxu0 0.0
    %3692 = vmatprep.subr.mxu0 0.0
    %3693 = vmatpush1.msra.mxu0 0.0
    %3694 = vmatprep.subr.mxu0 0.0
    %3695 = vmatpush1.msra.mxu0 0.0
    %3696 = vmatprep.subr.mxu0 0.0
    %3697 = vmatpush1.msra.mxu0 0.0
    %3698 = vmatprep.subr.mxu0 0.0
    %3699 = vmatpush1.msra.mxu0 0.0
    %3700 = vmatprep.subr.mxu0 0.0
    %3701 = vmatpush1.msra.mxu0 0.0
    %3702 = vmatprep.subr.mxu0 0.0
    %3703 = vmatpush1.msra.mxu0 0.0
    %3704 = vmatprep.subr.mxu0 0.0
    %3705 = vmatpush1.msra.mxu0 0.0
    %3706 = vmatprep.subr.mxu0 0.0
    %3707 = vmatpush1.msra.mxu0 0.0
    %3708 = vmatprep.subr.mxu0 0.0
    %3709 = vmatpush1.msra.mxu0 0.0
    %3710 = vmatprep.subr.mxu0 0.0
    %3711 = vmatpush1.msra.mxu0 0.0
    %3712 = vmatprep.subr.mxu0 0.0
    %3713 = vmatpush1.msra.mxu0 0.0
    %3714 = vmatprep.subr.mxu0 0.0
    %3715 = vmatpush1.msra.mxu0 0.0
    %3716 = vmatprep.subr.mxu0 0.0
    %3717 = vmatpush1.msra.mxu0 0.0
    %3718 = vmatprep.subr.mxu0 0.0
    %3719 = vmatpush1.msra.mxu0 0.0
    %3720 = vmatprep.subr.mxu0 0.0
    %3721 = vmatpush1.msra.mxu0 0.0
    %3722 = vmatprep.subr.mxu0 0.0
    %3723 = vmatpush1.msra.mxu0 0.0
    %3724 = vmatprep.subr.mxu0 0.0
    %3725 = vmatpush1.msra.mxu0 0.0
    %3726 = vmatprep.subr.mxu0 0.0
    %3727 = vmatpush1.msra.mxu0 0.0
    %3728 = vmatprep.subr.mxu0 0.0
    %3729 = vmatpush1.msra.mxu0 0.0
    %3730 = vmatprep.subr.mxu0 0.0
    %3731 = vmatpush1.msra.mxu0 0.0
    %3732 = vmatprep.subr.mxu0 0.0
    %3733 = vmatpush1.msra.mxu0 0.0
    %3734 = vmatprep.mubr.f32.mxu0 0.0
    %v3735 = vand.u32 %v3556, 4294901760
    %3736 = vmatmul.mubr.f32.gmra.mrb[0].mxu0 %v3735
    %v3737 = vpop.f32.mrb[0].mxu0
    %v3738 = vadd.f32 %v3637, %v3737
    %v3739 = vpop.f32.mrb[0].mxu0
    %3740 = vmatprep.mubr.f32.mxu0 0.0
    %v3741 = vand.u32 %v3559, 4294901760
    %3742 = vmatmul.mubr.f32.gmra.mrb[0].mxu0 %v3741
    %v3743 = vpop.f32.mrb[0].mxu0
    %v3744 = vadd.f32 %v3647, %v3743
    %v3745 = vpop.f32.mrb[0].mxu0
    %3746 = vdwg.mxu0
    %3747 = vmatprep.subr.mxu0 0.0
    %v3748 = vand.u32 %v3543, 4294901760
    %v3749 = vsub.f32 %v3543, %v3748
    %3750 = vmatpush1.msra.mxu0 %v3749
    %3751 = vmatprep.subr.mxu0 0.0
    %v3752 = vand.u32 %v3544, 4294901760
    %v3753 = vsub.f32 %v3544, %v3752
    %3754 = vmatpush1.msra.mxu0 %v3753
    %3755 = vmatprep.subr.mxu0 0.0
    %v3756 = vand.u32 %v3545, 4294901760
    %v3757 = vsub.f32 %v3545, %v3756
    %3758 = vmatpush1.msra.mxu0 %v3757
    %3759 = vmatprep.subr.mxu0 0.0
    %v3760 = vand.u32 %v3546, 4294901760
    %v3761 = vsub.f32 %v3546, %v3760
    %3762 = vmatpush1.msra.mxu0 %v3761
    %3763 = vmatprep.subr.mxu0 0.0
    %3764 = vmatpush1.msra.mxu0 0.0
    %3765 = vmatprep.subr.mxu0 0.0
    %3766 = vmatpush1.msra.mxu0 0.0
    %3767 = vmatprep.subr.mxu0 0.0
    %3768 = vmatpush1.msra.mxu0 0.0
    %3769 = vmatprep.subr.mxu0 0.0
    %3770 = vmatpush1.msra.mxu0 0.0
    %3771 = vmatprep.subr.mxu0 0.0
    %3772 = vmatpush1.msra.mxu0 0.0
    %3773 = vmatprep.subr.mxu0 0.0
    %3774 = vmatpush1.msra.mxu0 0.0
    %3775 = vmatprep.subr.mxu0 0.0
    %3776 = vmatpush1.msra.mxu0 0.0
    %3777 = vmatprep.subr.mxu0 0.0
    %3778 = vmatpush1.msra.mxu0 0.0
    %3779 = vmatprep.subr.mxu0 0.0
    %3780 = vmatpush1.msra.mxu0 0.0
    %3781 = vmatprep.subr.mxu0 0.0
    %3782 = vmatpush1.msra.mxu0 0.0
    %3783 = vmatprep.subr.mxu0 0.0
    %3784 = vmatpush1.msra.mxu0 0.0
    %3785 = vmatprep.subr.mxu0 0.0
    %3786 = vmatpush1.msra.mxu0 0.0
    %3787 = vmatprep.subr.mxu0 0.0
    %3788 = vmatpush1.msra.mxu0 0.0
    %3789 = vmatprep.subr.mxu0 0.0
    %3790 = vmatpush1.msra.mxu0 0.0
    %3791 = vmatprep.subr.mxu0 0.0
    %3792 = vmatpush1.msra.mxu0 0.0
    %3793 = vmatprep.subr.mxu0 0.0
    %3794 = vmatpush1.msra.mxu0 0.0
    %3795 = vmatprep.subr.mxu0 0.0
    %3796 = vmatpush1.msra.mxu0 0.0
    %3797 = vmatprep.subr.mxu0 0.0
    %3798 = vmatpush1.msra.mxu0 0.0
    %3799 = vmatprep.subr.mxu0 0.0
    %3800 = vmatpush1.msra.mxu0 0.0
    %3801 = vmatprep.subr.mxu0 0.0
    %3802 = vmatpush1.msra.mxu0 0.0
    %3803 = vmatprep.subr.mxu0 0.0
    %3804 = vmatpush1.msra.mxu0 0.0
    %3805 = vmatprep.subr.mxu0 0.0
    %3806 = vmatpush1.msra.mxu0 0.0
    %3807 = vmatprep.subr.mxu0 0.0
    %3808 = vmatpush1.msra.mxu0 0.0
    %3809 = vmatprep.subr.mxu0 0.0
    %3810 = vmatpush1.msra.mxu0 0.0
    %3811 = vmatprep.subr.mxu0 0.0
    %3812 = vmatpush1.msra.mxu0 0.0
    %3813 = vmatprep.subr.mxu0 0.0
    %3814 = vmatpush1.msra.mxu0 0.0
    %3815 = vmatprep.subr.mxu0 0.0
    %3816 = vmatpush1.msra.mxu0 0.0
    %3817 = vmatprep.subr.mxu0 0.0
    %3818 = vmatpush1.msra.mxu0 0.0
    %3819 = vmatprep.mubr.f32.mxu0 0.0
    %v3820 = vand.u32 %v3556, 4294901760
    %v3821 = vsub.f32 %v3556, %v3820
    %3822 = vmatmul.mubr.f32.gmra.mrb[0].mxu0 %v3821
    %v3823 = vpop.f32.mrb[0].mxu0
    %v3824 = vadd.f32 %v3738, %v3823
    %v3825 = vpop.f32.mrb[0].mxu0
    %3826 = vmatprep.mubr.f32.mxu0 0.0
    %v3827 = vand.u32 %v3559, 4294901760
    %v3828 = vsub.f32 %v3559, %v3827
    %3829 = vmatmul.mubr.f32.gmra.mrb[0].mxu0 %v3828
    %v3830 = vpop.f32.mrb[0].mxu0
    %v3831 = vadd.f32 %v3744, %v3830
    %v3832 = vpop.f32.mrb[0].mxu0
    %3833 = vdwg.mxu0
    %3834 = vmatprep.subr.mxu0 0.0
    %v3835 = vand.u32 %v3543, 4294901760
    %3836 = vmatpush1.msra.mxu0 %v3835
    %3837 = vmatprep.subr.mxu0 0.0
    %v3838 = vand.u32 %v3544, 4294901760
    %3839 = vmatpush1.msra.mxu0 %v3838
    %3840 = vmatprep.subr.mxu0 0.0
    %v3841 = vand.u32 %v3545, 4294901760
    %3842 = vmatpush1.msra.mxu0 %v3841
    %3843 = vmatprep.subr.mxu0 0.0
    %v3844 = vand.u32 %v3546, 4294901760
    %3845 = vmatpush1.msra.mxu0 %v3844
    %3846 = vmatprep.subr.mxu0 0.0
    %3847 = vmatpush1.msra.mxu0 0.0
    %3848 = vmatprep.subr.mxu0 0.0
    %3849 = vmatpush1.msra.mxu0 0.0
    %3850 = vmatprep.subr.mxu0 0.0
    %3851 = vmatpush1.msra.mxu0 0.0
    %3852 = vmatprep.subr.mxu0 0.0
    %3853 = vmatpush1.msra.mxu0 0.0
    %3854 = vmatprep.subr.mxu0 0.0
    %3855 = vmatpush1.msra.mxu0 0.0
    %3856 = vmatprep.subr.mxu0 0.0
    %3857 = vmatpush1.msra.mxu0 0.0
    %3858 = vmatprep.subr.mxu0 0.0
    %3859 = vmatpush1.msra.mxu0 0.0
    %3860 = vmatprep.subr.mxu0 0.0
    %3861 = vmatpush1.msra.mxu0 0.0
    %3862 = vmatprep.subr.mxu0 0.0
    %3863 = vmatpush1.msra.mxu0 0.0
    %3864 = vmatprep.subr.mxu0 0.0
    %3865 = vmatpush1.msra.mxu0 0.0
    %3866 = vmatprep.subr.mxu0 0.0
    %3867 = vmatpush1.msra.mxu0 0.0
    %3868 = vmatprep.subr.mxu0 0.0
    %3869 = vmatpush1.msra.mxu0 0.0
    %3870 = vmatprep.subr.mxu0 0.0
    %3871 = vmatpush1.msra.mxu0 0.0
    %3872 = vmatprep.subr.mxu0 0.0
    %3873 = vmatpush1.msra.mxu0 0.0
    %3874 = vmatprep.subr.mxu0 0.0
    %3875 = vmatpush1.msra.mxu0 0.0
    %3876 = vmatprep.subr.mxu0 0.0
    %3877 = vmatpush1.msra.mxu0 0.0
    %3878 = vmatprep.subr.mxu0 0.0
    %3879 = vmatpush1.msra.mxu0 0.0
    %3880 = vmatprep.subr.mxu0 0.0
    %3881 = vmatpush1.msra.mxu0 0.0
    %3882 = vmatprep.subr.mxu0 0.0
    %3883 = vmatpush1.msra.mxu0 0.0
    %3884 = vmatprep.subr.mxu0 0.0
    %3885 = vmatpush1.msra.mxu0 0.0
    %3886 = vmatprep.subr.mxu0 0.0
    %3887 = vmatpush1.msra.mxu0 0.0
    %3888 = vmatprep.subr.mxu0 0.0
    %3889 = vmatpush1.msra.mxu0 0.0
    %3890 = vmatprep.subr.mxu0 0.0
    %3891 = vmatpush1.msra.mxu0 0.0
    %3892 = vmatprep.subr.mxu0 0.0
    %3893 = vmatpush1.msra.mxu0 0.0
    %3894 = vmatprep.subr.mxu0 0.0
    %3895 = vmatpush1.msra.mxu0 0.0
    %3896 = vmatprep.subr.mxu0 0.0
    %3897 = vmatpush1.msra.mxu0 0.0
    %3898 = vmatprep.subr.mxu0 0.0
    %3899 = vmatpush1.msra.mxu0 0.0
    %3900 = vmatprep.subr.mxu0 0.0
    %3901 = vmatpush1.msra.mxu0 0.0
    %3902 = vmatprep.mubr.f32.mxu0 0.0
    %v3903 = vand.u32 %v3556, 4294901760
    %v3904 = vsub.f32 %v3556, %v3903
    %v3905 = vand.u32 %v3904, 4294901760
    %3906 = vmatmul.mubr.f32.gmra.mrb[0].mxu0 %v3905
    %v3907 = vpop.f32.mrb[0].mxu0
    %v3908 = vadd.f32 %v3824, %v3907
    %v3909 = vpop.f32.mrb[0].mxu0
    %3910 = vmatprep.mubr.f32.mxu0 0.0
    %v3911 = vand.u32 %v3559, 4294901760
    %v3912 = vsub.f32 %v3559, %v3911
    %v3913 = vand.u32 %v3912, 4294901760
    %3914 = vmatmul.mubr.f32.gmra.mrb[0].mxu0 %v3913
    %v3915 = vpop.f32.mrb[0].mxu0
    %v3916 = vadd.f32 %v3831, %v3915
    %v3917 = vpop.f32.mrb[0].mxu0
    %3918 = vdwg.mxu0
    %3919 = vmatprep.subr.mxu0 0.0
    %v3920 = vand.u32 %v3543, 4294901760
    %v3921 = vsub.f32 %v3543, %v3920
    %v3922 = vand.u32 %v3921, 4294901760
    %3923 = vmatpush1.msra.mxu0 %v3922
    %3924 = vmatprep.subr.mxu0 0.0
    %v3925 = vand.u32 %v3544, 4294901760
    %v3926 = vsub.f32 %v3544, %v3925
    %v3927 = vand.u32 %v3926, 4294901760
    %3928 = vmatpush1.msra.mxu0 %v3927
    %3929 = vmatprep.subr.mxu0 0.0
    %v3930 = vand.u32 %v3545, 4294901760
    %v3931 = vsub.f32 %v3545, %v3930
    %v3932 = vand.u32 %v3931, 4294901760
    %3933 = vmatpush1.msra.mxu0 %v3932
    %3934 = vmatprep.subr.mxu0 0.0
    %v3935 = vand.u32 %v3546, 4294901760
    %v3936 = vsub.f32 %v3546, %v3935
    %v3937 = vand.u32 %v3936, 4294901760
    %3938 = vmatpush1.msra.mxu0 %v3937
    %3939 = vmatprep.subr.mxu0 0.0
    %3940 = vmatpush1.msra.mxu0 0.0
    %3941 = vmatprep.subr.mxu0 0.0
    %3942 = vmatpush1.msra.mxu0 0.0
    %3943 = vmatprep.subr.mxu0 0.0
    %3944 = vmatpush1.msra.mxu0 0.0
    %3945 = vmatprep.subr.mxu0 0.0
    %3946 = vmatpush1.msra.mxu0 0.0
    %3947 = vmatprep.subr.mxu0 0.0
    %3948 = vmatpush1.msra.mxu0 0.0
    %3949 = vmatprep.subr.mxu0 0.0
    %3950 = vmatpush1.msra.mxu0 0.0
    %3951 = vmatprep.subr.mxu0 0.0
    %3952 = vmatpush1.msra.mxu0 0.0
    %3953 = vmatprep.subr.mxu0 0.0
    %3954 = vmatpush1.msra.mxu0 0.0
    %3955 = vmatprep.subr.mxu0 0.0
    %3956 = vmatpush1.msra.mxu0 0.0
    %3957 = vmatprep.subr.mxu0 0.0
    %3958 = vmatpush1.msra.mxu0 0.0
    %3959 = vmatprep.subr.mxu0 0.0
    %3960 = vmatpush1.msra.mxu0 0.0
    %3961 = vmatprep.subr.mxu0 0.0
    %3962 = vmatpush1.msra.mxu0 0.0
    %3963 = vmatprep.subr.mxu0 0.0
    %3964 = vmatpush1.msra.mxu0 0.0
    %3965 = vmatprep.subr.mxu0 0.0
    %3966 = vmatpush1.msra.mxu0 0.0
    %3967 = vmatprep.subr.mxu0 0.0
    %3968 = vmatpush1.msra.mxu0 0.0
    %3969 = vmatprep.subr.mxu0 0.0
    %3970 = vmatpush1.msra.mxu0 0.0
    %3971 = vmatprep.subr.mxu0 0.0
    %3972 = vmatpush1.msra.mxu0 0.0
    %3973 = vmatprep.subr.mxu0 0.0
    %3974 = vmatpush1.msra.mxu0 0.0
    %3975 = vmatprep.subr.mxu0 0.0
    %3976 = vmatpush1.msra.mxu0 0.0
    %3977 = vmatprep.subr.mxu0 0.0
    %3978 = vmatpush1.msra.mxu0 0.0
    %3979 = vmatprep.subr.mxu0 0.0
    %3980 = vmatpush1.msra.mxu0 0.0
    %3981 = vmatprep.subr.mxu0 0.0
    %3982 = vmatpush1.msra.mxu0 0.0
    %3983 = vmatprep.subr.mxu0 0.0
    %3984 = vmatpush1.msra.mxu0 0.0
    %3985 = vmatprep.subr.mxu0 0.0
    %3986 = vmatpush1.msra.mxu0 0.0
    %3987 = vmatprep.subr.mxu0 0.0
    %3988 = vmatpush1.msra.mxu0 0.0
    %3989 = vmatprep.subr.mxu0 0.0
    %3990 = vmatpush1.msra.mxu0 0.0
    %3991 = vmatprep.subr.mxu0 0.0
    %3992 = vmatpush1.msra.mxu0 0.0
    %3993 = vmatprep.subr.mxu0 0.0
    %3994 = vmatpush1.msra.mxu0 0.0
    %3995 = vmatprep.mubr.f32.mxu0 0.0
    %v3996 = vand.u32 %v3556, 4294901760
    %3997 = vmatmul.mubr.f32.gmra.mrb[0].mxu0 %v3996
    %v3998 = vpop.f32.mrb[0].mxu0
    %v3999 = vadd.f32 %v3908, %v3998
    %v4000 = vpop.f32.mrb[0].mxu0
    %4001 = vmatprep.mubr.f32.mxu0 0.0
    %v4002 = vand.u32 %v3559, 4294901760
    %4003 = vmatmul.mubr.f32.gmra.mrb[0].mxu0 %v4002
    %v4004 = vpop.f32.mrb[0].mxu0
    %v4005 = vadd.f32 %v3916, %v4004
    %v4006 = vpop.f32.mrb[0].mxu0
    %4007 = vdwg.mxu0
    %4008 = vmatprep.subr.mxu0 0.0
    %v4009 = vand.u32 %v3543, 4294901760
    %4010 = vmatpush1.msra.mxu0 %v4009
    %4011 = vmatprep.subr.mxu0 0.0
    %v4012 = vand.u32 %v3544, 4294901760
    %4013 = vmatpush1.msra.mxu0 %v4012
    %4014 = vmatprep.subr.mxu0 0.0
    %v4015 = vand.u32 %v3545, 4294901760
    %4016 = vmatpush1.msra.mxu0 %v4015
    %4017 = vmatprep.subr.mxu0 0.0
    %v4018 = vand.u32 %v3546, 4294901760
    %4019 = vmatpush1.msra.mxu0 %v4018
    %4020 = vmatprep.subr.mxu0 0.0
    %4021 = vmatpush1.msra.mxu0 0.0
    %4022 = vmatprep.subr.mxu0 0.0
    %4023 = vmatpush1.msra.mxu0 0.0
    %4024 = vmatprep.subr.mxu0 0.0
    %4025 = vmatpush1.msra.mxu0 0.0
    %4026 = vmatprep.subr.mxu0 0.0
    %4027 = vmatpush1.msra.mxu0 0.0
    %4028 = vmatprep.subr.mxu0 0.0
    %4029 = vmatpush1.msra.mxu0 0.0
    %4030 = vmatprep.subr.mxu0 0.0
    %4031 = vmatpush1.msra.mxu0 0.0
    %4032 = vmatprep.subr.mxu0 0.0
    %4033 = vmatpush1.msra.mxu0 0.0
    %4034 = vmatprep.subr.mxu0 0.0
    %4035 = vmatpush1.msra.mxu0 0.0
    %4036 = vmatprep.subr.mxu0 0.0
    %4037 = vmatpush1.msra.mxu0 0.0
    %4038 = vmatprep.subr.mxu0 0.0
    %4039 = vmatpush1.msra.mxu0 0.0
    %4040 = vmatprep.subr.mxu0 0.0
    %4041 = vmatpush1.msra.mxu0 0.0
    %4042 = vmatprep.subr.mxu0 0.0
    %4043 = vmatpush1.msra.mxu0 0.0
    %4044 = vmatprep.subr.mxu0 0.0
    %4045 = vmatpush1.msra.mxu0 0.0
    %4046 = vmatprep.subr.mxu0 0.0
    %4047 = vmatpush1.msra.mxu0 0.0
    %4048 = vmatprep.subr.mxu0 0.0
    %4049 = vmatpush1.msra.mxu0 0.0
    %4050 = vmatprep.subr.mxu0 0.0
    %4051 = vmatpush1.msra.mxu0 0.0
    %4052 = vmatprep.subr.mxu0 0.0
    %4053 = vmatpush1.msra.mxu0 0.0
    %4054 = vmatprep.subr.mxu0 0.0
    %4055 = vmatpush1.msra.mxu0 0.0
    %4056 = vmatprep.subr.mxu0 0.0
    %4057 = vmatpush1.msra.mxu0 0.0
    %4058 = vmatprep.subr.mxu0 0.0
    %4059 = vmatpush1.msra.mxu0 0.0
    %4060 = vmatprep.subr.mxu0 0.0
    %4061 = vmatpush1.msra.mxu0 0.0
    %4062 = vmatprep.subr.mxu0 0.0
    %4063 = vmatpush1.msra.mxu0 0.0
    %4064 = vmatprep.subr.mxu0 0.0
    %4065 = vmatpush1.msra.mxu0 0.0
    %4066 = vmatprep.subr.mxu0 0.0
    %4067 = vmatpush1.msra.mxu0 0.0
    %4068 = vmatprep.subr.mxu0 0.0
    %4069 = vmatpush1.msra.mxu0 0.0
    %4070 = vmatprep.subr.mxu0 0.0
    %4071 = vmatpush1.msra.mxu0 0.0
    %4072 = vmatprep.subr.mxu0 0.0
    %4073 = vmatpush1.msra.mxu0 0.0
    %4074 = vmatprep.subr.mxu0 0.0
    %4075 = vmatpush1.msra.mxu0 0.0
    %4076 = vmatprep.mubr.f32.mxu0 0.0
    %v4077 = vand.u32 %v3556, 4294901760
    %4078 = vmatmul.mubr.f32.gmra.mrb[0].mxu0 %v4077
    %v4079 = vpop.f32.mrb[0].mxu0
    %v4080 = vadd.f32 %v3999, %v4079
    %v4081 = vpop.f32.mrb[0].mxu0
    %4082 = vmatprep.mubr.f32.mxu0 0.0
    %v4083 = vand.u32 %v3559, 4294901760
    %4084 = vmatmul.mubr.f32.gmra.mrb[0].mxu0 %v4083
    %v4085 = vpop.f32.mrb[0].mxu0
    %v4086 = vadd.f32 %v4005, %v4085
    %v4087 = vpop.f32.mrb[0].mxu0
    %4088 = vdwg.mxu0
    %s4089 = scalar_lea.vmem %s10, 32
    %v4090 = vld [vmem:[%s4089] sm:$0xff]
    %v4091 = vld [vmem:[%s4089 + $0x8] sm:$0xff]
    %v4092 = vld [vmem:[%s4089 + $0x10] sm:$0xff]
    %v4093 = vld [vmem:[%s4089 + $0x18] sm:$0xff]
    %s4094 = scalar_lea.vmem %s11, 1
    %v4095 = vld [vmem:[%s4094] sm:$0x1]
    %v4097 = vlaneseq
    %v4098 = vshrl.u32 %v4097, 7
    %v4099 = vsub.s32 0, %v4098
    %v4100 = vrot.slane %v4095, %v4099
    %v4103 = vsel %vm753, %v3526, 0
    %v4106 = vsel %vm753, %v3527, 0
    %v4109 = vsel %vm753, %v3528, 0
    %v4112 = vsel %vm753, %v3529, 0
    %v4115 = vsel %vm753, %v3530, 0
    %v4118 = vsel %vm753, %v3531, 0
    %v4121 = vsel %vm753, %v3532, 0
    %v4124 = vsel %vm753, %v3533, 0
    %v4127 = vsel %vm753, %v3534, 0
    %v4130 = vsel %vm753, %v3535, 0
    %v4133 = vsel %vm753, %v3536, 0
    %v4136 = vsel %vm753, %v3537, 0
    %v4139 = vsel %vm753, %v3538, 0
    %v4142 = vsel %vm753, %v3539, 0
    %v4145 = vsel %vm753, %v3540, 0
    %v4148 = vsel %vm753, %v3541, 0
    %4150 = vmatprep.subr.mxu0 0.0
    %v4151 = vand.u32 %v4090, 4294901760
    %4152 = vmatpush1.msra.mxu0 %v4151
    %4153 = vmatprep.subr.mxu0 0.0
    %v4154 = vand.u32 %v4091, 4294901760
    %4155 = vmatpush1.msra.mxu0 %v4154
    %4156 = vmatprep.subr.mxu0 0.0
    %v4157 = vand.u32 %v4092, 4294901760
    %4158 = vmatpush1.msra.mxu0 %v4157
    %4159 = vmatprep.subr.mxu0 0.0
    %v4160 = vand.u32 %v4093, 4294901760
    %4161 = vmatpush1.msra.mxu0 %v4160
    %4162 = vmatprep.subr.mxu0 0.0
    %4163 = vmatpush1.msra.mxu0 0.0
    %4164 = vmatprep.subr.mxu0 0.0
    %4165 = vmatpush1.msra.mxu0 0.0
    %4166 = vmatprep.subr.mxu0 0.0
    %4167 = vmatpush1.msra.mxu0 0.0
    %4168 = vmatprep.subr.mxu0 0.0
    %4169 = vmatpush1.msra.mxu0 0.0
    %4170 = vmatprep.subr.mxu0 0.0
    %4171 = vmatpush1.msra.mxu0 0.0
    %4172 = vmatprep.subr.mxu0 0.0
    %4173 = vmatpush1.msra.mxu0 0.0
    %4174 = vmatprep.subr.mxu0 0.0
    %4175 = vmatpush1.msra.mxu0 0.0
    %4176 = vmatprep.subr.mxu0 0.0
    %4177 = vmatpush1.msra.mxu0 0.0
    %4178 = vmatprep.subr.mxu0 0.0
    %4179 = vmatpush1.msra.mxu0 0.0
    %4180 = vmatprep.subr.mxu0 0.0
    %4181 = vmatpush1.msra.mxu0 0.0
    %4182 = vmatprep.subr.mxu0 0.0
    %4183 = vmatpush1.msra.mxu0 0.0
    %4184 = vmatprep.subr.mxu0 0.0
    %4185 = vmatpush1.msra.mxu0 0.0
    %4186 = vmatprep.subr.mxu0 0.0
    %4187 = vmatpush1.msra.mxu0 0.0
    %4188 = vmatprep.subr.mxu0 0.0
    %4189 = vmatpush1.msra.mxu0 0.0
    %4190 = vmatprep.subr.mxu0 0.0
    %4191 = vmatpush1.msra.mxu0 0.0
    %4192 = vmatprep.subr.mxu0 0.0
    %4193 = vmatpush1.msra.mxu0 0.0
    %4194 = vmatprep.subr.mxu0 0.0
    %4195 = vmatpush1.msra.mxu0 0.0
    %4196 = vmatprep.subr.mxu0 0.0
    %4197 = vmatpush1.msra.mxu0 0.0
    %4198 = vmatprep.subr.mxu0 0.0
    %4199 = vmatpush1.msra.mxu0 0.0
    %4200 = vmatprep.subr.mxu0 0.0
    %4201 = vmatpush1.msra.mxu0 0.0
    %4202 = vmatprep.subr.mxu0 0.0
    %4203 = vmatpush1.msra.mxu0 0.0
    %4204 = vmatprep.subr.mxu0 0.0
    %4205 = vmatpush1.msra.mxu0 0.0
    %4206 = vmatprep.subr.mxu0 0.0
    %4207 = vmatpush1.msra.mxu0 0.0
    %4208 = vmatprep.subr.mxu0 0.0
    %4209 = vmatpush1.msra.mxu0 0.0
    %4210 = vmatprep.subr.mxu0 0.0
    %4211 = vmatpush1.msra.mxu0 0.0
    %4212 = vmatprep.subr.mxu0 0.0
    %4213 = vmatpush1.msra.mxu0 0.0
    %4214 = vmatprep.subr.mxu0 0.0
    %4215 = vmatpush1.msra.mxu0 0.0
    %4216 = vmatprep.subr.mxu0 0.0
    %4217 = vmatpush1.msra.mxu0 0.0
    %4218 = vmatprep.mubr.f32.mxu0 0.0
    %v4219 = vand.u32 %v4103, 4294901760
    %v4220 = vsub.f32 %v4103, %v4219
    %v4221 = vand.u32 %v4220, 4294901760
    %v4222 = vsub.f32 %v4220, %v4221
    %v4223 = vand.u32 %v4222, 4294901760
    %4224 = vmatmul.mubr.f32.gmra.mrb[0].mxu0 %v4223
    %v4225 = vpop.f32.mrb[0].mxu0
    %v4226 = vadd.f32 %v4100, %v4225
    %v4227 = vpop.f32.mrb[0].mxu0
    %4228 = vmatprep.mubr.f32.mxu0 0.0
    %v4229 = vand.u32 %v4106, 4294901760
    %v4230 = vsub.f32 %v4106, %v4229
    %v4231 = vand.u32 %v4230, 4294901760
    %v4232 = vsub.f32 %v4230, %v4231
    %v4233 = vand.u32 %v4232, 4294901760
    %4234 = vmatmul.mubr.f32.gmra.mrb[0].mxu0 %v4233
    %v4235 = vpop.f32.mrb[0].mxu0
    %v4236 = vadd.f32 %v4100, %v4235
    %v4237 = vpop.f32.mrb[0].mxu0
    %4238 = vmatprep.mubr.f32.mxu0 0.0
    %v4239 = vand.u32 %v4109, 4294901760
    %v4240 = vsub.f32 %v4109, %v4239
    %v4241 = vand.u32 %v4240, 4294901760
    %v4242 = vsub.f32 %v4240, %v4241
    %v4243 = vand.u32 %v4242, 4294901760
    %4244 = vmatmul.mubr.f32.gmra.mrb[0].mxu0 %v4243
    %v4245 = vpop.f32.mrb[0].mxu0
    %v4246 = vadd.f32 %v4100, %v4245
    %v4247 = vpop.f32.mrb[0].mxu0
    %4248 = vmatprep.mubr.f32.mxu0 0.0
    %v4249 = vand.u32 %v4112, 4294901760
    %v4250 = vsub.f32 %v4112, %v4249
    %v4251 = vand.u32 %v4250, 4294901760
    %v4252 = vsub.f32 %v4250, %v4251
    %v4253 = vand.u32 %v4252, 4294901760
    %4254 = vmatmul.mubr.f32.gmra.mrb[0].mxu0 %v4253
    %v4255 = vpop.f32.mrb[0].mxu0
    %v4256 = vadd.f32 %v4100, %v4255
    %v4257 = vpop.f32.mrb[0].mxu0
    %4258 = vmatprep.mubr.f32.mxu0 0.0
    %v4259 = vand.u32 %v4115, 4294901760
    %v4260 = vsub.f32 %v4115, %v4259
    %v4261 = vand.u32 %v4260, 4294901760
    %v4262 = vsub.f32 %v4260, %v4261
    %v4263 = vand.u32 %v4262, 4294901760
    %4264 = vmatmul.mubr.f32.gmra.mrb[0].mxu0 %v4263
    %v4265 = vpop.f32.mrb[0].mxu0
    %v4266 = vadd.f32 %v4100, %v4265
    %v4267 = vpop.f32.mrb[0].mxu0
    %4268 = vmatprep.mubr.f32.mxu0 0.0
    %v4269 = vand.u32 %v4118, 4294901760
    %v4270 = vsub.f32 %v4118, %v4269
    %v4271 = vand.u32 %v4270, 4294901760
    %v4272 = vsub.f32 %v4270, %v4271
    %v4273 = vand.u32 %v4272, 4294901760
    %4274 = vmatmul.mubr.f32.gmra.mrb[0].mxu0 %v4273
    %v4275 = vpop.f32.mrb[0].mxu0
    %v4276 = vadd.f32 %v4100, %v4275
    %v4277 = vpop.f32.mrb[0].mxu0
    %4278 = vmatprep.mubr.f32.mxu0 0.0
    %v4279 = vand.u32 %v4121, 4294901760
    %v4280 = vsub.f32 %v4121, %v4279
    %v4281 = vand.u32 %v4280, 4294901760
    %v4282 = vsub.f32 %v4280, %v4281
    %v4283 = vand.u32 %v4282, 4294901760
    %4284 = vmatmul.mubr.f32.gmra.mrb[0].mxu0 %v4283
    %v4285 = vpop.f32.mrb[0].mxu0
    %v4286 = vadd.f32 %v4100, %v4285
    %v4287 = vpop.f32.mrb[0].mxu0
    %4288 = vmatprep.mubr.f32.mxu0 0.0
    %v4289 = vand.u32 %v4124, 4294901760
    %v4290 = vsub.f32 %v4124, %v4289
    %v4291 = vand.u32 %v4290, 4294901760
    %v4292 = vsub.f32 %v4290, %v4291
    %v4293 = vand.u32 %v4292, 4294901760
    %4294 = vmatmul.mubr.f32.gmra.mrb[0].mxu0 %v4293
    %v4295 = vpop.f32.mrb[0].mxu0
    %v4296 = vadd.f32 %v4100, %v4295
    %v4297 = vpop.f32.mrb[0].mxu0
    %4298 = vmatprep.mubr.f32.mxu0 0.0
    %v4299 = vand.u32 %v4127, 4294901760
    %v4300 = vsub.f32 %v4127, %v4299
    %v4301 = vand.u32 %v4300, 4294901760
    %v4302 = vsub.f32 %v4300, %v4301
    %v4303 = vand.u32 %v4302, 4294901760
    %4304 = vmatmul.mubr.f32.gmra.mrb[0].mxu0 %v4303
    %v4305 = vpop.f32.mrb[0].mxu0
    %v4306 = vadd.f32 %v4100, %v4305
    %v4307 = vpop.f32.mrb[0].mxu0
    %4308 = vmatprep.mubr.f32.mxu0 0.0
    %v4309 = vand.u32 %v4130, 4294901760
    %v4310 = vsub.f32 %v4130, %v4309
    %v4311 = vand.u32 %v4310, 4294901760
    %v4312 = vsub.f32 %v4310, %v4311
    %v4313 = vand.u32 %v4312, 4294901760
    %4314 = vmatmul.mubr.f32.gmra.mrb[0].mxu0 %v4313
    %v4315 = vpop.f32.mrb[0].mxu0
    %v4316 = vadd.f32 %v4100, %v4315
    %v4317 = vpop.f32.mrb[0].mxu0
    %4318 = vmatprep.mubr.f32.mxu0 0.0
    %v4319 = vand.u32 %v4133, 4294901760
    %v4320 = vsub.f32 %v4133, %v4319
    %v4321 = vand.u32 %v4320, 4294901760
    %v4322 = vsub.f32 %v4320, %v4321
    %v4323 = vand.u32 %v4322, 4294901760
    %4324 = vmatmul.mubr.f32.gmra.mrb[0].mxu0 %v4323
    %v4325 = vpop.f32.mrb[0].mxu0
    %v4326 = vadd.f32 %v4100, %v4325
    %v4327 = vpop.f32.mrb[0].mxu0
    %4328 = vmatprep.mubr.f32.mxu0 0.0
    %v4329 = vand.u32 %v4136, 4294901760
    %v4330 = vsub.f32 %v4136, %v4329
    %v4331 = vand.u32 %v4330, 4294901760
    %v4332 = vsub.f32 %v4330, %v4331
    %v4333 = vand.u32 %v4332, 4294901760
    %4334 = vmatmul.mubr.f32.gmra.mrb[0].mxu0 %v4333
    %v4335 = vpop.f32.mrb[0].mxu0
    %v4336 = vadd.f32 %v4100, %v4335
    %v4337 = vpop.f32.mrb[0].mxu0
    %4338 = vmatprep.mubr.f32.mxu0 0.0
    %v4339 = vand.u32 %v4139, 4294901760
    %v4340 = vsub.f32 %v4139, %v4339
    %v4341 = vand.u32 %v4340, 4294901760
    %v4342 = vsub.f32 %v4340, %v4341
    %v4343 = vand.u32 %v4342, 4294901760
    %4344 = vmatmul.mubr.f32.gmra.mrb[0].mxu0 %v4343
    %v4345 = vpop.f32.mrb[0].mxu0
    %v4346 = vadd.f32 %v4100, %v4345
    %v4347 = vpop.f32.mrb[0].mxu0
    %4348 = vmatprep.mubr.f32.mxu0 0.0
    %v4349 = vand.u32 %v4142, 4294901760
    %v4350 = vsub.f32 %v4142, %v4349
    %v4351 = vand.u32 %v4350, 4294901760
    %v4352 = vsub.f32 %v4350, %v4351
    %v4353 = vand.u32 %v4352, 4294901760
    %4354 = vmatmul.mubr.f32.gmra.mrb[0].mxu0 %v4353
    %v4355 = vpop.f32.mrb[0].mxu0
    %v4356 = vadd.f32 %v4100, %v4355
    %v4357 = vpop.f32.mrb[0].mxu0
    %4358 = vmatprep.mubr.f32.mxu0 0.0
    %v4359 = vand.u32 %v4145, 4294901760
    %v4360 = vsub.f32 %v4145, %v4359
    %v4361 = vand.u32 %v4360, 4294901760
    %v4362 = vsub.f32 %v4360, %v4361
    %v4363 = vand.u32 %v4362, 4294901760
    %4364 = vmatmul.mubr.f32.gmra.mrb[0].mxu0 %v4363
    %v4365 = vpop.f32.mrb[0].mxu0
    %v4366 = vadd.f32 %v4100, %v4365
    %v4367 = vpop.f32.mrb[0].mxu0
    %4368 = vmatprep.mubr.f32.mxu0 0.0
    %v4369 = vand.u32 %v4148, 4294901760
    %v4370 = vsub.f32 %v4148, %v4369
    %v4371 = vand.u32 %v4370, 4294901760
    %v4372 = vsub.f32 %v4370, %v4371
    %v4373 = vand.u32 %v4372, 4294901760
    %4374 = vmatmul.mubr.f32.gmra.mrb[0].mxu0 %v4373
    %v4375 = vpop.f32.mrb[0].mxu0
    %v4376 = vadd.f32 %v4100, %v4375
    %v4377 = vpop.f32.mrb[0].mxu0
    %4378 = vdwg.mxu0
    %4379 = vmatprep.subr.mxu0 0.0
    %v4380 = vand.u32 %v4090, 4294901760
    %v4381 = vsub.f32 %v4090, %v4380
    %v4382 = vand.u32 %v4381, 4294901760
    %v4383 = vsub.f32 %v4381, %v4382
    %v4384 = vand.u32 %v4383, 4294901760
    %4385 = vmatpush1.msra.mxu0 %v4384
    %4386 = vmatprep.subr.mxu0 0.0
    %v4387 = vand.u32 %v4091, 4294901760
    %v4388 = vsub.f32 %v4091, %v4387
    %v4389 = vand.u32 %v4388, 4294901760
    %v4390 = vsub.f32 %v4388, %v4389
    %v4391 = vand.u32 %v4390, 4294901760
    %4392 = vmatpush1.msra.mxu0 %v4391
    %4393 = vmatprep.subr.mxu0 0.0
    %v4394 = vand.u32 %v4092, 4294901760
    %v4395 = vsub.f32 %v4092, %v4394
    %v4396 = vand.u32 %v4395, 4294901760
    %v4397 = vsub.f32 %v4395, %v4396
    %v4398 = vand.u32 %v4397, 4294901760
    %4399 = vmatpush1.msra.mxu0 %v4398
    %4400 = vmatprep.subr.mxu0 0.0
    %v4401 = vand.u32 %v4093, 4294901760
    %v4402 = vsub.f32 %v4093, %v4401
    %v4403 = vand.u32 %v4402, 4294901760
    %v4404 = vsub.f32 %v4402, %v4403
    %v4405 = vand.u32 %v4404, 4294901760
    %4406 = vmatpush1.msra.mxu0 %v4405
    %4407 = vmatprep.subr.mxu0 0.0
    %4408 = vmatpush1.msra.mxu0 0.0
    %4409 = vmatprep.subr.mxu0 0.0
    %4410 = vmatpush1.msra.mxu0 0.0
    %4411 = vmatprep.subr.mxu0 0.0
    %4412 = vmatpush1.msra.mxu0 0.0
    %4413 = vmatprep.subr.mxu0 0.0
    %4414 = vmatpush1.msra.mxu0 0.0
    %4415 = vmatprep.subr.mxu0 0.0
    %4416 = vmatpush1.msra.mxu0 0.0
    %4417 = vmatprep.subr.mxu0 0.0
    %4418 = vmatpush1.msra.mxu0 0.0
    %4419 = vmatprep.subr.mxu0 0.0
    %4420 = vmatpush1.msra.mxu0 0.0
    %4421 = vmatprep.subr.mxu0 0.0
    %4422 = vmatpush1.msra.mxu0 0.0
    %4423 = vmatprep.subr.mxu0 0.0
    %4424 = vmatpush1.msra.mxu0 0.0
    %4425 = vmatprep.subr.mxu0 0.0
    %4426 = vmatpush1.msra.mxu0 0.0
    %4427 = vmatprep.subr.mxu0 0.0
    %4428 = vmatpush1.msra.mxu0 0.0
    %4429 = vmatprep.subr.mxu0 0.0
    %4430 = vmatpush1.msra.mxu0 0.0
    %4431 = vmatprep.subr.mxu0 0.0
    %4432 = vmatpush1.msra.mxu0 0.0
    %4433 = vmatprep.subr.mxu0 0.0
    %4434 = vmatpush1.msra.mxu0 0.0
    %4435 = vmatprep.subr.mxu0 0.0
    %4436 = vmatpush1.msra.mxu0 0.0
    %4437 = vmatprep.subr.mxu0 0.0
    %4438 = vmatpush1.msra.mxu0 0.0
    %4439 = vmatprep.subr.mxu0 0.0
    %4440 = vmatpush1.msra.mxu0 0.0
    %4441 = vmatprep.subr.mxu0 0.0
    %4442 = vmatpush1.msra.mxu0 0.0
    %4443 = vmatprep.subr.mxu0 0.0
    %4444 = vmatpush1.msra.mxu0 0.0
    %4445 = vmatprep.subr.mxu0 0.0
    %4446 = vmatpush1.msra.mxu0 0.0
    %4447 = vmatprep.subr.mxu0 0.0
    %4448 = vmatpush1.msra.mxu0 0.0
    %4449 = vmatprep.subr.mxu0 0.0
    %4450 = vmatpush1.msra.mxu0 0.0
    %4451 = vmatprep.subr.mxu0 0.0
    %4452 = vmatpush1.msra.mxu0 0.0
    %4453 = vmatprep.subr.mxu0 0.0
    %4454 = vmatpush1.msra.mxu0 0.0
    %4455 = vmatprep.subr.mxu0 0.0
    %4456 = vmatpush1.msra.mxu0 0.0
    %4457 = vmatprep.subr.mxu0 0.0
    %4458 = vmatpush1.msra.mxu0 0.0
    %4459 = vmatprep.subr.mxu0 0.0
    %4460 = vmatpush1.msra.mxu0 0.0
    %4461 = vmatprep.subr.mxu0 0.0
    %4462 = vmatpush1.msra.mxu0 0.0
    %4463 = vmatprep.mubr.f32.mxu0 0.0
    %v4464 = vand.u32 %v4103, 4294901760
    %4465 = vmatmul.mubr.f32.gmra.mrb[0].mxu0 %v4464
    %v4466 = vpop.f32.mrb[0].mxu0
    %v4467 = vadd.f32 %v4226, %v4466
    %v4468 = vpop.f32.mrb[0].mxu0
    %4469 = vmatprep.mubr.f32.mxu0 0.0
    %v4470 = vand.u32 %v4106, 4294901760
    %4471 = vmatmul.mubr.f32.gmra.mrb[0].mxu0 %v4470
    %v4472 = vpop.f32.mrb[0].mxu0
    %v4473 = vadd.f32 %v4236, %v4472
    %v4474 = vpop.f32.mrb[0].mxu0
    %4475 = vmatprep.mubr.f32.mxu0 0.0
    %v4476 = vand.u32 %v4109, 4294901760
    %4477 = vmatmul.mubr.f32.gmra.mrb[0].mxu0 %v4476
    %v4478 = vpop.f32.mrb[0].mxu0
    %v4479 = vadd.f32 %v4246, %v4478
    %v4480 = vpop.f32.mrb[0].mxu0
    %4481 = vmatprep.mubr.f32.mxu0 0.0
    %v4482 = vand.u32 %v4112, 4294901760
    %4483 = vmatmul.mubr.f32.gmra.mrb[0].mxu0 %v4482
    %v4484 = vpop.f32.mrb[0].mxu0
    %v4485 = vadd.f32 %v4256, %v4484
    %v4486 = vpop.f32.mrb[0].mxu0
    %4487 = vmatprep.mubr.f32.mxu0 0.0
    %v4488 = vand.u32 %v4115, 4294901760
    %4489 = vmatmul.mubr.f32.gmra.mrb[0].mxu0 %v4488
    %v4490 = vpop.f32.mrb[0].mxu0
    %v4491 = vadd.f32 %v4266, %v4490
    %v4492 = vpop.f32.mrb[0].mxu0
    %4493 = vmatprep.mubr.f32.mxu0 0.0
    %v4494 = vand.u32 %v4118, 4294901760
    %4495 = vmatmul.mubr.f32.gmra.mrb[0].mxu0 %v4494
    %v4496 = vpop.f32.mrb[0].mxu0
    %v4497 = vadd.f32 %v4276, %v4496
    %v4498 = vpop.f32.mrb[0].mxu0
    %4499 = vmatprep.mubr.f32.mxu0 0.0
    %v4500 = vand.u32 %v4121, 4294901760
    %4501 = vmatmul.mubr.f32.gmra.mrb[0].mxu0 %v4500
    %v4502 = vpop.f32.mrb[0].mxu0
    %v4503 = vadd.f32 %v4286, %v4502
    %v4504 = vpop.f32.mrb[0].mxu0
    %4505 = vmatprep.mubr.f32.mxu0 0.0
    %v4506 = vand.u32 %v4124, 4294901760
    %4507 = vmatmul.mubr.f32.gmra.mrb[0].mxu0 %v4506
    %v4508 = vpop.f32.mrb[0].mxu0
    %v4509 = vadd.f32 %v4296, %v4508
    %v4510 = vpop.f32.mrb[0].mxu0
    %4511 = vmatprep.mubr.f32.mxu0 0.0
    %v4512 = vand.u32 %v4127, 4294901760
    %4513 = vmatmul.mubr.f32.gmra.mrb[0].mxu0 %v4512
    %v4514 = vpop.f32.mrb[0].mxu0
    %v4515 = vadd.f32 %v4306, %v4514
    %v4516 = vpop.f32.mrb[0].mxu0
    %4517 = vmatprep.mubr.f32.mxu0 0.0
    %v4518 = vand.u32 %v4130, 4294901760
    %4519 = vmatmul.mubr.f32.gmra.mrb[0].mxu0 %v4518
    %v4520 = vpop.f32.mrb[0].mxu0
    %v4521 = vadd.f32 %v4316, %v4520
    %v4522 = vpop.f32.mrb[0].mxu0
    %4523 = vmatprep.mubr.f32.mxu0 0.0
    %v4524 = vand.u32 %v4133, 4294901760
    %4525 = vmatmul.mubr.f32.gmra.mrb[0].mxu0 %v4524
    %v4526 = vpop.f32.mrb[0].mxu0
    %v4527 = vadd.f32 %v4326, %v4526
    %v4528 = vpop.f32.mrb[0].mxu0
    %4529 = vmatprep.mubr.f32.mxu0 0.0
    %v4530 = vand.u32 %v4136, 4294901760
    %4531 = vmatmul.mubr.f32.gmra.mrb[0].mxu0 %v4530
    %v4532 = vpop.f32.mrb[0].mxu0
    %v4533 = vadd.f32 %v4336, %v4532
    %v4534 = vpop.f32.mrb[0].mxu0
    %4535 = vmatprep.mubr.f32.mxu0 0.0
    %v4536 = vand.u32 %v4139, 4294901760
    %4537 = vmatmul.mubr.f32.gmra.mrb[0].mxu0 %v4536
    %v4538 = vpop.f32.mrb[0].mxu0
    %v4539 = vadd.f32 %v4346, %v4538
    %v4540 = vpop.f32.mrb[0].mxu0
    %4541 = vmatprep.mubr.f32.mxu0 0.0
    %v4542 = vand.u32 %v4142, 4294901760
    %4543 = vmatmul.mubr.f32.gmra.mrb[0].mxu0 %v4542
    %v4544 = vpop.f32.mrb[0].mxu0
    %v4545 = vadd.f32 %v4356, %v4544
    %v4546 = vpop.f32.mrb[0].mxu0
    %4547 = vmatprep.mubr.f32.mxu0 0.0
    %v4548 = vand.u32 %v4145, 4294901760
    %4549 = vmatmul.mubr.f32.gmra.mrb[0].mxu0 %v4548
    %v4550 = vpop.f32.mrb[0].mxu0
    %v4551 = vadd.f32 %v4366, %v4550
    %v4552 = vpop.f32.mrb[0].mxu0
    %4553 = vmatprep.mubr.f32.mxu0 0.0
    %v4554 = vand.u32 %v4148, 4294901760
    %4555 = vmatmul.mubr.f32.gmra.mrb[0].mxu0 %v4554
    %v4556 = vpop.f32.mrb[0].mxu0
    %v4557 = vadd.f32 %v4376, %v4556
    %v4558 = vpop.f32.mrb[0].mxu0
    %4559 = vdwg.mxu0
    %4560 = vmatprep.subr.mxu0 0.0
    %v4561 = vand.u32 %v4090, 4294901760
    %v4562 = vsub.f32 %v4090, %v4561
    %4563 = vmatpush1.msra.mxu0 %v4562
    %4564 = vmatprep.subr.mxu0 0.0
    %v4565 = vand.u32 %v4091, 4294901760
    %v4566 = vsub.f32 %v4091, %v4565
    %4567 = vmatpush1.msra.mxu0 %v4566
    %4568 = vmatprep.subr.mxu0 0.0
    %v4569 = vand.u32 %v4092, 4294901760
    %v4570 = vsub.f32 %v4092, %v4569
    %4571 = vmatpush1.msra.mxu0 %v4570
    %4572 = vmatprep.subr.mxu0 0.0
    %v4573 = vand.u32 %v4093, 4294901760
    %v4574 = vsub.f32 %v4093, %v4573
    %4575 = vmatpush1.msra.mxu0 %v4574
    %4576 = vmatprep.subr.mxu0 0.0
    %4577 = vmatpush1.msra.mxu0 0.0
    %4578 = vmatprep.subr.mxu0 0.0
    %4579 = vmatpush1.msra.mxu0 0.0
    %4580 = vmatprep.subr.mxu0 0.0
    %4581 = vmatpush1.msra.mxu0 0.0
    %4582 = vmatprep.subr.mxu0 0.0
    %4583 = vmatpush1.msra.mxu0 0.0
    %4584 = vmatprep.subr.mxu0 0.0
    %4585 = vmatpush1.msra.mxu0 0.0
    %4586 = vmatprep.subr.mxu0 0.0
    %4587 = vmatpush1.msra.mxu0 0.0
    %4588 = vmatprep.subr.mxu0 0.0
    %4589 = vmatpush1.msra.mxu0 0.0
    %4590 = vmatprep.subr.mxu0 0.0
    %4591 = vmatpush1.msra.mxu0 0.0
    %4592 = vmatprep.subr.mxu0 0.0
    %4593 = vmatpush1.msra.mxu0 0.0
    %4594 = vmatprep.subr.mxu0 0.0
    %4595 = vmatpush1.msra.mxu0 0.0
    %4596 = vmatprep.subr.mxu0 0.0
    %4597 = vmatpush1.msra.mxu0 0.0
    %4598 = vmatprep.subr.mxu0 0.0
    %4599 = vmatpush1.msra.mxu0 0.0
    %4600 = vmatprep.subr.mxu0 0.0
    %4601 = vmatpush1.msra.mxu0 0.0
    %4602 = vmatprep.subr.mxu0 0.0
    %4603 = vmatpush1.msra.mxu0 0.0
    %4604 = vmatprep.subr.mxu0 0.0
    %4605 = vmatpush1.msra.mxu0 0.0
    %4606 = vmatprep.subr.mxu0 0.0
    %4607 = vmatpush1.msra.mxu0 0.0
    %4608 = vmatprep.subr.mxu0 0.0
    %4609 = vmatpush1.msra.mxu0 0.0
    %4610 = vmatprep.subr.mxu0 0.0
    %4611 = vmatpush1.msra.mxu0 0.0
    %4612 = vmatprep.subr.mxu0 0.0
    %4613 = vmatpush1.msra.mxu0 0.0
    %4614 = vmatprep.subr.mxu0 0.0
    %4615 = vmatpush1.msra.mxu0 0.0
    %4616 = vmatprep.subr.mxu0 0.0
    %4617 = vmatpush1.msra.mxu0 0.0
    %4618 = vmatprep.subr.mxu0 0.0
    %4619 = vmatpush1.msra.mxu0 0.0
    %4620 = vmatprep.subr.mxu0 0.0
    %4621 = vmatpush1.msra.mxu0 0.0
    %4622 = vmatprep.subr.mxu0 0.0
    %4623 = vmatpush1.msra.mxu0 0.0
    %4624 = vmatprep.subr.mxu0 0.0
    %4625 = vmatpush1.msra.mxu0 0.0
    %4626 = vmatprep.subr.mxu0 0.0
    %4627 = vmatpush1.msra.mxu0 0.0
    %4628 = vmatprep.subr.mxu0 0.0
    %4629 = vmatpush1.msra.mxu0 0.0
    %4630 = vmatprep.subr.mxu0 0.0
    %4631 = vmatpush1.msra.mxu0 0.0
    %4632 = vmatprep.mubr.f32.mxu0 0.0
    %v4633 = vand.u32 %v4103, 4294901760
    %v4634 = vsub.f32 %v4103, %v4633
    %4635 = vmatmul.mubr.f32.gmra.mrb[0].mxu0 %v4634
    %v4636 = vpop.f32.mrb[0].mxu0
    %v4637 = vadd.f32 %v4467, %v4636
    %v4638 = vpop.f32.mrb[0].mxu0
    %4639 = vmatprep.mubr.f32.mxu0 0.0
    %v4640 = vand.u32 %v4106, 4294901760
    %v4641 = vsub.f32 %v4106, %v4640
    %4642 = vmatmul.mubr.f32.gmra.mrb[0].mxu0 %v4641
    %v4643 = vpop.f32.mrb[0].mxu0
    %v4644 = vadd.f32 %v4473, %v4643
    %v4645 = vpop.f32.mrb[0].mxu0
    %4646 = vmatprep.mubr.f32.mxu0 0.0
    %v4647 = vand.u32 %v4109, 4294901760
    %v4648 = vsub.f32 %v4109, %v4647
    %4649 = vmatmul.mubr.f32.gmra.mrb[0].mxu0 %v4648
    %v4650 = vpop.f32.mrb[0].mxu0
    %v4651 = vadd.f32 %v4479, %v4650
    %v4652 = vpop.f32.mrb[0].mxu0
    %4653 = vmatprep.mubr.f32.mxu0 0.0
    %v4654 = vand.u32 %v4112, 4294901760
    %v4655 = vsub.f32 %v4112, %v4654
    %4656 = vmatmul.mubr.f32.gmra.mrb[0].mxu0 %v4655
    %v4657 = vpop.f32.mrb[0].mxu0
    %v4658 = vadd.f32 %v4485, %v4657
    %v4659 = vpop.f32.mrb[0].mxu0
    %4660 = vmatprep.mubr.f32.mxu0 0.0
    %v4661 = vand.u32 %v4115, 4294901760
    %v4662 = vsub.f32 %v4115, %v4661
    %4663 = vmatmul.mubr.f32.gmra.mrb[0].mxu0 %v4662
    %v4664 = vpop.f32.mrb[0].mxu0
    %v4665 = vadd.f32 %v4491, %v4664
    %v4666 = vpop.f32.mrb[0].mxu0
    %4667 = vmatprep.mubr.f32.mxu0 0.0
    %v4668 = vand.u32 %v4118, 4294901760
    %v4669 = vsub.f32 %v4118, %v4668
    %4670 = vmatmul.mubr.f32.gmra.mrb[0].mxu0 %v4669
    %v4671 = vpop.f32.mrb[0].mxu0
    %v4672 = vadd.f32 %v4497, %v4671
    %v4673 = vpop.f32.mrb[0].mxu0
    %4674 = vmatprep.mubr.f32.mxu0 0.0
    %v4675 = vand.u32 %v4121, 4294901760
    %v4676 = vsub.f32 %v4121, %v4675
    %4677 = vmatmul.mubr.f32.gmra.mrb[0].mxu0 %v4676
    %v4678 = vpop.f32.mrb[0].mxu0
    %v4679 = vadd.f32 %v4503, %v4678
    %v4680 = vpop.f32.mrb[0].mxu0
    %4681 = vmatprep.mubr.f32.mxu0 0.0
    %v4682 = vand.u32 %v4124, 4294901760
    %v4683 = vsub.f32 %v4124, %v4682
    %4684 = vmatmul.mubr.f32.gmra.mrb[0].mxu0 %v4683
    %v4685 = vpop.f32.mrb[0].mxu0
    %v4686 = vadd.f32 %v4509, %v4685
    %v4687 = vpop.f32.mrb[0].mxu0
    %4688 = vmatprep.mubr.f32.mxu0 0.0
    %v4689 = vand.u32 %v4127, 4294901760
    %v4690 = vsub.f32 %v4127, %v4689
    %4691 = vmatmul.mubr.f32.gmra.mrb[0].mxu0 %v4690
    %v4692 = vpop.f32.mrb[0].mxu0
    %v4693 = vadd.f32 %v4515, %v4692
    %v4694 = vpop.f32.mrb[0].mxu0
    %4695 = vmatprep.mubr.f32.mxu0 0.0
    %v4696 = vand.u32 %v4130, 4294901760
    %v4697 = vsub.f32 %v4130, %v4696
    %4698 = vmatmul.mubr.f32.gmra.mrb[0].mxu0 %v4697
    %v4699 = vpop.f32.mrb[0].mxu0
    %v4700 = vadd.f32 %v4521, %v4699
    %v4701 = vpop.f32.mrb[0].mxu0
    %4702 = vmatprep.mubr.f32.mxu0 0.0
    %v4703 = vand.u32 %v4133, 4294901760
    %v4704 = vsub.f32 %v4133, %v4703
    %4705 = vmatmul.mubr.f32.gmra.mrb[0].mxu0 %v4704
    %v4706 = vpop.f32.mrb[0].mxu0
    %v4707 = vadd.f32 %v4527, %v4706
    %v4708 = vpop.f32.mrb[0].mxu0
    %4709 = vmatprep.mubr.f32.mxu0 0.0
    %v4710 = vand.u32 %v4136, 4294901760
    %v4711 = vsub.f32 %v4136, %v4710
    %4712 = vmatmul.mubr.f32.gmra.mrb[0].mxu0 %v4711
    %v4713 = vpop.f32.mrb[0].mxu0
    %v4714 = vadd.f32 %v4533, %v4713
    %v4715 = vpop.f32.mrb[0].mxu0
    %4716 = vmatprep.mubr.f32.mxu0 0.0
    %v4717 = vand.u32 %v4139, 4294901760
    %v4718 = vsub.f32 %v4139, %v4717
    %4719 = vmatmul.mubr.f32.gmra.mrb[0].mxu0 %v4718
    %v4720 = vpop.f32.mrb[0].mxu0
    %v4721 = vadd.f32 %v4539, %v4720
    %v4722 = vpop.f32.mrb[0].mxu0
    %4723 = vmatprep.mubr.f32.mxu0 0.0
    %v4724 = vand.u32 %v4142, 4294901760
    %v4725 = vsub.f32 %v4142, %v4724
    %4726 = vmatmul.mubr.f32.gmra.mrb[0].mxu0 %v4725
    %v4727 = vpop.f32.mrb[0].mxu0
    %v4728 = vadd.f32 %v4545, %v4727
    %v4729 = vpop.f32.mrb[0].mxu0
    %4730 = vmatprep.mubr.f32.mxu0 0.0
    %v4731 = vand.u32 %v4145, 4294901760
    %v4732 = vsub.f32 %v4145, %v4731
    %4733 = vmatmul.mubr.f32.gmra.mrb[0].mxu0 %v4732
    %v4734 = vpop.f32.mrb[0].mxu0
    %v4735 = vadd.f32 %v4551, %v4734
    %v4736 = vpop.f32.mrb[0].mxu0
    %4737 = vmatprep.mubr.f32.mxu0 0.0
    %v4738 = vand.u32 %v4148, 4294901760
    %v4739 = vsub.f32 %v4148, %v4738
    %4740 = vmatmul.mubr.f32.gmra.mrb[0].mxu0 %v4739
    %v4741 = vpop.f32.mrb[0].mxu0
    %v4742 = vadd.f32 %v4557, %v4741
    %v4743 = vpop.f32.mrb[0].mxu0
    %4744 = vdwg.mxu0
    %4745 = vmatprep.subr.mxu0 0.0
    %v4746 = vand.u32 %v4090, 4294901760
    %4747 = vmatpush1.msra.mxu0 %v4746
    %4748 = vmatprep.subr.mxu0 0.0
    %v4749 = vand.u32 %v4091, 4294901760
    %4750 = vmatpush1.msra.mxu0 %v4749
    %4751 = vmatprep.subr.mxu0 0.0
    %v4752 = vand.u32 %v4092, 4294901760
    %4753 = vmatpush1.msra.mxu0 %v4752
    %4754 = vmatprep.subr.mxu0 0.0
    %v4755 = vand.u32 %v4093, 4294901760
    %4756 = vmatpush1.msra.mxu0 %v4755
    %4757 = vmatprep.subr.mxu0 0.0
    %4758 = vmatpush1.msra.mxu0 0.0
    %4759 = vmatprep.subr.mxu0 0.0
    %4760 = vmatpush1.msra.mxu0 0.0
    %4761 = vmatprep.subr.mxu0 0.0
    %4762 = vmatpush1.msra.mxu0 0.0
    %4763 = vmatprep.subr.mxu0 0.0
    %4764 = vmatpush1.msra.mxu0 0.0
    %4765 = vmatprep.subr.mxu0 0.0
    %4766 = vmatpush1.msra.mxu0 0.0
    %4767 = vmatprep.subr.mxu0 0.0
    %4768 = vmatpush1.msra.mxu0 0.0
    %4769 = vmatprep.subr.mxu0 0.0
    %4770 = vmatpush1.msra.mxu0 0.0
    %4771 = vmatprep.subr.mxu0 0.0
    %4772 = vmatpush1.msra.mxu0 0.0
    %4773 = vmatprep.subr.mxu0 0.0
    %4774 = vmatpush1.msra.mxu0 0.0
    %4775 = vmatprep.subr.mxu0 0.0
    %4776 = vmatpush1.msra.mxu0 0.0
    %4777 = vmatprep.subr.mxu0 0.0
    %4778 = vmatpush1.msra.mxu0 0.0
    %4779 = vmatprep.subr.mxu0 0.0
    %4780 = vmatpush1.msra.mxu0 0.0
    %4781 = vmatprep.subr.mxu0 0.0
    %4782 = vmatpush1.msra.mxu0 0.0
    %4783 = vmatprep.subr.mxu0 0.0
    %4784 = vmatpush1.msra.mxu0 0.0
    %4785 = vmatprep.subr.mxu0 0.0
    %4786 = vmatpush1.msra.mxu0 0.0
    %4787 = vmatprep.subr.mxu0 0.0
    %4788 = vmatpush1.msra.mxu0 0.0
    %4789 = vmatprep.subr.mxu0 0.0
    %4790 = vmatpush1.msra.mxu0 0.0
    %4791 = vmatprep.subr.mxu0 0.0
    %4792 = vmatpush1.msra.mxu0 0.0
    %4793 = vmatprep.subr.mxu0 0.0
    %4794 = vmatpush1.msra.mxu0 0.0
    %4795 = vmatprep.subr.mxu0 0.0
    %4796 = vmatpush1.msra.mxu0 0.0
    %4797 = vmatprep.subr.mxu0 0.0
    %4798 = vmatpush1.msra.mxu0 0.0
    %4799 = vmatprep.subr.mxu0 0.0
    %4800 = vmatpush1.msra.mxu0 0.0
    %4801 = vmatprep.subr.mxu0 0.0
    %4802 = vmatpush1.msra.mxu0 0.0
    %4803 = vmatprep.subr.mxu0 0.0
    %4804 = vmatpush1.msra.mxu0 0.0
    %4805 = vmatprep.subr.mxu0 0.0
    %4806 = vmatpush1.msra.mxu0 0.0
    %4807 = vmatprep.subr.mxu0 0.0
    %4808 = vmatpush1.msra.mxu0 0.0
    %4809 = vmatprep.subr.mxu0 0.0
    %4810 = vmatpush1.msra.mxu0 0.0
    %4811 = vmatprep.subr.mxu0 0.0
    %4812 = vmatpush1.msra.mxu0 0.0
    %4813 = vmatprep.mubr.f32.mxu0 0.0
    %v4814 = vand.u32 %v4103, 4294901760
    %v4815 = vsub.f32 %v4103, %v4814
    %v4816 = vand.u32 %v4815, 4294901760
    %4817 = vmatmul.mubr.f32.gmra.mrb[0].mxu0 %v4816
    %v4818 = vpop.f32.mrb[0].mxu0
    %v4819 = vadd.f32 %v4637, %v4818
    %v4820 = vpop.f32.mrb[0].mxu0
    %4821 = vmatprep.mubr.f32.mxu0 0.0
    %v4822 = vand.u32 %v4106, 4294901760
    %v4823 = vsub.f32 %v4106, %v4822
    %v4824 = vand.u32 %v4823, 4294901760
    %4825 = vmatmul.mubr.f32.gmra.mrb[0].mxu0 %v4824
    %v4826 = vpop.f32.mrb[0].mxu0
    %v4827 = vadd.f32 %v4644, %v4826
    %v4828 = vpop.f32.mrb[0].mxu0
    %4829 = vmatprep.mubr.f32.mxu0 0.0
    %v4830 = vand.u32 %v4109, 4294901760
    %v4831 = vsub.f32 %v4109, %v4830
    %v4832 = vand.u32 %v4831, 4294901760
    %4833 = vmatmul.mubr.f32.gmra.mrb[0].mxu0 %v4832
    %v4834 = vpop.f32.mrb[0].mxu0
    %v4835 = vadd.f32 %v4651, %v4834
    %v4836 = vpop.f32.mrb[0].mxu0
    %4837 = vmatprep.mubr.f32.mxu0 0.0
    %v4838 = vand.u32 %v4112, 4294901760
    %v4839 = vsub.f32 %v4112, %v4838
    %v4840 = vand.u32 %v4839, 4294901760
    %4841 = vmatmul.mubr.f32.gmra.mrb[0].mxu0 %v4840
    %v4842 = vpop.f32.mrb[0].mxu0
    %v4843 = vadd.f32 %v4658, %v4842
    %v4844 = vpop.f32.mrb[0].mxu0
    %4845 = vmatprep.mubr.f32.mxu0 0.0
    %v4846 = vand.u32 %v4115, 4294901760
    %v4847 = vsub.f32 %v4115, %v4846
    %v4848 = vand.u32 %v4847, 4294901760
    %4849 = vmatmul.mubr.f32.gmra.mrb[0].mxu0 %v4848
    %v4850 = vpop.f32.mrb[0].mxu0
    %v4851 = vadd.f32 %v4665, %v4850
    %v4852 = vpop.f32.mrb[0].mxu0
    %4853 = vmatprep.mubr.f32.mxu0 0.0
    %v4854 = vand.u32 %v4118, 4294901760
    %v4855 = vsub.f32 %v4118, %v4854
    %v4856 = vand.u32 %v4855, 4294901760
    %4857 = vmatmul.mubr.f32.gmra.mrb[0].mxu0 %v4856
    %v4858 = vpop.f32.mrb[0].mxu0
    %v4859 = vadd.f32 %v4672, %v4858
    %v4860 = vpop.f32.mrb[0].mxu0
    %4861 = vmatprep.mubr.f32.mxu0 0.0
    %v4862 = vand.u32 %v4121, 4294901760
    %v4863 = vsub.f32 %v4121, %v4862
    %v4864 = vand.u32 %v4863, 4294901760
    %4865 = vmatmul.mubr.f32.gmra.mrb[0].mxu0 %v4864
    %v4866 = vpop.f32.mrb[0].mxu0
    %v4867 = vadd.f32 %v4679, %v4866
    %v4868 = vpop.f32.mrb[0].mxu0
    %4869 = vmatprep.mubr.f32.mxu0 0.0
    %v4870 = vand.u32 %v4124, 4294901760
    %v4871 = vsub.f32 %v4124, %v4870
    %v4872 = vand.u32 %v4871, 4294901760
    %4873 = vmatmul.mubr.f32.gmra.mrb[0].mxu0 %v4872
    %v4874 = vpop.f32.mrb[0].mxu0
    %v4875 = vadd.f32 %v4686, %v4874
    %v4876 = vpop.f32.mrb[0].mxu0
    %4877 = vmatprep.mubr.f32.mxu0 0.0
    %v4878 = vand.u32 %v4127, 4294901760
    %v4879 = vsub.f32 %v4127, %v4878
    %v4880 = vand.u32 %v4879, 4294901760
    %4881 = vmatmul.mubr.f32.gmra.mrb[0].mxu0 %v4880
    %v4882 = vpop.f32.mrb[0].mxu0
    %v4883 = vadd.f32 %v4693, %v4882
    %v4884 = vpop.f32.mrb[0].mxu0
    %4885 = vmatprep.mubr.f32.mxu0 0.0
    %v4886 = vand.u32 %v4130, 4294901760
    %v4887 = vsub.f32 %v4130, %v4886
    %v4888 = vand.u32 %v4887, 4294901760
    %4889 = vmatmul.mubr.f32.gmra.mrb[0].mxu0 %v4888
    %v4890 = vpop.f32.mrb[0].mxu0
    %v4891 = vadd.f32 %v4700, %v4890
    %v4892 = vpop.f32.mrb[0].mxu0
    %4893 = vmatprep.mubr.f32.mxu0 0.0
    %v4894 = vand.u32 %v4133, 4294901760
    %v4895 = vsub.f32 %v4133, %v4894
    %v4896 = vand.u32 %v4895, 4294901760
    %4897 = vmatmul.mubr.f32.gmra.mrb[0].mxu0 %v4896
    %v4898 = vpop.f32.mrb[0].mxu0
    %v4899 = vadd.f32 %v4707, %v4898
    %v4900 = vpop.f32.mrb[0].mxu0
    %4901 = vmatprep.mubr.f32.mxu0 0.0
    %v4902 = vand.u32 %v4136, 4294901760
    %v4903 = vsub.f32 %v4136, %v4902
    %v4904 = vand.u32 %v4903, 4294901760
    %4905 = vmatmul.mubr.f32.gmra.mrb[0].mxu0 %v4904
    %v4906 = vpop.f32.mrb[0].mxu0
    %v4907 = vadd.f32 %v4714, %v4906
    %v4908 = vpop.f32.mrb[0].mxu0
    %4909 = vmatprep.mubr.f32.mxu0 0.0
    %v4910 = vand.u32 %v4139, 4294901760
    %v4911 = vsub.f32 %v4139, %v4910
    %v4912 = vand.u32 %v4911, 4294901760
    %4913 = vmatmul.mubr.f32.gmra.mrb[0].mxu0 %v4912
    %v4914 = vpop.f32.mrb[0].mxu0
    %v4915 = vadd.f32 %v4721, %v4914
    %v4916 = vpop.f32.mrb[0].mxu0
    %4917 = vmatprep.mubr.f32.mxu0 0.0
    %v4918 = vand.u32 %v4142, 4294901760
    %v4919 = vsub.f32 %v4142, %v4918
    %v4920 = vand.u32 %v4919, 4294901760
    %4921 = vmatmul.mubr.f32.gmra.mrb[0].mxu0 %v4920
    %v4922 = vpop.f32.mrb[0].mxu0
    %v4923 = vadd.f32 %v4728, %v4922
    %v4924 = vpop.f32.mrb[0].mxu0
    %4925 = vmatprep.mubr.f32.mxu0 0.0
    %v4926 = vand.u32 %v4145, 4294901760
    %v4927 = vsub.f32 %v4145, %v4926
    %v4928 = vand.u32 %v4927, 4294901760
    %4929 = vmatmul.mubr.f32.gmra.mrb[0].mxu0 %v4928
    %v4930 = vpop.f32.mrb[0].mxu0
    %v4931 = vadd.f32 %v4735, %v4930
    %v4932 = vpop.f32.mrb[0].mxu0
    %4933 = vmatprep.mubr.f32.mxu0 0.0
    %v4934 = vand.u32 %v4148, 4294901760
    %v4935 = vsub.f32 %v4148, %v4934
    %v4936 = vand.u32 %v4935, 4294901760
    %4937 = vmatmul.mubr.f32.gmra.mrb[0].mxu0 %v4936
    %v4938 = vpop.f32.mrb[0].mxu0
    %v4939 = vadd.f32 %v4742, %v4938
    %v4940 = vpop.f32.mrb[0].mxu0
    %4941 = vdwg.mxu0
    %4942 = vmatprep.subr.mxu0 0.0
    %v4943 = vand.u32 %v4090, 4294901760
    %v4944 = vsub.f32 %v4090, %v4943
    %v4945 = vand.u32 %v4944, 4294901760
    %4946 = vmatpush1.msra.mxu0 %v4945
    %4947 = vmatprep.subr.mxu0 0.0
    %v4948 = vand.u32 %v4091, 4294901760
    %v4949 = vsub.f32 %v4091, %v4948
    %v4950 = vand.u32 %v4949, 4294901760
    %4951 = vmatpush1.msra.mxu0 %v4950
    %4952 = vmatprep.subr.mxu0 0.0
    %v4953 = vand.u32 %v4092, 4294901760
    %v4954 = vsub.f32 %v4092, %v4953
    %v4955 = vand.u32 %v4954, 4294901760
    %4956 = vmatpush1.msra.mxu0 %v4955
    %4957 = vmatprep.subr.mxu0 0.0
    %v4958 = vand.u32 %v4093, 4294901760
    %v4959 = vsub.f32 %v4093, %v4958
    %v4960 = vand.u32 %v4959, 4294901760
    %4961 = vmatpush1.msra.mxu0 %v4960
    %4962 = vmatprep.subr.mxu0 0.0
    %4963 = vmatpush1.msra.mxu0 0.0
    %4964 = vmatprep.subr.mxu0 0.0
    %4965 = vmatpush1.msra.mxu0 0.0
    %4966 = vmatprep.subr.mxu0 0.0
    %4967 = vmatpush1.msra.mxu0 0.0
    %4968 = vmatprep.subr.mxu0 0.0
    %4969 = vmatpush1.msra.mxu0 0.0
    %4970 = vmatprep.subr.mxu0 0.0
    %4971 = vmatpush1.msra.mxu0 0.0
    %4972 = vmatprep.subr.mxu0 0.0
    %4973 = vmatpush1.msra.mxu0 0.0
    %4974 = vmatprep.subr.mxu0 0.0
    %4975 = vmatpush1.msra.mxu0 0.0
    %4976 = vmatprep.subr.mxu0 0.0
    %4977 = vmatpush1.msra.mxu0 0.0
    %4978 = vmatprep.subr.mxu0 0.0
    %4979 = vmatpush1.msra.mxu0 0.0
    %4980 = vmatprep.subr.mxu0 0.0
    %4981 = vmatpush1.msra.mxu0 0.0
    %4982 = vmatprep.subr.mxu0 0.0
    %4983 = vmatpush1.msra.mxu0 0.0
    %4984 = vmatprep.subr.mxu0 0.0
    %4985 = vmatpush1.msra.mxu0 0.0
    %4986 = vmatprep.subr.mxu0 0.0
    %4987 = vmatpush1.msra.mxu0 0.0
    %4988 = vmatprep.subr.mxu0 0.0
    %4989 = vmatpush1.msra.mxu0 0.0
    %4990 = vmatprep.subr.mxu0 0.0
    %4991 = vmatpush1.msra.mxu0 0.0
    %4992 = vmatprep.subr.mxu0 0.0
    %4993 = vmatpush1.msra.mxu0 0.0
    %4994 = vmatprep.subr.mxu0 0.0
    %4995 = vmatpush1.msra.mxu0 0.0
    %4996 = vmatprep.subr.mxu0 0.0
    %4997 = vmatpush1.msra.mxu0 0.0
    %4998 = vmatprep.subr.mxu0 0.0
    %4999 = vmatpush1.msra.mxu0 0.0
    %5000 = vmatprep.subr.mxu0 0.0
    %5001 = vmatpush1.msra.mxu0 0.0
    %5002 = vmatprep.subr.mxu0 0.0
    %5003 = vmatpush1.msra.mxu0 0.0
    %5004 = vmatprep.subr.mxu0 0.0
    %5005 = vmatpush1.msra.mxu0 0.0
    %5006 = vmatprep.subr.mxu0 0.0
    %5007 = vmatpush1.msra.mxu0 0.0
    %5008 = vmatprep.subr.mxu0 0.0
    %5009 = vmatpush1.msra.mxu0 0.0
    %5010 = vmatprep.subr.mxu0 0.0
    %5011 = vmatpush1.msra.mxu0 0.0
    %5012 = vmatprep.subr.mxu0 0.0
    %5013 = vmatpush1.msra.mxu0 0.0
    %5014 = vmatprep.subr.mxu0 0.0
    %5015 = vmatpush1.msra.mxu0 0.0
    %5016 = vmatprep.subr.mxu0 0.0
    %5017 = vmatpush1.msra.mxu0 0.0
    %5018 = vmatprep.mubr.f32.mxu0 0.0
    %v5019 = vand.u32 %v4103, 4294901760
    %5020 = vmatmul.mubr.f32.gmra.mrb[0].mxu0 %v5019
    %v5021 = vpop.f32.mrb[0].mxu0
    %v5022 = vadd.f32 %v4819, %v5021
    %v5023 = vpop.f32.mrb[0].mxu0
    %5024 = vmatprep.mubr.f32.mxu0 0.0
    %v5025 = vand.u32 %v4106, 4294901760
    %5026 = vmatmul.mubr.f32.gmra.mrb[0].mxu0 %v5025
    %v5027 = vpop.f32.mrb[0].mxu0
    %v5028 = vadd.f32 %v4827, %v5027
    %v5029 = vpop.f32.mrb[0].mxu0
    %5030 = vmatprep.mubr.f32.mxu0 0.0
    %v5031 = vand.u32 %v4109, 4294901760
    %5032 = vmatmul.mubr.f32.gmra.mrb[0].mxu0 %v5031
    %v5033 = vpop.f32.mrb[0].mxu0
    %v5034 = vadd.f32 %v4835, %v5033
    %v5035 = vpop.f32.mrb[0].mxu0
    %5036 = vmatprep.mubr.f32.mxu0 0.0
    %v5037 = vand.u32 %v4112, 4294901760
    %5038 = vmatmul.mubr.f32.gmra.mrb[0].mxu0 %v5037
    %v5039 = vpop.f32.mrb[0].mxu0
    %v5040 = vadd.f32 %v4843, %v5039
    %v5041 = vpop.f32.mrb[0].mxu0
    %5042 = vmatprep.mubr.f32.mxu0 0.0
    %v5043 = vand.u32 %v4115, 4294901760
    %5044 = vmatmul.mubr.f32.gmra.mrb[0].mxu0 %v5043
    %v5045 = vpop.f32.mrb[0].mxu0
    %v5046 = vadd.f32 %v4851, %v5045
    %v5047 = vpop.f32.mrb[0].mxu0
    %5048 = vmatprep.mubr.f32.mxu0 0.0
    %v5049 = vand.u32 %v4118, 4294901760
    %5050 = vmatmul.mubr.f32.gmra.mrb[0].mxu0 %v5049
    %v5051 = vpop.f32.mrb[0].mxu0
    %v5052 = vadd.f32 %v4859, %v5051
    %v5053 = vpop.f32.mrb[0].mxu0
    %5054 = vmatprep.mubr.f32.mxu0 0.0
    %v5055 = vand.u32 %v4121, 4294901760
    %5056 = vmatmul.mubr.f32.gmra.mrb[0].mxu0 %v5055
    %v5057 = vpop.f32.mrb[0].mxu0
    %v5058 = vadd.f32 %v4867, %v5057
    %v5059 = vpop.f32.mrb[0].mxu0
    %5060 = vmatprep.mubr.f32.mxu0 0.0
    %v5061 = vand.u32 %v4124, 4294901760
    %5062 = vmatmul.mubr.f32.gmra.mrb[0].mxu0 %v5061
    %v5063 = vpop.f32.mrb[0].mxu0
    %v5064 = vadd.f32 %v4875, %v5063
    %v5065 = vpop.f32.mrb[0].mxu0
    %5066 = vmatprep.mubr.f32.mxu0 0.0
    %v5067 = vand.u32 %v4127, 4294901760
    %5068 = vmatmul.mubr.f32.gmra.mrb[0].mxu0 %v5067
    %v5069 = vpop.f32.mrb[0].mxu0
    %v5070 = vadd.f32 %v4883, %v5069
    %v5071 = vpop.f32.mrb[0].mxu0
    %5072 = vmatprep.mubr.f32.mxu0 0.0
    %v5073 = vand.u32 %v4130, 4294901760
    %5074 = vmatmul.mubr.f32.gmra.mrb[0].mxu0 %v5073
    %v5075 = vpop.f32.mrb[0].mxu0
    %v5076 = vadd.f32 %v4891, %v5075
    %v5077 = vpop.f32.mrb[0].mxu0
    %5078 = vmatprep.mubr.f32.mxu0 0.0
    %v5079 = vand.u32 %v4133, 4294901760
    %5080 = vmatmul.mubr.f32.gmra.mrb[0].mxu0 %v5079
    %v5081 = vpop.f32.mrb[0].mxu0
    %v5082 = vadd.f32 %v4899, %v5081
    %v5083 = vpop.f32.mrb[0].mxu0
    %5084 = vmatprep.mubr.f32.mxu0 0.0
    %v5085 = vand.u32 %v4136, 4294901760
    %5086 = vmatmul.mubr.f32.gmra.mrb[0].mxu0 %v5085
    %v5087 = vpop.f32.mrb[0].mxu0
    %v5088 = vadd.f32 %v4907, %v5087
    %v5089 = vpop.f32.mrb[0].mxu0
    %5090 = vmatprep.mubr.f32.mxu0 0.0
    %v5091 = vand.u32 %v4139, 4294901760
    %5092 = vmatmul.mubr.f32.gmra.mrb[0].mxu0 %v5091
    %v5093 = vpop.f32.mrb[0].mxu0
    %v5094 = vadd.f32 %v4915, %v5093
    %v5095 = vpop.f32.mrb[0].mxu0
    %5096 = vmatprep.mubr.f32.mxu0 0.0
    %v5097 = vand.u32 %v4142, 4294901760
    %5098 = vmatmul.mubr.f32.gmra.mrb[0].mxu0 %v5097
    %v5099 = vpop.f32.mrb[0].mxu0
    %v5100 = vadd.f32 %v4923, %v5099
    %v5101 = vpop.f32.mrb[0].mxu0
    %5102 = vmatprep.mubr.f32.mxu0 0.0
    %v5103 = vand.u32 %v4145, 4294901760
    %5104 = vmatmul.mubr.f32.gmra.mrb[0].mxu0 %v5103
    %v5105 = vpop.f32.mrb[0].mxu0
    %v5106 = vadd.f32 %v4931, %v5105
    %v5107 = vpop.f32.mrb[0].mxu0
    %5108 = vmatprep.mubr.f32.mxu0 0.0
    %v5109 = vand.u32 %v4148, 4294901760
    %5110 = vmatmul.mubr.f32.gmra.mrb[0].mxu0 %v5109
    %v5111 = vpop.f32.mrb[0].mxu0
    %v5112 = vadd.f32 %v4939, %v5111
    %v5113 = vpop.f32.mrb[0].mxu0
    %5114 = vdwg.mxu0
    %5115 = vmatprep.subr.mxu0 0.0
    %v5116 = vand.u32 %v4090, 4294901760
    %5117 = vmatpush1.msra.mxu0 %v5116
    %5118 = vmatprep.subr.mxu0 0.0
    %v5119 = vand.u32 %v4091, 4294901760
    %5120 = vmatpush1.msra.mxu0 %v5119
    %5121 = vmatprep.subr.mxu0 0.0
    %v5122 = vand.u32 %v4092, 4294901760
    %5123 = vmatpush1.msra.mxu0 %v5122
    %5124 = vmatprep.subr.mxu0 0.0
    %v5125 = vand.u32 %v4093, 4294901760
    %5126 = vmatpush1.msra.mxu0 %v5125
    %5127 = vmatprep.subr.mxu0 0.0
    %5128 = vmatpush1.msra.mxu0 0.0
    %5129 = vmatprep.subr.mxu0 0.0
    %5130 = vmatpush1.msra.mxu0 0.0
    %5131 = vmatprep.subr.mxu0 0.0
    %5132 = vmatpush1.msra.mxu0 0.0
    %5133 = vmatprep.subr.mxu0 0.0
    %5134 = vmatpush1.msra.mxu0 0.0
    %5135 = vmatprep.subr.mxu0 0.0
    %5136 = vmatpush1.msra.mxu0 0.0
    %5137 = vmatprep.subr.mxu0 0.0
    %5138 = vmatpush1.msra.mxu0 0.0
    %5139 = vmatprep.subr.mxu0 0.0
    %5140 = vmatpush1.msra.mxu0 0.0
    %5141 = vmatprep.subr.mxu0 0.0
    %5142 = vmatpush1.msra.mxu0 0.0
    %5143 = vmatprep.subr.mxu0 0.0
    %5144 = vmatpush1.msra.mxu0 0.0
    %5145 = vmatprep.subr.mxu0 0.0
    %5146 = vmatpush1.msra.mxu0 0.0
    %5147 = vmatprep.subr.mxu0 0.0
    %5148 = vmatpush1.msra.mxu0 0.0
    %5149 = vmatprep.subr.mxu0 0.0
    %5150 = vmatpush1.msra.mxu0 0.0
    %5151 = vmatprep.subr.mxu0 0.0
    %5152 = vmatpush1.msra.mxu0 0.0
    %5153 = vmatprep.subr.mxu0 0.0
    %5154 = vmatpush1.msra.mxu0 0.0
    %5155 = vmatprep.subr.mxu0 0.0
    %5156 = vmatpush1.msra.mxu0 0.0
    %5157 = vmatprep.subr.mxu0 0.0
    %5158 = vmatpush1.msra.mxu0 0.0
    %5159 = vmatprep.subr.mxu0 0.0
    %5160 = vmatpush1.msra.mxu0 0.0
    %5161 = vmatprep.subr.mxu0 0.0
    %5162 = vmatpush1.msra.mxu0 0.0
    %5163 = vmatprep.subr.mxu0 0.0
    %5164 = vmatpush1.msra.mxu0 0.0
    %5165 = vmatprep.subr.mxu0 0.0
    %5166 = vmatpush1.msra.mxu0 0.0
    %5167 = vmatprep.subr.mxu0 0.0
    %5168 = vmatpush1.msra.mxu0 0.0
    %5169 = vmatprep.subr.mxu0 0.0
    %5170 = vmatpush1.msra.mxu0 0.0
    %5171 = vmatprep.subr.mxu0 0.0
    %5172 = vmatpush1.msra.mxu0 0.0
    %5173 = vmatprep.subr.mxu0 0.0
    %5174 = vmatpush1.msra.mxu0 0.0
    %5175 = vmatprep.subr.mxu0 0.0
    %5176 = vmatpush1.msra.mxu0 0.0
    %5177 = vmatprep.subr.mxu0 0.0
    %5178 = vmatpush1.msra.mxu0 0.0
    %5179 = vmatprep.subr.mxu0 0.0
    %5180 = vmatpush1.msra.mxu0 0.0
    %5181 = vmatprep.subr.mxu0 0.0
    %5182 = vmatpush1.msra.mxu0 0.0
    %5183 = vmatprep.mubr.f32.mxu0 0.0
    %v5184 = vand.u32 %v4103, 4294901760
    %5185 = vmatmul.mubr.f32.gmra.mrb[0].mxu0 %v5184
    %v5186 = vpop.f32.mrb[0].mxu0
    %v5187 = vadd.f32 %v5022, %v5186
    %v5188 = vpop.f32.mrb[0].mxu0
    %5189 = vmatprep.mubr.f32.mxu0 0.0
    %v5190 = vand.u32 %v4106, 4294901760
    %5191 = vmatmul.mubr.f32.gmra.mrb[0].mxu0 %v5190
    %v5192 = vpop.f32.mrb[0].mxu0
    %v5193 = vadd.f32 %v5028, %v5192
    %v5194 = vpop.f32.mrb[0].mxu0
    %5195 = vmatprep.mubr.f32.mxu0 0.0
    %v5196 = vand.u32 %v4109, 4294901760
    %5197 = vmatmul.mubr.f32.gmra.mrb[0].mxu0 %v5196
    %v5198 = vpop.f32.mrb[0].mxu0
    %v5199 = vadd.f32 %v5034, %v5198
    %v5200 = vpop.f32.mrb[0].mxu0
    %5201 = vmatprep.mubr.f32.mxu0 0.0
    %v5202 = vand.u32 %v4112, 4294901760
    %5203 = vmatmul.mubr.f32.gmra.mrb[0].mxu0 %v5202
    %v5204 = vpop.f32.mrb[0].mxu0
    %v5205 = vadd.f32 %v5040, %v5204
    %v5206 = vpop.f32.mrb[0].mxu0
    %5207 = vmatprep.mubr.f32.mxu0 0.0
    %v5208 = vand.u32 %v4115, 4294901760
    %5209 = vmatmul.mubr.f32.gmra.mrb[0].mxu0 %v5208
    %v5210 = vpop.f32.mrb[0].mxu0
    %v5211 = vadd.f32 %v5046, %v5210
    %v5212 = vpop.f32.mrb[0].mxu0
    %5213 = vmatprep.mubr.f32.mxu0 0.0
    %v5214 = vand.u32 %v4118, 4294901760
    %5215 = vmatmul.mubr.f32.gmra.mrb[0].mxu0 %v5214
    %v5216 = vpop.f32.mrb[0].mxu0
    %v5217 = vadd.f32 %v5052, %v5216
    %v5218 = vpop.f32.mrb[0].mxu0
    %5219 = vmatprep.mubr.f32.mxu0 0.0
    %v5220 = vand.u32 %v4121, 4294901760
    %5221 = vmatmul.mubr.f32.gmra.mrb[0].mxu0 %v5220
    %v5222 = vpop.f32.mrb[0].mxu0
    %v5223 = vadd.f32 %v5058, %v5222
    %v5224 = vpop.f32.mrb[0].mxu0
    %5225 = vmatprep.mubr.f32.mxu0 0.0
    %v5226 = vand.u32 %v4124, 4294901760
    %5227 = vmatmul.mubr.f32.gmra.mrb[0].mxu0 %v5226
    %v5228 = vpop.f32.mrb[0].mxu0
    %v5229 = vadd.f32 %v5064, %v5228
    %v5230 = vpop.f32.mrb[0].mxu0
    %5231 = vmatprep.mubr.f32.mxu0 0.0
    %v5232 = vand.u32 %v4127, 4294901760
    %5233 = vmatmul.mubr.f32.gmra.mrb[0].mxu0 %v5232
    %v5234 = vpop.f32.mrb[0].mxu0
    %v5235 = vadd.f32 %v5070, %v5234
    %v5236 = vpop.f32.mrb[0].mxu0
    %5237 = vmatprep.mubr.f32.mxu0 0.0
    %v5238 = vand.u32 %v4130, 4294901760
    %5239 = vmatmul.mubr.f32.gmra.mrb[0].mxu0 %v5238
    %v5240 = vpop.f32.mrb[0].mxu0
    %v5241 = vadd.f32 %v5076, %v5240
    %v5242 = vpop.f32.mrb[0].mxu0
    %5243 = vmatprep.mubr.f32.mxu0 0.0
    %v5244 = vand.u32 %v4133, 4294901760
    %5245 = vmatmul.mubr.f32.gmra.mrb[0].mxu0 %v5244
    %v5246 = vpop.f32.mrb[0].mxu0
    %v5247 = vadd.f32 %v5082, %v5246
    %v5248 = vpop.f32.mrb[0].mxu0
    %5249 = vmatprep.mubr.f32.mxu0 0.0
    %v5250 = vand.u32 %v4136, 4294901760
    %5251 = vmatmul.mubr.f32.gmra.mrb[0].mxu0 %v5250
    %v5252 = vpop.f32.mrb[0].mxu0
    %v5253 = vadd.f32 %v5088, %v5252
    %v5254 = vpop.f32.mrb[0].mxu0
    %5255 = vmatprep.mubr.f32.mxu0 0.0
    %v5256 = vand.u32 %v4139, 4294901760
    %5257 = vmatmul.mubr.f32.gmra.mrb[0].mxu0 %v5256
    %v5258 = vpop.f32.mrb[0].mxu0
    %v5259 = vadd.f32 %v5094, %v5258
    %v5260 = vpop.f32.mrb[0].mxu0
    %5261 = vmatprep.mubr.f32.mxu0 0.0
    %v5262 = vand.u32 %v4142, 4294901760
    %5263 = vmatmul.mubr.f32.gmra.mrb[0].mxu0 %v5262
    %v5264 = vpop.f32.mrb[0].mxu0
    %v5265 = vadd.f32 %v5100, %v5264
    %v5266 = vpop.f32.mrb[0].mxu0
    %5267 = vmatprep.mubr.f32.mxu0 0.0
    %v5268 = vand.u32 %v4145, 4294901760
    %5269 = vmatmul.mubr.f32.gmra.mrb[0].mxu0 %v5268
    %v5270 = vpop.f32.mrb[0].mxu0
    %v5271 = vadd.f32 %v5106, %v5270
    %v5272 = vpop.f32.mrb[0].mxu0
    %5273 = vmatprep.mubr.f32.mxu0 0.0
    %v5274 = vand.u32 %v4148, 4294901760
    %5275 = vmatmul.mubr.f32.gmra.mrb[0].mxu0 %v5274
    %v5276 = vpop.f32.mrb[0].mxu0
    %v5277 = vadd.f32 %v5112, %v5276
    %v5278 = vpop.f32.mrb[0].mxu0
    %5279 = vdwg.mxu0
    %5282 = vrot.lane.b32.xlu0 %v4080, 64
    %v5283 = vpop.permute.xlu0 %5282
    %5284 = vrot.lane.b32.xlu0 %v4086, 64
    %v5285 = vpop.permute.xlu0 %5284
    %v5288 = vadd.f32 %v5187, %v5283
    %v5289 = vadd.f32 %v5193, %v5283
    %v5290 = vadd.f32 %v5199, %v5283
    %v5291 = vadd.f32 %v5205, %v5283
    %v5292 = vadd.f32 %v5211, %v5283
    %v5293 = vadd.f32 %v5217, %v5283
    %v5294 = vadd.f32 %v5223, %v5283
    %v5295 = vadd.f32 %v5229, %v5283
    %v5296 = vadd.f32 %v5235, %v5285
    %v5297 = vadd.f32 %v5241, %v5285
    %v5298 = vadd.f32 %v5247, %v5285
    %v5299 = vadd.f32 %v5253, %v5285
    %v5300 = vadd.f32 %v5259, %v5285
    %v5301 = vadd.f32 %v5265, %v5285
    %v5302 = vadd.f32 %v5271, %v5285
    %v5303 = vadd.f32 %v5277, %v5285
    %v5304 = vcombine.high %v4080, %v4080
    %v5306 = vunpack.c.l.s4 1966171168
    %v5307 = vunpack.c.0.s8 %v5306
    %v5308 = vlaneseq
    %v5309 = vshrl.u32 %v5308, 7
    %v5310 = vsub.s32 %v5307, %v5309
    %v5311 = vrot.slane %v4080, %v5310
    %v5313 = vunpack.c.l.s4 1966171168
    %v5314 = vunpack.c.0.s8 %v5313
    %v5315 = vlaneseq
    %v5316 = vshrl.u32 %v5315, 7
    %v5317 = vsub.s32 %v5314, %v5316
    %v5318 = vrot.slane %v5304, %v5317
    %v5319 = vcombine.high %v5311, %v5311
    %v5320 = vcombine.high %v5318, %v5318
    %v5322 = vunpack.c.l.s4 1966171168
    %v5323 = vunpack.c.0.s8 %v5322
    %v5324 = vlaneseq
    %v5325 = vshrl.u32 %v5324, 7
    %v5326 = vsub.s32 %v5323, %v5325
    %v5327 = vrot.slane %v5311, %v5326
    %v5329 = vunpack.c.l.s4 1966171168
    %v5330 = vunpack.c.0.s8 %v5329
    %v5331 = vlaneseq
    %v5332 = vshrl.u32 %v5331, 7
    %v5333 = vsub.s32 %v5330, %v5332
    %v5334 = vrot.slane %v5318, %v5333
    %v5336 = vunpack.c.l.s4 1966171168
    %v5337 = vunpack.c.0.s8 %v5336
    %v5338 = vlaneseq
    %v5339 = vshrl.u32 %v5338, 7
    %v5340 = vsub.s32 %v5337, %v5339
    %v5341 = vrot.slane %v5319, %v5340
    %v5343 = vunpack.c.l.s4 1966171168
    %v5344 = vunpack.c.0.s8 %v5343
    %v5345 = vlaneseq
    %v5346 = vshrl.u32 %v5345, 7
    %v5347 = vsub.s32 %v5344, %v5346
    %v5348 = vrot.slane %v5320, %v5347
    %v5349 = vcombine.high %v5327, %v5327
    %v5350 = vcombine.high %v5334, %v5334
    %v5351 = vcombine.high %v5341, %v5341
    %v5352 = vcombine.high %v5348, %v5348
    %v5353 = vcombine.high %v4086, %v4086
    %v5355 = vunpack.c.l.s4 1966171168
    %v5356 = vunpack.c.0.s8 %v5355
    %v5357 = vlaneseq
    %v5358 = vshrl.u32 %v5357, 7
    %v5359 = vsub.s32 %v5356, %v5358
    %v5360 = vrot.slane %v4086, %v5359
    %v5362 = vunpack.c.l.s4 1966171168
    %v5363 = vunpack.c.0.s8 %v5362
    %v5364 = vlaneseq
    %v5365 = vshrl.u32 %v5364, 7
    %v5366 = vsub.s32 %v5363, %v5365
    %v5367 = vrot.slane %v5353, %v5366
    %v5368 = vcombine.high %v5360, %v5360
    %v5369 = vcombine.high %v5367, %v5367
    %v5371 = vunpack.c.l.s4 1966171168
    %v5372 = vunpack.c.0.s8 %v5371
    %v5373 = vlaneseq
    %v5374 = vshrl.u32 %v5373, 7
    %v5375 = vsub.s32 %v5372, %v5374
    %v5376 = vrot.slane %v5360, %v5375
    %v5378 = vunpack.c.l.s4 1966171168
    %v5379 = vunpack.c.0.s8 %v5378
    %v5380 = vlaneseq
    %v5381 = vshrl.u32 %v5380, 7
    %v5382 = vsub.s32 %v5379, %v5381
    %v5383 = vrot.slane %v5367, %v5382
    %v5385 = vunpack.c.l.s4 1966171168
    %v5386 = vunpack.c.0.s8 %v5385
    %v5387 = vlaneseq
    %v5388 = vshrl.u32 %v5387, 7
    %v5389 = vsub.s32 %v5386, %v5388
    %v5390 = vrot.slane %v5368, %v5389
    %v5392 = vunpack.c.l.s4 1966171168
    %v5393 = vunpack.c.0.s8 %v5392
    %v5394 = vlaneseq
    %v5395 = vshrl.u32 %v5394, 7
    %v5396 = vsub.s32 %v5393, %v5395
    %v5397 = vrot.slane %v5369, %v5396
    %v5398 = vcombine.high %v5376, %v5376
    %v5399 = vcombine.high %v5383, %v5383
    %v5400 = vcombine.high %v5390, %v5390
    %v5401 = vcombine.high %v5397, %v5397
    %v5402 = vlaneseq
    %v5403 = vshrl.u32 %v5402, 7
    %v5404 = vsub.s32 0, %v5403
    %v5405 = vrot.slane %v5327, %v5404
    %v5406 = vlaneseq
    %v5407 = vshrl.u32 %v5406, 7
    %v5408 = vsub.s32 0, %v5407
    %v5409 = vrot.slane %v5341, %v5408
    %v5410 = vlaneseq
    %v5411 = vshrl.u32 %v5410, 7
    %v5412 = vsub.s32 0, %v5411
    %v5413 = vrot.slane %v5349, %v5412
    %v5414 = vlaneseq
    %v5415 = vshrl.u32 %v5414, 7
    %v5416 = vsub.s32 0, %v5415
    %v5417 = vrot.slane %v5351, %v5416
    %v5418 = vlaneseq
    %v5419 = vshrl.u32 %v5418, 7
    %v5420 = vsub.s32 0, %v5419
    %v5421 = vrot.slane %v5334, %v5420
    %v5422 = vlaneseq
    %v5423 = vshrl.u32 %v5422, 7
    %v5424 = vsub.s32 0, %v5423
    %v5425 = vrot.slane %v5348, %v5424
    %v5426 = vlaneseq
    %v5427 = vshrl.u32 %v5426, 7
    %v5428 = vsub.s32 0, %v5427
    %v5429 = vrot.slane %v5350, %v5428
    %v5430 = vlaneseq
    %v5431 = vshrl.u32 %v5430, 7
    %v5432 = vsub.s32 0, %v5431
    %v5433 = vrot.slane %v5352, %v5432
    %v5434 = vlaneseq
    %v5435 = vshrl.u32 %v5434, 7
    %v5436 = vsub.s32 0, %v5435
    %v5437 = vrot.slane %v5376, %v5436
    %v5438 = vlaneseq
    %v5439 = vshrl.u32 %v5438, 7
    %v5440 = vsub.s32 0, %v5439
    %v5441 = vrot.slane %v5390, %v5440
    %v5442 = vlaneseq
    %v5443 = vshrl.u32 %v5442, 7
    %v5444 = vsub.s32 0, %v5443
    %v5445 = vrot.slane %v5398, %v5444
    %v5446 = vlaneseq
    %v5447 = vshrl.u32 %v5446, 7
    %v5448 = vsub.s32 0, %v5447
    %v5449 = vrot.slane %v5400, %v5448
    %v5450 = vlaneseq
    %v5451 = vshrl.u32 %v5450, 7
    %v5452 = vsub.s32 0, %v5451
    %v5453 = vrot.slane %v5383, %v5452
    %v5454 = vlaneseq
    %v5455 = vshrl.u32 %v5454, 7
    %v5456 = vsub.s32 0, %v5455
    %v5457 = vrot.slane %v5397, %v5456
    %v5458 = vlaneseq
    %v5459 = vshrl.u32 %v5458, 7
    %v5460 = vsub.s32 0, %v5459
    %v5461 = vrot.slane %v5399, %v5460
    %v5462 = vlaneseq
    %v5463 = vshrl.u32 %v5462, 7
    %v5464 = vsub.s32 0, %v5463
    %v5465 = vrot.slane %v5401, %v5464
    %5466 = vrot.lane.b32.xlu0 %v5405, 32
    %v5467 = vpop.permute.xlu0 %5466
    %5468 = vrot.lane.b32.xlu0 %v5409, 32
    %v5469 = vpop.permute.xlu0 %5468
    %5470 = vrot.lane.b32.xlu0 %v5413, 32
    %v5471 = vpop.permute.xlu0 %5470
    %5472 = vrot.lane.b32.xlu0 %v5417, 32
    %v5473 = vpop.permute.xlu0 %5472
    %5474 = vrot.lane.b32.xlu0 %v5421, 32
    %v5475 = vpop.permute.xlu0 %5474
    %5476 = vrot.lane.b32.xlu0 %v5425, 32
    %v5477 = vpop.permute.xlu0 %5476
    %5478 = vrot.lane.b32.xlu0 %v5429, 32
    %v5479 = vpop.permute.xlu0 %5478
    %5480 = vrot.lane.b32.xlu0 %v5433, 32
    %v5481 = vpop.permute.xlu0 %5480
    %5482 = vrot.lane.b32.xlu0 %v5437, 32
    %v5483 = vpop.permute.xlu0 %5482
    %5484 = vrot.lane.b32.xlu0 %v5441, 32
    %v5485 = vpop.permute.xlu0 %5484
    %5486 = vrot.lane.b32.xlu0 %v5445, 32
    %v5487 = vpop.permute.xlu0 %5486
    %5488 = vrot.lane.b32.xlu0 %v5449, 32
    %v5489 = vpop.permute.xlu0 %5488
    %5490 = vrot.lane.b32.xlu0 %v5453, 32
    %v5491 = vpop.permute.xlu0 %5490
    %5492 = vrot.lane.b32.xlu0 %v5457, 32
    %v5493 = vpop.permute.xlu0 %5492
    %5494 = vrot.lane.b32.xlu0 %v5461, 32
    %v5495 = vpop.permute.xlu0 %5494
    %5496 = vrot.lane.b32.xlu0 %v5465, 32
    %v5497 = vpop.permute.xlu0 %5496
    %v5514 = vadd.f32 %v5288, %v5467
    %v5515 = vadd.f32 %v5289, %v5469
    %v5516 = vadd.f32 %v5290, %v5471
    %v5517 = vadd.f32 %v5291, %v5473
    %v5518 = vadd.f32 %v5292, %v5475
    %v5519 = vadd.f32 %v5293, %v5477
    %v5520 = vadd.f32 %v5294, %v5479
    %v5521 = vadd.f32 %v5295, %v5481
    %v5522 = vadd.f32 %v5296, %v5483
    %v5523 = vadd.f32 %v5297, %v5485
    %v5524 = vadd.f32 %v5298, %v5487
    %v5525 = vadd.f32 %v5299, %v5489
    %v5526 = vadd.f32 %v5300, %v5491
    %v5527 = vadd.f32 %v5301, %v5493
    %v5528 = vadd.f32 %v5302, %v5495
    %v5529 = vadd.f32 %v5303, %v5497
    %v5530 = vxor.u32 %v5514, 2147483648
    %v5531 = vxor.u32 %v5515, 2147483648
    %v5532 = vxor.u32 %v5516, 2147483648
    %v5533 = vxor.u32 %v5517, 2147483648
    %v5534 = vxor.u32 %v5518, 2147483648
    %v5535 = vxor.u32 %v5519, 2147483648
    %v5536 = vxor.u32 %v5520, 2147483648
    %v5537 = vxor.u32 %v5521, 2147483648
    %v5538 = vxor.u32 %v5522, 2147483648
    %v5539 = vxor.u32 %v5523, 2147483648
    %v5540 = vxor.u32 %v5524, 2147483648
    %v5541 = vxor.u32 %v5525, 2147483648
    %v5542 = vxor.u32 %v5526, 2147483648
    %v5543 = vxor.u32 %v5527, 2147483648
    %v5544 = vxor.u32 %v5528, 2147483648
    %v5545 = vxor.u32 %v5529, 2147483648
    %v5546 = vmul.f32 %v5530, 1.442695
    %v5547 = vpow.pop %v5546
    %v5548 = vmul.f32 %v5531, 1.442695
    %v5549 = vpow.pop %v5548
    %v5550 = vmul.f32 %v5532, 1.442695
    %v5551 = vpow.pop %v5550
    %v5552 = vmul.f32 %v5533, 1.442695
    %v5553 = vpow.pop %v5552
    %v5554 = vmul.f32 %v5534, 1.442695
    %v5555 = vpow.pop %v5554
    %v5556 = vmul.f32 %v5535, 1.442695
    %v5557 = vpow.pop %v5556
    %v5558 = vmul.f32 %v5536, 1.442695
    %v5559 = vpow.pop %v5558
    %v5560 = vmul.f32 %v5537, 1.442695
    %v5561 = vpow.pop %v5560
    %v5562 = vmul.f32 %v5538, 1.442695
    %v5563 = vpow.pop %v5562
    %v5564 = vmul.f32 %v5539, 1.442695
    %v5565 = vpow.pop %v5564
    %v5566 = vmul.f32 %v5540, 1.442695
    %v5567 = vpow.pop %v5566
    %v5568 = vmul.f32 %v5541, 1.442695
    %v5569 = vpow.pop %v5568
    %v5570 = vmul.f32 %v5542, 1.442695
    %v5571 = vpow.pop %v5570
    %v5572 = vmul.f32 %v5543, 1.442695
    %v5573 = vpow.pop %v5572
    %v5574 = vmul.f32 %v5544, 1.442695
    %v5575 = vpow.pop %v5574
    %v5576 = vmul.f32 %v5545, 1.442695
    %v5577 = vpow.pop %v5576
    %v5578 = vadd.f32 %v5547, 1.0
    %v5579 = vadd.f32 %v5549, 1.0
    %v5580 = vadd.f32 %v5551, 1.0
    %v5581 = vadd.f32 %v5553, 1.0
    %v5582 = vadd.f32 %v5555, 1.0
    %v5583 = vadd.f32 %v5557, 1.0
    %v5584 = vadd.f32 %v5559, 1.0
    %v5585 = vadd.f32 %v5561, 1.0
    %v5586 = vadd.f32 %v5563, 1.0
    %v5587 = vadd.f32 %v5565, 1.0
    %v5588 = vadd.f32 %v5567, 1.0
    %v5589 = vadd.f32 %v5569, 1.0
    %v5590 = vadd.f32 %v5571, 1.0
    %v5591 = vadd.f32 %v5573, 1.0
    %v5592 = vadd.f32 %v5575, 1.0
    %v5593 = vadd.f32 %v5577, 1.0
    %v5594 = vrcp.pop %v5578
    %v5595 = vmul.f32 1.0, %v5594
    %v5596 = vrcp.pop %v5579
    %v5597 = vmul.f32 1.0, %v5596
    %v5598 = vrcp.pop %v5580
    %v5599 = vmul.f32 1.0, %v5598
    %v5600 = vrcp.pop %v5581
    %v5601 = vmul.f32 1.0, %v5600
    %v5602 = vrcp.pop %v5582
    %v5603 = vmul.f32 1.0, %v5602
    %v5604 = vrcp.pop %v5583
    %v5605 = vmul.f32 1.0, %v5604
    %v5606 = vrcp.pop %v5584
    %v5607 = vmul.f32 1.0, %v5606
    %v5608 = vrcp.pop %v5585
    %v5609 = vmul.f32 1.0, %v5608
    %v5610 = vrcp.pop %v5586
    %v5611 = vmul.f32 1.0, %v5610
    %v5612 = vrcp.pop %v5587
    %v5613 = vmul.f32 1.0, %v5612
    %v5614 = vrcp.pop %v5588
    %v5615 = vmul.f32 1.0, %v5614
    %v5616 = vrcp.pop %v5589
    %v5617 = vmul.f32 1.0, %v5616
    %v5618 = vrcp.pop %v5590
    %v5619 = vmul.f32 1.0, %v5618
    %v5620 = vrcp.pop %v5591
    %v5621 = vmul.f32 1.0, %v5620
    %v5622 = vrcp.pop %v5592
    %v5623 = vmul.f32 1.0, %v5622
    %v5624 = vrcp.pop %v5593
    %v5625 = vmul.f32 1.0, %v5624
    %5626 = vrot.lane.b32.xlu0 %v4080, 96
    %v5627 = vpop.permute.xlu0 %5626
    %5628 = vrot.lane.b32.xlu0 %v4086, 96
    %v5629 = vpop.permute.xlu0 %5628
    %v5632 = vmul.f32 %v5595, %v5627
    %v5633 = vmul.f32 %v5597, %v5627
    %v5634 = vmul.f32 %v5599, %v5627
    %v5635 = vmul.f32 %v5601, %v5627
    %v5636 = vmul.f32 %v5603, %v5627
    %v5637 = vmul.f32 %v5605, %v5627
    %v5638 = vmul.f32 %v5607, %v5627
    %v5639 = vmul.f32 %v5609, %v5627
    %v5640 = vmul.f32 %v5611, %v5629
    %v5641 = vmul.f32 %v5613, %v5629
    %v5642 = vmul.f32 %v5615, %v5629
    %v5643 = vmul.f32 %v5617, %v5629
    %v5644 = vmul.f32 %v5619, %v5629
    %v5645 = vmul.f32 %v5621, %v5629
    %v5646 = vmul.f32 %v5623, %v5629
    %v5647 = vmul.f32 %v5625, %v5629
    %v5648 = vsel %vm753, %v5632, 0.0
    %v5649 = vrot.slane %v5648, 4
    %v5650 = vadd.f32 %v5648, %v5649
    %v5651 = vrot.slane %v5650, 2
    %v5652 = vadd.f32 %v5650, %v5651
    %v5653 = vrot.slane %v5652, 1
    %v5654 = vadd.f32 %v5652, %v5653
    %v5655 = vsel %vm753, %v5633, 0.0
    %v5656 = vrot.slane %v5655, 4
    %v5657 = vadd.f32 %v5655, %v5656
    %v5658 = vrot.slane %v5657, 2
    %v5659 = vadd.f32 %v5657, %v5658
    %v5660 = vrot.slane %v5659, 1
    %v5661 = vadd.f32 %v5659, %v5660
    %v5662 = vsel %vm753, %v5634, 0.0
    %v5663 = vrot.slane %v5662, 4
    %v5664 = vadd.f32 %v5662, %v5663
    %v5665 = vrot.slane %v5664, 2
    %v5666 = vadd.f32 %v5664, %v5665
    %v5667 = vrot.slane %v5666, 1
    %v5668 = vadd.f32 %v5666, %v5667
    %v5669 = vsel %vm753, %v5635, 0.0
    %v5670 = vrot.slane %v5669, 4
    %v5671 = vadd.f32 %v5669, %v5670
    %v5672 = vrot.slane %v5671, 2
    %v5673 = vadd.f32 %v5671, %v5672
    %v5674 = vrot.slane %v5673, 1
    %v5675 = vadd.f32 %v5673, %v5674
    %v5676 = vsel %vm753, %v5636, 0.0
    %v5677 = vrot.slane %v5676, 4
    %v5678 = vadd.f32 %v5676, %v5677
    %v5679 = vrot.slane %v5678, 2
    %v5680 = vadd.f32 %v5678, %v5679
    %v5681 = vrot.slane %v5680, 1
    %v5682 = vadd.f32 %v5680, %v5681
    %v5683 = vsel %vm753, %v5637, 0.0
    %v5684 = vrot.slane %v5683, 4
    %v5685 = vadd.f32 %v5683, %v5684
    %v5686 = vrot.slane %v5685, 2
    %v5687 = vadd.f32 %v5685, %v5686
    %v5688 = vrot.slane %v5687, 1
    %v5689 = vadd.f32 %v5687, %v5688
    %v5690 = vsel %vm753, %v5638, 0.0
    %v5691 = vrot.slane %v5690, 4
    %v5692 = vadd.f32 %v5690, %v5691
    %v5693 = vrot.slane %v5692, 2
    %v5694 = vadd.f32 %v5692, %v5693
    %v5695 = vrot.slane %v5694, 1
    %v5696 = vadd.f32 %v5694, %v5695
    %v5697 = vsel %vm753, %v5639, 0.0
    %v5698 = vrot.slane %v5697, 4
    %v5699 = vadd.f32 %v5697, %v5698
    %v5700 = vrot.slane %v5699, 2
    %v5701 = vadd.f32 %v5699, %v5700
    %v5702 = vrot.slane %v5701, 1
    %v5703 = vadd.f32 %v5701, %v5702
    %v5704 = vsel %vm753, %v5640, 0.0
    %v5705 = vrot.slane %v5704, 4
    %v5706 = vadd.f32 %v5704, %v5705
    %v5707 = vrot.slane %v5706, 2
    %v5708 = vadd.f32 %v5706, %v5707
    %v5709 = vrot.slane %v5708, 1
    %v5710 = vadd.f32 %v5708, %v5709
    %v5711 = vsel %vm753, %v5641, 0.0
    %v5712 = vrot.slane %v5711, 4
    %v5713 = vadd.f32 %v5711, %v5712
    %v5714 = vrot.slane %v5713, 2
    %v5715 = vadd.f32 %v5713, %v5714
    %v5716 = vrot.slane %v5715, 1
    %v5717 = vadd.f32 %v5715, %v5716
    %v5718 = vsel %vm753, %v5642, 0.0
    %v5719 = vrot.slane %v5718, 4
    %v5720 = vadd.f32 %v5718, %v5719
    %v5721 = vrot.slane %v5720, 2
    %v5722 = vadd.f32 %v5720, %v5721
    %v5723 = vrot.slane %v5722, 1
    %v5724 = vadd.f32 %v5722, %v5723
    %v5725 = vsel %vm753, %v5643, 0.0
    %v5726 = vrot.slane %v5725, 4
    %v5727 = vadd.f32 %v5725, %v5726
    %v5728 = vrot.slane %v5727, 2
    %v5729 = vadd.f32 %v5727, %v5728
    %v5730 = vrot.slane %v5729, 1
    %v5731 = vadd.f32 %v5729, %v5730
    %v5732 = vsel %vm753, %v5644, 0.0
    %v5733 = vrot.slane %v5732, 4
    %v5734 = vadd.f32 %v5732, %v5733
    %v5735 = vrot.slane %v5734, 2
    %v5736 = vadd.f32 %v5734, %v5735
    %v5737 = vrot.slane %v5736, 1
    %v5738 = vadd.f32 %v5736, %v5737
    %v5739 = vsel %vm753, %v5645, 0.0
    %v5740 = vrot.slane %v5739, 4
    %v5741 = vadd.f32 %v5739, %v5740
    %v5742 = vrot.slane %v5741, 2
    %v5743 = vadd.f32 %v5741, %v5742
    %v5744 = vrot.slane %v5743, 1
    %v5745 = vadd.f32 %v5743, %v5744
    %v5746 = vsel %vm753, %v5646, 0.0
    %v5747 = vrot.slane %v5746, 4
    %v5748 = vadd.f32 %v5746, %v5747
    %v5749 = vrot.slane %v5748, 2
    %v5750 = vadd.f32 %v5748, %v5749
    %v5751 = vrot.slane %v5750, 1
    %v5752 = vadd.f32 %v5750, %v5751
    %v5753 = vsel %vm753, %v5647, 0.0
    %v5754 = vrot.slane %v5753, 4
    %v5755 = vadd.f32 %v5753, %v5754
    %v5756 = vrot.slane %v5755, 2
    %v5757 = vadd.f32 %v5755, %v5756
    %v5758 = vrot.slane %v5757, 1
    %v5759 = vadd.f32 %v5757, %v5758
    %v5760 = vsel %vm753, %v5595, 0.0
    %v5761 = vrot.slane %v5760, 4
    %v5762 = vadd.f32 %v5760, %v5761
    %v5763 = vrot.slane %v5762, 2
    %v5764 = vadd.f32 %v5762, %v5763
    %v5765 = vrot.slane %v5764, 1
    %v5766 = vadd.f32 %v5764, %v5765
    %v5767 = vsel %vm753, %v5597, 0.0
    %v5768 = vrot.slane %v5767, 4
    %v5769 = vadd.f32 %v5767, %v5768
    %v5770 = vrot.slane %v5769, 2
    %v5771 = vadd.f32 %v5769, %v5770
    %v5772 = vrot.slane %v5771, 1
    %v5773 = vadd.f32 %v5771, %v5772
    %v5774 = vsel %vm753, %v5599, 0.0
    %v5775 = vrot.slane %v5774, 4
    %v5776 = vadd.f32 %v5774, %v5775
    %v5777 = vrot.slane %v5776, 2
    %v5778 = vadd.f32 %v5776, %v5777
    %v5779 = vrot.slane %v5778, 1
    %v5780 = vadd.f32 %v5778, %v5779
    %v5781 = vsel %vm753, %v5601, 0.0
    %v5782 = vrot.slane %v5781, 4
    %v5783 = vadd.f32 %v5781, %v5782
    %v5784 = vrot.slane %v5783, 2
    %v5785 = vadd.f32 %v5783, %v5784
    %v5786 = vrot.slane %v5785, 1
    %v5787 = vadd.f32 %v5785, %v5786
    %v5788 = vsel %vm753, %v5603, 0.0
    %v5789 = vrot.slane %v5788, 4
    %v5790 = vadd.f32 %v5788, %v5789
    %v5791 = vrot.slane %v5790, 2
    %v5792 = vadd.f32 %v5790, %v5791
    %v5793 = vrot.slane %v5792, 1
    %v5794 = vadd.f32 %v5792, %v5793
    %v5795 = vsel %vm753, %v5605, 0.0
    %v5796 = vrot.slane %v5795, 4
    %v5797 = vadd.f32 %v5795, %v5796
    %v5798 = vrot.slane %v5797, 2
    %v5799 = vadd.f32 %v5797, %v5798
    %v5800 = vrot.slane %v5799, 1
    %v5801 = vadd.f32 %v5799, %v5800
    %v5802 = vsel %vm753, %v5607, 0.0
    %v5803 = vrot.slane %v5802, 4
    %v5804 = vadd.f32 %v5802, %v5803
    %v5805 = vrot.slane %v5804, 2
    %v5806 = vadd.f32 %v5804, %v5805
    %v5807 = vrot.slane %v5806, 1
    %v5808 = vadd.f32 %v5806, %v5807
    %v5809 = vsel %vm753, %v5609, 0.0
    %v5810 = vrot.slane %v5809, 4
    %v5811 = vadd.f32 %v5809, %v5810
    %v5812 = vrot.slane %v5811, 2
    %v5813 = vadd.f32 %v5811, %v5812
    %v5814 = vrot.slane %v5813, 1
    %v5815 = vadd.f32 %v5813, %v5814
    %v5816 = vsel %vm753, %v5611, 0.0
    %v5817 = vrot.slane %v5816, 4
    %v5818 = vadd.f32 %v5816, %v5817
    %v5819 = vrot.slane %v5818, 2
    %v5820 = vadd.f32 %v5818, %v5819
    %v5821 = vrot.slane %v5820, 1
    %v5822 = vadd.f32 %v5820, %v5821
    %v5823 = vsel %vm753, %v5613, 0.0
    %v5824 = vrot.slane %v5823, 4
    %v5825 = vadd.f32 %v5823, %v5824
    %v5826 = vrot.slane %v5825, 2
    %v5827 = vadd.f32 %v5825, %v5826
    %v5828 = vrot.slane %v5827, 1
    %v5829 = vadd.f32 %v5827, %v5828
    %v5830 = vsel %vm753, %v5615, 0.0
    %v5831 = vrot.slane %v5830, 4
    %v5832 = vadd.f32 %v5830, %v5831
    %v5833 = vrot.slane %v5832, 2
    %v5834 = vadd.f32 %v5832, %v5833
    %v5835 = vrot.slane %v5834, 1
    %v5836 = vadd.f32 %v5834, %v5835
    %v5837 = vsel %vm753, %v5617, 0.0
    %v5838 = vrot.slane %v5837, 4
    %v5839 = vadd.f32 %v5837, %v5838
    %v5840 = vrot.slane %v5839, 2
    %v5841 = vadd.f32 %v5839, %v5840
    %v5842 = vrot.slane %v5841, 1
    %v5843 = vadd.f32 %v5841, %v5842
    %v5844 = vsel %vm753, %v5619, 0.0
    %v5845 = vrot.slane %v5844, 4
    %v5846 = vadd.f32 %v5844, %v5845
    %v5847 = vrot.slane %v5846, 2
    %v5848 = vadd.f32 %v5846, %v5847
    %v5849 = vrot.slane %v5848, 1
    %v5850 = vadd.f32 %v5848, %v5849
    %v5851 = vsel %vm753, %v5621, 0.0
    %v5852 = vrot.slane %v5851, 4
    %v5853 = vadd.f32 %v5851, %v5852
    %v5854 = vrot.slane %v5853, 2
    %v5855 = vadd.f32 %v5853, %v5854
    %v5856 = vrot.slane %v5855, 1
    %v5857 = vadd.f32 %v5855, %v5856
    %v5858 = vsel %vm753, %v5623, 0.0
    %v5859 = vrot.slane %v5858, 4
    %v5860 = vadd.f32 %v5858, %v5859
    %v5861 = vrot.slane %v5860, 2
    %v5862 = vadd.f32 %v5860, %v5861
    %v5863 = vrot.slane %v5862, 1
    %v5864 = vadd.f32 %v5862, %v5863
    %v5865 = vsel %vm753, %v5625, 0.0
    %v5866 = vrot.slane %v5865, 4
    %v5867 = vadd.f32 %v5865, %v5866
    %v5868 = vrot.slane %v5867, 2
    %v5869 = vadd.f32 %v5867, %v5868
    %v5870 = vrot.slane %v5869, 1
    %v5871 = vadd.f32 %v5869, %v5870
    %v5872 = vrcp.pop %v5766
    %v5873 = vrcp.pop %v5773
    %v5874 = vrcp.pop %v5780
    %v5875 = vrcp.pop %v5787
    %v5876 = vrcp.pop %v5794
    %v5877 = vrcp.pop %v5801
    %v5878 = vrcp.pop %v5808
    %v5879 = vrcp.pop %v5815
    %v5880 = vrcp.pop %v5822
    %v5881 = vrcp.pop %v5829
    %v5882 = vrcp.pop %v5836
    %v5883 = vrcp.pop %v5843
    %v5884 = vrcp.pop %v5850
    %v5885 = vrcp.pop %v5857
    %v5886 = vrcp.pop %v5864
    %v5887 = vrcp.pop %v5871
    %v5888 = vmul.f32 %v5766, %v5872
    %v5889 = vmul.f32 %v5773, %v5873
    %v5890 = vmul.f32 %v5780, %v5874
    %v5891 = vmul.f32 %v5787, %v5875
    %v5892 = vmul.f32 %v5794, %v5876
    %v5893 = vmul.f32 %v5801, %v5877
    %v5894 = vmul.f32 %v5808, %v5878
    %v5895 = vmul.f32 %v5815, %v5879
    %v5896 = vmul.f32 %v5822, %v5880
    %v5897 = vmul.f32 %v5829, %v5881
    %v5898 = vmul.f32 %v5836, %v5882
    %v5899 = vmul.f32 %v5843, %v5883
    %v5900 = vmul.f32 %v5850, %v5884
    %v5901 = vmul.f32 %v5857, %v5885
    %v5902 = vmul.f32 %v5864, %v5886
    %v5903 = vmul.f32 %v5871, %v5887
    %v5904 = vsub.f32 2.0, %v5888
    %v5905 = vsub.f32 2.0, %v5889
    %v5906 = vsub.f32 2.0, %v5890
    %v5907 = vsub.f32 2.0, %v5891
    %v5908 = vsub.f32 2.0, %v5892
    %v5909 = vsub.f32 2.0, %v5893
    %v5910 = vsub.f32 2.0, %v5894
    %v5911 = vsub.f32 2.0, %v5895
    %v5912 = vsub.f32 2.0, %v5896
    %v5913 = vsub.f32 2.0, %v5897
    %v5914 = vsub.f32 2.0, %v5898
    %v5915 = vsub.f32 2.0, %v5899
    %v5916 = vsub.f32 2.0, %v5900
    %v5917 = vsub.f32 2.0, %v5901
    %v5918 = vsub.f32 2.0, %v5902
    %v5919 = vsub.f32 2.0, %v5903
    %v5920 = vmul.f32 %v5872, %v5904
    %v5921 = vmul.f32 %v5873, %v5905
    %v5922 = vmul.f32 %v5874, %v5906
    %v5923 = vmul.f32 %v5875, %v5907
    %v5924 = vmul.f32 %v5876, %v5908
    %v5925 = vmul.f32 %v5877, %v5909
    %v5926 = vmul.f32 %v5878, %v5910
    %v5927 = vmul.f32 %v5879, %v5911
    %v5928 = vmul.f32 %v5880, %v5912
    %v5929 = vmul.f32 %v5881, %v5913
    %v5930 = vmul.f32 %v5882, %v5914
    %v5931 = vmul.f32 %v5883, %v5915
    %v5932 = vmul.f32 %v5884, %v5916
    %v5933 = vmul.f32 %v5885, %v5917
    %v5934 = vmul.f32 %v5886, %v5918
    %v5935 = vmul.f32 %v5887, %v5919
    %v5936 = vmul.f32 %v5654, %v5920
    %v5937 = vmul.f32 %v5661, %v5921
    %v5938 = vmul.f32 %v5668, %v5922
    %v5939 = vmul.f32 %v5675, %v5923
    %v5940 = vmul.f32 %v5682, %v5924
    %v5941 = vmul.f32 %v5689, %v5925
    %v5942 = vmul.f32 %v5696, %v5926
    %v5943 = vmul.f32 %v5703, %v5927
    %v5944 = vmul.f32 %v5710, %v5928
    %v5945 = vmul.f32 %v5717, %v5929
    %v5946 = vmul.f32 %v5724, %v5930
    %v5947 = vmul.f32 %v5731, %v5931
    %v5948 = vmul.f32 %v5738, %v5932
    %v5949 = vmul.f32 %v5745, %v5933
    %v5950 = vmul.f32 %v5752, %v5934
    %v5951 = vmul.f32 %v5759, %v5935
    %v5968 = vsel %vm3165, %v5937, %v5936
    %v5969 = vsel %vm3167, %v5938, %v5968
    %v5970 = vsel %vm3169, %v5939, %v5969
    %v5971 = vsel %vm3171, %v5940, %v5970
    %v5972 = vsel %vm3173, %v5941, %v5971
    %v5973 = vsel %vm3175, %v5942, %v5972
    %v5974 = vsel %vm3177, %v5943, %v5973
    %v5975 = vsel %vm3165, %v5945, %v5944
    %v5976 = vsel %vm3167, %v5946, %v5975
    %v5977 = vsel %vm3169, %v5947, %v5976
    %v5978 = vsel %vm3171, %v5948, %v5977
    %v5979 = vsel %vm3173, %v5949, %v5978
    %v5980 = vsel %vm3175, %v5950, %v5979
    %v5981 = vsel %vm3177, %v5951, %v5980
    %v5984 = vadd.f32 %v4080, %v5974
    %v5985 = vadd.f32 %v4086, %v5981
    %v5986 = vmul.f32 %v5984, %v3193
    %v5987 = vmul.f32 %v5985, %v3198
    %v5988 = vsel %vm753, %v5986, 0.0
    %v5989 = vsel %vm753, %v5987, 0.0
    %v5990 = vadd.f32 %v5988, %v5989
    %v5991 = vrot.slane %v5990, 4
    %v5992 = vadd.f32 %v5990, %v5991
    %v5993 = vrot.slane %v5992, 2
    %v5994 = vadd.f32 %v5992, %v5993
    %v5995 = vrot.slane %v5994, 1
    %v5996 = vadd.f32 %v5994, %v5995
    %v5997 = vmul.f32 %v5996, %v3307
    %v5998 = vsub.f32 %v5986, %v5997
    %v5999 = vsub.f32 %v5987, %v5997
    %v6000 = vmul.f32 %v5998, %v5998
    %v6001 = vmul.f32 %v5999, %v5999
    %v6002 = vsel %vm753, %v6000, 0.0
    %v6003 = vsel %vm753, %v6001, 0.0
    %v6004 = vadd.f32 %v6002, %v6003
    %v6005 = vrot.slane %v6004, 4
    %v6006 = vadd.f32 %v6004, %v6005
    %v6007 = vrot.slane %v6006, 2
    %v6008 = vadd.f32 %v6006, %v6007
    %v6009 = vrot.slane %v6008, 1
    %v6010 = vadd.f32 %v6008, %v6009
    %v6011 = vmul.f32 %v6010, %v3307
    %s6012 = scalar_lea.vmem %s12, 1
    %v6013 = vld [vmem:[%s6012] sm:$0x1]
    %v6014 = vadd.f32 %v6011, 1e-05
    %v6015 = vrsqrt.pop %v6014
    %v6016 = vmul.f32 %v6013, %v6015
    %v6018 = vlaneseq
    %v6019 = vshrl.u32 %v6018, 7
    %v6020 = vsub.s32 0, %v6019
    %v6021 = vrot.slane %v6016, %v6020
    %v6023 = vmul.f32 %v5986, %v6021
    %v6024 = vmul.f32 %v5987, %v6021
    %s6025 = scalar_lea.vmem %s13, 1
    %v6026 = vld [vmem:[%s6025] sm:$0x1]
    %v6027 = vmul.f32 %v5997, %v6016
    %v6028 = vsub.f32 %v6026, %v6027
    %v6030 = vlaneseq
    %v6031 = vshrl.u32 %v6030, 7
    %v6032 = vsub.s32 0, %v6031
    %v6033 = vrot.slane %v6028, %v6032
    %v6035 = vadd.f32 %v6023, %v6033
    %v6036 = vadd.f32 %v6024, %v6033
    %v6037 = vmax.f32 %v6035, 0.0
    %v6038 = vmax.f32 %v6036, 0.0
    %v6039 = vadd.f32 %v3508, %v6037
    %v6040 = vadd.f32 %v3509, %v6038
    %v6041 = vsel %vm753, %v6039, 0.0
    %v6042 = vrot.slane %v6041, 4
    %v6043 = vadd.f32 %v6041, %v6042
    %v6044 = vrot.slane %v6043, 2
    %v6045 = vadd.f32 %v6043, %v6044
    %v6046 = vrot.slane %v6045, 1
    %v6047 = vadd.f32 %v6045, %v6046
    %v6048 = vsel %vm753, %v6040, 0.0
    %v6049 = vrot.slane %v6048, 4
    %v6050 = vadd.f32 %v6048, %v6049
    %v6051 = vrot.slane %v6050, 2
    %v6052 = vadd.f32 %v6050, %v6051
    %v6053 = vrot.slane %v6052, 1
    %v6054 = vadd.f32 %v6052, %v6053
    %v6055 = vrcp.pop 8.0
    %v6056 = vmul.f32 %v6047, %v6055
    %v6057 = vmul.f32 %v6054, %v6055
    %v6058 = vld [vmem:[%s16] sm:$0xff]
    %v6059 = vld [vmem:[%s16 + $0x8] sm:$0xff]
    %v6060 = vld [vmem:[%s16 + $0x10] sm:$0xff]
    %v6061 = vld [vmem:[%s16 + $0x18] sm:$0xff]
    %v6062 = vld [vmem:[%s17] sm:$0x1]
    %v6064 = vlaneseq
    %v6065 = vshrl.u32 %v6064, 7
    %v6066 = vsub.s32 0, %v6065
    %v6067 = vrot.slane %v6062, %v6066
    %v6071 = vsel %vm3165, %v6057, %v6056
    %v6072 = vsel %vm753, %v6071, 0
    %6074 = vmatprep.subr.mxu0 0.0
    %v6075 = vand.u32 %v6058, 4294901760
    %6076 = vmatpush1.msra.mxu0 %v6075
    %6077 = vmatprep.subr.mxu0 0.0
    %v6078 = vand.u32 %v6059, 4294901760
    %6079 = vmatpush1.msra.mxu0 %v6078
    %6080 = vmatprep.subr.mxu0 0.0
    %v6081 = vand.u32 %v6060, 4294901760
    %6082 = vmatpush1.msra.mxu0 %v6081
    %6083 = vmatprep.subr.mxu0 0.0
    %v6084 = vand.u32 %v6061, 4294901760
    %6085 = vmatpush1.msra.mxu0 %v6084
    %6086 = vmatprep.subr.mxu0 0.0
    %6087 = vmatpush1.msra.mxu0 0.0
    %6088 = vmatprep.subr.mxu0 0.0
    %6089 = vmatpush1.msra.mxu0 0.0
    %6090 = vmatprep.subr.mxu0 0.0
    %6091 = vmatpush1.msra.mxu0 0.0
    %6092 = vmatprep.subr.mxu0 0.0
    %6093 = vmatpush1.msra.mxu0 0.0
    %6094 = vmatprep.subr.mxu0 0.0
    %6095 = vmatpush1.msra.mxu0 0.0
    %6096 = vmatprep.subr.mxu0 0.0
    %6097 = vmatpush1.msra.mxu0 0.0
    %6098 = vmatprep.subr.mxu0 0.0
    %6099 = vmatpush1.msra.mxu0 0.0
    %6100 = vmatprep.subr.mxu0 0.0
    %6101 = vmatpush1.msra.mxu0 0.0
    %6102 = vmatprep.subr.mxu0 0.0
    %6103 = vmatpush1.msra.mxu0 0.0
    %6104 = vmatprep.subr.mxu0 0.0
    %6105 = vmatpush1.msra.mxu0 0.0
    %6106 = vmatprep.subr.mxu0 0.0
    %6107 = vmatpush1.msra.mxu0 0.0
    %6108 = vmatprep.subr.mxu0 0.0
    %6109 = vmatpush1.msra.mxu0 0.0
    %6110 = vmatprep.subr.mxu0 0.0
    %6111 = vmatpush1.msra.mxu0 0.0
    %6112 = vmatprep.subr.mxu0 0.0
    %6113 = vmatpush1.msra.mxu0 0.0
    %6114 = vmatprep.subr.mxu0 0.0
    %6115 = vmatpush1.msra.mxu0 0.0
    %6116 = vmatprep.subr.mxu0 0.0
    %6117 = vmatpush1.msra.mxu0 0.0
    %6118 = vmatprep.subr.mxu0 0.0
    %6119 = vmatpush1.msra.mxu0 0.0
    %6120 = vmatprep.subr.mxu0 0.0
    %6121 = vmatpush1.msra.mxu0 0.0
    %6122 = vmatprep.subr.mxu0 0.0
    %6123 = vmatpush1.msra.mxu0 0.0
    %6124 = vmatprep.subr.mxu0 0.0
    %6125 = vmatpush1.msra.mxu0 0.0
    %6126 = vmatprep.subr.mxu0 0.0
    %6127 = vmatpush1.msra.mxu0 0.0
    %6128 = vmatprep.subr.mxu0 0.0
    %6129 = vmatpush1.msra.mxu0 0.0
    %6130 = vmatprep.subr.mxu0 0.0
    %6131 = vmatpush1.msra.mxu0 0.0
    %6132 = vmatprep.subr.mxu0 0.0
    %6133 = vmatpush1.msra.mxu0 0.0
    %6134 = vmatprep.subr.mxu0 0.0
    %6135 = vmatpush1.msra.mxu0 0.0
    %6136 = vmatprep.subr.mxu0 0.0
    %6137 = vmatpush1.msra.mxu0 0.0
    %6138 = vmatprep.subr.mxu0 0.0
    %6139 = vmatpush1.msra.mxu0 0.0
    %6140 = vmatprep.subr.mxu0 0.0
    %6141 = vmatpush1.msra.mxu0 0.0
    %6142 = vmatprep.mubr.f32.mxu0 0.0
    %v6143 = vand.u32 %v6072, 4294901760
    %v6144 = vsub.f32 %v6072, %v6143
    %v6145 = vand.u32 %v6144, 4294901760
    %v6146 = vsub.f32 %v6144, %v6145
    %v6147 = vand.u32 %v6146, 4294901760
    %6148 = vmatmul.mubr.f32.gmra.mrb[0].mxu0 %v6147
    %v6149 = vpop.f32.mrb[0].mxu0
    %v6150 = vadd.f32 %v6067, %v6149
    %v6151 = vpop.f32.mrb[0].mxu0
    %6152 = vdwg.mxu0
    %6153 = vmatprep.subr.mxu0 0.0
    %v6154 = vand.u32 %v6058, 4294901760
    %v6155 = vsub.f32 %v6058, %v6154
    %v6156 = vand.u32 %v6155, 4294901760
    %v6157 = vsub.f32 %v6155, %v6156
    %v6158 = vand.u32 %v6157, 4294901760
    %6159 = vmatpush1.msra.mxu0 %v6158
    %6160 = vmatprep.subr.mxu0 0.0
    %v6161 = vand.u32 %v6059, 4294901760
    %v6162 = vsub.f32 %v6059, %v6161
    %v6163 = vand.u32 %v6162, 4294901760
    %v6164 = vsub.f32 %v6162, %v6163
    %v6165 = vand.u32 %v6164, 4294901760
    %6166 = vmatpush1.msra.mxu0 %v6165
    %6167 = vmatprep.subr.mxu0 0.0
    %v6168 = vand.u32 %v6060, 4294901760
    %v6169 = vsub.f32 %v6060, %v6168
    %v6170 = vand.u32 %v6169, 4294901760
    %v6171 = vsub.f32 %v6169, %v6170
    %v6172 = vand.u32 %v6171, 4294901760
    %6173 = vmatpush1.msra.mxu0 %v6172
    %6174 = vmatprep.subr.mxu0 0.0
    %v6175 = vand.u32 %v6061, 4294901760
    %v6176 = vsub.f32 %v6061, %v6175
    %v6177 = vand.u32 %v6176, 4294901760
    %v6178 = vsub.f32 %v6176, %v6177
    %v6179 = vand.u32 %v6178, 4294901760
    %6180 = vmatpush1.msra.mxu0 %v6179
    %6181 = vmatprep.subr.mxu0 0.0
    %6182 = vmatpush1.msra.mxu0 0.0
    %6183 = vmatprep.subr.mxu0 0.0
    %6184 = vmatpush1.msra.mxu0 0.0
    %6185 = vmatprep.subr.mxu0 0.0
    %6186 = vmatpush1.msra.mxu0 0.0
    %6187 = vmatprep.subr.mxu0 0.0
    %6188 = vmatpush1.msra.mxu0 0.0
    %6189 = vmatprep.subr.mxu0 0.0
    %6190 = vmatpush1.msra.mxu0 0.0
    %6191 = vmatprep.subr.mxu0 0.0
    %6192 = vmatpush1.msra.mxu0 0.0
    %6193 = vmatprep.subr.mxu0 0.0
    %6194 = vmatpush1.msra.mxu0 0.0
    %6195 = vmatprep.subr.mxu0 0.0
    %6196 = vmatpush1.msra.mxu0 0.0
    %6197 = vmatprep.subr.mxu0 0.0
    %6198 = vmatpush1.msra.mxu0 0.0
    %6199 = vmatprep.subr.mxu0 0.0
    %6200 = vmatpush1.msra.mxu0 0.0
    %6201 = vmatprep.subr.mxu0 0.0
    %6202 = vmatpush1.msra.mxu0 0.0
    %6203 = vmatprep.subr.mxu0 0.0
    %6204 = vmatpush1.msra.mxu0 0.0
    %6205 = vmatprep.subr.mxu0 0.0
    %6206 = vmatpush1.msra.mxu0 0.0
    %6207 = vmatprep.subr.mxu0 0.0
    %6208 = vmatpush1.msra.mxu0 0.0
    %6209 = vmatprep.subr.mxu0 0.0
    %6210 = vmatpush1.msra.mxu0 0.0
    %6211 = vmatprep.subr.mxu0 0.0
    %6212 = vmatpush1.msra.mxu0 0.0
    %6213 = vmatprep.subr.mxu0 0.0
    %6214 = vmatpush1.msra.mxu0 0.0
    %6215 = vmatprep.subr.mxu0 0.0
    %6216 = vmatpush1.msra.mxu0 0.0
    %6217 = vmatprep.subr.mxu0 0.0
    %6218 = vmatpush1.msra.mxu0 0.0
    %6219 = vmatprep.subr.mxu0 0.0
    %6220 = vmatpush1.msra.mxu0 0.0
    %6221 = vmatprep.subr.mxu0 0.0
    %6222 = vmatpush1.msra.mxu0 0.0
    %6223 = vmatprep.subr.mxu0 0.0
    %6224 = vmatpush1.msra.mxu0 0.0
    %6225 = vmatprep.subr.mxu0 0.0
    %6226 = vmatpush1.msra.mxu0 0.0
    %6227 = vmatprep.subr.mxu0 0.0
    %6228 = vmatpush1.msra.mxu0 0.0
    %6229 = vmatprep.subr.mxu0 0.0
    %6230 = vmatpush1.msra.mxu0 0.0
    %6231 = vmatprep.subr.mxu0 0.0
    %6232 = vmatpush1.msra.mxu0 0.0
    %6233 = vmatprep.subr.mxu0 0.0
    %6234 = vmatpush1.msra.mxu0 0.0
    %6235 = vmatprep.subr.mxu0 0.0
    %6236 = vmatpush1.msra.mxu0 0.0
    %6237 = vmatprep.mubr.f32.mxu0 0.0
    %v6238 = vand.u32 %v6072, 4294901760
    %6239 = vmatmul.mubr.f32.gmra.mrb[0].mxu0 %v6238
    %v6240 = vpop.f32.mrb[0].mxu0
    %v6241 = vadd.f32 %v6150, %v6240
    %v6242 = vpop.f32.mrb[0].mxu0
    %6243 = vdwg.mxu0
    %6244 = vmatprep.subr.mxu0 0.0
    %v6245 = vand.u32 %v6058, 4294901760
    %v6246 = vsub.f32 %v6058, %v6245
    %6247 = vmatpush1.msra.mxu0 %v6246
    %6248 = vmatprep.subr.mxu0 0.0
    %v6249 = vand.u32 %v6059, 4294901760
    %v6250 = vsub.f32 %v6059, %v6249
    %6251 = vmatpush1.msra.mxu0 %v6250
    %6252 = vmatprep.subr.mxu0 0.0
    %v6253 = vand.u32 %v6060, 4294901760
    %v6254 = vsub.f32 %v6060, %v6253
    %6255 = vmatpush1.msra.mxu0 %v6254
    %6256 = vmatprep.subr.mxu0 0.0
    %v6257 = vand.u32 %v6061, 4294901760
    %v6258 = vsub.f32 %v6061, %v6257
    %6259 = vmatpush1.msra.mxu0 %v6258
    %6260 = vmatprep.subr.mxu0 0.0
    %6261 = vmatpush1.msra.mxu0 0.0
    %6262 = vmatprep.subr.mxu0 0.0
    %6263 = vmatpush1.msra.mxu0 0.0
    %6264 = vmatprep.subr.mxu0 0.0
    %6265 = vmatpush1.msra.mxu0 0.0
    %6266 = vmatprep.subr.mxu0 0.0
    %6267 = vmatpush1.msra.mxu0 0.0
    %6268 = vmatprep.subr.mxu0 0.0
    %6269 = vmatpush1.msra.mxu0 0.0
    %6270 = vmatprep.subr.mxu0 0.0
    %6271 = vmatpush1.msra.mxu0 0.0
    %6272 = vmatprep.subr.mxu0 0.0
    %6273 = vmatpush1.msra.mxu0 0.0
    %6274 = vmatprep.subr.mxu0 0.0
    %6275 = vmatpush1.msra.mxu0 0.0
    %6276 = vmatprep.subr.mxu0 0.0
    %6277 = vmatpush1.msra.mxu0 0.0
    %6278 = vmatprep.subr.mxu0 0.0
    %6279 = vmatpush1.msra.mxu0 0.0
    %6280 = vmatprep.subr.mxu0 0.0
    %6281 = vmatpush1.msra.mxu0 0.0
    %6282 = vmatprep.subr.mxu0 0.0
    %6283 = vmatpush1.msra.mxu0 0.0
    %6284 = vmatprep.subr.mxu0 0.0
    %6285 = vmatpush1.msra.mxu0 0.0
    %6286 = vmatprep.subr.mxu0 0.0
    %6287 = vmatpush1.msra.mxu0 0.0
    %6288 = vmatprep.subr.mxu0 0.0
    %6289 = vmatpush1.msra.mxu0 0.0
    %6290 = vmatprep.subr.mxu0 0.0
    %6291 = vmatpush1.msra.mxu0 0.0
    %6292 = vmatprep.subr.mxu0 0.0
    %6293 = vmatpush1.msra.mxu0 0.0
    %6294 = vmatprep.subr.mxu0 0.0
    %6295 = vmatpush1.msra.mxu0 0.0
    %6296 = vmatprep.subr.mxu0 0.0
    %6297 = vmatpush1.msra.mxu0 0.0
    %6298 = vmatprep.subr.mxu0 0.0
    %6299 = vmatpush1.msra.mxu0 0.0
    %6300 = vmatprep.subr.mxu0 0.0
    %6301 = vmatpush1.msra.mxu0 0.0
    %6302 = vmatprep.subr.mxu0 0.0
    %6303 = vmatpush1.msra.mxu0 0.0
    %6304 = vmatprep.subr.mxu0 0.0
    %6305 = vmatpush1.msra.mxu0 0.0
    %6306 = vmatprep.subr.mxu0 0.0
    %6307 = vmatpush1.msra.mxu0 0.0
    %6308 = vmatprep.subr.mxu0 0.0
    %6309 = vmatpush1.msra.mxu0 0.0
    %6310 = vmatprep.subr.mxu0 0.0
    %6311 = vmatpush1.msra.mxu0 0.0
    %6312 = vmatprep.subr.mxu0 0.0
    %6313 = vmatpush1.msra.mxu0 0.0
    %6314 = vmatprep.subr.mxu0 0.0
    %6315 = vmatpush1.msra.mxu0 0.0
    %6316 = vmatprep.mubr.f32.mxu0 0.0
    %v6317 = vand.u32 %v6072, 4294901760
    %v6318 = vsub.f32 %v6072, %v6317
    %6319 = vmatmul.mubr.f32.gmra.mrb[0].mxu0 %v6318
    %v6320 = vpop.f32.mrb[0].mxu0
    %v6321 = vadd.f32 %v6241, %v6320
    %v6322 = vpop.f32.mrb[0].mxu0
    %6323 = vdwg.mxu0
    %6324 = vmatprep.subr.mxu0 0.0
    %v6325 = vand.u32 %v6058, 4294901760
    %6326 = vmatpush1.msra.mxu0 %v6325
    %6327 = vmatprep.subr.mxu0 0.0
    %v6328 = vand.u32 %v6059, 4294901760
    %6329 = vmatpush1.msra.mxu0 %v6328
    %6330 = vmatprep.subr.mxu0 0.0
    %v6331 = vand.u32 %v6060, 4294901760
    %6332 = vmatpush1.msra.mxu0 %v6331
    %6333 = vmatprep.subr.mxu0 0.0
    %v6334 = vand.u32 %v6061, 4294901760
    %6335 = vmatpush1.msra.mxu0 %v6334
    %6336 = vmatprep.subr.mxu0 0.0
    %6337 = vmatpush1.msra.mxu0 0.0
    %6338 = vmatprep.subr.mxu0 0.0
    %6339 = vmatpush1.msra.mxu0 0.0
    %6340 = vmatprep.subr.mxu0 0.0
    %6341 = vmatpush1.msra.mxu0 0.0
    %6342 = vmatprep.subr.mxu0 0.0
    %6343 = vmatpush1.msra.mxu0 0.0
    %6344 = vmatprep.subr.mxu0 0.0
    %6345 = vmatpush1.msra.mxu0 0.0
    %6346 = vmatprep.subr.mxu0 0.0
    %6347 = vmatpush1.msra.mxu0 0.0
    %6348 = vmatprep.subr.mxu0 0.0
    %6349 = vmatpush1.msra.mxu0 0.0
    %6350 = vmatprep.subr.mxu0 0.0
    %6351 = vmatpush1.msra.mxu0 0.0
    %6352 = vmatprep.subr.mxu0 0.0
    %6353 = vmatpush1.msra.mxu0 0.0
    %6354 = vmatprep.subr.mxu0 0.0
    %6355 = vmatpush1.msra.mxu0 0.0
    %6356 = vmatprep.subr.mxu0 0.0
    %6357 = vmatpush1.msra.mxu0 0.0
    %6358 = vmatprep.subr.mxu0 0.0
    %6359 = vmatpush1.msra.mxu0 0.0
    %6360 = vmatprep.subr.mxu0 0.0
    %6361 = vmatpush1.msra.mxu0 0.0
    %6362 = vmatprep.subr.mxu0 0.0
    %6363 = vmatpush1.msra.mxu0 0.0
    %6364 = vmatprep.subr.mxu0 0.0
    %6365 = vmatpush1.msra.mxu0 0.0
    %6366 = vmatprep.subr.mxu0 0.0
    %6367 = vmatpush1.msra.mxu0 0.0
    %6368 = vmatprep.subr.mxu0 0.0
    %6369 = vmatpush1.msra.mxu0 0.0
    %6370 = vmatprep.subr.mxu0 0.0
    %6371 = vmatpush1.msra.mxu0 0.0
    %6372 = vmatprep.subr.mxu0 0.0
    %6373 = vmatpush1.msra.mxu0 0.0
    %6374 = vmatprep.subr.mxu0 0.0
    %6375 = vmatpush1.msra.mxu0 0.0
    %6376 = vmatprep.subr.mxu0 0.0
    %6377 = vmatpush1.msra.mxu0 0.0
    %6378 = vmatprep.subr.mxu0 0.0
    %6379 = vmatpush1.msra.mxu0 0.0
    %6380 = vmatprep.subr.mxu0 0.0
    %6381 = vmatpush1.msra.mxu0 0.0
    %6382 = vmatprep.subr.mxu0 0.0
    %6383 = vmatpush1.msra.mxu0 0.0
    %6384 = vmatprep.subr.mxu0 0.0
    %6385 = vmatpush1.msra.mxu0 0.0
    %6386 = vmatprep.subr.mxu0 0.0
    %6387 = vmatpush1.msra.mxu0 0.0
    %6388 = vmatprep.subr.mxu0 0.0
    %6389 = vmatpush1.msra.mxu0 0.0
    %6390 = vmatprep.subr.mxu0 0.0
    %6391 = vmatpush1.msra.mxu0 0.0
    %6392 = vmatprep.mubr.f32.mxu0 0.0
    %v6393 = vand.u32 %v6072, 4294901760
    %v6394 = vsub.f32 %v6072, %v6393
    %v6395 = vand.u32 %v6394, 4294901760
    %6396 = vmatmul.mubr.f32.gmra.mrb[0].mxu0 %v6395
    %v6397 = vpop.f32.mrb[0].mxu0
    %v6398 = vadd.f32 %v6321, %v6397
    %v6399 = vpop.f32.mrb[0].mxu0
    %6400 = vdwg.mxu0
    %6401 = vmatprep.subr.mxu0 0.0
    %v6402 = vand.u32 %v6058, 4294901760
    %v6403 = vsub.f32 %v6058, %v6402
    %v6404 = vand.u32 %v6403, 4294901760
    %6405 = vmatpush1.msra.mxu0 %v6404
    %6406 = vmatprep.subr.mxu0 0.0
    %v6407 = vand.u32 %v6059, 4294901760
    %v6408 = vsub.f32 %v6059, %v6407
    %v6409 = vand.u32 %v6408, 4294901760
    %6410 = vmatpush1.msra.mxu0 %v6409
    %6411 = vmatprep.subr.mxu0 0.0
    %v6412 = vand.u32 %v6060, 4294901760
    %v6413 = vsub.f32 %v6060, %v6412
    %v6414 = vand.u32 %v6413, 4294901760
    %6415 = vmatpush1.msra.mxu0 %v6414
    %6416 = vmatprep.subr.mxu0 0.0
    %v6417 = vand.u32 %v6061, 4294901760
    %v6418 = vsub.f32 %v6061, %v6417
    %v6419 = vand.u32 %v6418, 4294901760
    %6420 = vmatpush1.msra.mxu0 %v6419
    %6421 = vmatprep.subr.mxu0 0.0
    %6422 = vmatpush1.msra.mxu0 0.0
    %6423 = vmatprep.subr.mxu0 0.0
    %6424 = vmatpush1.msra.mxu0 0.0
    %6425 = vmatprep.subr.mxu0 0.0
    %6426 = vmatpush1.msra.mxu0 0.0
    %6427 = vmatprep.subr.mxu0 0.0
    %6428 = vmatpush1.msra.mxu0 0.0
    %6429 = vmatprep.subr.mxu0 0.0
    %6430 = vmatpush1.msra.mxu0 0.0
    %6431 = vmatprep.subr.mxu0 0.0
    %6432 = vmatpush1.msra.mxu0 0.0
    %6433 = vmatprep.subr.mxu0 0.0
    %6434 = vmatpush1.msra.mxu0 0.0
    %6435 = vmatprep.subr.mxu0 0.0
    %6436 = vmatpush1.msra.mxu0 0.0
    %6437 = vmatprep.subr.mxu0 0.0
    %6438 = vmatpush1.msra.mxu0 0.0
    %6439 = vmatprep.subr.mxu0 0.0
    %6440 = vmatpush1.msra.mxu0 0.0
    %6441 = vmatprep.subr.mxu0 0.0
    %6442 = vmatpush1.msra.mxu0 0.0
    %6443 = vmatprep.subr.mxu0 0.0
    %6444 = vmatpush1.msra.mxu0 0.0
    %6445 = vmatprep.subr.mxu0 0.0
    %6446 = vmatpush1.msra.mxu0 0.0
    %6447 = vmatprep.subr.mxu0 0.0
    %6448 = vmatpush1.msra.mxu0 0.0
    %6449 = vmatprep.subr.mxu0 0.0
    %6450 = vmatpush1.msra.mxu0 0.0
    %6451 = vmatprep.subr.mxu0 0.0
    %6452 = vmatpush1.msra.mxu0 0.0
    %6453 = vmatprep.subr.mxu0 0.0
    %6454 = vmatpush1.msra.mxu0 0.0
    %6455 = vmatprep.subr.mxu0 0.0
    %6456 = vmatpush1.msra.mxu0 0.0
    %6457 = vmatprep.subr.mxu0 0.0
    %6458 = vmatpush1.msra.mxu0 0.0
    %6459 = vmatprep.subr.mxu0 0.0
    %6460 = vmatpush1.msra.mxu0 0.0
    %6461 = vmatprep.subr.mxu0 0.0
    %6462 = vmatpush1.msra.mxu0 0.0
    %6463 = vmatprep.subr.mxu0 0.0
    %6464 = vmatpush1.msra.mxu0 0.0
    %6465 = vmatprep.subr.mxu0 0.0
    %6466 = vmatpush1.msra.mxu0 0.0
    %6467 = vmatprep.subr.mxu0 0.0
    %6468 = vmatpush1.msra.mxu0 0.0
    %6469 = vmatprep.subr.mxu0 0.0
    %6470 = vmatpush1.msra.mxu0 0.0
    %6471 = vmatprep.subr.mxu0 0.0
    %6472 = vmatpush1.msra.mxu0 0.0
    %6473 = vmatprep.subr.mxu0 0.0
    %6474 = vmatpush1.msra.mxu0 0.0
    %6475 = vmatprep.subr.mxu0 0.0
    %6476 = vmatpush1.msra.mxu0 0.0
    %6477 = vmatprep.mubr.f32.mxu0 0.0
    %v6478 = vand.u32 %v6072, 4294901760
    %6479 = vmatmul.mubr.f32.gmra.mrb[0].mxu0 %v6478
    %v6480 = vpop.f32.mrb[0].mxu0
    %v6481 = vadd.f32 %v6398, %v6480
    %v6482 = vpop.f32.mrb[0].mxu0
    %6483 = vdwg.mxu0
    %6484 = vmatprep.subr.mxu0 0.0
    %v6485 = vand.u32 %v6058, 4294901760
    %6486 = vmatpush1.msra.mxu0 %v6485
    %6487 = vmatprep.subr.mxu0 0.0
    %v6488 = vand.u32 %v6059, 4294901760
    %6489 = vmatpush1.msra.mxu0 %v6488
    %6490 = vmatprep.subr.mxu0 0.0
    %v6491 = vand.u32 %v6060, 4294901760
    %6492 = vmatpush1.msra.mxu0 %v6491
    %6493 = vmatprep.subr.mxu0 0.0
    %v6494 = vand.u32 %v6061, 4294901760
    %6495 = vmatpush1.msra.mxu0 %v6494
    %6496 = vmatprep.subr.mxu0 0.0
    %6497 = vmatpush1.msra.mxu0 0.0
    %6498 = vmatprep.subr.mxu0 0.0
    %6499 = vmatpush1.msra.mxu0 0.0
    %6500 = vmatprep.subr.mxu0 0.0
    %6501 = vmatpush1.msra.mxu0 0.0
    %6502 = vmatprep.subr.mxu0 0.0
    %6503 = vmatpush1.msra.mxu0 0.0
    %6504 = vmatprep.subr.mxu0 0.0
    %6505 = vmatpush1.msra.mxu0 0.0
    %6506 = vmatprep.subr.mxu0 0.0
    %6507 = vmatpush1.msra.mxu0 0.0
    %6508 = vmatprep.subr.mxu0 0.0
    %6509 = vmatpush1.msra.mxu0 0.0
    %6510 = vmatprep.subr.mxu0 0.0
    %6511 = vmatpush1.msra.mxu0 0.0
    %6512 = vmatprep.subr.mxu0 0.0
    %6513 = vmatpush1.msra.mxu0 0.0
    %6514 = vmatprep.subr.mxu0 0.0
    %6515 = vmatpush1.msra.mxu0 0.0
    %6516 = vmatprep.subr.mxu0 0.0
    %6517 = vmatpush1.msra.mxu0 0.0
    %6518 = vmatprep.subr.mxu0 0.0
    %6519 = vmatpush1.msra.mxu0 0.0
    %6520 = vmatprep.subr.mxu0 0.0
    %6521 = vmatpush1.msra.mxu0 0.0
    %6522 = vmatprep.subr.mxu0 0.0
    %6523 = vmatpush1.msra.mxu0 0.0
    %6524 = vmatprep.subr.mxu0 0.0
    %6525 = vmatpush1.msra.mxu0 0.0
    %6526 = vmatprep.subr.mxu0 0.0
    %6527 = vmatpush1.msra.mxu0 0.0
    %6528 = vmatprep.subr.mxu0 0.0
    %6529 = vmatpush1.msra.mxu0 0.0
    %6530 = vmatprep.subr.mxu0 0.0
    %6531 = vmatpush1.msra.mxu0 0.0
    %6532 = vmatprep.subr.mxu0 0.0
    %6533 = vmatpush1.msra.mxu0 0.0
    %6534 = vmatprep.subr.mxu0 0.0
    %6535 = vmatpush1.msra.mxu0 0.0
    %6536 = vmatprep.subr.mxu0 0.0
    %6537 = vmatpush1.msra.mxu0 0.0
    %6538 = vmatprep.subr.mxu0 0.0
    %6539 = vmatpush1.msra.mxu0 0.0
    %6540 = vmatprep.subr.mxu0 0.0
    %6541 = vmatpush1.msra.mxu0 0.0
    %6542 = vmatprep.subr.mxu0 0.0
    %6543 = vmatpush1.msra.mxu0 0.0
    %6544 = vmatprep.subr.mxu0 0.0
    %6545 = vmatpush1.msra.mxu0 0.0
    %6546 = vmatprep.subr.mxu0 0.0
    %6547 = vmatpush1.msra.mxu0 0.0
    %6548 = vmatprep.subr.mxu0 0.0
    %6549 = vmatpush1.msra.mxu0 0.0
    %6550 = vmatprep.subr.mxu0 0.0
    %6551 = vmatpush1.msra.mxu0 0.0
    %6552 = vmatprep.mubr.f32.mxu0 0.0
    %v6553 = vand.u32 %v6072, 4294901760
    %6554 = vmatmul.mubr.f32.gmra.mrb[0].mxu0 %v6553
    %v6555 = vpop.f32.mrb[0].mxu0
    %v6556 = vadd.f32 %v6481, %v6555
    %v6557 = vpop.f32.mrb[0].mxu0
    %6558 = vdwg.mxu0
    %v6559 = vmax.f32 %v6556, 0.0
    %v6560 = vld [vmem:[%s18] sm:$0xff]
    %v6561 = vld [vmem:[%s18 + $0x8] sm:$0xff]
    %v6562 = vld [vmem:[%s18 + $0x10] sm:$0xff]
    %v6563 = vld [vmem:[%s18 + $0x18] sm:$0xff]
    %v6564 = vld [vmem:[%s19] sm:$0x1]
    %v6566 = vlaneseq
    %v6567 = vshrl.u32 %v6566, 7
    %v6568 = vsub.s32 0, %v6567
    %v6569 = vrot.slane %v6564, %v6568
    %v6572 = vsel %vm753, %v6559, 0
    %6574 = vmatprep.subr.mxu0 0.0
    %v6575 = vand.u32 %v6560, 4294901760
    %6576 = vmatpush1.msra.mxu0 %v6575
    %6577 = vmatprep.subr.mxu0 0.0
    %v6578 = vand.u32 %v6561, 4294901760
    %6579 = vmatpush1.msra.mxu0 %v6578
    %6580 = vmatprep.subr.mxu0 0.0
    %v6581 = vand.u32 %v6562, 4294901760
    %6582 = vmatpush1.msra.mxu0 %v6581
    %6583 = vmatprep.subr.mxu0 0.0
    %v6584 = vand.u32 %v6563, 4294901760
    %6585 = vmatpush1.msra.mxu0 %v6584
    %6586 = vmatprep.subr.mxu0 0.0
    %6587 = vmatpush1.msra.mxu0 0.0
    %6588 = vmatprep.subr.mxu0 0.0
    %6589 = vmatpush1.msra.mxu0 0.0
    %6590 = vmatprep.subr.mxu0 0.0
    %6591 = vmatpush1.msra.mxu0 0.0
    %6592 = vmatprep.subr.mxu0 0.0
    %6593 = vmatpush1.msra.mxu0 0.0
    %6594 = vmatprep.subr.mxu0 0.0
    %6595 = vmatpush1.msra.mxu0 0.0
    %6596 = vmatprep.subr.mxu0 0.0
    %6597 = vmatpush1.msra.mxu0 0.0
    %6598 = vmatprep.subr.mxu0 0.0
    %6599 = vmatpush1.msra.mxu0 0.0
    %6600 = vmatprep.subr.mxu0 0.0
    %6601 = vmatpush1.msra.mxu0 0.0
    %6602 = vmatprep.subr.mxu0 0.0
    %6603 = vmatpush1.msra.mxu0 0.0
    %6604 = vmatprep.subr.mxu0 0.0
    %6605 = vmatpush1.msra.mxu0 0.0
    %6606 = vmatprep.subr.mxu0 0.0
    %6607 = vmatpush1.msra.mxu0 0.0
    %6608 = vmatprep.subr.mxu0 0.0
    %6609 = vmatpush1.msra.mxu0 0.0
    %6610 = vmatprep.subr.mxu0 0.0
    %6611 = vmatpush1.msra.mxu0 0.0
    %6612 = vmatprep.subr.mxu0 0.0
    %6613 = vmatpush1.msra.mxu0 0.0
    %6614 = vmatprep.subr.mxu0 0.0
    %6615 = vmatpush1.msra.mxu0 0.0
    %6616 = vmatprep.subr.mxu0 0.0
    %6617 = vmatpush1.msra.mxu0 0.0
    %6618 = vmatprep.subr.mxu0 0.0
    %6619 = vmatpush1.msra.mxu0 0.0
    %6620 = vmatprep.subr.mxu0 0.0
    %6621 = vmatpush1.msra.mxu0 0.0
    %6622 = vmatprep.subr.mxu0 0.0
    %6623 = vmatpush1.msra.mxu0 0.0
    %6624 = vmatprep.subr.mxu0 0.0
    %6625 = vmatpush1.msra.mxu0 0.0
    %6626 = vmatprep.subr.mxu0 0.0
    %6627 = vmatpush1.msra.mxu0 0.0
    %6628 = vmatprep.subr.mxu0 0.0
    %6629 = vmatpush1.msra.mxu0 0.0
    %6630 = vmatprep.subr.mxu0 0.0
    %6631 = vmatpush1.msra.mxu0 0.0
    %6632 = vmatprep.subr.mxu0 0.0
    %6633 = vmatpush1.msra.mxu0 0.0
    %6634 = vmatprep.subr.mxu0 0.0
    %6635 = vmatpush1.msra.mxu0 0.0
    %6636 = vmatprep.subr.mxu0 0.0
    %6637 = vmatpush1.msra.mxu0 0.0
    %6638 = vmatprep.subr.mxu0 0.0
    %6639 = vmatpush1.msra.mxu0 0.0
    %6640 = vmatprep.subr.mxu0 0.0
    %6641 = vmatpush1.msra.mxu0 0.0
    %6642 = vmatprep.mubr.f32.mxu0 0.0
    %v6643 = vand.u32 %v6572, 4294901760
    %v6644 = vsub.f32 %v6572, %v6643
    %v6645 = vand.u32 %v6644, 4294901760
    %v6646 = vsub.f32 %v6644, %v6645
    %v6647 = vand.u32 %v6646, 4294901760
    %6648 = vmatmul.mubr.f32.gmra.mrb[0].mxu0 %v6647
    %v6649 = vpop.f32.mrb[0].mxu0
    %v6650 = vadd.f32 %v6569, %v6649
    %v6651 = vpop.f32.mrb[0].mxu0
    %6652 = vdwg.mxu0
    %6653 = vmatprep.subr.mxu0 0.0
    %v6654 = vand.u32 %v6560, 4294901760
    %v6655 = vsub.f32 %v6560, %v6654
    %v6656 = vand.u32 %v6655, 4294901760
    %v6657 = vsub.f32 %v6655, %v6656
    %v6658 = vand.u32 %v6657, 4294901760
    %6659 = vmatpush1.msra.mxu0 %v6658
    %6660 = vmatprep.subr.mxu0 0.0
    %v6661 = vand.u32 %v6561, 4294901760
    %v6662 = vsub.f32 %v6561, %v6661
    %v6663 = vand.u32 %v6662, 4294901760
    %v6664 = vsub.f32 %v6662, %v6663
    %v6665 = vand.u32 %v6664, 4294901760
    %6666 = vmatpush1.msra.mxu0 %v6665
    %6667 = vmatprep.subr.mxu0 0.0
    %v6668 = vand.u32 %v6562, 4294901760
    %v6669 = vsub.f32 %v6562, %v6668
    %v6670 = vand.u32 %v6669, 4294901760
    %v6671 = vsub.f32 %v6669, %v6670
    %v6672 = vand.u32 %v6671, 4294901760
    %6673 = vmatpush1.msra.mxu0 %v6672
    %6674 = vmatprep.subr.mxu0 0.0
    %v6675 = vand.u32 %v6563, 4294901760
    %v6676 = vsub.f32 %v6563, %v6675
    %v6677 = vand.u32 %v6676, 4294901760
    %v6678 = vsub.f32 %v6676, %v6677
    %v6679 = vand.u32 %v6678, 4294901760
    %6680 = vmatpush1.msra.mxu0 %v6679
    %6681 = vmatprep.subr.mxu0 0.0
    %6682 = vmatpush1.msra.mxu0 0.0
    %6683 = vmatprep.subr.mxu0 0.0
    %6684 = vmatpush1.msra.mxu0 0.0
    %6685 = vmatprep.subr.mxu0 0.0
    %6686 = vmatpush1.msra.mxu0 0.0
    %6687 = vmatprep.subr.mxu0 0.0
    %6688 = vmatpush1.msra.mxu0 0.0
    %6689 = vmatprep.subr.mxu0 0.0
    %6690 = vmatpush1.msra.mxu0 0.0
    %6691 = vmatprep.subr.mxu0 0.0
    %6692 = vmatpush1.msra.mxu0 0.0
    %6693 = vmatprep.subr.mxu0 0.0
    %6694 = vmatpush1.msra.mxu0 0.0
    %6695 = vmatprep.subr.mxu0 0.0
    %6696 = vmatpush1.msra.mxu0 0.0
    %6697 = vmatprep.subr.mxu0 0.0
    %6698 = vmatpush1.msra.mxu0 0.0
    %6699 = vmatprep.subr.mxu0 0.0
    %6700 = vmatpush1.msra.mxu0 0.0
    %6701 = vmatprep.subr.mxu0 0.0
    %6702 = vmatpush1.msra.mxu0 0.0
    %6703 = vmatprep.subr.mxu0 0.0
    %6704 = vmatpush1.msra.mxu0 0.0
    %6705 = vmatprep.subr.mxu0 0.0
    %6706 = vmatpush1.msra.mxu0 0.0
    %6707 = vmatprep.subr.mxu0 0.0
    %6708 = vmatpush1.msra.mxu0 0.0
    %6709 = vmatprep.subr.mxu0 0.0
    %6710 = vmatpush1.msra.mxu0 0.0
    %6711 = vmatprep.subr.mxu0 0.0
    %6712 = vmatpush1.msra.mxu0 0.0
    %6713 = vmatprep.subr.mxu0 0.0
    %6714 = vmatpush1.msra.mxu0 0.0
    %6715 = vmatprep.subr.mxu0 0.0
    %6716 = vmatpush1.msra.mxu0 0.0
    %6717 = vmatprep.subr.mxu0 0.0
    %6718 = vmatpush1.msra.mxu0 0.0
    %6719 = vmatprep.subr.mxu0 0.0
    %6720 = vmatpush1.msra.mxu0 0.0
    %6721 = vmatprep.subr.mxu0 0.0
    %6722 = vmatpush1.msra.mxu0 0.0
    %6723 = vmatprep.subr.mxu0 0.0
    %6724 = vmatpush1.msra.mxu0 0.0
    %6725 = vmatprep.subr.mxu0 0.0
    %6726 = vmatpush1.msra.mxu0 0.0
    %6727 = vmatprep.subr.mxu0 0.0
    %6728 = vmatpush1.msra.mxu0 0.0
    %6729 = vmatprep.subr.mxu0 0.0
    %6730 = vmatpush1.msra.mxu0 0.0
    %6731 = vmatprep.subr.mxu0 0.0
    %6732 = vmatpush1.msra.mxu0 0.0
    %6733 = vmatprep.subr.mxu0 0.0
    %6734 = vmatpush1.msra.mxu0 0.0
    %6735 = vmatprep.subr.mxu0 0.0
    %6736 = vmatpush1.msra.mxu0 0.0
    %6737 = vmatprep.mubr.f32.mxu0 0.0
    %v6738 = vand.u32 %v6572, 4294901760
    %6739 = vmatmul.mubr.f32.gmra.mrb[0].mxu0 %v6738
    %v6740 = vpop.f32.mrb[0].mxu0
    %v6741 = vadd.f32 %v6650, %v6740
    %v6742 = vpop.f32.mrb[0].mxu0
    %6743 = vdwg.mxu0
    %6744 = vmatprep.subr.mxu0 0.0
    %v6745 = vand.u32 %v6560, 4294901760
    %v6746 = vsub.f32 %v6560, %v6745
    %6747 = vmatpush1.msra.mxu0 %v6746
    %6748 = vmatprep.subr.mxu0 0.0
    %v6749 = vand.u32 %v6561, 4294901760
    %v6750 = vsub.f32 %v6561, %v6749
    %6751 = vmatpush1.msra.mxu0 %v6750
    %6752 = vmatprep.subr.mxu0 0.0
    %v6753 = vand.u32 %v6562, 4294901760
    %v6754 = vsub.f32 %v6562, %v6753
    %6755 = vmatpush1.msra.mxu0 %v6754
    %6756 = vmatprep.subr.mxu0 0.0
    %v6757 = vand.u32 %v6563, 4294901760
    %v6758 = vsub.f32 %v6563, %v6757
    %6759 = vmatpush1.msra.mxu0 %v6758
    %6760 = vmatprep.subr.mxu0 0.0
    %6761 = vmatpush1.msra.mxu0 0.0
    %6762 = vmatprep.subr.mxu0 0.0
    %6763 = vmatpush1.msra.mxu0 0.0
    %6764 = vmatprep.subr.mxu0 0.0
    %6765 = vmatpush1.msra.mxu0 0.0
    %6766 = vmatprep.subr.mxu0 0.0
    %6767 = vmatpush1.msra.mxu0 0.0
    %6768 = vmatprep.subr.mxu0 0.0
    %6769 = vmatpush1.msra.mxu0 0.0
    %6770 = vmatprep.subr.mxu0 0.0
    %6771 = vmatpush1.msra.mxu0 0.0
    %6772 = vmatprep.subr.mxu0 0.0
    %6773 = vmatpush1.msra.mxu0 0.0
    %6774 = vmatprep.subr.mxu0 0.0
    %6775 = vmatpush1.msra.mxu0 0.0
    %6776 = vmatprep.subr.mxu0 0.0
    %6777 = vmatpush1.msra.mxu0 0.0
    %6778 = vmatprep.subr.mxu0 0.0
    %6779 = vmatpush1.msra.mxu0 0.0
    %6780 = vmatprep.subr.mxu0 0.0
    %6781 = vmatpush1.msra.mxu0 0.0
    %6782 = vmatprep.subr.mxu0 0.0
    %6783 = vmatpush1.msra.mxu0 0.0
    %6784 = vmatprep.subr.mxu0 0.0
    %6785 = vmatpush1.msra.mxu0 0.0
    %6786 = vmatprep.subr.mxu0 0.0
    %6787 = vmatpush1.msra.mxu0 0.0
    %6788 = vmatprep.subr.mxu0 0.0
    %6789 = vmatpush1.msra.mxu0 0.0
    %6790 = vmatprep.subr.mxu0 0.0
    %6791 = vmatpush1.msra.mxu0 0.0
    %6792 = vmatprep.subr.mxu0 0.0
    %6793 = vmatpush1.msra.mxu0 0.0
    %6794 = vmatprep.subr.mxu0 0.0
    %6795 = vmatpush1.msra.mxu0 0.0
    %6796 = vmatprep.subr.mxu0 0.0
    %6797 = vmatpush1.msra.mxu0 0.0
    %6798 = vmatprep.subr.mxu0 0.0
    %6799 = vmatpush1.msra.mxu0 0.0
    %6800 = vmatprep.subr.mxu0 0.0
    %6801 = vmatpush1.msra.mxu0 0.0
    %6802 = vmatprep.subr.mxu0 0.0
    %6803 = vmatpush1.msra.mxu0 0.0
    %6804 = vmatprep.subr.mxu0 0.0
    %6805 = vmatpush1.msra.mxu0 0.0
    %6806 = vmatprep.subr.mxu0 0.0
    %6807 = vmatpush1.msra.mxu0 0.0
    %6808 = vmatprep.subr.mxu0 0.0
    %6809 = vmatpush1.msra.mxu0 0.0
    %6810 = vmatprep.subr.mxu0 0.0
    %6811 = vmatpush1.msra.mxu0 0.0
    %6812 = vmatprep.subr.mxu0 0.0
    %6813 = vmatpush1.msra.mxu0 0.0
    %6814 = vmatprep.subr.mxu0 0.0
    %6815 = vmatpush1.msra.mxu0 0.0
    %6816 = vmatprep.mubr.f32.mxu0 0.0
    %v6817 = vand.u32 %v6572, 4294901760
    %v6818 = vsub.f32 %v6572, %v6817
    %6819 = vmatmul.mubr.f32.gmra.mrb[0].mxu0 %v6818
    %v6820 = vpop.f32.mrb[0].mxu0
    %v6821 = vadd.f32 %v6741, %v6820
    %v6822 = vpop.f32.mrb[0].mxu0
    %6823 = vdwg.mxu0
    %6824 = vmatprep.subr.mxu0 0.0
    %v6825 = vand.u32 %v6560, 4294901760
    %6826 = vmatpush1.msra.mxu0 %v6825
    %6827 = vmatprep.subr.mxu0 0.0
    %v6828 = vand.u32 %v6561, 4294901760
    %6829 = vmatpush1.msra.mxu0 %v6828
    %6830 = vmatprep.subr.mxu0 0.0
    %v6831 = vand.u32 %v6562, 4294901760
    %6832 = vmatpush1.msra.mxu0 %v6831
    %6833 = vmatprep.subr.mxu0 0.0
    %v6834 = vand.u32 %v6563, 4294901760
    %6835 = vmatpush1.msra.mxu0 %v6834
    %6836 = vmatprep.subr.mxu0 0.0
    %6837 = vmatpush1.msra.mxu0 0.0
    %6838 = vmatprep.subr.mxu0 0.0
    %6839 = vmatpush1.msra.mxu0 0.0
    %6840 = vmatprep.subr.mxu0 0.0
    %6841 = vmatpush1.msra.mxu0 0.0
    %6842 = vmatprep.subr.mxu0 0.0
    %6843 = vmatpush1.msra.mxu0 0.0
    %6844 = vmatprep.subr.mxu0 0.0
    %6845 = vmatpush1.msra.mxu0 0.0
    %6846 = vmatprep.subr.mxu0 0.0
    %6847 = vmatpush1.msra.mxu0 0.0
    %6848 = vmatprep.subr.mxu0 0.0
    %6849 = vmatpush1.msra.mxu0 0.0
    %6850 = vmatprep.subr.mxu0 0.0
    %6851 = vmatpush1.msra.mxu0 0.0
    %6852 = vmatprep.subr.mxu0 0.0
    %6853 = vmatpush1.msra.mxu0 0.0
    %6854 = vmatprep.subr.mxu0 0.0
    %6855 = vmatpush1.msra.mxu0 0.0
    %6856 = vmatprep.subr.mxu0 0.0
    %6857 = vmatpush1.msra.mxu0 0.0
    %6858 = vmatprep.subr.mxu0 0.0
    %6859 = vmatpush1.msra.mxu0 0.0
    %6860 = vmatprep.subr.mxu0 0.0
    %6861 = vmatpush1.msra.mxu0 0.0
    %6862 = vmatprep.subr.mxu0 0.0
    %6863 = vmatpush1.msra.mxu0 0.0
    %6864 = vmatprep.subr.mxu0 0.0
    %6865 = vmatpush1.msra.mxu0 0.0
    %6866 = vmatprep.subr.mxu0 0.0
    %6867 = vmatpush1.msra.mxu0 0.0
    %6868 = vmatprep.subr.mxu0 0.0
    %6869 = vmatpush1.msra.mxu0 0.0
    %6870 = vmatprep.subr.mxu0 0.0
    %6871 = vmatpush1.msra.mxu0 0.0
    %6872 = vmatprep.subr.mxu0 0.0
    %6873 = vmatpush1.msra.mxu0 0.0
    %6874 = vmatprep.subr.mxu0 0.0
    %6875 = vmatpush1.msra.mxu0 0.0
    %6876 = vmatprep.subr.mxu0 0.0
    %6877 = vmatpush1.msra.mxu0 0.0
    %6878 = vmatprep.subr.mxu0 0.0
    %6879 = vmatpush1.msra.mxu0 0.0
    %6880 = vmatprep.subr.mxu0 0.0
    %6881 = vmatpush1.msra.mxu0 0.0
    %6882 = vmatprep.subr.mxu0 0.0
    %6883 = vmatpush1.msra.mxu0 0.0
    %6884 = vmatprep.subr.mxu0 0.0
    %6885 = vmatpush1.msra.mxu0 0.0
    %6886 = vmatprep.subr.mxu0 0.0
    %6887 = vmatpush1.msra.mxu0 0.0
    %6888 = vmatprep.subr.mxu0 0.0
    %6889 = vmatpush1.msra.mxu0 0.0
    %6890 = vmatprep.subr.mxu0 0.0
    %6891 = vmatpush1.msra.mxu0 0.0
    %6892 = vmatprep.mubr.f32.mxu0 0.0
    %v6893 = vand.u32 %v6572, 4294901760
    %v6894 = vsub.f32 %v6572, %v6893
    %v6895 = vand.u32 %v6894, 4294901760
    %6896 = vmatmul.mubr.f32.gmra.mrb[0].mxu0 %v6895
    %v6897 = vpop.f32.mrb[0].mxu0
    %v6898 = vadd.f32 %v6821, %v6897
    %v6899 = vpop.f32.mrb[0].mxu0
    %6900 = vdwg.mxu0
    %6901 = vmatprep.subr.mxu0 0.0
    %v6902 = vand.u32 %v6560, 4294901760
    %v6903 = vsub.f32 %v6560, %v6902
    %v6904 = vand.u32 %v6903, 4294901760
    %6905 = vmatpush1.msra.mxu0 %v6904
    %6906 = vmatprep.subr.mxu0 0.0
    %v6907 = vand.u32 %v6561, 4294901760
    %v6908 = vsub.f32 %v6561, %v6907
    %v6909 = vand.u32 %v6908, 4294901760
    %6910 = vmatpush1.msra.mxu0 %v6909
    %6911 = vmatprep.subr.mxu0 0.0
    %v6912 = vand.u32 %v6562, 4294901760
    %v6913 = vsub.f32 %v6562, %v6912
    %v6914 = vand.u32 %v6913, 4294901760
    %6915 = vmatpush1.msra.mxu0 %v6914
    %6916 = vmatprep.subr.mxu0 0.0
    %v6917 = vand.u32 %v6563, 4294901760
    %v6918 = vsub.f32 %v6563, %v6917
    %v6919 = vand.u32 %v6918, 4294901760
    %6920 = vmatpush1.msra.mxu0 %v6919
    %6921 = vmatprep.subr.mxu0 0.0
    %6922 = vmatpush1.msra.mxu0 0.0
    %6923 = vmatprep.subr.mxu0 0.0
    %6924 = vmatpush1.msra.mxu0 0.0
    %6925 = vmatprep.subr.mxu0 0.0
    %6926 = vmatpush1.msra.mxu0 0.0
    %6927 = vmatprep.subr.mxu0 0.0
    %6928 = vmatpush1.msra.mxu0 0.0
    %6929 = vmatprep.subr.mxu0 0.0
    %6930 = vmatpush1.msra.mxu0 0.0
    %6931 = vmatprep.subr.mxu0 0.0
    %6932 = vmatpush1.msra.mxu0 0.0
    %6933 = vmatprep.subr.mxu0 0.0
    %6934 = vmatpush1.msra.mxu0 0.0
    %6935 = vmatprep.subr.mxu0 0.0
    %6936 = vmatpush1.msra.mxu0 0.0
    %6937 = vmatprep.subr.mxu0 0.0
    %6938 = vmatpush1.msra.mxu0 0.0
    %6939 = vmatprep.subr.mxu0 0.0
    %6940 = vmatpush1.msra.mxu0 0.0
    %6941 = vmatprep.subr.mxu0 0.0
    %6942 = vmatpush1.msra.mxu0 0.0
    %6943 = vmatprep.subr.mxu0 0.0
    %6944 = vmatpush1.msra.mxu0 0.0
    %6945 = vmatprep.subr.mxu0 0.0
    %6946 = vmatpush1.msra.mxu0 0.0
    %6947 = vmatprep.subr.mxu0 0.0
    %6948 = vmatpush1.msra.mxu0 0.0
    %6949 = vmatprep.subr.mxu0 0.0
    %6950 = vmatpush1.msra.mxu0 0.0
    %6951 = vmatprep.subr.mxu0 0.0
    %6952 = vmatpush1.msra.mxu0 0.0
    %6953 = vmatprep.subr.mxu0 0.0
    %6954 = vmatpush1.msra.mxu0 0.0
    %6955 = vmatprep.subr.mxu0 0.0
    %6956 = vmatpush1.msra.mxu0 0.0
    %6957 = vmatprep.subr.mxu0 0.0
    %6958 = vmatpush1.msra.mxu0 0.0
    %6959 = vmatprep.subr.mxu0 0.0
    %6960 = vmatpush1.msra.mxu0 0.0
    %6961 = vmatprep.subr.mxu0 0.0
    %6962 = vmatpush1.msra.mxu0 0.0
    %6963 = vmatprep.subr.mxu0 0.0
    %6964 = vmatpush1.msra.mxu0 0.0
    %6965 = vmatprep.subr.mxu0 0.0
    %6966 = vmatpush1.msra.mxu0 0.0
    %6967 = vmatprep.subr.mxu0 0.0
    %6968 = vmatpush1.msra.mxu0 0.0
    %6969 = vmatprep.subr.mxu0 0.0
    %6970 = vmatpush1.msra.mxu0 0.0
    %6971 = vmatprep.subr.mxu0 0.0
    %6972 = vmatpush1.msra.mxu0 0.0
    %6973 = vmatprep.subr.mxu0 0.0
    %6974 = vmatpush1.msra.mxu0 0.0
    %6975 = vmatprep.subr.mxu0 0.0
    %6976 = vmatpush1.msra.mxu0 0.0
    %6977 = vmatprep.mubr.f32.mxu0 0.0
    %v6978 = vand.u32 %v6572, 4294901760
    %6979 = vmatmul.mubr.f32.gmra.mrb[0].mxu0 %v6978
    %v6980 = vpop.f32.mrb[0].mxu0
    %v6981 = vadd.f32 %v6898, %v6980
    %v6982 = vpop.f32.mrb[0].mxu0
    %6983 = vdwg.mxu0
    %6984 = vmatprep.subr.mxu0 0.0
    %v6985 = vand.u32 %v6560, 4294901760
    %6986 = vmatpush1.msra.mxu0 %v6985
    %6987 = vmatprep.subr.mxu0 0.0
    %v6988 = vand.u32 %v6561, 4294901760
    %6989 = vmatpush1.msra.mxu0 %v6988
    %6990 = vmatprep.subr.mxu0 0.0
    %v6991 = vand.u32 %v6562, 4294901760
    %6992 = vmatpush1.msra.mxu0 %v6991
    %6993 = vmatprep.subr.mxu0 0.0
    %v6994 = vand.u32 %v6563, 4294901760
    %6995 = vmatpush1.msra.mxu0 %v6994
    %6996 = vmatprep.subr.mxu0 0.0
    %6997 = vmatpush1.msra.mxu0 0.0
    %6998 = vmatprep.subr.mxu0 0.0
    %6999 = vmatpush1.msra.mxu0 0.0
    %7000 = vmatprep.subr.mxu0 0.0
    %7001 = vmatpush1.msra.mxu0 0.0
    %7002 = vmatprep.subr.mxu0 0.0
    %7003 = vmatpush1.msra.mxu0 0.0
    %7004 = vmatprep.subr.mxu0 0.0
    %7005 = vmatpush1.msra.mxu0 0.0
    %7006 = vmatprep.subr.mxu0 0.0
    %7007 = vmatpush1.msra.mxu0 0.0
    %7008 = vmatprep.subr.mxu0 0.0
    %7009 = vmatpush1.msra.mxu0 0.0
    %7010 = vmatprep.subr.mxu0 0.0
    %7011 = vmatpush1.msra.mxu0 0.0
    %7012 = vmatprep.subr.mxu0 0.0
    %7013 = vmatpush1.msra.mxu0 0.0
    %7014 = vmatprep.subr.mxu0 0.0
    %7015 = vmatpush1.msra.mxu0 0.0
    %7016 = vmatprep.subr.mxu0 0.0
    %7017 = vmatpush1.msra.mxu0 0.0
    %7018 = vmatprep.subr.mxu0 0.0
    %7019 = vmatpush1.msra.mxu0 0.0
    %7020 = vmatprep.subr.mxu0 0.0
    %7021 = vmatpush1.msra.mxu0 0.0
    %7022 = vmatprep.subr.mxu0 0.0
    %7023 = vmatpush1.msra.mxu0 0.0
    %7024 = vmatprep.subr.mxu0 0.0
    %7025 = vmatpush1.msra.mxu0 0.0
    %7026 = vmatprep.subr.mxu0 0.0
    %7027 = vmatpush1.msra.mxu0 0.0
    %7028 = vmatprep.subr.mxu0 0.0
    %7029 = vmatpush1.msra.mxu0 0.0
    %7030 = vmatprep.subr.mxu0 0.0
    %7031 = vmatpush1.msra.mxu0 0.0
    %7032 = vmatprep.subr.mxu0 0.0
    %7033 = vmatpush1.msra.mxu0 0.0
    %7034 = vmatprep.subr.mxu0 0.0
    %7035 = vmatpush1.msra.mxu0 0.0
    %7036 = vmatprep.subr.mxu0 0.0
    %7037 = vmatpush1.msra.mxu0 0.0
    %7038 = vmatprep.subr.mxu0 0.0
    %7039 = vmatpush1.msra.mxu0 0.0
    %7040 = vmatprep.subr.mxu0 0.0
    %7041 = vmatpush1.msra.mxu0 0.0
    %7042 = vmatprep.subr.mxu0 0.0
    %7043 = vmatpush1.msra.mxu0 0.0
    %7044 = vmatprep.subr.mxu0 0.0
    %7045 = vmatpush1.msra.mxu0 0.0
    %7046 = vmatprep.subr.mxu0 0.0
    %7047 = vmatpush1.msra.mxu0 0.0
    %7048 = vmatprep.subr.mxu0 0.0
    %7049 = vmatpush1.msra.mxu0 0.0
    %7050 = vmatprep.subr.mxu0 0.0
    %7051 = vmatpush1.msra.mxu0 0.0
    %7052 = vmatprep.mubr.f32.mxu0 0.0
    %v7053 = vand.u32 %v6572, 4294901760
    %7054 = vmatmul.mubr.f32.gmra.mrb[0].mxu0 %v7053
    %v7055 = vpop.f32.mrb[0].mxu0
    %v7056 = vadd.f32 %v6981, %v7055
    %v7057 = vpop.f32.mrb[0].mxu0
    %7058 = vdwg.mxu0
    %v7059 = vmax.f32 %v7056, 0.0
    %v7060 = vld [vmem:[%s20] sm:$0xff]
    %v7061 = vld [vmem:[%s20 + $0x8] sm:$0xff]
    %v7062 = vld [vmem:[%s20 + $0x10] sm:$0xff]
    %v7063 = vld [vmem:[%s20 + $0x18] sm:$0xff]
    %v7064 = vld [vmem:[%s21] sm:$0x1]
    %v7066 = vlaneseq
    %v7067 = vshrl.u32 %v7066, 7
    %v7068 = vsub.s32 0, %v7067
    %v7069 = vrot.slane %v7064, %v7068
    %v7072 = vsel %vm753, %v7059, 0
    %7074 = vmatprep.subr.mxu0 0.0
    %v7075 = vand.u32 %v7060, 4294901760
    %7076 = vmatpush1.msra.mxu0 %v7075
    %7077 = vmatprep.subr.mxu0 0.0
    %v7078 = vand.u32 %v7061, 4294901760
    %7079 = vmatpush1.msra.mxu0 %v7078
    %7080 = vmatprep.subr.mxu0 0.0
    %v7081 = vand.u32 %v7062, 4294901760
    %7082 = vmatpush1.msra.mxu0 %v7081
    %7083 = vmatprep.subr.mxu0 0.0
    %v7084 = vand.u32 %v7063, 4294901760
    %7085 = vmatpush1.msra.mxu0 %v7084
    %7086 = vmatprep.subr.mxu0 0.0
    %7087 = vmatpush1.msra.mxu0 0.0
    %7088 = vmatprep.subr.mxu0 0.0
    %7089 = vmatpush1.msra.mxu0 0.0
    %7090 = vmatprep.subr.mxu0 0.0
    %7091 = vmatpush1.msra.mxu0 0.0
    %7092 = vmatprep.subr.mxu0 0.0
    %7093 = vmatpush1.msra.mxu0 0.0
    %7094 = vmatprep.subr.mxu0 0.0
    %7095 = vmatpush1.msra.mxu0 0.0
    %7096 = vmatprep.subr.mxu0 0.0
    %7097 = vmatpush1.msra.mxu0 0.0
    %7098 = vmatprep.subr.mxu0 0.0
    %7099 = vmatpush1.msra.mxu0 0.0
    %7100 = vmatprep.subr.mxu0 0.0
    %7101 = vmatpush1.msra.mxu0 0.0
    %7102 = vmatprep.subr.mxu0 0.0
    %7103 = vmatpush1.msra.mxu0 0.0
    %7104 = vmatprep.subr.mxu0 0.0
    %7105 = vmatpush1.msra.mxu0 0.0
    %7106 = vmatprep.subr.mxu0 0.0
    %7107 = vmatpush1.msra.mxu0 0.0
    %7108 = vmatprep.subr.mxu0 0.0
    %7109 = vmatpush1.msra.mxu0 0.0
    %7110 = vmatprep.subr.mxu0 0.0
    %7111 = vmatpush1.msra.mxu0 0.0
    %7112 = vmatprep.subr.mxu0 0.0
    %7113 = vmatpush1.msra.mxu0 0.0
    %7114 = vmatprep.subr.mxu0 0.0
    %7115 = vmatpush1.msra.mxu0 0.0
    %7116 = vmatprep.subr.mxu0 0.0
    %7117 = vmatpush1.msra.mxu0 0.0
    %7118 = vmatprep.subr.mxu0 0.0
    %7119 = vmatpush1.msra.mxu0 0.0
    %7120 = vmatprep.subr.mxu0 0.0
    %7121 = vmatpush1.msra.mxu0 0.0
    %7122 = vmatprep.subr.mxu0 0.0
    %7123 = vmatpush1.msra.mxu0 0.0
    %7124 = vmatprep.subr.mxu0 0.0
    %7125 = vmatpush1.msra.mxu0 0.0
    %7126 = vmatprep.subr.mxu0 0.0
    %7127 = vmatpush1.msra.mxu0 0.0
    %7128 = vmatprep.subr.mxu0 0.0
    %7129 = vmatpush1.msra.mxu0 0.0
    %7130 = vmatprep.subr.mxu0 0.0
    %7131 = vmatpush1.msra.mxu0 0.0
    %7132 = vmatprep.subr.mxu0 0.0
    %7133 = vmatpush1.msra.mxu0 0.0
    %7134 = vmatprep.subr.mxu0 0.0
    %7135 = vmatpush1.msra.mxu0 0.0
    %7136 = vmatprep.subr.mxu0 0.0
    %7137 = vmatpush1.msra.mxu0 0.0
    %7138 = vmatprep.subr.mxu0 0.0
    %7139 = vmatpush1.msra.mxu0 0.0
    %7140 = vmatprep.subr.mxu0 0.0
    %7141 = vmatpush1.msra.mxu0 0.0
    %7142 = vmatprep.mubr.f32.mxu0 0.0
    %v7143 = vand.u32 %v7072, 4294901760
    %v7144 = vsub.f32 %v7072, %v7143
    %v7145 = vand.u32 %v7144, 4294901760
    %v7146 = vsub.f32 %v7144, %v7145
    %v7147 = vand.u32 %v7146, 4294901760
    %7148 = vmatmul.mubr.f32.gmra.mrb[0].mxu0 %v7147
    %v7149 = vpop.f32.mrb[0].mxu0
    %v7150 = vadd.f32 %v7069, %v7149
    %v7151 = vpop.f32.mrb[0].mxu0
    %7152 = vdwg.mxu0
    %7153 = vmatprep.subr.mxu0 0.0
    %v7154 = vand.u32 %v7060, 4294901760
    %v7155 = vsub.f32 %v7060, %v7154
    %v7156 = vand.u32 %v7155, 4294901760
    %v7157 = vsub.f32 %v7155, %v7156
    %v7158 = vand.u32 %v7157, 4294901760
    %7159 = vmatpush1.msra.mxu0 %v7158
    %7160 = vmatprep.subr.mxu0 0.0
    %v7161 = vand.u32 %v7061, 4294901760
    %v7162 = vsub.f32 %v7061, %v7161
    %v7163 = vand.u32 %v7162, 4294901760
    %v7164 = vsub.f32 %v7162, %v7163
    %v7165 = vand.u32 %v7164, 4294901760
    %7166 = vmatpush1.msra.mxu0 %v7165
    %7167 = vmatprep.subr.mxu0 0.0
    %v7168 = vand.u32 %v7062, 4294901760
    %v7169 = vsub.f32 %v7062, %v7168
    %v7170 = vand.u32 %v7169, 4294901760
    %v7171 = vsub.f32 %v7169, %v7170
    %v7172 = vand.u32 %v7171, 4294901760
    %7173 = vmatpush1.msra.mxu0 %v7172
    %7174 = vmatprep.subr.mxu0 0.0
    %v7175 = vand.u32 %v7063, 4294901760
    %v7176 = vsub.f32 %v7063, %v7175
    %v7177 = vand.u32 %v7176, 4294901760
    %v7178 = vsub.f32 %v7176, %v7177
    %v7179 = vand.u32 %v7178, 4294901760
    %7180 = vmatpush1.msra.mxu0 %v7179
    %7181 = vmatprep.subr.mxu0 0.0
    %7182 = vmatpush1.msra.mxu0 0.0
    %7183 = vmatprep.subr.mxu0 0.0
    %7184 = vmatpush1.msra.mxu0 0.0
    %7185 = vmatprep.subr.mxu0 0.0
    %7186 = vmatpush1.msra.mxu0 0.0
    %7187 = vmatprep.subr.mxu0 0.0
    %7188 = vmatpush1.msra.mxu0 0.0
    %7189 = vmatprep.subr.mxu0 0.0
    %7190 = vmatpush1.msra.mxu0 0.0
    %7191 = vmatprep.subr.mxu0 0.0
    %7192 = vmatpush1.msra.mxu0 0.0
    %7193 = vmatprep.subr.mxu0 0.0
    %7194 = vmatpush1.msra.mxu0 0.0
    %7195 = vmatprep.subr.mxu0 0.0
    %7196 = vmatpush1.msra.mxu0 0.0
    %7197 = vmatprep.subr.mxu0 0.0
    %7198 = vmatpush1.msra.mxu0 0.0
    %7199 = vmatprep.subr.mxu0 0.0
    %7200 = vmatpush1.msra.mxu0 0.0
    %7201 = vmatprep.subr.mxu0 0.0
    %7202 = vmatpush1.msra.mxu0 0.0
    %7203 = vmatprep.subr.mxu0 0.0
    %7204 = vmatpush1.msra.mxu0 0.0
    %7205 = vmatprep.subr.mxu0 0.0
    %7206 = vmatpush1.msra.mxu0 0.0
    %7207 = vmatprep.subr.mxu0 0.0
    %7208 = vmatpush1.msra.mxu0 0.0
    %7209 = vmatprep.subr.mxu0 0.0
    %7210 = vmatpush1.msra.mxu0 0.0
    %7211 = vmatprep.subr.mxu0 0.0
    %7212 = vmatpush1.msra.mxu0 0.0
    %7213 = vmatprep.subr.mxu0 0.0
    %7214 = vmatpush1.msra.mxu0 0.0
    %7215 = vmatprep.subr.mxu0 0.0
    %7216 = vmatpush1.msra.mxu0 0.0
    %7217 = vmatprep.subr.mxu0 0.0
    %7218 = vmatpush1.msra.mxu0 0.0
    %7219 = vmatprep.subr.mxu0 0.0
    %7220 = vmatpush1.msra.mxu0 0.0
    %7221 = vmatprep.subr.mxu0 0.0
    %7222 = vmatpush1.msra.mxu0 0.0
    %7223 = vmatprep.subr.mxu0 0.0
    %7224 = vmatpush1.msra.mxu0 0.0
    %7225 = vmatprep.subr.mxu0 0.0
    %7226 = vmatpush1.msra.mxu0 0.0
    %7227 = vmatprep.subr.mxu0 0.0
    %7228 = vmatpush1.msra.mxu0 0.0
    %7229 = vmatprep.subr.mxu0 0.0
    %7230 = vmatpush1.msra.mxu0 0.0
    %7231 = vmatprep.subr.mxu0 0.0
    %7232 = vmatpush1.msra.mxu0 0.0
    %7233 = vmatprep.subr.mxu0 0.0
    %7234 = vmatpush1.msra.mxu0 0.0
    %7235 = vmatprep.subr.mxu0 0.0
    %7236 = vmatpush1.msra.mxu0 0.0
    %7237 = vmatprep.mubr.f32.mxu0 0.0
    %v7238 = vand.u32 %v7072, 4294901760
    %7239 = vmatmul.mubr.f32.gmra.mrb[0].mxu0 %v7238
    %v7240 = vpop.f32.mrb[0].mxu0
    %v7241 = vadd.f32 %v7150, %v7240
    %v7242 = vpop.f32.mrb[0].mxu0
    %7243 = vdwg.mxu0
    %7244 = vmatprep.subr.mxu0 0.0
    %v7245 = vand.u32 %v7060, 4294901760
    %v7246 = vsub.f32 %v7060, %v7245
    %7247 = vmatpush1.msra.mxu0 %v7246
    %7248 = vmatprep.subr.mxu0 0.0
    %v7249 = vand.u32 %v7061, 4294901760
    %v7250 = vsub.f32 %v7061, %v7249
    %7251 = vmatpush1.msra.mxu0 %v7250
    %7252 = vmatprep.subr.mxu0 0.0
    %v7253 = vand.u32 %v7062, 4294901760
    %v7254 = vsub.f32 %v7062, %v7253
    %7255 = vmatpush1.msra.mxu0 %v7254
    %7256 = vmatprep.subr.mxu0 0.0
    %v7257 = vand.u32 %v7063, 4294901760
    %v7258 = vsub.f32 %v7063, %v7257
    %7259 = vmatpush1.msra.mxu0 %v7258
    %7260 = vmatprep.subr.mxu0 0.0
    %7261 = vmatpush1.msra.mxu0 0.0
    %7262 = vmatprep.subr.mxu0 0.0
    %7263 = vmatpush1.msra.mxu0 0.0
    %7264 = vmatprep.subr.mxu0 0.0
    %7265 = vmatpush1.msra.mxu0 0.0
    %7266 = vmatprep.subr.mxu0 0.0
    %7267 = vmatpush1.msra.mxu0 0.0
    %7268 = vmatprep.subr.mxu0 0.0
    %7269 = vmatpush1.msra.mxu0 0.0
    %7270 = vmatprep.subr.mxu0 0.0
    %7271 = vmatpush1.msra.mxu0 0.0
    %7272 = vmatprep.subr.mxu0 0.0
    %7273 = vmatpush1.msra.mxu0 0.0
    %7274 = vmatprep.subr.mxu0 0.0
    %7275 = vmatpush1.msra.mxu0 0.0
    %7276 = vmatprep.subr.mxu0 0.0
    %7277 = vmatpush1.msra.mxu0 0.0
    %7278 = vmatprep.subr.mxu0 0.0
    %7279 = vmatpush1.msra.mxu0 0.0
    %7280 = vmatprep.subr.mxu0 0.0
    %7281 = vmatpush1.msra.mxu0 0.0
    %7282 = vmatprep.subr.mxu0 0.0
    %7283 = vmatpush1.msra.mxu0 0.0
    %7284 = vmatprep.subr.mxu0 0.0
    %7285 = vmatpush1.msra.mxu0 0.0
    %7286 = vmatprep.subr.mxu0 0.0
    %7287 = vmatpush1.msra.mxu0 0.0
    %7288 = vmatprep.subr.mxu0 0.0
    %7289 = vmatpush1.msra.mxu0 0.0
    %7290 = vmatprep.subr.mxu0 0.0
    %7291 = vmatpush1.msra.mxu0 0.0
    %7292 = vmatprep.subr.mxu0 0.0
    %7293 = vmatpush1.msra.mxu0 0.0
    %7294 = vmatprep.subr.mxu0 0.0
    %7295 = vmatpush1.msra.mxu0 0.0
    %7296 = vmatprep.subr.mxu0 0.0
    %7297 = vmatpush1.msra.mxu0 0.0
    %7298 = vmatprep.subr.mxu0 0.0
    %7299 = vmatpush1.msra.mxu0 0.0
    %7300 = vmatprep.subr.mxu0 0.0
    %7301 = vmatpush1.msra.mxu0 0.0
    %7302 = vmatprep.subr.mxu0 0.0
    %7303 = vmatpush1.msra.mxu0 0.0
    %7304 = vmatprep.subr.mxu0 0.0
    %7305 = vmatpush1.msra.mxu0 0.0
    %7306 = vmatprep.subr.mxu0 0.0
    %7307 = vmatpush1.msra.mxu0 0.0
    %7308 = vmatprep.subr.mxu0 0.0
    %7309 = vmatpush1.msra.mxu0 0.0
    %7310 = vmatprep.subr.mxu0 0.0
    %7311 = vmatpush1.msra.mxu0 0.0
    %7312 = vmatprep.subr.mxu0 0.0
    %7313 = vmatpush1.msra.mxu0 0.0
    %7314 = vmatprep.subr.mxu0 0.0
    %7315 = vmatpush1.msra.mxu0 0.0
    %7316 = vmatprep.mubr.f32.mxu0 0.0
    %v7317 = vand.u32 %v7072, 4294901760
    %v7318 = vsub.f32 %v7072, %v7317
    %7319 = vmatmul.mubr.f32.gmra.mrb[0].mxu0 %v7318
    %v7320 = vpop.f32.mrb[0].mxu0
    %v7321 = vadd.f32 %v7241, %v7320
    %v7322 = vpop.f32.mrb[0].mxu0
    %7323 = vdwg.mxu0
    %7324 = vmatprep.subr.mxu0 0.0
    %v7325 = vand.u32 %v7060, 4294901760
    %7326 = vmatpush1.msra.mxu0 %v7325
    %7327 = vmatprep.subr.mxu0 0.0
    %v7328 = vand.u32 %v7061, 4294901760
    %7329 = vmatpush1.msra.mxu0 %v7328
    %7330 = vmatprep.subr.mxu0 0.0
    %v7331 = vand.u32 %v7062, 4294901760
    %7332 = vmatpush1.msra.mxu0 %v7331
    %7333 = vmatprep.subr.mxu0 0.0
    %v7334 = vand.u32 %v7063, 4294901760
    %7335 = vmatpush1.msra.mxu0 %v7334
    %7336 = vmatprep.subr.mxu0 0.0
    %7337 = vmatpush1.msra.mxu0 0.0
    %7338 = vmatprep.subr.mxu0 0.0
    %7339 = vmatpush1.msra.mxu0 0.0
    %7340 = vmatprep.subr.mxu0 0.0
    %7341 = vmatpush1.msra.mxu0 0.0
    %7342 = vmatprep.subr.mxu0 0.0
    %7343 = vmatpush1.msra.mxu0 0.0
    %7344 = vmatprep.subr.mxu0 0.0
    %7345 = vmatpush1.msra.mxu0 0.0
    %7346 = vmatprep.subr.mxu0 0.0
    %7347 = vmatpush1.msra.mxu0 0.0
    %7348 = vmatprep.subr.mxu0 0.0
    %7349 = vmatpush1.msra.mxu0 0.0
    %7350 = vmatprep.subr.mxu0 0.0
    %7351 = vmatpush1.msra.mxu0 0.0
    %7352 = vmatprep.subr.mxu0 0.0
    %7353 = vmatpush1.msra.mxu0 0.0
    %7354 = vmatprep.subr.mxu0 0.0
    %7355 = vmatpush1.msra.mxu0 0.0
    %7356 = vmatprep.subr.mxu0 0.0
    %7357 = vmatpush1.msra.mxu0 0.0
    %7358 = vmatprep.subr.mxu0 0.0
    %7359 = vmatpush1.msra.mxu0 0.0
    %7360 = vmatprep.subr.mxu0 0.0
    %7361 = vmatpush1.msra.mxu0 0.0
    %7362 = vmatprep.subr.mxu0 0.0
    %7363 = vmatpush1.msra.mxu0 0.0
    %7364 = vmatprep.subr.mxu0 0.0
    %7365 = vmatpush1.msra.mxu0 0.0
    %7366 = vmatprep.subr.mxu0 0.0
    %7367 = vmatpush1.msra.mxu0 0.0
    %7368 = vmatprep.subr.mxu0 0.0
    %7369 = vmatpush1.msra.mxu0 0.0
    %7370 = vmatprep.subr.mxu0 0.0
    %7371 = vmatpush1.msra.mxu0 0.0
    %7372 = vmatprep.subr.mxu0 0.0
    %7373 = vmatpush1.msra.mxu0 0.0
    %7374 = vmatprep.subr.mxu0 0.0
    %7375 = vmatpush1.msra.mxu0 0.0
    %7376 = vmatprep.subr.mxu0 0.0
    %7377 = vmatpush1.msra.mxu0 0.0
    %7378 = vmatprep.subr.mxu0 0.0
    %7379 = vmatpush1.msra.mxu0 0.0
    %7380 = vmatprep.subr.mxu0 0.0
    %7381 = vmatpush1.msra.mxu0 0.0
    %7382 = vmatprep.subr.mxu0 0.0
    %7383 = vmatpush1.msra.mxu0 0.0
    %7384 = vmatprep.subr.mxu0 0.0
    %7385 = vmatpush1.msra.mxu0 0.0
    %7386 = vmatprep.subr.mxu0 0.0
    %7387 = vmatpush1.msra.mxu0 0.0
    %7388 = vmatprep.subr.mxu0 0.0
    %7389 = vmatpush1.msra.mxu0 0.0
    %7390 = vmatprep.subr.mxu0 0.0
    %7391 = vmatpush1.msra.mxu0 0.0
    %7392 = vmatprep.mubr.f32.mxu0 0.0
    %v7393 = vand.u32 %v7072, 4294901760
    %v7394 = vsub.f32 %v7072, %v7393
    %v7395 = vand.u32 %v7394, 4294901760
    %7396 = vmatmul.mubr.f32.gmra.mrb[0].mxu0 %v7395
    %v7397 = vpop.f32.mrb[0].mxu0
    %v7398 = vadd.f32 %v7321, %v7397
    %v7399 = vpop.f32.mrb[0].mxu0
    %7400 = vdwg.mxu0
    %7401 = vmatprep.subr.mxu0 0.0
    %v7402 = vand.u32 %v7060, 4294901760
    %v7403 = vsub.f32 %v7060, %v7402
    %v7404 = vand.u32 %v7403, 4294901760
    %7405 = vmatpush1.msra.mxu0 %v7404
    %7406 = vmatprep.subr.mxu0 0.0
    %v7407 = vand.u32 %v7061, 4294901760
    %v7408 = vsub.f32 %v7061, %v7407
    %v7409 = vand.u32 %v7408, 4294901760
    %7410 = vmatpush1.msra.mxu0 %v7409
    %7411 = vmatprep.subr.mxu0 0.0
    %v7412 = vand.u32 %v7062, 4294901760
    %v7413 = vsub.f32 %v7062, %v7412
    %v7414 = vand.u32 %v7413, 4294901760
    %7415 = vmatpush1.msra.mxu0 %v7414
    %7416 = vmatprep.subr.mxu0 0.0
    %v7417 = vand.u32 %v7063, 4294901760
    %v7418 = vsub.f32 %v7063, %v7417
    %v7419 = vand.u32 %v7418, 4294901760
    %7420 = vmatpush1.msra.mxu0 %v7419
    %7421 = vmatprep.subr.mxu0 0.0
    %7422 = vmatpush1.msra.mxu0 0.0
    %7423 = vmatprep.subr.mxu0 0.0
    %7424 = vmatpush1.msra.mxu0 0.0
    %7425 = vmatprep.subr.mxu0 0.0
    %7426 = vmatpush1.msra.mxu0 0.0
    %7427 = vmatprep.subr.mxu0 0.0
    %7428 = vmatpush1.msra.mxu0 0.0
    %7429 = vmatprep.subr.mxu0 0.0
    %7430 = vmatpush1.msra.mxu0 0.0
    %7431 = vmatprep.subr.mxu0 0.0
    %7432 = vmatpush1.msra.mxu0 0.0
    %7433 = vmatprep.subr.mxu0 0.0
    %7434 = vmatpush1.msra.mxu0 0.0
    %7435 = vmatprep.subr.mxu0 0.0
    %7436 = vmatpush1.msra.mxu0 0.0
    %7437 = vmatprep.subr.mxu0 0.0
    %7438 = vmatpush1.msra.mxu0 0.0
    %7439 = vmatprep.subr.mxu0 0.0
    %7440 = vmatpush1.msra.mxu0 0.0
    %7441 = vmatprep.subr.mxu0 0.0
    %7442 = vmatpush1.msra.mxu0 0.0
    %7443 = vmatprep.subr.mxu0 0.0
    %7444 = vmatpush1.msra.mxu0 0.0
    %7445 = vmatprep.subr.mxu0 0.0
    %7446 = vmatpush1.msra.mxu0 0.0
    %7447 = vmatprep.subr.mxu0 0.0
    %7448 = vmatpush1.msra.mxu0 0.0
    %7449 = vmatprep.subr.mxu0 0.0
    %7450 = vmatpush1.msra.mxu0 0.0
    %7451 = vmatprep.subr.mxu0 0.0
    %7452 = vmatpush1.msra.mxu0 0.0
    %7453 = vmatprep.subr.mxu0 0.0
    %7454 = vmatpush1.msra.mxu0 0.0
    %7455 = vmatprep.subr.mxu0 0.0
    %7456 = vmatpush1.msra.mxu0 0.0
    %7457 = vmatprep.subr.mxu0 0.0
    %7458 = vmatpush1.msra.mxu0 0.0
    %7459 = vmatprep.subr.mxu0 0.0
    %7460 = vmatpush1.msra.mxu0 0.0
    %7461 = vmatprep.subr.mxu0 0.0
    %7462 = vmatpush1.msra.mxu0 0.0
    %7463 = vmatprep.subr.mxu0 0.0
    %7464 = vmatpush1.msra.mxu0 0.0
    %7465 = vmatprep.subr.mxu0 0.0
    %7466 = vmatpush1.msra.mxu0 0.0
    %7467 = vmatprep.subr.mxu0 0.0
    %7468 = vmatpush1.msra.mxu0 0.0
    %7469 = vmatprep.subr.mxu0 0.0
    %7470 = vmatpush1.msra.mxu0 0.0
    %7471 = vmatprep.subr.mxu0 0.0
    %7472 = vmatpush1.msra.mxu0 0.0
    %7473 = vmatprep.subr.mxu0 0.0
    %7474 = vmatpush1.msra.mxu0 0.0
    %7475 = vmatprep.subr.mxu0 0.0
    %7476 = vmatpush1.msra.mxu0 0.0
    %7477 = vmatprep.mubr.f32.mxu0 0.0
    %v7478 = vand.u32 %v7072, 4294901760
    %7479 = vmatmul.mubr.f32.gmra.mrb[0].mxu0 %v7478
    %v7480 = vpop.f32.mrb[0].mxu0
    %v7481 = vadd.f32 %v7398, %v7480
    %v7482 = vpop.f32.mrb[0].mxu0
    %7483 = vdwg.mxu0
    %7484 = vmatprep.subr.mxu0 0.0
    %v7485 = vand.u32 %v7060, 4294901760
    %7486 = vmatpush1.msra.mxu0 %v7485
    %7487 = vmatprep.subr.mxu0 0.0
    %v7488 = vand.u32 %v7061, 4294901760
    %7489 = vmatpush1.msra.mxu0 %v7488
    %7490 = vmatprep.subr.mxu0 0.0
    %v7491 = vand.u32 %v7062, 4294901760
    %7492 = vmatpush1.msra.mxu0 %v7491
    %7493 = vmatprep.subr.mxu0 0.0
    %v7494 = vand.u32 %v7063, 4294901760
    %7495 = vmatpush1.msra.mxu0 %v7494
    %7496 = vmatprep.subr.mxu0 0.0
    %7497 = vmatpush1.msra.mxu0 0.0
    %7498 = vmatprep.subr.mxu0 0.0
    %7499 = vmatpush1.msra.mxu0 0.0
    %7500 = vmatprep.subr.mxu0 0.0
    %7501 = vmatpush1.msra.mxu0 0.0
    %7502 = vmatprep.subr.mxu0 0.0
    %7503 = vmatpush1.msra.mxu0 0.0
    %7504 = vmatprep.subr.mxu0 0.0
    %7505 = vmatpush1.msra.mxu0 0.0
    %7506 = vmatprep.subr.mxu0 0.0
    %7507 = vmatpush1.msra.mxu0 0.0
    %7508 = vmatprep.subr.mxu0 0.0
    %7509 = vmatpush1.msra.mxu0 0.0
    %7510 = vmatprep.subr.mxu0 0.0
    %7511 = vmatpush1.msra.mxu0 0.0
    %7512 = vmatprep.subr.mxu0 0.0
    %7513 = vmatpush1.msra.mxu0 0.0
    %7514 = vmatprep.subr.mxu0 0.0
    %7515 = vmatpush1.msra.mxu0 0.0
    %7516 = vmatprep.subr.mxu0 0.0
    %7517 = vmatpush1.msra.mxu0 0.0
    %7518 = vmatprep.subr.mxu0 0.0
    %7519 = vmatpush1.msra.mxu0 0.0
    %7520 = vmatprep.subr.mxu0 0.0
    %7521 = vmatpush1.msra.mxu0 0.0
    %7522 = vmatprep.subr.mxu0 0.0
    %7523 = vmatpush1.msra.mxu0 0.0
    %7524 = vmatprep.subr.mxu0 0.0
    %7525 = vmatpush1.msra.mxu0 0.0
    %7526 = vmatprep.subr.mxu0 0.0
    %7527 = vmatpush1.msra.mxu0 0.0
    %7528 = vmatprep.subr.mxu0 0.0
    %7529 = vmatpush1.msra.mxu0 0.0
    %7530 = vmatprep.subr.mxu0 0.0
    %7531 = vmatpush1.msra.mxu0 0.0
    %7532 = vmatprep.subr.mxu0 0.0
    %7533 = vmatpush1.msra.mxu0 0.0
    %7534 = vmatprep.subr.mxu0 0.0
    %7535 = vmatpush1.msra.mxu0 0.0
    %7536 = vmatprep.subr.mxu0 0.0
    %7537 = vmatpush1.msra.mxu0 0.0
    %7538 = vmatprep.subr.mxu0 0.0
    %7539 = vmatpush1.msra.mxu0 0.0
    %7540 = vmatprep.subr.mxu0 0.0
    %7541 = vmatpush1.msra.mxu0 0.0
    %7542 = vmatprep.subr.mxu0 0.0
    %7543 = vmatpush1.msra.mxu0 0.0
    %7544 = vmatprep.subr.mxu0 0.0
    %7545 = vmatpush1.msra.mxu0 0.0
    %7546 = vmatprep.subr.mxu0 0.0
    %7547 = vmatpush1.msra.mxu0 0.0
    %7548 = vmatprep.subr.mxu0 0.0
    %7549 = vmatpush1.msra.mxu0 0.0
    %7550 = vmatprep.subr.mxu0 0.0
    %7551 = vmatpush1.msra.mxu0 0.0
    %7552 = vmatprep.mubr.f32.mxu0 0.0
    %v7553 = vand.u32 %v7072, 4294901760
    %7554 = vmatmul.mubr.f32.gmra.mrb[0].mxu0 %v7553
    %v7555 = vpop.f32.mrb[0].mxu0
    %v7556 = vadd.f32 %v7481, %v7555
    %v7557 = vpop.f32.mrb[0].mxu0
    %7558 = vdwg.mxu0
    %vm7559 = vcmask 17408
    %7560 = vst.msk [vmem:[#allocation2] sm:$0x3] %vm7559, %v7556
    // Predicated region
    $region90: #{gated_gcn_forward.1} parent=1 // pred_check
      _
    $region91: #{gated_gcn_forward.1} parent=1 // pred_check_branch
      %7562 = sbr.rel (0) target = $region93
    $region92: #{gated_gcn_forward.1} parent=1 // pred_region
      %s7564 = ssub.s32 32, 32
      %7565 = vsyncadd [#allocation3], %s7564
      %s7567 = sshll.u32 [#allocation2], 4
      %s7568 = int_to_ptr.vmem [resolvable:$true] %s7567
      %7570 = dma.vmem_to_hbm [thread:$0]  %s7568, 32, %s22, [#allocation3]
    $region93: #{gated_gcn_forward.1} parent=1 // pred_fallthru
      _
    // Predicated region
    $region94: #{gated_gcn_forward.1} parent=1 // pred_check
      _
    $region95: #{gated_gcn_forward.1} parent=1 // pred_check_branch
      %7572 = sbr.rel (0) target = $region97
    $region96: #{gated_gcn_forward.1} parent=1 // pred_region
      %7573 = dma.done [#allocation3], 32
    $region97: #{gated_gcn_forward.1} parent=1 // pred_fallthru
      _
    %7574 = vsyncpa [#allocation3], 1

</llo_original>
